<compile_context>
chip_gen: v7x
topology: tpu7x:2x2x1
jax: 0.10.0
libtpu: 0.0.40
codegen_flags: <defaults>
</compile_context>

<pallas_src>
import numpy as np
import jax
import jax.numpy as jnp
from jax.experimental import pallas as pl
from jax.experimental.pallas import tpu as pltpu

C_OUTPUT = 21
SAL_PAD = 32   # pred_sal output channels zero-padded 21 -> 32 (was 128)


# ------------- kernel A: fused 1x1-conv head (channels-first, single grid step) -------------

def _seg_convs_kernel(x32_ref, x16_ref, x8_ref,
                      w0_ref, b0_ref, w1_ref, b1_ref, w2_ref, b2_ref,
                      seg32_ref, seg16_ref, seg8_ref):
    # X[b]: (Cin, H*W) f32, W: (CO, Cin) bf16, bias: (CO, 1) f32 -> (CO, H*W) f32.
    w0 = w0_ref[...]
    w1 = w1_ref[...]
    w2 = w2_ref[...]
    b0 = b0_ref[...]
    b1 = b1_ref[...]
    b2 = b2_ref[...]
    B = x32_ref.shape[0]
    for b in range(B):   # tiny static loop (small B, small bodies) -> scheduler visibility
        s32 = jnp.dot(w0, x32_ref[b].astype(jnp.bfloat16),
                      preferred_element_type=jnp.float32) + b0
        seg32_ref[b] = s32
        seg16_ref[b] = (jnp.dot(w1, x16_ref[b].astype(jnp.bfloat16),
                                preferred_element_type=jnp.float32) + b1 + s32)
        seg8_ref[b] = (jnp.dot(w2, x8_ref[b].astype(jnp.bfloat16),
                               preferred_element_type=jnp.float32) + b2)


def seg_convs(x32, x16, x8, w0, b0, w1, b1, w2, b2):
    B, _, HW32 = x32.shape
    _, _, HW16 = x16.shape
    _, _, HW8 = x8.shape
    CO = w0.shape[0]
    # Total I/O is tiny: single invocation, whole arrays resident in VMEM, no per-step
    # pipeline overhead, weights loaded exactly once.
    return pl.pallas_call(
        _seg_convs_kernel,
        out_shape=(jax.ShapeDtypeStruct((B, CO, HW32), jnp.float32),
                   jax.ShapeDtypeStruct((B, CO, HW16), jnp.float32),
                   jax.ShapeDtypeStruct((B, CO, HW8), jnp.float32)),
    )(x32, x16, x8, w0, b0, w1, b1, w2, b2)


# -------- kernel B: fused bilinear upsample x2 + seg8 residual + upsample x8 --------

def _upsample_kernel(s16_ref, s8_ref, b1_ref, b2_ref,
                     ry2_ref, rx2t_ref, ry8_ref, rx8t_ref, o_ref):
    ry2 = ry2_ref[...]     # bf16 separable bilinear factors (exact in bf16)
    rx2t = rx2t_ref[...]
    ry8 = ry8_ref[...]
    rx8t = rx8t_ref[...]
    planes = s16_ref.shape[0]

    @pl.loop(0, planes)    # dynamic loop bounds vreg live ranges per plane
    def _(g):
        # upsample[1]: ConvTranspose2d(k=4,s=2,p=1) bilinear == Ry2 @ P @ Rx2^T + b1
        a = jnp.dot(s16_ref[g].astype(jnp.bfloat16), rx2t,
                    preferred_element_type=jnp.float32)                    # (H16, 2W16)
        m = jnp.dot(ry2, a.astype(jnp.bfloat16),
                    preferred_element_type=jnp.float32)                    # (2H16, 2W16)
        m = m + b1_ref[g] + s8_ref[g]                                      # + seg8 residual
        # upsample[2]: ConvTranspose2d(k=16,s=8,p=4) bilinear == Ry8 @ M @ Rx8^T + b2
        t = jnp.dot(m.astype(jnp.bfloat16), rx8t,
                    preferred_element_type=jnp.float32)                    # (H8, 8W8)
        o_ref[g] = (jnp.dot(ry8, t.astype(jnp.bfloat16),
                            preferred_element_type=jnp.float32) + b2_ref[g])


def _bilinear_1d_matrix(size_in, stride):
    """1-D factor of ConvTranspose2d(k=2s, stride=s, pad=s//2) with the separable
    bilinear weight produced by get_upsampling_weight (filt[ky]*filt[kx])."""
    k = 2 * stride
    p = stride // 2
    factor = (k + 1) // 2
    center = factor - 0.5                      # k is even
    filt = 1.0 - np.abs(np.arange(k) - center) / factor
    size_out = (size_in - 1) * stride - 2 * p + k
    R = np.zeros((size_out, size_in), dtype=np.float32)
    for o in range(size_out):
        for i in range(size_in):
            kk = o + p - i * stride
            if 0 <= kk < k:
                R[o, i] = filt[kk]
    return R


def _pick_group(P, hout, wout, min_steps=6, max_block_bytes=4 * 1024 * 1024):
    """Largest divisor of P giving >= min_steps grid steps (megacore balance, writeback
    overlap) with an f32 output block small enough for every generation's VMEM."""
    best = 1
    for g in range(1, P + 1):
        if P % g == 0 and P // g >= min_steps and g * hout * wout * 4 <= max_block_bytes:
            best = g
    return best


def fused_bilinear_upsample(seg16_planes, seg8_planes, bias1_planes, bias2_planes):
    """Per (b,c) plane: Ry8 @ (Ry2 @ seg16 @ Rx2^T + b1 + seg8) @ Rx8^T + b2."""
    P, H16, W16 = seg16_planes.shape
    _, H8, W8 = seg8_planes.shape
    assert (H8, W8) == (2 * H16, 2 * W16)
    Ry2 = jnp.asarray(_bilinear_1d_matrix(H16, 2), jnp.bfloat16)       # (2*H16, H16)
    Rx2t = jnp.asarray(_bilinear_1d_matrix(W16, 2).T, jnp.bfloat16)    # (W16, 2*W16)
    Ry8 = jnp.asarray(_bilinear_1d_matrix(H8, 8), jnp.bfloat16)        # (8*H8,  H8)
    Rx8t = jnp.asarray(_bilinear_1d_matrix(W8, 8).T, jnp.bfloat16)     # (W8,  8*W8)
    Hout, Wout = Ry8.shape[0], Rx8t.shape[1]
    G = _pick_group(P, Hout, Wout)     # e.g. P=42 -> G=7 (6 balanced grid steps)
    return pl.pallas_call(
        _upsample_kernel,
        out_shape=jax.ShapeDtypeStruct((P, Hout, Wout), jnp.float32),
        grid_spec=pltpu.PrefetchScalarGridSpec(
            num_scalar_prefetch=0,
            grid=(P // G,),
            in_specs=[
                pl.BlockSpec((G, H16, W16), lambda i: (i, 0, 0)),
                pl.BlockSpec((G, H8, W8), lambda i: (i, 0, 0)),
                pl.BlockSpec((G, 1, 1), lambda i: (i, 0, 0)),
                pl.BlockSpec((G, 1, 1), lambda i: (i, 0, 0)),
                pl.BlockSpec((2 * H16, H16), lambda i: (0, 0)),
                pl.BlockSpec((W16, 2 * W16), lambda i: (0, 0)),
                pl.BlockSpec((8 * H8, H8), lambda i: (0, 0)),
                pl.BlockSpec((W8, 8 * W8), lambda i: (0, 0)),
            ],
            out_specs=pl.BlockSpec((G, Hout, Wout), lambda i: (i, 0, 0)),
        ),
        compiler_params=pltpu.CompilerParams(dimension_semantics=("parallel",)),
    )(seg16_planes, seg8_planes, bias1_planes, bias2_planes, Ry2, Rx2t, Ry8, Rx8t)


# ---------------------- kernel C: pred_sal (16x16 conv) + sigmoid ----------------------

def _sal_kernel(x_ref, w_ref, b_ref, o_ref):
    @pl.when(pl.program_id(0) == 0)
    def _():
        o_ref[...] = jnp.zeros_like(o_ref)
    o_ref[...] += jnp.dot(x_ref[...].astype(jnp.bfloat16), w_ref[...],
                          preferred_element_type=jnp.float32)

    @pl.when(pl.program_id(0) == pl.num_programs(0) - 1)
    def _():
        o_ref[...] = jax.nn.sigmoid(o_ref[...] + b_ref[...])


def _pick_tk(K, cap=8192, align=256):
    """Largest divisor of K that is <= cap and a multiple of `align`; keeps the
    double-buffered bf16 weight block small on every generation."""
    best = None
    t = align
    while t <= min(K, cap):
        if K % t == 0:
            best = t
        t += align
    return best if best is not None else K


def sal_head(x_flat, w_sal, b_sal):
    B, K = x_flat.shape
    K2, N = w_sal.shape
    assert K == K2
    tk = _pick_tk(K)
    return pl.pallas_call(
        _sal_kernel,
        out_shape=jax.ShapeDtypeStruct((B, N), jnp.float32),
        grid_spec=pltpu.PrefetchScalarGridSpec(
            num_scalar_prefetch=0,
            grid=(K // tk,),
            in_specs=[
                pl.BlockSpec((B, tk), lambda k: (0, k)),
                pl.BlockSpec((tk, N), lambda k: (k, 0)),
                pl.BlockSpec((1, N), lambda k: (0, 0)),
            ],
            out_specs=pl.BlockSpec((B, N), lambda k: (0, 0)),
        ),
        compiler_params=pltpu.CompilerParams(dimension_semantics=("arbitrary",)),
    )(x_flat, w_sal, b_sal)


# ----------------------- forward (head of RESNET50_SIZE) ------------------

def resnet50_size_forward(params, feat8, feat16, feat32):
    """RESNET50_SIZE.forward head: pred_seg[0..2], Pass / bilinear ConvTranspose2d
    upsamplers, pred_sal + spatial mean + sigmoid.  I/O is NCHW."""
    CO = C_OUTPUT
    B, C32, H32, W32 = feat32.shape
    _, C16, H16, W16 = feat16.shape
    _, C8, H8, W8 = feat8.shape
    assert (H16, W16) == (H32, W32)
    assert (H8, W8) == (2 * H16, 2 * W16)
    assert (H32, W32) == (16, 16)   # pred_sal's 16x16 valid conv -> 1x1 map (mean == identity)

    # NCHW -> (B, C, H*W): pure reshapes, no transposes anywhere in the graph.
    x32 = feat32.reshape(B, C32, H32 * W32)
    x16 = feat16.reshape(B, C16, H16 * W16)
    x8 = feat8.reshape(B, C8, H8 * W8)

    # seg32 = pred_seg[0](feat32); seg32x = seg32; upsample[0] == Pass (identity)
    # seg16 = pred_seg[1](feat16) + seg32 ; seg8 = pred_seg[2](feat8)   -- all one kernel
    seg32, seg16, seg8 = seg_convs(
        x32, x16, x8,
        params["w_seg0"], params["b_seg0"],
        params["w_seg1"], params["b_seg1"],
        params["w_seg2"], params["b_seg2"])
    seg32x = seg32.reshape(B, CO, H32, W32)

    # seg = upsample[2]( upsample[1](seg16) + seg8 )   -- one fused kernel, per-plane groups
    seg16_p = seg16.reshape(B * CO, H16, W16)
    seg8_p = seg8.reshape(B * CO, H8, W8)
    b1_p = jnp.tile(params["b_up1"], B).reshape(B * CO, 1, 1)
    b2_p = jnp.tile(params["b_up2"], B).reshape(B * CO, 1, 1)
    seg_p = fused_bilinear_upsample(seg16_p, seg8_p, b1_p, b2_p)
    seg = seg_p.reshape(B, CO, seg_p.shape[1], seg_p.shape[2])

    # sal = sigmoid(mean_hw(pred_sal(feat32)));  16x16 input -> the valid conv gives a 1x1
    # map so the spatial mean is the identity and the conv is one (B, 16*16*C32) matmul.
    sal_full = sal_head(feat32.reshape(B, C32 * H32 * W32),
                        params["w_sal"], params["b_sal"])
    sal = sal_full[:, :CO].reshape(B, CO, 1, 1)

    return seg, sal, seg32x


# ----------------------- deterministic parameter init ---------------------

def init_params(key, c8, c16, c32, co=C_OUTPUT):
    ks = jax.random.split(key, 6)
    std = 0.02  # weight_init: Conv2d.weight ~ N(0, 0.02), Conv2d.bias = 0
    bf16 = jnp.bfloat16
    params = {
        # 1x1 conv weights stored channels-first (CO, Cin) == PyTorch (CO, Cin, 1, 1)
        # squeezed, cast to bf16 for the MXU (f32 accumulation stays in-kernel).
        "w_seg0": (std * jax.random.normal(ks[0], (co, c32), jnp.float32)).astype(bf16),
        "b_seg0": jnp.zeros((co, 1), jnp.float32),
        "w_seg1": (std * jax.random.normal(ks[1], (co, c16), jnp.float32)).astype(bf16),
        "b_seg1": jnp.zeros((co, 1), jnp.float32),
        "w_seg2": (std * jax.random.normal(ks[2], (co, c8), jnp.float32)).astype(bf16),
        "b_seg2": jnp.zeros((co, 1), jnp.float32),
        # ConvTranspose2d biases (their weights are the fixed bilinear kernels)
        "b_up1": 0.01 * jax.random.normal(ks[4], (co,), jnp.float32),
        "b_up2": 0.01 * jax.random.normal(ks[5], (co,), jnp.float32),
    }
    # pred_sal: Conv2d(c32, co, kernel_size=16); PyTorch weight (co, c32, 16, 16).
    # Flattened over (ci, ky, kx) to match NCHW-flattened feat32, transposed to (K, co),
    # zero-padded on the output-channel axis 21 -> 32 lanes, stored bf16.
    w_sal_torch = std * jax.random.normal(ks[3], (co, c32, 16, 16), jnp.float32)
    w_sal = w_sal_torch.reshape(co, c32 * 16 * 16).T               # (K, co)
    params["w_sal"] = jnp.pad(w_sal, ((0, 0), (0, SAL_PAD - co))).astype(bf16)
    params["b_sal"] = jnp.zeros((1, SAL_PAD), jnp.float32)
    return params


if __name__ == "__main__":
    # Synthetic stand-in feature maps for the backbone of a 256x256 image:
    #   feat8 : stride 8, feat16/feat32 : stride 16 (last stage dilated).
    B, C8, C16, C32 = 2, 16, 32, 64
    key = jax.random.PRNGKey(0)
    k_p, k8, k16, k32 = jax.random.split(key, 4)
    params = init_params(k_p, C8, C16, C32)
    feat8 = jax.random.normal(k8, (B, C8, 32, 32), jnp.float32)
    feat16 = jax.random.normal(k16, (B, C16, 16, 16), jnp.float32)
    feat32 = jax.random.normal(k32, (B, C32, 16, 16), jnp.float32)

    fwd = jax.jit(resnet50_size_forward)
    seg, sal, seg32x = fwd(params, feat8, feat16, feat32)
    jax.block_until_ready((seg, sal, seg32x))

    assert seg.shape == (B, C_OUTPUT, 256, 256)
    assert sal.shape == (B, C_OUTPUT, 1, 1)
    assert seg32x.shape == (B, C_OUTPUT, 16, 16)
    print("KERNEL_OK")
</pallas_src>

<mosaic_0001>
module attributes {stable_mosaic.version = 11 : i64} {
  func.func @_seg_convs_kernel(%arg0: memref<2x64x256xf32, #tpu.memory_space<vmem>>, %arg1: memref<2x32x256xf32, #tpu.memory_space<vmem>>, %arg2: memref<2x16x1024xf32, #tpu.memory_space<vmem>>, %arg3: memref<21x64xbf16, #tpu.memory_space<vmem>>, %arg4: memref<21x1xf32, #tpu.memory_space<vmem>>, %arg5: memref<21x32xbf16, #tpu.memory_space<vmem>>, %arg6: memref<21x1xf32, #tpu.memory_space<vmem>>, %arg7: memref<21x16xbf16, #tpu.memory_space<vmem>>, %arg8: memref<21x1xf32, #tpu.memory_space<vmem>>, %arg9: memref<2x21x256xf32, #tpu.memory_space<vmem>>, %arg10: memref<2x21x256xf32, #tpu.memory_space<vmem>>, %arg11: memref<2x21x1024xf32, #tpu.memory_space<vmem>>) attributes {dimension_semantics = [], scalar_prefetch = 0 : i64, scratch_operands = 0 : i64, tpu.core_type = #tpu.core_type<tc>} {
    %c0 = arith.constant 0 : index
    %c0_0 = arith.constant 0 : index
    %0 = vector.load %arg3[%c0, %c0_0] : memref<21x64xbf16, #tpu.memory_space<vmem>>, vector<21x64xbf16>
    %c0_1 = arith.constant 0 : index
    %c0_2 = arith.constant 0 : index
    %1 = vector.load %arg5[%c0_1, %c0_2] : memref<21x32xbf16, #tpu.memory_space<vmem>>, vector<21x32xbf16>
    %c0_3 = arith.constant 0 : index
    %c0_4 = arith.constant 0 : index
    %2 = vector.load %arg7[%c0_3, %c0_4] : memref<21x16xbf16, #tpu.memory_space<vmem>>, vector<21x16xbf16>
    %c0_5 = arith.constant 0 : index
    %c0_6 = arith.constant 0 : index
    %3 = vector.load %arg4[%c0_5, %c0_6] : memref<21x1xf32, #tpu.memory_space<vmem>>, vector<21x1xf32>
    %c0_7 = arith.constant 0 : index
    %c0_8 = arith.constant 0 : index
    %4 = vector.load %arg6[%c0_7, %c0_8] : memref<21x1xf32, #tpu.memory_space<vmem>>, vector<21x1xf32>
    %c0_9 = arith.constant 0 : index
    %c0_10 = arith.constant 0 : index
    %5 = vector.load %arg8[%c0_9, %c0_10] : memref<21x1xf32, #tpu.memory_space<vmem>>, vector<21x1xf32>
    %c0_11 = arith.constant 0 : index
    %c0_12 = arith.constant 0 : index
    %c0_13 = arith.constant 0 : index
    %6 = vector.load %arg0[%c0_11, %c0_12, %c0_13] : memref<2x64x256xf32, #tpu.memory_space<vmem>>, vector<1x64x256xf32>
    %7 = vector.shape_cast %6 : vector<1x64x256xf32> to vector<64x256xf32>
    %8 = arith.truncf %7 : vector<64x256xf32> to vector<64x256xbf16>
    %cst = arith.constant dense<0.000000e+00> : vector<21x256xf32>
    %9 = tpu.matmul %0, %8, %cst {dimension_numbers = #tpu.dot_dimension_numbers<[1], [0], [0], [1], [0, 0, 1, 1], [], []>} : vector<21x64xbf16>, vector<64x256xbf16>, vector<21x256xf32> -> vector<21x256xf32>
    %10 = vector.broadcast %3 : vector<21x1xf32> to vector<21x256xf32>
    %11 = arith.addf %9, %10 : vector<21x256xf32>
    %c0_14 = arith.constant 0 : index
    %c0_15 = arith.constant 0 : index
    %c0_16 = arith.constant 0 : index
    %12 = vector.load %arg9[%c0_14, %c0_15, %c0_16] : memref<2x21x256xf32, #tpu.memory_space<vmem>>, vector<1x21x256xf32>
    %13 = vector.shape_cast %12 : vector<1x21x256xf32> to vector<21x256xf32>
    %14 = vector.shape_cast %11 : vector<21x256xf32> to vector<1x21x256xf32>
    tpu.vector_store %arg9[%c0_14, %c0_15, %c0_16], %14 {strides = array<i32>} : memref<2x21x256xf32, #tpu.memory_space<vmem>>, vector<1x21x256xf32>,
    %c0_17 = arith.constant 0 : index
    %c0_18 = arith.constant 0 : index
    %c0_19 = arith.constant 0 : index
    %15 = vector.load %arg1[%c0_17, %c0_18, %c0_19] : memref<2x32x256xf32, #tpu.memory_space<vmem>>, vector<1x32x256xf32>
    %16 = vector.shape_cast %15 : vector<1x32x256xf32> to vector<32x256xf32>
    %17 = arith.truncf %16 : vector<32x256xf32> to vector<32x256xbf16>
    %cst_20 = arith.constant dense<0.000000e+00> : vector<21x256xf32>
    %18 = tpu.matmul %1, %17, %cst_20 {dimension_numbers = #tpu.dot_dimension_numbers<[1], [0], [0], [1], [0, 0, 1, 1], [], []>} : vector<21x32xbf16>, vector<32x256xbf16>, vector<21x256xf32> -> vector<21x256xf32>
    %19 = vector.broadcast %4 : vector<21x1xf32> to vector<21x256xf32>
    %20 = arith.addf %18, %19 : vector<21x256xf32>
    %21 = arith.addf %20, %11 : vector<21x256xf32>
    %c0_21 = arith.constant 0 : index
    %c0_22 = arith.constant 0 : index
    %c0_23 = arith.constant 0 : index
    %22 = vector.load %arg10[%c0_21, %c0_22, %c0_23] : memref<2x21x256xf32, #tpu.memory_space<vmem>>, vector<1x21x256xf32>
    %23 = vector.shape_cast %22 : vector<1x21x256xf32> to vector<21x256xf32>
    %24 = vector.shape_cast %21 : vector<21x256xf32> to vector<1x21x256xf32>
    tpu.vector_store %arg10[%c0_21, %c0_22, %c0_23], %24 {strides = array<i32>} : memref<2x21x256xf32, #tpu.memory_space<vmem>>, vector<1x21x256xf32>,
    %c0_24 = arith.constant 0 : index
    %c0_25 = arith.constant 0 : index
    %c0_26 = arith.constant 0 : index
    %25 = vector.load %arg2[%c0_24, %c0_25, %c0_26] : memref<2x16x1024xf32, #tpu.memory_space<vmem>>, vector<1x16x1024xf32>
    %26 = vector.shape_cast %25 : vector<1x16x1024xf32> to vector<16x1024xf32>
    %27 = arith.truncf %26 : vector<16x1024xf32> to vector<16x1024xbf16>
    %cst_27 = arith.constant dense<0.000000e+00> : vector<21x1024xf32>
    %28 = tpu.matmul %2, %27, %cst_27 {dimension_numbers = #tpu.dot_dimension_numbers<[1], [0], [0], [1], [0, 0, 1, 1], [], []>} : vector<21x16xbf16>, vector<16x1024xbf16>, vector<21x1024xf32> -> vector<21x1024xf32>
    %29 = vector.broadcast %5 : vector<21x1xf32> to vector<21x1024xf32>
    %30 = arith.addf %28, %29 : vector<21x1024xf32>
    %c0_28 = arith.constant 0 : index
    %c0_29 = arith.constant 0 : index
    %c0_30 = arith.constant 0 : index
    %31 = vector.load %arg11[%c0_28, %c0_29, %c0_30] : memref<2x21x1024xf32, #tpu.memory_space<vmem>>, vector<1x21x1024xf32>
    %32 = vector.shape_cast %31 : vector<1x21x1024xf32> to vector<21x1024xf32>
    %33 = vector.shape_cast %30 : vector<21x1024xf32> to vector<1x21x1024xf32>
    tpu.vector_store %arg11[%c0_28, %c0_29, %c0_30], %33 {strides = array<i32>} : memref<2x21x1024xf32, #tpu.memory_space<vmem>>, vector<1x21x1024xf32>,
    %c1 = arith.constant 1 : index
    %c0_31 = arith.constant 0 : index
    %c0_32 = arith.constant 0 : index
    %34 = vector.load %arg0[%c1, %c0_31, %c0_32] : memref<2x64x256xf32, #tpu.memory_space<vmem>>, vector<1x64x256xf32>
    %35 = vector.shape_cast %34 : vector<1x64x256xf32> to vector<64x256xf32>
    %36 = arith.truncf %35 : vector<64x256xf32> to vector<64x256xbf16>
    %cst_33 = arith.constant dense<0.000000e+00> : vector<21x256xf32>
    %37 = tpu.matmul %0, %36, %cst_33 {dimension_numbers = #tpu.dot_dimension_numbers<[1], [0], [0], [1], [0, 0, 1, 1], [], []>} : vector<21x64xbf16>, vector<64x256xbf16>, vector<21x256xf32> -> vector<21x256xf32>
    %38 = vector.broadcast %3 : vector<21x1xf32> to vector<21x256xf32>
    %39 = arith.addf %37, %38 : vector<21x256xf32>
    %c1_34 = arith.constant 1 : index
    %c0_35 = arith.constant 0 : index
    %c0_36 = arith.constant 0 : index
    %40 = vector.load %arg9[%c1_34, %c0_35, %c0_36] : memref<2x21x256xf32, #tpu.memory_space<vmem>>, vector<1x21x256xf32>
    %41 = vector.shape_cast %40 : vector<1x21x256xf32> to vector<21x256xf32>
    %42 = vector.shape_cast %39 : vector<21x256xf32> to vector<1x21x256xf32>
    tpu.vector_store %arg9[%c1_34, %c0_35, %c0_36], %42 {strides = array<i32>} : memref<2x21x256xf32, #tpu.memory_space<vmem>>, vector<1x21x256xf32>,
    %c1_37 = arith.constant 1 : index
    %c0_38 = arith.constant 0 : index
    %c0_39 = arith.constant 0 : index
    %43 = vector.load %arg1[%c1_37, %c0_38, %c0_39] : memref<2x32x256xf32, #tpu.memory_space<vmem>>, vector<1x32x256xf32>
    %44 = vector.shape_cast %43 : vector<1x32x256xf32> to vector<32x256xf32>
    %45 = arith.truncf %44 : vector<32x256xf32> to vector<32x256xbf16>
    %cst_40 = arith.constant dense<0.000000e+00> : vector<21x256xf32>
    %46 = tpu.matmul %1, %45, %cst_40 {dimension_numbers = #tpu.dot_dimension_numbers<[1], [0], [0], [1], [0, 0, 1, 1], [], []>} : vector<21x32xbf16>, vector<32x256xbf16>, vector<21x256xf32> -> vector<21x256xf32>
    %47 = vector.broadcast %4 : vector<21x1xf32> to vector<21x256xf32>
    %48 = arith.addf %46, %47 : vector<21x256xf32>
    %49 = arith.addf %48, %39 : vector<21x256xf32>
    %c1_41 = arith.constant 1 : index
    %c0_42 = arith.constant 0 : index
    %c0_43 = arith.constant 0 : index
    %50 = vector.load %arg10[%c1_41, %c0_42, %c0_43] : memref<2x21x256xf32, #tpu.memory_space<vmem>>, vector<1x21x256xf32>
    %51 = vector.shape_cast %50 : vector<1x21x256xf32> to vector<21x256xf32>
    %52 = vector.shape_cast %49 : vector<21x256xf32> to vector<1x21x256xf32>
    tpu.vector_store %arg10[%c1_41, %c0_42, %c0_43], %52 {strides = array<i32>} : memref<2x21x256xf32, #tpu.memory_space<vmem>>, vector<1x21x256xf32>,
    %c1_44 = arith.constant 1 : index
    %c0_45 = arith.constant 0 : index
    %c0_46 = arith.constant 0 : index
    %53 = vector.load %arg2[%c1_44, %c0_45, %c0_46] : memref<2x16x1024xf32, #tpu.memory_space<vmem>>, vector<1x16x1024xf32>
    %54 = vector.shape_cast %53 : vector<1x16x1024xf32> to vector<16x1024xf32>
    %55 = arith.truncf %54 : vector<16x1024xf32> to vector<16x1024xbf16>
    %cst_47 = arith.constant dense<0.000000e+00> : vector<21x1024xf32>
    %56 = tpu.matmul %2, %55, %cst_47 {dimension_numbers = #tpu.dot_dimension_numbers<[1], [0], [0], [1], [0, 0, 1, 1], [], []>} : vector<21x16xbf16>, vector<16x1024xbf16>, vector<21x1024xf32> -> vector<21x1024xf32>
    %57 = vector.broadcast %5 : vector<21x1xf32> to vector<21x1024xf32>
    %58 = arith.addf %56, %57 : vector<21x1024xf32>
    %c1_48 = arith.constant 1 : index
    %c0_49 = arith.constant 0 : index
    %c0_50 = arith.constant 0 : index
    %59 = vector.load %arg11[%c1_48, %c0_49, %c0_50] : memref<2x21x1024xf32, #tpu.memory_space<vmem>>, vector<1x21x1024xf32>
    %60 = vector.shape_cast %59 : vector<1x21x1024xf32> to vector<21x1024xf32>
    %61 = vector.shape_cast %58 : vector<21x1024xf32> to vector<1x21x1024xf32>
    tpu.vector_store %arg11[%c1_48, %c0_49, %c0_50], %61 {strides = array<i32>} : memref<2x21x1024xf32, #tpu.memory_space<vmem>>, vector<1x21x1024xf32>,
    return
  }
}

module attributes {stable_mosaic.version = 11 : i64} {
  func.func @_sal_kernel(%arg0: i32, %arg1: memref<2x8192xf32, #tpu.memory_space<vmem>>, %arg2: memref<8192x32xbf16, #tpu.memory_space<vmem>>, %arg3: memref<1x32xf32, #tpu.memory_space<vmem>>, %arg4: memref<2x32xf32, #tpu.memory_space<vmem>>) attributes {dimension_semantics = [#tpu.dimension_semantics<arbitrary>], iteration_bounds = array<i64: 2>, scalar_prefetch = 0 : i64, scratch_operands = 0 : i64, tpu.core_type = #tpu.core_type<tc>, window_params = [{transform_indices = @transform_0, window_bounds = array<i64: 2, 8192>}, {transform_indices = @transform_1, window_bounds = array<i64: 8192, 32>}, {pipeline_mode = #tpu.pipeline_mode<synchronous>, transform_indices = @transform_2, window_bounds = array<i64: 1, 32>}, {pipeline_mode = #tpu.pipeline_mode<synchronous>, transform_indices = @transform_3, window_bounds = array<i64: 2, 32>}]} {
    %c0_i32 = arith.constant 0 : i32
    %0 = arith.cmpi eq, %arg0, %c0_i32 : i32
    %1 = arith.extui %0 : i1 to i32
    %c0_i32_0 = arith.constant 0 : i32
    %2 = arith.cmpi ne, %1, %c0_i32_0 : i32
    scf.if %2 {
      %cst_9 = arith.constant 0.000000e+00 : f32
      %13 = vector.broadcast %cst_9 : f32 to vector<2x32xf32>
      %c0_10 = arith.constant 0 : index
      %c0_11 = arith.constant 0 : index
      %14 = vector.load %arg4[%c0_10, %c0_11] : memref<2x32xf32, #tpu.memory_space<vmem>>, vector<2x32xf32>
      tpu.vector_store %arg4[%c0_10, %c0_11], %13 {strides = array<i32>} : memref<2x32xf32, #tpu.memory_space<vmem>>, vector<2x32xf32>,
    } else {
    }
    %c0 = arith.constant 0 : index
    %c0_1 = arith.constant 0 : index
    %3 = vector.load %arg4[%c0, %c0_1] : memref<2x32xf32, #tpu.memory_space<vmem>>, vector<2x32xf32>
    %c0_2 = arith.constant 0 : index
    %c0_3 = arith.constant 0 : index
    %4 = vector.load %arg1[%c0_2, %c0_3] : memref<2x8192xf32, #tpu.memory_space<vmem>>, vector<2x8192xf32>
    %5 = arith.truncf %4 : vector<2x8192xf32> to vector<2x8192xbf16>
    %c0_4 = arith.constant 0 : index
    %c0_5 = arith.constant 0 : index
    %6 = vector.load %arg2[%c0_4, %c0_5] : memref<8192x32xbf16, #tpu.memory_space<vmem>>, vector<8192x32xbf16>
    %cst = arith.constant dense<0.000000e+00> : vector<2x32xf32>
    %7 = tpu.matmul %5, %6, %cst {dimension_numbers = #tpu.dot_dimension_numbers<[1], [0], [0], [1], [0, 0, 1, 1], [], []>} : vector<2x8192xbf16>, vector<8192x32xbf16>, vector<2x32xf32> -> vector<2x32xf32>
    %8 = arith.addf %3, %7 : vector<2x32xf32>
    %c0_6 = arith.constant 0 : index
    %c0_7 = arith.constant 0 : index
    %9 = vector.load %arg4[%c0_6, %c0_7] : memref<2x32xf32, #tpu.memory_space<vmem>>, vector<2x32xf32>
    tpu.vector_store %arg4[%c0_6, %c0_7], %8 {strides = array<i32>} : memref<2x32xf32, #tpu.memory_space<vmem>>, vector<2x32xf32>,
    %c1_i32 = arith.constant 1 : i32
    %10 = arith.cmpi eq, %arg0, %c1_i32 : i32
    %11 = arith.extui %10 : i1 to i32
    %c0_i32_8 = arith.constant 0 : i32
    %12 = arith.cmpi ne, %11, %c0_i32_8 : i32
    scf.if %12 {
      %c0_9 = arith.constant 0 : index
      %c0_10 = arith.constant 0 : index
      %13 = vector.load %arg4[%c0_9, %c0_10] : memref<2x32xf32, #tpu.memory_space<vmem>>, vector<2x32xf32>
      %c0_11 = arith.constant 0 : index
      %c0_12 = arith.constant 0 : index
      %14 = vector.load %arg3[%c0_11, %c0_12] : memref<1x32xf32, #tpu.memory_space<vmem>>, vector<1x32xf32>
      %15 = vector.broadcast %14 : vector<1x32xf32> to vector<2x32xf32>
      %16 = arith.addf %13, %15 : vector<2x32xf32>
      %17 = arith.negf %16 : vector<2x32xf32>
      %18 = math.exp %17 : vector<2x32xf32>
      %cst_13 = arith.constant 1.000000e+00 : f32
      %19 = vector.broadcast %cst_13 : f32 to vector<2x32xf32>
      %20 = arith.addf %19, %18 : vector<2x32xf32>
      %21 = arith.divf %19, %20 : vector<2x32xf32>
      %c0_14 = arith.constant 0 : index
      %c0_15 = arith.constant 0 : index
      %22 = vector.load %arg4[%c0_14, %c0_15] : memref<2x32xf32, #tpu.memory_space<vmem>>, vector<2x32xf32>
      tpu.vector_store %arg4[%c0_14, %c0_15], %21 {strides = array<i32>} : memref<2x32xf32, #tpu.memory_space<vmem>>, vector<2x32xf32>,
    } else {
    }
    return
  }
  func.func @transform_0(%arg0: i32) -> (i32, i32) {
    %c0_i32 = arith.constant 0 : i32
    %c0_i32_0 = arith.constant 0 : i32
    return %c0_i32, %arg0 : i32, i32
  }
  func.func @transform_1(%arg0: i32) -> (i32, i32) {
    %c0_i32 = arith.constant 0 : i32
    %c0_i32_0 = arith.constant 0 : i32
    return %arg0, %c0_i32 : i32, i32
  }
  func.func @transform_2(%arg0: i32) -> (i32, i32) {
    %c0_i32 = arith.constant 0 : i32
    %c0_i32_0 = arith.constant 0 : i32
    %c0_i32_1 = arith.constant 0 : i32
    return %c0_i32, %c0_i32_0 : i32, i32
  }
  func.func @transform_3(%arg0: i32) -> (i32, i32) {
    %c0_i32 = arith.constant 0 : i32
    %c0_i32_0 = arith.constant 0 : i32
    %c0_i32_1 = arith.constant 0 : i32
    return %c0_i32, %c0_i32_0 : i32, i32
  }
}

module attributes {stable_mosaic.version = 11 : i64} {
  func.func @_upsample_kernel(%arg0: i32, %arg1: memref<7x16x16xf32, #tpu.memory_space<vmem>>, %arg2: memref<7x32x32xf32, #tpu.memory_space<vmem>>, %arg3: memref<7x1x1xf32, #tpu.memory_space<vmem>>, %arg4: memref<7x1x1xf32, #tpu.memory_space<vmem>>, %arg5: memref<32x16xbf16, #tpu.memory_space<vmem>>, %arg6: memref<16x32xbf16, #tpu.memory_space<vmem>>, %arg7: memref<256x32xbf16, #tpu.memory_space<vmem>>, %arg8: memref<32x256xbf16, #tpu.memory_space<vmem>>, %arg9: memref<7x256x256xf32, #tpu.memory_space<vmem>>) attributes {dimension_semantics = [#tpu.dimension_semantics<parallel>], iteration_bounds = array<i64: 6>, scalar_prefetch = 0 : i64, scratch_operands = 0 : i64, tpu.core_type = #tpu.core_type<tc>, window_params = [{transform_indices = @transform_0, window_bounds = array<i64: 7, 16, 16>}, {transform_indices = @transform_1, window_bounds = array<i64: 7, 32, 32>}, {transform_indices = @transform_2, window_bounds = array<i64: 7, 1, 1>}, {transform_indices = @transform_3, window_bounds = array<i64: 7, 1, 1>}, {pipeline_mode = #tpu.pipeline_mode<synchronous>, transform_indices = @transform_4, window_bounds = array<i64: 32, 16>}, {pipeline_mode = #tpu.pipeline_mode<synchronous>, transform_indices = @transform_5, window_bounds = array<i64: 16, 32>}, {pipeline_mode = #tpu.pipeline_mode<synchronous>, transform_indices = @transform_6, window_bounds = array<i64: 256, 32>}, {pipeline_mode = #tpu.pipeline_mode<synchronous>, transform_indices = @transform_7, window_bounds = array<i64: 32, 256>}, {transform_indices = @transform_8, window_bounds = array<i64: 7, 256, 256>}]} {
    %c0 = arith.constant 0 : index
    %c0_0 = arith.constant 0 : index
    %0 = vector.load %arg5[%c0, %c0_0] : memref<32x16xbf16, #tpu.memory_space<vmem>>, vector<32x16xbf16>
    %c0_1 = arith.constant 0 : index
    %c0_2 = arith.constant 0 : index
    %1 = vector.load %arg6[%c0_1, %c0_2] : memref<16x32xbf16, #tpu.memory_space<vmem>>, vector<16x32xbf16>
    %c0_3 = arith.constant 0 : index
    %c0_4 = arith.constant 0 : index
    %2 = vector.load %arg7[%c0_3, %c0_4] : memref<256x32xbf16, #tpu.memory_space<vmem>>, vector<256x32xbf16>
    %c0_5 = arith.constant 0 : index
    %c0_6 = arith.constant 0 : index
    %3 = vector.load %arg8[%c0_5, %c0_6] : memref<32x256xbf16, #tpu.memory_space<vmem>>, vector<32x256xbf16>
    %c0_i32 = arith.constant 0 : i32
    %c7_i32 = arith.constant 7 : i32
    %4 = arith.addi %c0_i32, %c7_i32 : i32
    %c1_i32 = arith.constant 1 : i32
    scf.for %arg10 = %c0_i32 to %4 step %c1_i32  : i32 {
      %c1_i32_8 = arith.constant 1 : i32
      %5 = arith.muli %arg10, %c1_i32_8 : i32
      %c0_i32_9 = arith.constant 0 : i32
      %6 = arith.addi %c0_i32_9, %5 : i32
      %7 = arith.index_cast %6 : i32 to index
      %c0_10 = arith.constant 0 : index
      %c0_11 = arith.constant 0 : index
      %8 = vector.load %arg1[%7, %c0_10, %c0_11] : memref<7x16x16xf32, #tpu.memory_space<vmem>>, vector<1x16x16xf32>
      %9 = vector.shape_cast %8 : vector<1x16x16xf32> to vector<16x16xf32>
      %10 = arith.truncf %9 : vector<16x16xf32> to vector<16x16xbf16>
      %cst = arith.constant dense<0.000000e+00> : vector<16x32xf32>
      %11 = tpu.matmul %10, %1, %cst {dimension_numbers = #tpu.dot_dimension_numbers<[1], [0], [0], [1], [0, 0, 1, 1], [], []>} : vector<16x16xbf16>, vector<16x32xbf16>, vector<16x32xf32> -> vector<16x32xf32>
      %12 = arith.truncf %11 : vector<16x32xf32> to vector<16x32xbf16>
      %cst_12 = arith.constant dense<0.000000e+00> : vector<32x32xf32>
      %13 = tpu.matmul %0, %12, %cst_12 {dimension_numbers = #tpu.dot_dimension_numbers<[1], [0], [0], [1], [0, 0, 1, 1], [], []>} : vector<32x16xbf16>, vector<16x32xbf16>, vector<32x32xf32> -> vector<32x32xf32>
      %14 = arith.index_cast %6 : i32 to index
      %c0_13 = arith.constant 0 : index
      %c0_14 = arith.constant 0 : index
      %15 = vector.load %arg3[%14, %c0_13, %c0_14] : memref<7x1x1xf32, #tpu.memory_space<vmem>>, vector<1x1x1xf32>
      %16 = vector.shape_cast %15 : vector<1x1x1xf32> to vector<1x1xf32>
      %17 = vector.broadcast %16 : vector<1x1xf32> to vector<32x32xf32>
      %18 = arith.addf %13, %17 : vector<32x32xf32>
      %19 = arith.index_cast %6 : i32 to index
      %c0_15 = arith.constant 0 : index
      %c0_16 = arith.constant 0 : index
      %20 = vector.load %arg2[%19, %c0_15, %c0_16] : memref<7x32x32xf32, #tpu.memory_space<vmem>>, vector<1x32x32xf32>
      %21 = vector.shape_cast %20 : vector<1x32x32xf32> to vector<32x32xf32>
      %22 = arith.addf %18, %21 : vector<32x32xf32>
      %23 = arith.truncf %22 : vector<32x32xf32> to vector<32x32xbf16>
      %cst_17 = arith.constant dense<0.000000e+00> : vector<32x256xf32>
      %24 = tpu.matmul %23, %3, %cst_17 {dimension_numbers = #tpu.dot_dimension_numbers<[1], [0], [0], [1], [0, 0, 1, 1], [], []>} : vector<32x32xbf16>, vector<32x256xbf16>, vector<32x256xf32> -> vector<32x256xf32>
      %25 = arith.truncf %24 : vector<32x256xf32> to vector<32x256xbf16>
      %cst_18 = arith.constant dense<0.000000e+00> : vector<256x256xf32>
      %26 = tpu.matmul %2, %25, %cst_18 {dimension_numbers = #tpu.dot_dimension_numbers<[1], [0], [0], [1], [0, 0, 1, 1], [], []>} : vector<256x32xbf16>, vector<32x256xbf16>, vector<256x256xf32> -> vector<256x256xf32>
      %27 = arith.index_cast %6 : i32 to index
      %c0_19 = arith.constant 0 : index
      %c0_20 = arith.constant 0 : index
      %28 = vector.load %arg4[%27, %c0_19, %c0_20] : memref<7x1x1xf32, #tpu.memory_space<vmem>>, vector<1x1x1xf32>
      %29 = vector.shape_cast %28 : vector<1x1x1xf32> to vector<1x1xf32>
      %30 = vector.broadcast %29 : vector<1x1xf32> to vector<256x256xf32>
      %31 = arith.addf %26, %30 : vector<256x256xf32>
      %32 = arith.index_cast %6 : i32 to index
      %c0_21 = arith.constant 0 : index
      %c0_22 = arith.constant 0 : index
      %33 = vector.load %arg9[%32, %c0_21, %c0_22] : memref<7x256x256xf32, #tpu.memory_space<vmem>>, vector<1x256x256xf32>
      %34 = vector.shape_cast %33 : vector<1x256x256xf32> to vector<256x256xf32>
      %35 = vector.shape_cast %31 : vector<256x256xf32> to vector<1x256x256xf32>
      tpu.vector_store %arg9[%32, %c0_21, %c0_22], %35 {strides = array<i32>} : memref<7x256x256xf32, #tpu.memory_space<vmem>>, vector<1x256x256xf32>,
    }
    %c7_i32_7 = arith.constant 7 : i32
    return
  }
  func.func @transform_0(%arg0: i32) -> (i32, i32, i32) {
    %c0_i32 = arith.constant 0 : i32
    %c0_i32_0 = arith.constant 0 : i32
    %c0_i32_1 = arith.constant 0 : i32
    return %arg0, %c0_i32, %c0_i32_0 : i32, i32, i32
  }
  func.func @transform_1(%arg0: i32) -> (i32, i32, i32) {
    %c0_i32 = arith.constant 0 : i32
    %c0_i32_0 = arith.constant 0 : i32
    %c0_i32_1 = arith.constant 0 : i32
    return %arg0, %c0_i32, %c0_i32_0 : i32, i32, i32
  }
  func.func @transform_2(%arg0: i32) -> (i32, i32, i32) {
    %c0_i32 = arith.constant 0 : i32
    %c0_i32_0 = arith.constant 0 : i32
    %c0_i32_1 = arith.constant 0 : i32
    return %arg0, %c0_i32, %c0_i32_0 : i32, i32, i32
  }
  func.func @transform_3(%arg0: i32) -> (i32, i32, i32) {
    %c0_i32 = arith.constant 0 : i32
    %c0_i32_0 = arith.constant 0 : i32
    %c0_i32_1 = arith.constant 0 : i32
    return %arg0, %c0_i32, %c0_i32_0 : i32, i32, i32
  }
  func.func @transform_4(%arg0: i32) -> (i32, i32) {
    %c0_i32 = arith.constant 0 : i32
    %c0_i32_0 = arith.constant 0 : i32
    %c0_i32_1 = arith.constant 0 : i32
    return %c0_i32, %c0_i32_0 : i32, i32
  }
  func.func @transform_5(%arg0: i32) -> (i32, i32) {
    %c0_i32 = arith.constant 0 : i32
    %c0_i32_0 = arith.constant 0 : i32
    %c0_i32_1 = arith.constant 0 : i32
    return %c0_i32, %c0_i32_0 : i32, i32
  }
  func.func @transform_6(%arg0: i32) -> (i32, i32) {
    %c0_i32 = arith.constant 0 : i32
    %c0_i32_0 = arith.constant 0 : i32
    %c0_i32_1 = arith.constant 0 : i32
    return %c0_i32, %c0_i32_0 : i32, i32
  }
  func.func @transform_7(%arg0: i32) -> (i32, i32) {
    %c0_i32 = arith.constant 0 : i32
    %c0_i32_0 = arith.constant 0 : i32
    %c0_i32_1 = arith.constant 0 : i32
    return %c0_i32, %c0_i32_0 : i32, i32
  }
  func.func @transform_8(%arg0: i32) -> (i32, i32, i32) {
    %c0_i32 = arith.constant 0 : i32
    %c0_i32_0 = arith.constant 0 : i32
    %c0_i32_1 = arith.constant 0 : i32
    return %arg0, %c0_i32, %c0_i32_0 : i32, i32, i32
  }
}

</mosaic_0001>

<llo_original>
// kernel: tile.13
$region0: #{tile.13}
  #allocation2 [shape = 's32[1]{0}', space=sflag, size = 0x4, scoped, tag = 'scoped memory for tile.13']
  %s0 = inlined_call_operand.hbm [shape: f32[21], index: 0, kind: input, shape index: {}]
  %s1 = inlined_call_operand.vmem [shape: f32[2,21], index: 1, kind: output, shape index: {}]
  $region1: #{tile.13} parent=0
    #allocation0 [shape = 'u8[512]{0}', space=vmem, size = 0x400, scoped, tag = 'operand span for operand 0']
    #allocation1 [shape = 's32[1]{0}', space=sflag, size = 0x4, scoped, tag = 'scoped memory for tile.13']
    %2 = vsyncpa [#allocation1], 0
    // Predicated region
    $region2: #{tile.13} parent=1 // pred_check
      _
    $region3: #{tile.13} parent=1 // pred_check_branch
      %4 = sbr.rel (0) target = $region5
    $region4: #{tile.13} parent=1 // pred_region
      %s6 = ssub.s32 16, 16
      %7 = vsyncadd [#allocation1], %s6
      %s9 = sshll.u32 [#allocation0], 4
      %s10 = int_to_ptr.vmem [resolvable:$true] %s9
      %12 = dma.hbm_to_vmem [thread:$0]  %s0, 16, %s10, [#allocation1]
    $region5: #{tile.13} parent=1 // pred_fallthru
      _
    // Predicated region
    $region6: #{tile.13} parent=1 // pred_check
      _
    $region7: #{tile.13} parent=1 // pred_check_branch
      %14 = sbr.rel (0) target = $region9
    $region8: #{tile.13} parent=1 // pred_region
      %15 = dma.done [#allocation1], 16
    $region9: #{tile.13} parent=1 // pred_fallthru
      _
    %v16 = vld [vmem:[#allocation0] ss:$0 sm:$0xff]
    %17 = vst [vmem:[%s1] sm:$0x3] %v16
    %18 = vsyncpa [#allocation1], 1

// kernel: tile.1
$region0: #{tile.1}
  %s0 = inlined_call_operand.vmem [shape: f32[2,21], index: 0, kind: input, shape index: {}]
  %s1 = inlined_call_operand.vmem [shape: f32[42,1,1], index: 1, kind: output, shape index: {}]
  $region1: #{tile.1} parent=0
    #allocation0 [shape = 'u8[172032]{0}', space=vmem, size = 0x2a000, scoped, tag = 'scoped mem for output reshape']
    #allocation1 [shape = 'u8[4096]{0}', space=vmem, size = 0x1000, scoped, tag = 'scoped mem for input reshape']
    %s3 = sshllo.u32 0, 2
    %v4 = vld [vmem:[%s0] sm:%s3]
    %5 = vst [vmem:[#allocation1] sm:%s3] %v4
    %v6 = vld [vmem:[#allocation1] sm:$0x3]
    %vm7 = vcmask 7168
    %8 = vst.msk [vmem:[#allocation0] ss:$168 sm:$0x3] %vm7, %v6
    %v9 = vld [vmem:[#allocation1] sm:$0x3]
    %10 = vrot.lane.b32.xlu0 %v9, 127
    %v11 = vpop.permute.xlu0 %10
    %vm12 = vcmask 7168
    %s13 = scalar_lea.vmem [#allocation0], 8
    %14 = vst.msk [vmem:[%s13] ss:$168 sm:$0x3] %vm12, %v11
    %v15 = vld [vmem:[#allocation1] sm:$0x3]
    %16 = vrot.lane.b32.xlu0 %v15, 126
    %v17 = vpop.permute.xlu0 %16
    %vm18 = vcmask 7168
    %s19 = scalar_lea.vmem [#allocation0], 16
    %20 = vst.msk [vmem:[%s19] ss:$168 sm:$0x3] %vm18, %v17
    %s21 = scalar_lea.vmem [#allocation1], 1
    %s22 = smov 3
    %v23 = vld [vmem:[%s21] ss:$-1 sm:%s22]
    %24 = vrot.lane.b32.xlu0 %v23, 125
    %v25 = vpop.permute.xlu0 %24
    %vm26 = vcmask 7168
    %s27 = scalar_lea.vmem [#allocation0], 192
    %28 = vst.msk [vmem:[%s27] ss:$-168 sm:$0x3] %vm26, %v25
    %v29 = vld [vmem:[#allocation1] sm:$0x3]
    %30 = vrot.lane.b32.xlu0 %v29, 124
    %v31 = vpop.permute.xlu0 %30
    %vm32 = vcmask 7168
    %s33 = scalar_lea.vmem [#allocation0], 32
    %34 = vst.msk [vmem:[%s33] ss:$168 sm:$0x3] %vm32, %v31
    %v35 = vld [vmem:[#allocation1] sm:$0x3]
    %36 = vrot.lane.b32.xlu0 %v35, 123
    %v37 = vpop.permute.xlu0 %36
    %vm38 = vcmask 7168
    %s39 = scalar_lea.vmem [#allocation0], 40
    %40 = vst.msk [vmem:[%s39] ss:$168 sm:$0x3] %vm38, %v37
    %v41 = vld [vmem:[#allocation1] sm:$0x3]
    %42 = vrot.lane.b32.xlu0 %v41, 122
    %v43 = vpop.permute.xlu0 %42
    %vm44 = vcmask 7168
    %s45 = scalar_lea.vmem [#allocation0], 48
    %46 = vst.msk [vmem:[%s45] ss:$168 sm:$0x3] %vm44, %v43
    %s47 = scalar_lea.vmem [#allocation1], 1
    %s48 = smov 3
    %v49 = vld [vmem:[%s47] ss:$-1 sm:%s48]
    %50 = vrot.lane.b32.xlu0 %v49, 121
    %v51 = vpop.permute.xlu0 %50
    %vm52 = vcmask 7168
    %s53 = scalar_lea.vmem [#allocation0], 224
    %54 = vst.msk [vmem:[%s53] ss:$-168 sm:$0x3] %vm52, %v51
    %v55 = vld [vmem:[#allocation1] sm:$0x3]
    %56 = vrot.lane.b32.xlu0 %v55, 120
    %v57 = vpop.permute.xlu0 %56
    %vm58 = vcmask 7168
    %s59 = scalar_lea.vmem [#allocation0], 64
    %60 = vst.msk [vmem:[%s59] ss:$168 sm:$0x3] %vm58, %v57
    %v61 = vld [vmem:[#allocation1] sm:$0x3]
    %62 = vrot.lane.b32.xlu0 %v61, 119
    %v63 = vpop.permute.xlu0 %62
    %vm64 = vcmask 7168
    %s65 = scalar_lea.vmem [#allocation0], 72
    %66 = vst.msk [vmem:[%s65] ss:$168 sm:$0x3] %vm64, %v63
    %v67 = vld [vmem:[#allocation1] sm:$0x3]
    %68 = vrot.lane.b32.xlu0 %v67, 118
    %v69 = vpop.permute.xlu0 %68
    %vm70 = vcmask 7168
    %s71 = scalar_lea.vmem [#allocation0], 80
    %72 = vst.msk [vmem:[%s71] ss:$168 sm:$0x3] %vm70, %v69
    %s73 = scalar_lea.vmem [#allocation1], 1
    %s74 = smov 3
    %v75 = vld [vmem:[%s73] ss:$-1 sm:%s74]
    %76 = vrot.lane.b32.xlu0 %v75, 117
    %v77 = vpop.permute.xlu0 %76
    %vm78 = vcmask 7168
    %s79 = scalar_lea.vmem [#allocation0], 256
    %80 = vst.msk [vmem:[%s79] ss:$-168 sm:$0x3] %vm78, %v77
    %v81 = vld [vmem:[#allocation1] sm:$0x3]
    %82 = vrot.lane.b32.xlu0 %v81, 116
    %v83 = vpop.permute.xlu0 %82
    %vm84 = vcmask 7168
    %s85 = scalar_lea.vmem [#allocation0], 96
    %86 = vst.msk [vmem:[%s85] ss:$168 sm:$0x3] %vm84, %v83
    %v87 = vld [vmem:[#allocation1] sm:$0x3]
    %88 = vrot.lane.b32.xlu0 %v87, 115
    %v89 = vpop.permute.xlu0 %88
    %vm90 = vcmask 7168
    %s91 = scalar_lea.vmem [#allocation0], 104
    %92 = vst.msk [vmem:[%s91] ss:$168 sm:$0x3] %vm90, %v89
    %v93 = vld [vmem:[#allocation1] sm:$0x3]
    %94 = vrot.lane.b32.xlu0 %v93, 114
    %v95 = vpop.permute.xlu0 %94
    %vm96 = vcmask 7168
    %s97 = scalar_lea.vmem [#allocation0], 112
    %98 = vst.msk [vmem:[%s97] ss:$168 sm:$0x3] %vm96, %v95
    %s99 = scalar_lea.vmem [#allocation1], 1
    %s100 = smov 3
    %v101 = vld [vmem:[%s99] ss:$-1 sm:%s100]
    %102 = vrot.lane.b32.xlu0 %v101, 113
    %v103 = vpop.permute.xlu0 %102
    %vm104 = vcmask 7168
    %s105 = scalar_lea.vmem [#allocation0], 288
    %106 = vst.msk [vmem:[%s105] ss:$-168 sm:$0x3] %vm104, %v103
    %v107 = vld [vmem:[#allocation1] sm:$0x3]
    %108 = vrot.lane.b32.xlu0 %v107, 112
    %v109 = vpop.permute.xlu0 %108
    %vm110 = vcmask 7168
    %s111 = scalar_lea.vmem [#allocation0], 128
    %112 = vst.msk [vmem:[%s111] ss:$168 sm:$0x3] %vm110, %v109
    %v113 = vld [vmem:[#allocation1] sm:$0x3]
    %114 = vrot.lane.b32.xlu0 %v113, 111
    %v115 = vpop.permute.xlu0 %114
    %vm116 = vcmask 7168
    %s117 = scalar_lea.vmem [#allocation0], 136
    %118 = vst.msk [vmem:[%s117] ss:$168 sm:$0x3] %vm116, %v115
    %v119 = vld [vmem:[#allocation1] sm:$0x3]
    %120 = vrot.lane.b32.xlu0 %v119, 110
    %v121 = vpop.permute.xlu0 %120
    %vm122 = vcmask 7168
    %s123 = scalar_lea.vmem [#allocation0], 144
    %124 = vst.msk [vmem:[%s123] ss:$168 sm:$0x3] %vm122, %v121
    %s125 = scalar_lea.vmem [#allocation1], 1
    %s126 = smov 3
    %v127 = vld [vmem:[%s125] ss:$-1 sm:%s126]
    %128 = vrot.lane.b32.xlu0 %v127, 109
    %v129 = vpop.permute.xlu0 %128
    %vm130 = vcmask 7168
    %s131 = scalar_lea.vmem [#allocation0], 320
    %132 = vst.msk [vmem:[%s131] ss:$-168 sm:$0x3] %vm130, %v129
    %v133 = vld [vmem:[#allocation1] sm:$0x3]
    %134 = vrot.lane.b32.xlu0 %v133, 108
    %v135 = vpop.permute.xlu0 %134
    %vm136 = vcmask 7168
    %s137 = scalar_lea.vmem [#allocation0], 160
    %138 = vst.msk [vmem:[%s137] ss:$168 sm:$0x3] %vm136, %v135
    %s140 = sshllo.u32 0, 1
    %v142 = vld [vmem:[#allocation0] sm:%s140]
    %s143 = sshllo.u32 0, 1
    %144 = vst [vmem:[%s1] sm:%s143] %v142
    %s145 = scalar_lea.vmem [#allocation0], 8
    %v146 = vld [vmem:[%s145] sm:%s140]
    %s147 = sshllo.u32 0, 1
    %s148 = scalar_lea.vmem %s1, 1
    %149 = vst [vmem:[%s148] sm:%s147] %v146
    %s150 = scalar_lea.vmem [#allocation0], 16
    %v151 = vld [vmem:[%s150] sm:%s140]
    %s152 = sshllo.u32 0, 1
    %s153 = smul.addr 1, 2
    %s154 = scalar_lea.vmem %s1, %s153
    %155 = vst [vmem:[%s154] sm:%s152] %v151
    %s156 = scalar_lea.vmem [#allocation0], 24
    %v157 = vld [vmem:[%s156] sm:%s140]
    %s158 = sshllo.u32 0, 1
    %s159 = smul.addr 1, 3
    %s160 = scalar_lea.vmem %s1, %s159
    %161 = vst [vmem:[%s160] sm:%s158] %v157
    %s162 = scalar_lea.vmem [#allocation0], 32
    %v163 = vld [vmem:[%s162] sm:%s140]
    %s164 = sshllo.u32 0, 1
    %s165 = smul.addr 1, 4
    %s166 = scalar_lea.vmem %s1, %s165
    %167 = vst [vmem:[%s166] sm:%s164] %v163
    %s168 = scalar_lea.vmem [#allocation0], 40
    %v169 = vld [vmem:[%s168] sm:%s140]
    %s170 = sshllo.u32 0, 1
    %s171 = smul.addr 1, 5
    %s172 = scalar_lea.vmem %s1, %s171
    %173 = vst [vmem:[%s172] sm:%s170] %v169
    %s174 = scalar_lea.vmem [#allocation0], 48
    %v175 = vld [vmem:[%s174] sm:%s140]
    %s176 = sshllo.u32 0, 1
    %s177 = smul.addr 1, 6
    %s178 = scalar_lea.vmem %s1, %s177
    %179 = vst [vmem:[%s178] sm:%s176] %v175
    %s180 = scalar_lea.vmem [#allocation0], 56
    %v181 = vld [vmem:[%s180] sm:%s140]
    %s182 = sshllo.u32 0, 1
    %s183 = smul.addr 1, 7
    %s184 = scalar_lea.vmem %s1, %s183
    %185 = vst [vmem:[%s184] sm:%s182] %v181
    %s186 = scalar_lea.vmem [#allocation0], 64
    %v187 = vld [vmem:[%s186] sm:%s140]
    %s188 = sshllo.u32 0, 1
    %s189 = smul.addr 1, 8
    %s190 = scalar_lea.vmem %s1, %s189
    %191 = vst [vmem:[%s190] sm:%s188] %v187
    %s192 = scalar_lea.vmem [#allocation0], 72
    %v193 = vld [vmem:[%s192] sm:%s140]
    %s194 = sshllo.u32 0, 1
    %s195 = smul.addr 1, 9
    %s196 = scalar_lea.vmem %s1, %s195
    %197 = vst [vmem:[%s196] sm:%s194] %v193
    %s198 = scalar_lea.vmem [#allocation0], 80
    %v199 = vld [vmem:[%s198] sm:%s140]
    %s200 = sshllo.u32 0, 1
    %s201 = smul.addr 1, 10
    %s202 = scalar_lea.vmem %s1, %s201
    %203 = vst [vmem:[%s202] sm:%s200] %v199
    %s204 = scalar_lea.vmem [#allocation0], 88
    %v205 = vld [vmem:[%s204] sm:%s140]
    %s206 = sshllo.u32 0, 1
    %s207 = smul.addr 1, 11
    %s208 = scalar_lea.vmem %s1, %s207
    %209 = vst [vmem:[%s208] sm:%s206] %v205
    %s210 = scalar_lea.vmem [#allocation0], 96
    %v211 = vld [vmem:[%s210] sm:%s140]
    %s212 = sshllo.u32 0, 1
    %s213 = smul.addr 1, 12
    %s214 = scalar_lea.vmem %s1, %s213
    %215 = vst [vmem:[%s214] sm:%s212] %v211
    %s216 = scalar_lea.vmem [#allocation0], 104
    %v217 = vld [vmem:[%s216] sm:%s140]
    %s218 = sshllo.u32 0, 1
    %s219 = smul.addr 1, 13
    %s220 = scalar_lea.vmem %s1, %s219
    %221 = vst [vmem:[%s220] sm:%s218] %v217
    %s222 = scalar_lea.vmem [#allocation0], 112
    %v223 = vld [vmem:[%s222] sm:%s140]
    %s224 = sshllo.u32 0, 1
    %s225 = smul.addr 1, 14
    %s226 = scalar_lea.vmem %s1, %s225
    %227 = vst [vmem:[%s226] sm:%s224] %v223
    %s228 = scalar_lea.vmem [#allocation0], 120
    %v229 = vld [vmem:[%s228] sm:%s140]
    %s230 = sshllo.u32 0, 1
    %s231 = smul.addr 1, 15
    %s232 = scalar_lea.vmem %s1, %s231
    %233 = vst [vmem:[%s232] sm:%s230] %v229
    %s234 = scalar_lea.vmem [#allocation0], 128
    %v235 = vld [vmem:[%s234] sm:%s140]
    %s236 = sshllo.u32 0, 1
    %s237 = smul.addr 1, 16
    %s238 = scalar_lea.vmem %s1, %s237
    %239 = vst [vmem:[%s238] sm:%s236] %v235
    %s240 = scalar_lea.vmem [#allocation0], 136
    %v241 = vld [vmem:[%s240] sm:%s140]
    %s242 = sshllo.u32 0, 1
    %s243 = smul.addr 1, 17
    %s244 = scalar_lea.vmem %s1, %s243
    %245 = vst [vmem:[%s244] sm:%s242] %v241
    %s246 = scalar_lea.vmem [#allocation0], 144
    %v247 = vld [vmem:[%s246] sm:%s140]
    %s248 = sshllo.u32 0, 1
    %s249 = smul.addr 1, 18
    %s250 = scalar_lea.vmem %s1, %s249
    %251 = vst [vmem:[%s250] sm:%s248] %v247
    %s252 = scalar_lea.vmem [#allocation0], 152
    %v253 = vld [vmem:[%s252] sm:%s140]
    %s254 = sshllo.u32 0, 1
    %s255 = smul.addr 1, 19
    %s256 = scalar_lea.vmem %s1, %s255
    %257 = vst [vmem:[%s256] sm:%s254] %v253
    %s258 = scalar_lea.vmem [#allocation0], 160
    %v259 = vld [vmem:[%s258] sm:%s140]
    %s260 = sshllo.u32 0, 1
    %s261 = smul.addr 1, 20
    %s262 = scalar_lea.vmem %s1, %s261
    %263 = vst [vmem:[%s262] sm:%s260] %v259
    %s264 = scalar_lea.vmem [#allocation0], 168
    %v265 = vld [vmem:[%s264] sm:%s140]
    %s266 = sshllo.u32 0, 1
    %s267 = smul.addr 1, 21
    %s268 = scalar_lea.vmem %s1, %s267
    %269 = vst [vmem:[%s268] sm:%s266] %v265
    %s270 = scalar_lea.vmem [#allocation0], 176
    %v271 = vld [vmem:[%s270] sm:%s140]
    %s272 = sshllo.u32 0, 1
    %s273 = smul.addr 1, 22
    %s274 = scalar_lea.vmem %s1, %s273
    %275 = vst [vmem:[%s274] sm:%s272] %v271
    %s276 = scalar_lea.vmem [#allocation0], 184
    %v277 = vld [vmem:[%s276] sm:%s140]
    %s278 = sshllo.u32 0, 1
    %s279 = smul.addr 1, 23
    %s280 = scalar_lea.vmem %s1, %s279
    %281 = vst [vmem:[%s280] sm:%s278] %v277
    %s282 = scalar_lea.vmem [#allocation0], 192
    %v283 = vld [vmem:[%s282] sm:%s140]
    %s284 = sshllo.u32 0, 1
    %s285 = smul.addr 1, 24
    %s286 = scalar_lea.vmem %s1, %s285
    %287 = vst [vmem:[%s286] sm:%s284] %v283
    %s288 = scalar_lea.vmem [#allocation0], 200
    %v289 = vld [vmem:[%s288] sm:%s140]
    %s290 = sshllo.u32 0, 1
    %s291 = smul.addr 1, 25
    %s292 = scalar_lea.vmem %s1, %s291
    %293 = vst [vmem:[%s292] sm:%s290] %v289
    %s294 = scalar_lea.vmem [#allocation0], 208
    %v295 = vld [vmem:[%s294] sm:%s140]
    %s296 = sshllo.u32 0, 1
    %s297 = smul.addr 1, 26
    %s298 = scalar_lea.vmem %s1, %s297
    %299 = vst [vmem:[%s298] sm:%s296] %v295
    %s300 = scalar_lea.vmem [#allocation0], 216
    %v301 = vld [vmem:[%s300] sm:%s140]
    %s302 = sshllo.u32 0, 1
    %s303 = smul.addr 1, 27
    %s304 = scalar_lea.vmem %s1, %s303
    %305 = vst [vmem:[%s304] sm:%s302] %v301
    %s306 = scalar_lea.vmem [#allocation0], 224
    %v307 = vld [vmem:[%s306] sm:%s140]
    %s308 = sshllo.u32 0, 1
    %s309 = smul.addr 1, 28
    %s310 = scalar_lea.vmem %s1, %s309
    %311 = vst [vmem:[%s310] sm:%s308] %v307
    %s312 = scalar_lea.vmem [#allocation0], 232
    %v313 = vld [vmem:[%s312] sm:%s140]
    %s314 = sshllo.u32 0, 1
    %s315 = smul.addr 1, 29
    %s316 = scalar_lea.vmem %s1, %s315
    %317 = vst [vmem:[%s316] sm:%s314] %v313
    %s318 = scalar_lea.vmem [#allocation0], 240
    %v319 = vld [vmem:[%s318] sm:%s140]
    %s320 = sshllo.u32 0, 1
    %s321 = smul.addr 1, 30
    %s322 = scalar_lea.vmem %s1, %s321
    %323 = vst [vmem:[%s322] sm:%s320] %v319
    %s324 = scalar_lea.vmem [#allocation0], 248
    %v325 = vld [vmem:[%s324] sm:%s140]
    %s326 = sshllo.u32 0, 1
    %s327 = smul.addr 1, 31
    %s328 = scalar_lea.vmem %s1, %s327
    %329 = vst [vmem:[%s328] sm:%s326] %v325
    %s330 = scalar_lea.vmem [#allocation0], 256
    %v331 = vld [vmem:[%s330] sm:%s140]
    %s332 = sshllo.u32 0, 1
    %s333 = smul.addr 1, 32
    %s334 = scalar_lea.vmem %s1, %s333
    %335 = vst [vmem:[%s334] sm:%s332] %v331
    %s336 = scalar_lea.vmem [#allocation0], 264
    %v337 = vld [vmem:[%s336] sm:%s140]
    %s338 = sshllo.u32 0, 1
    %s339 = smul.addr 1, 33
    %s340 = scalar_lea.vmem %s1, %s339
    %341 = vst [vmem:[%s340] sm:%s338] %v337
    %s342 = scalar_lea.vmem [#allocation0], 272
    %v343 = vld [vmem:[%s342] sm:%s140]
    %s344 = sshllo.u32 0, 1
    %s345 = smul.addr 1, 34
    %s346 = scalar_lea.vmem %s1, %s345
    %347 = vst [vmem:[%s346] sm:%s344] %v343
    %s348 = scalar_lea.vmem [#allocation0], 280
    %v349 = vld [vmem:[%s348] sm:%s140]
    %s350 = sshllo.u32 0, 1
    %s351 = smul.addr 1, 35
    %s352 = scalar_lea.vmem %s1, %s351
    %353 = vst [vmem:[%s352] sm:%s350] %v349
    %s354 = scalar_lea.vmem [#allocation0], 288
    %v355 = vld [vmem:[%s354] sm:%s140]
    %s356 = sshllo.u32 0, 1
    %s357 = smul.addr 1, 36
    %s358 = scalar_lea.vmem %s1, %s357
    %359 = vst [vmem:[%s358] sm:%s356] %v355
    %s360 = scalar_lea.vmem [#allocation0], 296
    %v361 = vld [vmem:[%s360] sm:%s140]
    %s362 = sshllo.u32 0, 1
    %s363 = smul.addr 1, 37
    %s364 = scalar_lea.vmem %s1, %s363
    %365 = vst [vmem:[%s364] sm:%s362] %v361
    %s366 = scalar_lea.vmem [#allocation0], 304
    %v367 = vld [vmem:[%s366] sm:%s140]
    %s368 = sshllo.u32 0, 1
    %s369 = smul.addr 1, 38
    %s370 = scalar_lea.vmem %s1, %s369
    %371 = vst [vmem:[%s370] sm:%s368] %v367
    %s372 = scalar_lea.vmem [#allocation0], 312
    %v373 = vld [vmem:[%s372] sm:%s140]
    %s374 = sshllo.u32 0, 1
    %s375 = smul.addr 1, 39
    %s376 = scalar_lea.vmem %s1, %s375
    %377 = vst [vmem:[%s376] sm:%s374] %v373
    %s378 = scalar_lea.vmem [#allocation0], 320
    %v379 = vld [vmem:[%s378] sm:%s140]
    %s380 = sshllo.u32 0, 1
    %s381 = smul.addr 1, 40
    %s382 = scalar_lea.vmem %s1, %s381
    %383 = vst [vmem:[%s382] sm:%s380] %v379
    %s384 = scalar_lea.vmem [#allocation0], 328
    %v385 = vld [vmem:[%s384] sm:%s140]
    %s386 = sshllo.u32 0, 1
    %s387 = smul.addr 1, 41
    %s388 = scalar_lea.vmem %s1, %s387
    %389 = vst [vmem:[%s388] sm:%s386] %v385

// kernel: resnet50_size_forward.3
$region0: #{resnet50_size_forward.3}
  #allocation0 [shape = 'u32[]', space=smem, size = 0x4, offset = 0x4, fixed_abs, tag = 'smem constant byte address 0x4 - core index']
  #allocation1 [shape = 'u32[144,128]{1,0:T(1,128)}', space=vmem, size = 0x12000, scoped, tag = 'internal scratch']
  %s0 = inlined_call_operand.vmem [shape: f32[2,64,256], index: 0, kind: input, shape index: {}]
  %s1 = inlined_call_operand.vmem [shape: f32[2,32,256], index: 1, kind: input, shape index: {}]
  %s2 = inlined_call_operand.vmem [shape: f32[2,16,1024], index: 2, kind: input, shape index: {}]
  %s3 = inlined_call_operand.hbm [shape: bf16[21,64], index: 3, kind: input, shape index: {}]
  %s4 = inlined_call_operand.vmem [shape: f32[21,1], index: 4, kind: input, shape index: {}]
  %s5 = inlined_call_operand.hbm [shape: bf16[21,32], index: 5, kind: input, shape index: {}]
  %s6 = inlined_call_operand.vmem [shape: f32[21,1], index: 6, kind: input, shape index: {}]
  %s7 = inlined_call_operand.vmem [shape: bf16[21,16], index: 7, kind: input, shape index: {}]
  %s8 = inlined_call_operand.vmem [shape: f32[21,1], index: 8, kind: input, shape index: {}]
  %s9 = inlined_call_operand.vmem [shape: f32[2,21,256], index: 9, kind: output, shape index: {0}]
  %s10 = inlined_call_operand.vmem [shape: f32[2,21,256], index: 10, kind: output, shape index: {1}]
  %s11 = inlined_call_operand.vmem [shape: f32[2,21,1024], index: 11, kind: output, shape index: {2}]
  %12 = xla_tuple %s9, %s10, %s11
  %s13 = sld [smem:[#allocation0]]
  $region70: #{resnet50_size_forward.3} parent=0
    _
  %s15 = ssub.s32 1, %s13
  %s16 = scalar_select 0, %s15, %s13
  $region1: #{resnet50_size_forward.3} parent=0
    #allocation2 [shape = 'u8[6144]{0}', space=vmem, size = 0x1800, scoped, tag = 'input window, operand 3, single buffered']
    #allocation3 [shape = 's32[1]{0}', space=sflag, size = 0x4, scoped, tag = 'scoped memory for resnet50_size_forward.3']
    #allocation4 [shape = 'u8[6144]{0}', space=vmem, size = 0x1800, scoped, tag = 'input window, operand 5, single buffered']
    #allocation5 [shape = 's32[1]{0}', space=sflag, size = 0x4, scoped, tag = 'scoped memory for resnet50_size_forward.3']
    %17 = vsyncpa [#allocation3], 0
    %18 = vsyncpa [#allocation5], 0
    // Predicated region
    $region2: #{resnet50_size_forward.3} parent=1 // pred_check
      _
    $region3: #{resnet50_size_forward.3} parent=1 // pred_check_branch
      %20 = sbr.rel (0) target = $region5
    $region4: #{resnet50_size_forward.3} parent=1 // pred_region
      _
    $region5: #{resnet50_size_forward.3} parent=1 // pred_fallthru
      _
    // Predicated region
    $region6: #{resnet50_size_forward.3} parent=1 // pred_check
      _
    $region7: #{resnet50_size_forward.3} parent=1 // pred_check_branch
      %22 = sbr.rel (0) target = $region9
    $region8: #{resnet50_size_forward.3} parent=1 // pred_region
      _
    $region9: #{resnet50_size_forward.3} parent=1 // pred_fallthru
      _
    // Predicated region
    $region10: #{resnet50_size_forward.3} parent=1 // pred_check
      _
    $region11: #{resnet50_size_forward.3} parent=1 // pred_check_branch
      %24 = sbr.rel (0) target = $region13
    $region12: #{resnet50_size_forward.3} parent=1 // pred_region
      _
    $region13: #{resnet50_size_forward.3} parent=1 // pred_fallthru
      _
    // Predicated region
    $region14: #{resnet50_size_forward.3} parent=1 // pred_check
      _
    $region15: #{resnet50_size_forward.3} parent=1 // pred_check_branch
      %26 = sbr.rel (0) target = $region17
    $region16: #{resnet50_size_forward.3} parent=1 // pred_region
      %s28 = ssub.s32 192, 192
      %29 = vsyncadd [#allocation3], %s28
      %s30 = sshll.u32 [#allocation2], 4
      %s31 = int_to_ptr.vmem [resolvable:$true] %s30
      %36 = dma.hbm_to_vmem [thread:$0]  %s3, 192, %s31, [#allocation3], 64, 64, 4
    $region17: #{resnet50_size_forward.3} parent=1 // pred_fallthru
      _
    // Predicated region
    $region18: #{resnet50_size_forward.3} parent=1 // pred_check
      _
    $region19: #{resnet50_size_forward.3} parent=1 // pred_check_branch
      %38 = sbr.rel (0) target = $region21
    $region20: #{resnet50_size_forward.3} parent=1 // pred_region
      _
    $region21: #{resnet50_size_forward.3} parent=1 // pred_fallthru
      _
    // Predicated region
    $region22: #{resnet50_size_forward.3} parent=1 // pred_check
      _
    $region23: #{resnet50_size_forward.3} parent=1 // pred_check_branch
      %40 = sbr.rel (0) target = $region25
    $region24: #{resnet50_size_forward.3} parent=1 // pred_region
      %s42 = ssub.s32 192, 192
      %43 = vsyncadd [#allocation5], %s42
      %s44 = sshll.u32 [#allocation4], 4
      %s45 = int_to_ptr.vmem [resolvable:$true] %s44
      %50 = dma.hbm_to_vmem [thread:$0]  %s5, 192, %s45, [#allocation5], 64, 64, 4
    $region25: #{resnet50_size_forward.3} parent=1 // pred_fallthru
      _
    // Predicated region
    $region26: #{resnet50_size_forward.3} parent=1 // pred_check
      _
    $region27: #{resnet50_size_forward.3} parent=1 // pred_check_branch
      %52 = sbr.rel (0) target = $region29
    $region28: #{resnet50_size_forward.3} parent=1 // pred_region
      _
    $region29: #{resnet50_size_forward.3} parent=1 // pred_fallthru
      _
    // Predicated region
    $region30: #{resnet50_size_forward.3} parent=1 // pred_check
      _
    $region31: #{resnet50_size_forward.3} parent=1 // pred_check_branch
      %54 = sbr.rel (0) target = $region33
    $region32: #{resnet50_size_forward.3} parent=1 // pred_region
      _
    $region33: #{resnet50_size_forward.3} parent=1 // pred_fallthru
      _
    // Predicated region
    $region34: #{resnet50_size_forward.3} parent=1 // pred_check
      _
    $region35: #{resnet50_size_forward.3} parent=1 // pred_check_branch
      %56 = sbr.rel (0) target = $region37
    $region36: #{resnet50_size_forward.3} parent=1 // pred_region
      _
    $region37: #{resnet50_size_forward.3} parent=1 // pred_fallthru
      _
    // Predicated region
    $region38: #{resnet50_size_forward.3} parent=1 // pred_check
      _
    $region39: #{resnet50_size_forward.3} parent=1 // pred_check_branch
      %58 = sbr.rel (0) target = $region41
    $region40: #{resnet50_size_forward.3} parent=1 // pred_region
      %59 = dma.done [#allocation3], 192
    $region41: #{resnet50_size_forward.3} parent=1 // pred_fallthru
      _
    // Predicated region
    $region42: #{resnet50_size_forward.3} parent=1 // pred_check
      _
    $region43: #{resnet50_size_forward.3} parent=1 // pred_check_branch
      %61 = sbr.rel (0) target = $region45
    $region44: #{resnet50_size_forward.3} parent=1 // pred_region
      %62 = dma.done [#allocation5], 192
    $region45: #{resnet50_size_forward.3} parent=1 // pred_fallthru
      _
    %v64 = vld [vmem:[#allocation2] sm:$0xf]
    %v65 = vld [vmem:[#allocation2 + $0x4] sm:$0xf]
    %v66 = vld [vmem:[#allocation2 + $0x8] sm:$0x7]
    %v67 = vld [vmem:[#allocation4] sm:$0xf]
    %v68 = vld [vmem:[#allocation4 + $0x4] sm:$0xf]
    %v69 = vld [vmem:[#allocation4 + $0x8] sm:$0x7]
    %v70 = vld [vmem:[%s7] sm:$0xf]
    %v71 = vld [vmem:[%s7 + $0x4] sm:$0xf]
    %v72 = vld [vmem:[%s7 + $0x8] sm:$0x7]
    %v73 = vld [vmem:[%s4] sm:$0xff]
    %v74 = vld [vmem:[%s4 + $0x8] sm:$0xff]
    %v75 = vld [vmem:[%s4 + $0x10] sm:$0x1f]
    %v76 = vld [vmem:[%s6] sm:$0xff]
    %v77 = vld [vmem:[%s6 + $0x8] sm:$0xff]
    %v78 = vld [vmem:[%s6 + $0x10] sm:$0x1f]
    %v79 = vld [vmem:[%s8] sm:$0xff]
    %v80 = vld [vmem:[%s8 + $0x8] sm:$0xff]
    %v81 = vld [vmem:[%s8 + $0x10] sm:$0x1f]
    %v82 = vld [vmem:[%s0] sm:$0xff]
    %v83 = vld [vmem:[%s0 + $0x8] sm:$0xff]
    %v84 = vld [vmem:[%s0 + $0x10] sm:$0xff]
    %v85 = vld [vmem:[%s0 + $0x18] sm:$0xff]
    %v86 = vld [vmem:[%s0 + $0x20] sm:$0xff]
    %v87 = vld [vmem:[%s0 + $0x28] sm:$0xff]
    %v88 = vld [vmem:[%s0 + $0x30] sm:$0xff]
    %v89 = vld [vmem:[%s0 + $0x38] sm:$0xff]
    %v90 = vld [vmem:[%s0 + $0x40] sm:$0xff]
    %v91 = vld [vmem:[%s0 + $0x48] sm:$0xff]
    %v92 = vld [vmem:[%s0 + $0x50] sm:$0xff]
    %v93 = vld [vmem:[%s0 + $0x58] sm:$0xff]
    %v94 = vld [vmem:[%s0 + $0x60] sm:$0xff]
    %v95 = vld [vmem:[%s0 + $0x68] sm:$0xff]
    %v96 = vld [vmem:[%s0 + $0x70] sm:$0xff]
    %v97 = vld [vmem:[%s0 + $0x78] sm:$0xff]
    %v98 = vpack.c.bf16 %v84, %v82
    %v99 = vpack.c.bf16 %v85, %v83
    %v100 = vpack.c.bf16 %v88, %v86
    %v101 = vpack.c.bf16 %v89, %v87
    %v102 = vpack.c.bf16 %v92, %v90
    %v103 = vpack.c.bf16 %v93, %v91
    %v104 = vpack.c.bf16 %v96, %v94
    %v105 = vpack.c.bf16 %v97, %v95
    %107 = vset.pattern.permute.xlu0 0
    %108 = vperm.xlu0 %107, %v73
    %v109 = vpop.permute.xlu0 %108
    %112 = vset.pattern.permute.xlu0 0
    %113 = vperm.xlu0 %112, %v74
    %v114 = vpop.permute.xlu0 %113
    %117 = vset.pattern.permute.xlu0 0
    %118 = vperm.xlu0 %117, %v75
    %v119 = vpop.permute.xlu0 %118
    %v124 = vunpack.c.l.b16 %v64
    %v125 = vunpack.c.l.b16 %v65
    %v126 = vunpack.c.l.b16 %v66
    %v127 = vpack.c.b16 %v125, %v124
    %v128 = vpack.c.b16 %v126, %v126
    %vm129 = vcmask 523264
    %v131 = vsel %vm129, %v127, 0
    %v134 = vsel %vm129, %v128, 0
    %136 = vmatprep.subr.bf16.mxu0 %v99
    %137 = vmatpush1.bf16.msra.mxu0 %v98
    %138 = vmatprep.subr.bf16.mxu0 %v101
    %139 = vmatpush1.bf16.msra.mxu0 %v100
    %140 = vmatprep.subr.bf16.mxu0 %v103
    %141 = vmatpush1.bf16.msra.mxu0 %v102
    %142 = vmatprep.subr.bf16.mxu0 %v105
    %143 = vmatpush1.bf16.msra.mxu0 %v104
    %144 = vmatprep.subr.bf16.mxu0 0
    %145 = vmatpush1.bf16.msra.mxu0 0
    %146 = vmatprep.subr.bf16.mxu0 0
    %147 = vmatpush1.bf16.msra.mxu0 0
    %148 = vmatprep.subr.bf16.mxu0 0
    %149 = vmatpush1.bf16.msra.mxu0 0
    %150 = vmatprep.subr.bf16.mxu0 0
    %151 = vmatpush1.bf16.msra.mxu0 0
    %152 = vmatprep.subr.bf16.mxu0 0
    %153 = vmatpush1.bf16.msra.mxu0 0
    %154 = vmatprep.subr.bf16.mxu0 0
    %155 = vmatpush1.bf16.msra.mxu0 0
    %156 = vmatprep.subr.bf16.mxu0 0
    %157 = vmatpush1.bf16.msra.mxu0 0
    %158 = vmatprep.subr.bf16.mxu0 0
    %159 = vmatpush1.bf16.msra.mxu0 0
    %160 = vmatprep.subr.bf16.mxu0 0
    %161 = vmatpush1.bf16.msra.mxu0 0
    %162 = vmatprep.subr.bf16.mxu0 0
    %163 = vmatpush1.bf16.msra.mxu0 0
    %164 = vmatprep.subr.bf16.mxu0 0
    %165 = vmatpush1.bf16.msra.mxu0 0
    %166 = vmatprep.subr.bf16.mxu0 0
    %167 = vmatpush1.bf16.msra.mxu0 0
    %168 = vmatprep.mubr.bf16.mxu0 0
    %169 = vmatmul.mubr.bf16.gmra.mrb[0].mxu0 %v131
    %v170 = vpop.f32.mrb[0].mxu0
    %v171 = vadd.f32 %v109, %v170
    %v172 = vpop.f32.mrb[0].mxu0
    %v173 = vadd.f32 %v109, %v172
    %v174 = vpop.f32.mrb[0].mxu0
    %v175 = vadd.f32 %v114, %v174
    %v176 = vpop.f32.mrb[0].mxu0
    %v177 = vadd.f32 %v114, %v176
    %178 = vmatprep.mubr.bf16.mxu0 0
    %179 = vmatmul.mubr.bf16.gmra.mrb[0].mxu0 %v134
    %v180 = vpop.f32.mrb[0].mxu0
    %v181 = vadd.f32 %v119, %v180
    %v182 = vpop.f32.mrb[0].mxu0
    %v183 = vadd.f32 %v119, %v182
    %v184 = vpop.f32.mrb[0].mxu0
    %v185 = vpop.f32.mrb[0].mxu0
    %186 = vdwg.mxu0
    %187 = vst [vmem:[%s9] sm:$0xff] %v171
    %188 = vst [vmem:[%s9 + $0x8] sm:$0xff] %v173
    %189 = vst [vmem:[%s9 + $0x10] sm:$0xff] %v175
    %190 = vst [vmem:[%s9 + $0x18] sm:$0xff] %v177
    %191 = vst [vmem:[%s9 + $0x20] sm:$0x1f] %v181
    %192 = vst [vmem:[%s9 + $0x28] sm:$0x1f] %v183
    %v193 = vld [vmem:[%s1] sm:$0xff]
    %v194 = vld [vmem:[%s1 + $0x8] sm:$0xff]
    %v195 = vld [vmem:[%s1 + $0x10] sm:$0xff]
    %v196 = vld [vmem:[%s1 + $0x18] sm:$0xff]
    %v197 = vld [vmem:[%s1 + $0x20] sm:$0xff]
    %v198 = vld [vmem:[%s1 + $0x28] sm:$0xff]
    %v199 = vld [vmem:[%s1 + $0x30] sm:$0xff]
    %v200 = vld [vmem:[%s1 + $0x38] sm:$0xff]
    %v201 = vpack.c.bf16 %v195, %v193
    %v202 = vpack.c.bf16 %v196, %v194
    %v203 = vpack.c.bf16 %v199, %v197
    %v204 = vpack.c.bf16 %v200, %v198
    %206 = vset.pattern.permute.xlu0 0
    %207 = vperm.xlu0 %206, %v76
    %v208 = vpop.permute.xlu0 %207
    %211 = vset.pattern.permute.xlu0 0
    %212 = vperm.xlu0 %211, %v77
    %v213 = vpop.permute.xlu0 %212
    %216 = vset.pattern.permute.xlu0 0
    %217 = vperm.xlu0 %216, %v78
    %v218 = vpop.permute.xlu0 %217
    %v223 = vunpack.c.l.b16 %v67
    %v224 = vunpack.c.l.b16 %v68
    %v225 = vunpack.c.l.b16 %v69
    %v226 = vpack.c.b16 %v224, %v223
    %v227 = vpack.c.b16 %v225, %v225
    %vm228 = vcmask 261120
    %v230 = vsel %vm228, %v226, 0
    %v233 = vsel %vm228, %v227, 0
    %235 = vmatprep.subr.bf16.mxu0 %v202
    %236 = vmatpush1.bf16.msra.mxu0 %v201
    %237 = vmatprep.subr.bf16.mxu0 %v204
    %238 = vmatpush1.bf16.msra.mxu0 %v203
    %239 = vmatprep.subr.bf16.mxu0 0
    %240 = vmatpush1.bf16.msra.mxu0 0
    %241 = vmatprep.subr.bf16.mxu0 0
    %242 = vmatpush1.bf16.msra.mxu0 0
    %243 = vmatprep.subr.bf16.mxu0 0
    %244 = vmatpush1.bf16.msra.mxu0 0
    %245 = vmatprep.subr.bf16.mxu0 0
    %246 = vmatpush1.bf16.msra.mxu0 0
    %247 = vmatprep.subr.bf16.mxu0 0
    %248 = vmatpush1.bf16.msra.mxu0 0
    %249 = vmatprep.subr.bf16.mxu0 0
    %250 = vmatpush1.bf16.msra.mxu0 0
    %251 = vmatprep.subr.bf16.mxu0 0
    %252 = vmatpush1.bf16.msra.mxu0 0
    %253 = vmatprep.subr.bf16.mxu0 0
    %254 = vmatpush1.bf16.msra.mxu0 0
    %255 = vmatprep.subr.bf16.mxu0 0
    %256 = vmatpush1.bf16.msra.mxu0 0
    %257 = vmatprep.subr.bf16.mxu0 0
    %258 = vmatpush1.bf16.msra.mxu0 0
    %259 = vmatprep.subr.bf16.mxu0 0
    %260 = vmatpush1.bf16.msra.mxu0 0
    %261 = vmatprep.subr.bf16.mxu0 0
    %262 = vmatpush1.bf16.msra.mxu0 0
    %263 = vmatprep.subr.bf16.mxu0 0
    %264 = vmatpush1.bf16.msra.mxu0 0
    %265 = vmatprep.subr.bf16.mxu0 0
    %266 = vmatpush1.bf16.msra.mxu0 0
    %267 = vmatprep.mubr.bf16.mxu0 0
    %268 = vmatmul.mubr.bf16.gmra.mrb[0].mxu0 %v230
    %v269 = vpop.f32.mrb[0].mxu0
    %v270 = vadd.f32 %v208, %v269
    %v271 = vpop.f32.mrb[0].mxu0
    %v272 = vadd.f32 %v208, %v271
    %v273 = vpop.f32.mrb[0].mxu0
    %v274 = vadd.f32 %v213, %v273
    %v275 = vpop.f32.mrb[0].mxu0
    %v276 = vadd.f32 %v213, %v275
    %277 = vmatprep.mubr.bf16.mxu0 0
    %278 = vmatmul.mubr.bf16.gmra.mrb[0].mxu0 %v233
    %v279 = vpop.f32.mrb[0].mxu0
    %v280 = vadd.f32 %v218, %v279
    %v281 = vpop.f32.mrb[0].mxu0
    %v282 = vadd.f32 %v218, %v281
    %v283 = vpop.f32.mrb[0].mxu0
    %v284 = vpop.f32.mrb[0].mxu0
    %285 = vdwg.mxu0
    %v286 = vadd.f32 %v270, %v171
    %v287 = vadd.f32 %v272, %v173
    %v288 = vadd.f32 %v274, %v175
    %v289 = vadd.f32 %v276, %v177
    %v290 = vadd.f32 %v280, %v181
    %v291 = vadd.f32 %v282, %v183
    %292 = vst [vmem:[%s10] sm:$0xff] %v286
    %293 = vst [vmem:[%s10 + $0x8] sm:$0xff] %v287
    %294 = vst [vmem:[%s10 + $0x10] sm:$0xff] %v288
    %295 = vst [vmem:[%s10 + $0x18] sm:$0xff] %v289
    %296 = vst [vmem:[%s10 + $0x20] sm:$0x1f] %v290
    %297 = vst [vmem:[%s10 + $0x28] sm:$0x1f] %v291
    %v298 = vld [vmem:[%s2] sm:$0xff]
    %v299 = vld [vmem:[%s2 + $0x8] sm:$0xff]
    %v300 = vld [vmem:[%s2 + $0x10] sm:$0xff]
    %v301 = vld [vmem:[%s2 + $0x18] sm:$0xff]
    %v302 = vld [vmem:[%s2 + $0x20] sm:$0xff]
    %v303 = vld [vmem:[%s2 + $0x28] sm:$0xff]
    %v304 = vld [vmem:[%s2 + $0x30] sm:$0xff]
    %v305 = vld [vmem:[%s2 + $0x38] sm:$0xff]
    %v306 = vld [vmem:[%s2 + $0x40] sm:$0xff]
    %v307 = vld [vmem:[%s2 + $0x48] sm:$0xff]
    %v308 = vld [vmem:[%s2 + $0x50] sm:$0xff]
    %v309 = vld [vmem:[%s2 + $0x58] sm:$0xff]
    %v310 = vld [vmem:[%s2 + $0x60] sm:$0xff]
    %v311 = vld [vmem:[%s2 + $0x68] sm:$0xff]
    %v312 = vld [vmem:[%s2 + $0x70] sm:$0xff]
    %v313 = vld [vmem:[%s2 + $0x78] sm:$0xff]
    %v314 = vpack.c.bf16 %v306, %v298
    %v315 = vpack.c.bf16 %v307, %v299
    %v316 = vpack.c.bf16 %v308, %v300
    %v317 = vpack.c.bf16 %v309, %v301
    %v318 = vpack.c.bf16 %v310, %v302
    %v319 = vpack.c.bf16 %v311, %v303
    %v320 = vpack.c.bf16 %v312, %v304
    %v321 = vpack.c.bf16 %v313, %v305
    %323 = vset.pattern.permute.xlu0 0
    %324 = vperm.xlu0 %323, %v79
    %v325 = vpop.permute.xlu0 %324
    %328 = vset.pattern.permute.xlu0 0
    %329 = vperm.xlu0 %328, %v80
    %v330 = vpop.permute.xlu0 %329
    %333 = vset.pattern.permute.xlu0 0
    %334 = vperm.xlu0 %333, %v81
    %v335 = vpop.permute.xlu0 %334
    %v340 = vunpack.c.l.b16 %v70
    %v341 = vunpack.c.l.b16 %v71
    %v342 = vunpack.c.l.b16 %v72
    %v343 = vpack.c.b16 %v341, %v340
    %v344 = vpack.c.b16 %v342, %v342
    %vm345 = vcmask 130048
    %v347 = vsel %vm345, %v343, 0
    %v350 = vsel %vm345, %v344, 0
    %352 = vmatprep.subr.bf16.mxu0 %v315
    %353 = vmatpush1.bf16.msra.mxu0 %v314
    %354 = vmatprep.subr.bf16.mxu0 0
    %355 = vmatpush1.bf16.msra.mxu0 0
    %356 = vmatprep.subr.bf16.mxu0 0
    %357 = vmatpush1.bf16.msra.mxu0 0
    %358 = vmatprep.subr.bf16.mxu0 0
    %359 = vmatpush1.bf16.msra.mxu0 0
    %360 = vmatprep.subr.bf16.mxu0 0
    %361 = vmatpush1.bf16.msra.mxu0 0
    %362 = vmatprep.subr.bf16.mxu0 0
    %363 = vmatpush1.bf16.msra.mxu0 0
    %364 = vmatprep.subr.bf16.mxu0 0
    %365 = vmatpush1.bf16.msra.mxu0 0
    %366 = vmatprep.subr.bf16.mxu0 0
    %367 = vmatpush1.bf16.msra.mxu0 0
    %368 = vmatprep.subr.bf16.mxu0 0
    %369 = vmatpush1.bf16.msra.mxu0 0
    %370 = vmatprep.subr.bf16.mxu0 0
    %371 = vmatpush1.bf16.msra.mxu0 0
    %372 = vmatprep.subr.bf16.mxu0 0
    %373 = vmatpush1.bf16.msra.mxu0 0
    %374 = vmatprep.subr.bf16.mxu0 0
    %375 = vmatpush1.bf16.msra.mxu0 0
    %376 = vmatprep.subr.bf16.mxu0 0
    %377 = vmatpush1.bf16.msra.mxu0 0
    %378 = vmatprep.subr.bf16.mxu0 0
    %379 = vmatpush1.bf16.msra.mxu0 0
    %380 = vmatprep.subr.bf16.mxu0 0
    %381 = vmatpush1.bf16.msra.mxu0 0
    %382 = vmatprep.subr.bf16.mxu0 0
    %383 = vmatpush1.bf16.msra.mxu0 0
    %384 = vmatprep.mubr.bf16.mxu0 0
    %385 = vmatmul.mubr.bf16.gmra.mrb[0].mxu0 %v347
    %v386 = vpop.f32.mrb[0].mxu0
    %v387 = vadd.f32 %v325, %v386
    %v388 = vpop.f32.mrb[0].mxu0
    %v389 = vadd.f32 %v325, %v388
    %v390 = vpop.f32.mrb[0].mxu0
    %v391 = vadd.f32 %v330, %v390
    %v392 = vpop.f32.mrb[0].mxu0
    %v393 = vadd.f32 %v330, %v392
    %394 = vmatprep.mubr.bf16.mxu0 0
    %395 = vmatmul.mubr.bf16.gmra.mrb[0].mxu0 %v350
    %v396 = vpop.f32.mrb[0].mxu0
    %v397 = vadd.f32 %v335, %v396
    %v398 = vpop.f32.mrb[0].mxu0
    %v399 = vadd.f32 %v335, %v398
    %v400 = vpop.f32.mrb[0].mxu0
    %v401 = vpop.f32.mrb[0].mxu0
    %402 = vdwg.mxu0
    %403 = vmatprep.subr.bf16.mxu0 %v317
    %404 = vmatpush1.bf16.msra.mxu0 %v316
    %405 = vmatprep.subr.bf16.mxu0 0
    %406 = vmatpush1.bf16.msra.mxu0 0
    %407 = vmatprep.subr.bf16.mxu0 0
    %408 = vmatpush1.bf16.msra.mxu0 0
    %409 = vmatprep.subr.bf16.mxu0 0
    %410 = vmatpush1.bf16.msra.mxu0 0
    %411 = vmatprep.subr.bf16.mxu0 0
    %412 = vmatpush1.bf16.msra.mxu0 0
    %413 = vmatprep.subr.bf16.mxu0 0
    %414 = vmatpush1.bf16.msra.mxu0 0
    %415 = vmatprep.subr.bf16.mxu0 0
    %416 = vmatpush1.bf16.msra.mxu0 0
    %417 = vmatprep.subr.bf16.mxu0 0
    %418 = vmatpush1.bf16.msra.mxu0 0
    %419 = vmatprep.subr.bf16.mxu0 0
    %420 = vmatpush1.bf16.msra.mxu0 0
    %421 = vmatprep.subr.bf16.mxu0 0
    %422 = vmatpush1.bf16.msra.mxu0 0
    %423 = vmatprep.subr.bf16.mxu0 0
    %424 = vmatpush1.bf16.msra.mxu0 0
    %425 = vmatprep.subr.bf16.mxu0 0
    %426 = vmatpush1.bf16.msra.mxu0 0
    %427 = vmatprep.subr.bf16.mxu0 0
    %428 = vmatpush1.bf16.msra.mxu0 0
    %429 = vmatprep.subr.bf16.mxu0 0
    %430 = vmatpush1.bf16.msra.mxu0 0
    %431 = vmatprep.subr.bf16.mxu0 0
    %432 = vmatpush1.bf16.msra.mxu0 0
    %433 = vmatprep.subr.bf16.mxu0 0
    %434 = vmatpush1.bf16.msra.mxu0 0
    %435 = vmatprep.mubr.bf16.mxu0 0
    %436 = vmatmul.mubr.bf16.gmra.mrb[0].mxu0 %v347
    %v437 = vpop.f32.mrb[0].mxu0
    %v438 = vadd.f32 %v325, %v437
    %v439 = vpop.f32.mrb[0].mxu0
    %v440 = vadd.f32 %v325, %v439
    %v441 = vpop.f32.mrb[0].mxu0
    %v442 = vadd.f32 %v330, %v441
    %v443 = vpop.f32.mrb[0].mxu0
    %v444 = vadd.f32 %v330, %v443
    %445 = vmatprep.mubr.bf16.mxu0 0
    %446 = vmatmul.mubr.bf16.gmra.mrb[0].mxu0 %v350
    %v447 = vpop.f32.mrb[0].mxu0
    %v448 = vadd.f32 %v335, %v447
    %v449 = vpop.f32.mrb[0].mxu0
    %v450 = vadd.f32 %v335, %v449
    %v451 = vpop.f32.mrb[0].mxu0
    %v452 = vpop.f32.mrb[0].mxu0
    %453 = vdwg.mxu0
    %454 = vmatprep.subr.bf16.mxu0 %v319
    %455 = vmatpush1.bf16.msra.mxu0 %v318
    %456 = vmatprep.subr.bf16.mxu0 0
    %457 = vmatpush1.bf16.msra.mxu0 0
    %458 = vmatprep.subr.bf16.mxu0 0
    %459 = vmatpush1.bf16.msra.mxu0 0
    %460 = vmatprep.subr.bf16.mxu0 0
    %461 = vmatpush1.bf16.msra.mxu0 0
    %462 = vmatprep.subr.bf16.mxu0 0
    %463 = vmatpush1.bf16.msra.mxu0 0
    %464 = vmatprep.subr.bf16.mxu0 0
    %465 = vmatpush1.bf16.msra.mxu0 0
    %466 = vmatprep.subr.bf16.mxu0 0
    %467 = vmatpush1.bf16.msra.mxu0 0
    %468 = vmatprep.subr.bf16.mxu0 0
    %469 = vmatpush1.bf16.msra.mxu0 0
    %470 = vmatprep.subr.bf16.mxu0 0
    %471 = vmatpush1.bf16.msra.mxu0 0
    %472 = vmatprep.subr.bf16.mxu0 0
    %473 = vmatpush1.bf16.msra.mxu0 0
    %474 = vmatprep.subr.bf16.mxu0 0
    %475 = vmatpush1.bf16.msra.mxu0 0
    %476 = vmatprep.subr.bf16.mxu0 0
    %477 = vmatpush1.bf16.msra.mxu0 0
    %478 = vmatprep.subr.bf16.mxu0 0
    %479 = vmatpush1.bf16.msra.mxu0 0
    %480 = vmatprep.subr.bf16.mxu0 0
    %481 = vmatpush1.bf16.msra.mxu0 0
    %482 = vmatprep.subr.bf16.mxu0 0
    %483 = vmatpush1.bf16.msra.mxu0 0
    %484 = vmatprep.subr.bf16.mxu0 0
    %485 = vmatpush1.bf16.msra.mxu0 0
    %486 = vmatprep.mubr.bf16.mxu0 0
    %487 = vmatmul.mubr.bf16.gmra.mrb[0].mxu0 %v347
    %v488 = vpop.f32.mrb[0].mxu0
    %v489 = vadd.f32 %v325, %v488
    %v490 = vpop.f32.mrb[0].mxu0
    %v491 = vadd.f32 %v325, %v490
    %v492 = vpop.f32.mrb[0].mxu0
    %v493 = vadd.f32 %v330, %v492
    %v494 = vpop.f32.mrb[0].mxu0
    %v495 = vadd.f32 %v330, %v494
    %496 = vmatprep.mubr.bf16.mxu0 0
    %497 = vmatmul.mubr.bf16.gmra.mrb[0].mxu0 %v350
    %v498 = vpop.f32.mrb[0].mxu0
    %v499 = vadd.f32 %v335, %v498
    %v500 = vpop.f32.mrb[0].mxu0
    %v501 = vadd.f32 %v335, %v500
    %v502 = vpop.f32.mrb[0].mxu0
    %v503 = vpop.f32.mrb[0].mxu0
    %504 = vdwg.mxu0
    %505 = vmatprep.subr.bf16.mxu0 %v321
    %506 = vmatpush1.bf16.msra.mxu0 %v320
    %507 = vmatprep.subr.bf16.mxu0 0
    %508 = vmatpush1.bf16.msra.mxu0 0
    %509 = vmatprep.subr.bf16.mxu0 0
    %510 = vmatpush1.bf16.msra.mxu0 0
    %511 = vmatprep.subr.bf16.mxu0 0
    %512 = vmatpush1.bf16.msra.mxu0 0
    %513 = vmatprep.subr.bf16.mxu0 0
    %514 = vmatpush1.bf16.msra.mxu0 0
    %515 = vmatprep.subr.bf16.mxu0 0
    %516 = vmatpush1.bf16.msra.mxu0 0
    %517 = vmatprep.subr.bf16.mxu0 0
    %518 = vmatpush1.bf16.msra.mxu0 0
    %519 = vmatprep.subr.bf16.mxu0 0
    %520 = vmatpush1.bf16.msra.mxu0 0
    %521 = vmatprep.subr.bf16.mxu0 0
    %522 = vmatpush1.bf16.msra.mxu0 0
    %523 = vmatprep.subr.bf16.mxu0 0
    %524 = vmatpush1.bf16.msra.mxu0 0
    %525 = vmatprep.subr.bf16.mxu0 0
    %526 = vmatpush1.bf16.msra.mxu0 0
    %527 = vmatprep.subr.bf16.mxu0 0
    %528 = vmatpush1.bf16.msra.mxu0 0
    %529 = vmatprep.subr.bf16.mxu0 0
    %530 = vmatpush1.bf16.msra.mxu0 0
    %531 = vmatprep.subr.bf16.mxu0 0
    %532 = vmatpush1.bf16.msra.mxu0 0
    %533 = vmatprep.subr.bf16.mxu0 0
    %534 = vmatpush1.bf16.msra.mxu0 0
    %535 = vmatprep.subr.bf16.mxu0 0
    %536 = vmatpush1.bf16.msra.mxu0 0
    %537 = vmatprep.mubr.bf16.mxu0 0
    %538 = vmatmul.mubr.bf16.gmra.mrb[0].mxu0 %v347
    %v539 = vpop.f32.mrb[0].mxu0
    %v540 = vadd.f32 %v325, %v539
    %v541 = vpop.f32.mrb[0].mxu0
    %v542 = vadd.f32 %v325, %v541
    %v543 = vpop.f32.mrb[0].mxu0
    %v544 = vadd.f32 %v330, %v543
    %v545 = vpop.f32.mrb[0].mxu0
    %v546 = vadd.f32 %v330, %v545
    %547 = vmatprep.mubr.bf16.mxu0 0
    %548 = vmatmul.mubr.bf16.gmra.mrb[0].mxu0 %v350
    %v549 = vpop.f32.mrb[0].mxu0
    %v550 = vadd.f32 %v335, %v549
    %v551 = vpop.f32.mrb[0].mxu0
    %v552 = vadd.f32 %v335, %v551
    %v553 = vpop.f32.mrb[0].mxu0
    %v554 = vpop.f32.mrb[0].mxu0
    %555 = vdwg.mxu0
    %556 = vst [vmem:[%s11] sm:$0xff] %v387
    %557 = vst [vmem:[%s11 + $0x8] sm:$0xff] %v389
    %558 = vst [vmem:[%s11 + $0x10] sm:$0xff] %v438
    %559 = vst [vmem:[%s11 + $0x18] sm:$0xff] %v440
    %560 = vst [vmem:[%s11 + $0x20] sm:$0xff] %v489
    %561 = vst [vmem:[%s11 + $0x28] sm:$0xff] %v491
    %562 = vst [vmem:[%s11 + $0x30] sm:$0xff] %v540
    %563 = vst [vmem:[%s11 + $0x38] sm:$0xff] %v542
    %564 = vst [vmem:[%s11 + $0x40] sm:$0xff] %v391
    %565 = vst [vmem:[%s11 + $0x48] sm:$0xff] %v393
    %566 = vst [vmem:[%s11 + $0x50] sm:$0xff] %v442
    %567 = vst [vmem:[%s11 + $0x58] sm:$0xff] %v444
    %568 = vst [vmem:[%s11 + $0x60] sm:$0xff] %v493
    %569 = vst [vmem:[%s11 + $0x68] sm:$0xff] %v495
    %570 = vst [vmem:[%s11 + $0x70] sm:$0xff] %v544
    %571 = vst [vmem:[%s11 + $0x78] sm:$0xff] %v546
    %572 = vst [vmem:[%s11 + $0x80] sm:$0x1f] %v397
    %573 = vst [vmem:[%s11 + $0x88] sm:$0x1f] %v399
    %574 = vst [vmem:[%s11 + $0x90] sm:$0x1f] %v448
    %575 = vst [vmem:[%s11 + $0x98] sm:$0x1f] %v450
    %576 = vst [vmem:[%s11 + $0xa0] sm:$0x1f] %v499
    %577 = vst [vmem:[%s11 + $0xa8] sm:$0x1f] %v501
    %578 = vst [vmem:[%s11 + $0xb0] sm:$0x1f] %v550
    %579 = vst [vmem:[%s11 + $0xb8] sm:$0x1f] %v552
    %s580 = scalar_lea.vmem %s0, 128
    %v581 = vld [vmem:[%s580] sm:$0xff]
    %v582 = vld [vmem:[%s580 + $0x8] sm:$0xff]
    %v583 = vld [vmem:[%s580 + $0x10] sm:$0xff]
    %v584 = vld [vmem:[%s580 + $0x18] sm:$0xff]
    %v585 = vld [vmem:[%s580 + $0x20] sm:$0xff]
    %v586 = vld [vmem:[%s580 + $0x28] sm:$0xff]
    %v587 = vld [vmem:[%s580 + $0x30] sm:$0xff]
    %v588 = vld [vmem:[%s580 + $0x38] sm:$0xff]
    %v589 = vld [vmem:[%s580 + $0x40] sm:$0xff]
    %v590 = vld [vmem:[%s580 + $0x48] sm:$0xff]
    %v591 = vld [vmem:[%s580 + $0x50] sm:$0xff]
    %v592 = vld [vmem:[%s580 + $0x58] sm:$0xff]
    %v593 = vld [vmem:[%s580 + $0x60] sm:$0xff]
    %v594 = vld [vmem:[%s580 + $0x68] sm:$0xff]
    %v595 = vld [vmem:[%s580 + $0x70] sm:$0xff]
    %v596 = vld [vmem:[%s580 + $0x78] sm:$0xff]
    %v597 = vpack.c.bf16 %v583, %v581
    %v598 = vpack.c.bf16 %v584, %v582
    %v599 = vpack.c.bf16 %v587, %v585
    %v600 = vpack.c.bf16 %v588, %v586
    %v601 = vpack.c.bf16 %v591, %v589
    %v602 = vpack.c.bf16 %v592, %v590
    %v603 = vpack.c.bf16 %v595, %v593
    %v604 = vpack.c.bf16 %v596, %v594
    %605 = vmatprep.subr.bf16.mxu0 %v598
    %606 = vmatpush1.bf16.msra.mxu0 %v597
    %607 = vmatprep.subr.bf16.mxu0 %v600
    %608 = vmatpush1.bf16.msra.mxu0 %v599
    %609 = vmatprep.subr.bf16.mxu0 %v602
    %610 = vmatpush1.bf16.msra.mxu0 %v601
    %611 = vmatprep.subr.bf16.mxu0 %v604
    %612 = vmatpush1.bf16.msra.mxu0 %v603
    %613 = vmatprep.subr.bf16.mxu0 0
    %614 = vmatpush1.bf16.msra.mxu0 0
    %615 = vmatprep.subr.bf16.mxu0 0
    %616 = vmatpush1.bf16.msra.mxu0 0
    %617 = vmatprep.subr.bf16.mxu0 0
    %618 = vmatpush1.bf16.msra.mxu0 0
    %619 = vmatprep.subr.bf16.mxu0 0
    %620 = vmatpush1.bf16.msra.mxu0 0
    %621 = vmatprep.subr.bf16.mxu0 0
    %622 = vmatpush1.bf16.msra.mxu0 0
    %623 = vmatprep.subr.bf16.mxu0 0
    %624 = vmatpush1.bf16.msra.mxu0 0
    %625 = vmatprep.subr.bf16.mxu0 0
    %626 = vmatpush1.bf16.msra.mxu0 0
    %627 = vmatprep.subr.bf16.mxu0 0
    %628 = vmatpush1.bf16.msra.mxu0 0
    %629 = vmatprep.subr.bf16.mxu0 0
    %630 = vmatpush1.bf16.msra.mxu0 0
    %631 = vmatprep.subr.bf16.mxu0 0
    %632 = vmatpush1.bf16.msra.mxu0 0
    %633 = vmatprep.subr.bf16.mxu0 0
    %634 = vmatpush1.bf16.msra.mxu0 0
    %635 = vmatprep.subr.bf16.mxu0 0
    %636 = vmatpush1.bf16.msra.mxu0 0
    %637 = vmatprep.mubr.bf16.mxu0 0
    %638 = vmatmul.mubr.bf16.gmra.mrb[0].mxu0 %v131
    %v639 = vpop.f32.mrb[0].mxu0
    %v640 = vadd.f32 %v109, %v639
    %v641 = vpop.f32.mrb[0].mxu0
    %v642 = vadd.f32 %v109, %v641
    %v643 = vpop.f32.mrb[0].mxu0
    %v644 = vadd.f32 %v114, %v643
    %v645 = vpop.f32.mrb[0].mxu0
    %v646 = vadd.f32 %v114, %v645
    %647 = vmatprep.mubr.bf16.mxu0 0
    %648 = vmatmul.mubr.bf16.gmra.mrb[0].mxu0 %v134
    %v649 = vpop.f32.mrb[0].mxu0
    %v650 = vadd.f32 %v119, %v649
    %v651 = vpop.f32.mrb[0].mxu0
    %v652 = vadd.f32 %v119, %v651
    %v653 = vpop.f32.mrb[0].mxu0
    %v654 = vpop.f32.mrb[0].mxu0
    %655 = vdwg.mxu0
    %s656 = scalar_lea.vmem %s9, 48
    %657 = vst [vmem:[%s656] sm:$0xff] %v640
    %658 = vst [vmem:[%s656 + $0x8] sm:$0xff] %v642
    %659 = vst [vmem:[%s656 + $0x10] sm:$0xff] %v644
    %660 = vst [vmem:[%s656 + $0x18] sm:$0xff] %v646
    %661 = vst [vmem:[%s656 + $0x20] sm:$0x1f] %v650
    %662 = vst [vmem:[%s656 + $0x28] sm:$0x1f] %v652
    %s663 = scalar_lea.vmem %s1, 64
    %v664 = vld [vmem:[%s663] sm:$0xff]
    %v665 = vld [vmem:[%s663 + $0x8] sm:$0xff]
    %v666 = vld [vmem:[%s663 + $0x10] sm:$0xff]
    %v667 = vld [vmem:[%s663 + $0x18] sm:$0xff]
    %v668 = vld [vmem:[%s663 + $0x20] sm:$0xff]
    %v669 = vld [vmem:[%s663 + $0x28] sm:$0xff]
    %v670 = vld [vmem:[%s663 + $0x30] sm:$0xff]
    %v671 = vld [vmem:[%s663 + $0x38] sm:$0xff]
    %v672 = vpack.c.bf16 %v666, %v664
    %v673 = vpack.c.bf16 %v667, %v665
    %v674 = vpack.c.bf16 %v670, %v668
    %v675 = vpack.c.bf16 %v671, %v669
    %676 = vmatprep.subr.bf16.mxu0 %v673
    %677 = vmatpush1.bf16.msra.mxu0 %v672
    %678 = vmatprep.subr.bf16.mxu0 %v675
    %679 = vmatpush1.bf16.msra.mxu0 %v674
    %680 = vmatprep.subr.bf16.mxu0 0
    %681 = vmatpush1.bf16.msra.mxu0 0
    %682 = vmatprep.subr.bf16.mxu0 0
    %683 = vmatpush1.bf16.msra.mxu0 0
    %684 = vmatprep.subr.bf16.mxu0 0
    %685 = vmatpush1.bf16.msra.mxu0 0
    %686 = vmatprep.subr.bf16.mxu0 0
    %687 = vmatpush1.bf16.msra.mxu0 0
    %688 = vmatprep.subr.bf16.mxu0 0
    %689 = vmatpush1.bf16.msra.mxu0 0
    %690 = vmatprep.subr.bf16.mxu0 0
    %691 = vmatpush1.bf16.msra.mxu0 0
    %692 = vmatprep.subr.bf16.mxu0 0
    %693 = vmatpush1.bf16.msra.mxu0 0
    %694 = vmatprep.subr.bf16.mxu0 0
    %695 = vmatpush1.bf16.msra.mxu0 0
    %696 = vmatprep.subr.bf16.mxu0 0
    %697 = vmatpush1.bf16.msra.mxu0 0
    %698 = vmatprep.subr.bf16.mxu0 0
    %699 = vmatpush1.bf16.msra.mxu0 0
    %700 = vmatprep.subr.bf16.mxu0 0
    %701 = vmatpush1.bf16.msra.mxu0 0
    %702 = vmatprep.subr.bf16.mxu0 0
    %703 = vmatpush1.bf16.msra.mxu0 0
    %704 = vmatprep.subr.bf16.mxu0 0
    %705 = vmatpush1.bf16.msra.mxu0 0
    %706 = vmatprep.subr.bf16.mxu0 0
    %707 = vmatpush1.bf16.msra.mxu0 0
    %708 = vmatprep.mubr.bf16.mxu0 0
    %709 = vmatmul.mubr.bf16.gmra.mrb[0].mxu0 %v230
    %v710 = vpop.f32.mrb[0].mxu0
    %v711 = vadd.f32 %v208, %v710
    %v712 = vpop.f32.mrb[0].mxu0
    %v713 = vadd.f32 %v208, %v712
    %v714 = vpop.f32.mrb[0].mxu0
    %v715 = vadd.f32 %v213, %v714
    %v716 = vpop.f32.mrb[0].mxu0
    %v717 = vadd.f32 %v213, %v716
    %718 = vmatprep.mubr.bf16.mxu0 0
    %719 = vmatmul.mubr.bf16.gmra.mrb[0].mxu0 %v233
    %v720 = vpop.f32.mrb[0].mxu0
    %v721 = vadd.f32 %v218, %v720
    %v722 = vpop.f32.mrb[0].mxu0
    %v723 = vadd.f32 %v218, %v722
    %v724 = vpop.f32.mrb[0].mxu0
    %v725 = vpop.f32.mrb[0].mxu0
    %726 = vdwg.mxu0
    %v727 = vadd.f32 %v711, %v640
    %v728 = vadd.f32 %v713, %v642
    %v729 = vadd.f32 %v715, %v644
    %v730 = vadd.f32 %v717, %v646
    %v731 = vadd.f32 %v721, %v650
    %v732 = vadd.f32 %v723, %v652
    %s733 = scalar_lea.vmem %s10, 48
    %734 = vst [vmem:[%s733] sm:$0xff] %v727
    %735 = vst [vmem:[%s733 + $0x8] sm:$0xff] %v728
    %736 = vst [vmem:[%s733 + $0x10] sm:$0xff] %v729
    %737 = vst [vmem:[%s733 + $0x18] sm:$0xff] %v730
    %738 = vst [vmem:[%s733 + $0x20] sm:$0x1f] %v731
    %739 = vst [vmem:[%s733 + $0x28] sm:$0x1f] %v732
    %s740 = scalar_lea.vmem %s2, 128
    %v741 = vld [vmem:[%s740] sm:$0xff]
    %v742 = vld [vmem:[%s740 + $0x8] sm:$0xff]
    %v743 = vld [vmem:[%s740 + $0x10] sm:$0xff]
    %v744 = vld [vmem:[%s740 + $0x18] sm:$0xff]
    %v745 = vld [vmem:[%s740 + $0x20] sm:$0xff]
    %v746 = vld [vmem:[%s740 + $0x28] sm:$0xff]
    %v747 = vld [vmem:[%s740 + $0x30] sm:$0xff]
    %v748 = vld [vmem:[%s740 + $0x38] sm:$0xff]
    %v749 = vld [vmem:[%s740 + $0x40] sm:$0xff]
    %v750 = vld [vmem:[%s740 + $0x48] sm:$0xff]
    %v751 = vld [vmem:[%s740 + $0x50] sm:$0xff]
    %v752 = vld [vmem:[%s740 + $0x58] sm:$0xff]
    %v753 = vld [vmem:[%s740 + $0x60] sm:$0xff]
    %v754 = vld [vmem:[%s740 + $0x68] sm:$0xff]
    %v755 = vld [vmem:[%s740 + $0x70] sm:$0xff]
    %v756 = vld [vmem:[%s740 + $0x78] sm:$0xff]
    %v757 = vpack.c.bf16 %v749, %v741
    %v758 = vpack.c.bf16 %v750, %v742
    %v759 = vpack.c.bf16 %v751, %v743
    %v760 = vpack.c.bf16 %v752, %v744
    %v761 = vpack.c.bf16 %v753, %v745
    %v762 = vpack.c.bf16 %v754, %v746
    %v763 = vpack.c.bf16 %v755, %v747
    %v764 = vpack.c.bf16 %v756, %v748
    %765 = vmatprep.subr.bf16.mxu0 %v758
    %766 = vmatpush1.bf16.msra.mxu0 %v757
    %767 = vmatprep.subr.bf16.mxu0 0
    %768 = vmatpush1.bf16.msra.mxu0 0
    %769 = vmatprep.subr.bf16.mxu0 0
    %770 = vmatpush1.bf16.msra.mxu0 0
    %771 = vmatprep.subr.bf16.mxu0 0
    %772 = vmatpush1.bf16.msra.mxu0 0
    %773 = vmatprep.subr.bf16.mxu0 0
    %774 = vmatpush1.bf16.msra.mxu0 0
    %775 = vmatprep.subr.bf16.mxu0 0
    %776 = vmatpush1.bf16.msra.mxu0 0
    %777 = vmatprep.subr.bf16.mxu0 0
    %778 = vmatpush1.bf16.msra.mxu0 0
    %779 = vmatprep.subr.bf16.mxu0 0
    %780 = vmatpush1.bf16.msra.mxu0 0
    %781 = vmatprep.subr.bf16.mxu0 0
    %782 = vmatpush1.bf16.msra.mxu0 0
    %783 = vmatprep.subr.bf16.mxu0 0
    %784 = vmatpush1.bf16.msra.mxu0 0
    %785 = vmatprep.subr.bf16.mxu0 0
    %786 = vmatpush1.bf16.msra.mxu0 0
    %787 = vmatprep.subr.bf16.mxu0 0
    %788 = vmatpush1.bf16.msra.mxu0 0
    %789 = vmatprep.subr.bf16.mxu0 0
    %790 = vmatpush1.bf16.msra.mxu0 0
    %791 = vmatprep.subr.bf16.mxu0 0
    %792 = vmatpush1.bf16.msra.mxu0 0
    %793 = vmatprep.subr.bf16.mxu0 0
    %794 = vmatpush1.bf16.msra.mxu0 0
    %795 = vmatprep.subr.bf16.mxu0 0
    %796 = vmatpush1.bf16.msra.mxu0 0
    %797 = vmatprep.mubr.bf16.mxu0 0
    %798 = vmatmul.mubr.bf16.gmra.mrb[0].mxu0 %v347
    %v799 = vpop.f32.mrb[0].mxu0
    %v800 = vadd.f32 %v325, %v799
    %v801 = vpop.f32.mrb[0].mxu0
    %v802 = vadd.f32 %v325, %v801
    %v803 = vpop.f32.mrb[0].mxu0
    %v804 = vadd.f32 %v330, %v803
    %v805 = vpop.f32.mrb[0].mxu0
    %v806 = vadd.f32 %v330, %v805
    %807 = vmatprep.mubr.bf16.mxu0 0
    %808 = vmatmul.mubr.bf16.gmra.mrb[0].mxu0 %v350
    %v809 = vpop.f32.mrb[0].mxu0
    %v810 = vadd.f32 %v335, %v809
    %v811 = vpop.f32.mrb[0].mxu0
    %v812 = vadd.f32 %v335, %v811
    %v813 = vpop.f32.mrb[0].mxu0
    %v814 = vpop.f32.mrb[0].mxu0
    %815 = vdwg.mxu0
    %816 = vmatprep.subr.bf16.mxu0 %v760
    %817 = vmatpush1.bf16.msra.mxu0 %v759
    %818 = vmatprep.subr.bf16.mxu0 0
    %819 = vmatpush1.bf16.msra.mxu0 0
    %820 = vmatprep.subr.bf16.mxu0 0
    %821 = vmatpush1.bf16.msra.mxu0 0
    %822 = vmatprep.subr.bf16.mxu0 0
    %823 = vmatpush1.bf16.msra.mxu0 0
    %824 = vmatprep.subr.bf16.mxu0 0
    %825 = vmatpush1.bf16.msra.mxu0 0
    %826 = vmatprep.subr.bf16.mxu0 0
    %827 = vmatpush1.bf16.msra.mxu0 0
    %828 = vmatprep.subr.bf16.mxu0 0
    %829 = vmatpush1.bf16.msra.mxu0 0
    %830 = vmatprep.subr.bf16.mxu0 0
    %831 = vmatpush1.bf16.msra.mxu0 0
    %832 = vmatprep.subr.bf16.mxu0 0
    %833 = vmatpush1.bf16.msra.mxu0 0
    %834 = vmatprep.subr.bf16.mxu0 0
    %835 = vmatpush1.bf16.msra.mxu0 0
    %836 = vmatprep.subr.bf16.mxu0 0
    %837 = vmatpush1.bf16.msra.mxu0 0
    %838 = vmatprep.subr.bf16.mxu0 0
    %839 = vmatpush1.bf16.msra.mxu0 0
    %840 = vmatprep.subr.bf16.mxu0 0
    %841 = vmatpush1.bf16.msra.mxu0 0
    %842 = vmatprep.subr.bf16.mxu0 0
    %843 = vmatpush1.bf16.msra.mxu0 0
    %844 = vmatprep.subr.bf16.mxu0 0
    %845 = vmatpush1.bf16.msra.mxu0 0
    %846 = vmatprep.subr.bf16.mxu0 0
    %847 = vmatpush1.bf16.msra.mxu0 0
    %848 = vmatprep.mubr.bf16.mxu0 0
    %849 = vmatmul.mubr.bf16.gmra.mrb[0].mxu0 %v347
    %v850 = vpop.f32.mrb[0].mxu0
    %v851 = vadd.f32 %v325, %v850
    %v852 = vpop.f32.mrb[0].mxu0
    %v853 = vadd.f32 %v325, %v852
    %v854 = vpop.f32.mrb[0].mxu0
    %v855 = vadd.f32 %v330, %v854
    %v856 = vpop.f32.mrb[0].mxu0
    %v857 = vadd.f32 %v330, %v856
    %858 = vmatprep.mubr.bf16.mxu0 0
    %859 = vmatmul.mubr.bf16.gmra.mrb[0].mxu0 %v350
    %v860 = vpop.f32.mrb[0].mxu0
    %v861 = vadd.f32 %v335, %v860
    %v862 = vpop.f32.mrb[0].mxu0
    %v863 = vadd.f32 %v335, %v862
    %v864 = vpop.f32.mrb[0].mxu0
    %v865 = vpop.f32.mrb[0].mxu0
    %866 = vdwg.mxu0
    %867 = vmatprep.subr.bf16.mxu0 %v762
    %868 = vmatpush1.bf16.msra.mxu0 %v761
    %869 = vmatprep.subr.bf16.mxu0 0
    %870 = vmatpush1.bf16.msra.mxu0 0
    %871 = vmatprep.subr.bf16.mxu0 0
    %872 = vmatpush1.bf16.msra.mxu0 0
    %873 = vmatprep.subr.bf16.mxu0 0
    %874 = vmatpush1.bf16.msra.mxu0 0
    %875 = vmatprep.subr.bf16.mxu0 0
    %876 = vmatpush1.bf16.msra.mxu0 0
    %877 = vmatprep.subr.bf16.mxu0 0
    %878 = vmatpush1.bf16.msra.mxu0 0
    %879 = vmatprep.subr.bf16.mxu0 0
    %880 = vmatpush1.bf16.msra.mxu0 0
    %881 = vmatprep.subr.bf16.mxu0 0
    %882 = vmatpush1.bf16.msra.mxu0 0
    %883 = vmatprep.subr.bf16.mxu0 0
    %884 = vmatpush1.bf16.msra.mxu0 0
    %885 = vmatprep.subr.bf16.mxu0 0
    %886 = vmatpush1.bf16.msra.mxu0 0
    %887 = vmatprep.subr.bf16.mxu0 0
    %888 = vmatpush1.bf16.msra.mxu0 0
    %889 = vmatprep.subr.bf16.mxu0 0
    %890 = vmatpush1.bf16.msra.mxu0 0
    %891 = vmatprep.subr.bf16.mxu0 0
    %892 = vmatpush1.bf16.msra.mxu0 0
    %893 = vmatprep.subr.bf16.mxu0 0
    %894 = vmatpush1.bf16.msra.mxu0 0
    %895 = vmatprep.subr.bf16.mxu0 0
    %896 = vmatpush1.bf16.msra.mxu0 0
    %897 = vmatprep.subr.bf16.mxu0 0
    %898 = vmatpush1.bf16.msra.mxu0 0
    %899 = vmatprep.mubr.bf16.mxu0 0
    %900 = vmatmul.mubr.bf16.gmra.mrb[0].mxu0 %v347
    %v901 = vpop.f32.mrb[0].mxu0
    %v902 = vadd.f32 %v325, %v901
    %v903 = vpop.f32.mrb[0].mxu0
    %v904 = vadd.f32 %v325, %v903
    %v905 = vpop.f32.mrb[0].mxu0
    %v906 = vadd.f32 %v330, %v905
    %v907 = vpop.f32.mrb[0].mxu0
    %v908 = vadd.f32 %v330, %v907
    %909 = vmatprep.mubr.bf16.mxu0 0
    %910 = vmatmul.mubr.bf16.gmra.mrb[0].mxu0 %v350
    %v911 = vpop.f32.mrb[0].mxu0
    %v912 = vadd.f32 %v335, %v911
    %v913 = vpop.f32.mrb[0].mxu0
    %v914 = vadd.f32 %v335, %v913
    %v915 = vpop.f32.mrb[0].mxu0
    %v916 = vpop.f32.mrb[0].mxu0
    %917 = vdwg.mxu0
    %918 = vmatprep.subr.bf16.mxu0 %v764
    %919 = vmatpush1.bf16.msra.mxu0 %v763
    %920 = vmatprep.subr.bf16.mxu0 0
    %921 = vmatpush1.bf16.msra.mxu0 0
    %922 = vmatprep.subr.bf16.mxu0 0
    %923 = vmatpush1.bf16.msra.mxu0 0
    %924 = vmatprep.subr.bf16.mxu0 0
    %925 = vmatpush1.bf16.msra.mxu0 0
    %926 = vmatprep.subr.bf16.mxu0 0
    %927 = vmatpush1.bf16.msra.mxu0 0
    %928 = vmatprep.subr.bf16.mxu0 0
    %929 = vmatpush1.bf16.msra.mxu0 0
    %930 = vmatprep.subr.bf16.mxu0 0
    %931 = vmatpush1.bf16.msra.mxu0 0
    %932 = vmatprep.subr.bf16.mxu0 0
    %933 = vmatpush1.bf16.msra.mxu0 0
    %934 = vmatprep.subr.bf16.mxu0 0
    %935 = vmatpush1.bf16.msra.mxu0 0
    %936 = vmatprep.subr.bf16.mxu0 0
    %937 = vmatpush1.bf16.msra.mxu0 0
    %938 = vmatprep.subr.bf16.mxu0 0
    %939 = vmatpush1.bf16.msra.mxu0 0
    %940 = vmatprep.subr.bf16.mxu0 0
    %941 = vmatpush1.bf16.msra.mxu0 0
    %942 = vmatprep.subr.bf16.mxu0 0
    %943 = vmatpush1.bf16.msra.mxu0 0
    %944 = vmatprep.subr.bf16.mxu0 0
    %945 = vmatpush1.bf16.msra.mxu0 0
    %946 = vmatprep.subr.bf16.mxu0 0
    %947 = vmatpush1.bf16.msra.mxu0 0
    %948 = vmatprep.subr.bf16.mxu0 0
    %949 = vmatpush1.bf16.msra.mxu0 0
    %950 = vmatprep.mubr.bf16.mxu0 0
    %951 = vmatmul.mubr.bf16.gmra.mrb[0].mxu0 %v347
    %v952 = vpop.f32.mrb[0].mxu0
    %v953 = vadd.f32 %v325, %v952
    %v954 = vpop.f32.mrb[0].mxu0
    %v955 = vadd.f32 %v325, %v954
    %v956 = vpop.f32.mrb[0].mxu0
    %v957 = vadd.f32 %v330, %v956
    %v958 = vpop.f32.mrb[0].mxu0
    %v959 = vadd.f32 %v330, %v958
    %960 = vmatprep.mubr.bf16.mxu0 0
    %961 = vmatmul.mubr.bf16.gmra.mrb[0].mxu0 %v350
    %v962 = vpop.f32.mrb[0].mxu0
    %v963 = vadd.f32 %v335, %v962
    %v964 = vpop.f32.mrb[0].mxu0
    %v965 = vadd.f32 %v335, %v964
    %v966 = vpop.f32.mrb[0].mxu0
    %v967 = vpop.f32.mrb[0].mxu0
    %968 = vdwg.mxu0
    %s969 = scalar_lea.vmem %s11, 192
    %970 = vst [vmem:[%s969] sm:$0xff] %v800
    %971 = vst [vmem:[%s969 + $0x8] sm:$0xff] %v802
    %972 = vst [vmem:[%s969 + $0x10] sm:$0xff] %v851
    %973 = vst [vmem:[%s969 + $0x18] sm:$0xff] %v853
    %974 = vst [vmem:[%s969 + $0x20] sm:$0xff] %v902
    %975 = vst [vmem:[%s969 + $0x28] sm:$0xff] %v904
    %976 = vst [vmem:[%s969 + $0x30] sm:$0xff] %v953
    %977 = vst [vmem:[%s969 + $0x38] sm:$0xff] %v955
    %978 = vst [vmem:[%s969 + $0x40] sm:$0xff] %v804
    %979 = vst [vmem:[%s969 + $0x48] sm:$0xff] %v806
    %980 = vst [vmem:[%s969 + $0x50] sm:$0xff] %v855
    %981 = vst [vmem:[%s969 + $0x58] sm:$0xff] %v857
    %982 = vst [vmem:[%s969 + $0x60] sm:$0xff] %v906
    %983 = vst [vmem:[%s969 + $0x68] sm:$0xff] %v908
    %984 = vst [vmem:[%s969 + $0x70] sm:$0xff] %v957
    %985 = vst [vmem:[%s969 + $0x78] sm:$0xff] %v959
    %986 = vst [vmem:[%s969 + $0x80] sm:$0x1f] %v810
    %987 = vst [vmem:[%s969 + $0x88] sm:$0x1f] %v812
    %988 = vst [vmem:[%s969 + $0x90] sm:$0x1f] %v861
    %989 = vst [vmem:[%s969 + $0x98] sm:$0x1f] %v863
    %990 = vst [vmem:[%s969 + $0xa0] sm:$0x1f] %v912
    %991 = vst [vmem:[%s969 + $0xa8] sm:$0x1f] %v914
    %992 = vst [vmem:[%s969 + $0xb0] sm:$0x1f] %v963
    %993 = vst [vmem:[%s969 + $0xb8] sm:$0x1f] %v965
    // Predicated region
    $region46: #{resnet50_size_forward.3} parent=1 // pred_check
      _
    $region47: #{resnet50_size_forward.3} parent=1 // pred_check_branch
      %995 = sbr.rel (0) target = $region49
    $region48: #{resnet50_size_forward.3} parent=1 // pred_region
      _
    $region49: #{resnet50_size_forward.3} parent=1 // pred_fallthru
      _
    // Predicated region
    $region50: #{resnet50_size_forward.3} parent=1 // pred_check
      _
    $region51: #{resnet50_size_forward.3} parent=1 // pred_check_branch
      %997 = sbr.rel (0) target = $region53
    $region52: #{resnet50_size_forward.3} parent=1 // pred_region
      _
    $region53: #{resnet50_size_forward.3} parent=1 // pred_fallthru
      _
    // Predicated region
    $region54: #{resnet50_size_forward.3} parent=1 // pred_check
      _
    $region55: #{resnet50_size_forward.3} parent=1 // pred_check_branch
      %999 = sbr.rel (0) target = $region57
    $region56: #{resnet50_size_forward.3} parent=1 // pred_region
      _
    $region57: #{resnet50_size_forward.3} parent=1 // pred_fallthru
      _
    // Predicated region
    $region58: #{resnet50_size_forward.3} parent=1 // pred_check
      _
    $region59: #{resnet50_size_forward.3} parent=1 // pred_check_branch
      %1001 = sbr.rel (0) target = $region61
    $region60: #{resnet50_size_forward.3} parent=1 // pred_region
      _
    $region61: #{resnet50_size_forward.3} parent=1 // pred_fallthru
      _
    // Predicated region
    $region62: #{resnet50_size_forward.3} parent=1 // pred_check
      _
    $region63: #{resnet50_size_forward.3} parent=1 // pred_check_branch
      %1003 = sbr.rel (0) target = $region65
    $region64: #{resnet50_size_forward.3} parent=1 // pred_region
      _
    $region65: #{resnet50_size_forward.3} parent=1 // pred_fallthru
      _
    // Predicated region
    $region66: #{resnet50_size_forward.3} parent=1 // pred_check
      _
    $region67: #{resnet50_size_forward.3} parent=1 // pred_check_branch
      %1005 = sbr.rel (0) target = $region69
    $region68: #{resnet50_size_forward.3} parent=1 // pred_region
      _
    $region69: #{resnet50_size_forward.3} parent=1 // pred_fallthru
      _
    %1006 = vsyncpa [#allocation3], 1
    %1007 = vsyncpa [#allocation5], 1

// kernel: resnet50_size_forward.4
$region0: #{resnet50_size_forward.4}
  #allocation0 [shape = 'u32[]', space=smem, size = 0x4, offset = 0x4, fixed_abs, tag = 'smem constant byte address 0x4 - core index']
  #allocation1 [shape = 'u32[144,128]{1,0:T(1,128)}', space=vmem, size = 0x12000, scoped, tag = 'internal scratch']
  %s0 = inlined_call_operand.vmem [shape: f32[42,16,16], index: 0, kind: input, shape index: {}]
  %s1 = inlined_call_operand.vmem [shape: f32[42,32,32], index: 1, kind: input, shape index: {}]
  %s2 = inlined_call_operand.vmem [shape: f32[42,1,1], index: 2, kind: input, shape index: {}]
  %s3 = inlined_call_operand.vmem [shape: f32[42,1,1], index: 3, kind: input, shape index: {}]
  %s4 = inlined_call_operand.vmem [shape: bf16[32,16], index: 4, kind: input, shape index: {}]
  %s5 = inlined_call_operand.vmem [shape: bf16[16,32], index: 5, kind: input, shape index: {}]
  %s6 = inlined_call_operand.vmem [shape: bf16[256,32], index: 6, kind: input, shape index: {}]
  %s7 = inlined_call_operand.vmem [shape: bf16[32,256], index: 7, kind: input, shape index: {}]
  %s8 = inlined_call_operand.hbm [shape: f32[42,256,256], index: 8, kind: output, shape index: {}]
  %s9 = sld [smem:[#allocation0]]
  $region72: #{resnet50_size_forward.4} parent=0
    _
  %s11 = ssub.s32 1, %s9
  %s12 = scalar_select 0, %s11, %s9
  $region1: #{resnet50_size_forward.4} parent=0
    #allocation2 [shape = 'u8[3670016]{0}', space=vmem, size = 0x380000, scoped, tag = 'output window, operand 0']
    #allocation3 [shape = 's32[2]{0}', space=sflag, size = 0x8, scoped, tag = 'scoped memory for resnet50_size_forward.4']
    %13 = vsyncpa [#allocation3], 0
    %s14 = scalar_lea.sflag [#allocation3], 1
    %15 = vsyncpa %s14, 0
    loop: start=0, step=1, limit=8
    $region2: #{resnet50_size_forward.4} parent=1 // loop_pre_header
      _
    $region3: #{resnet50_size_forward.4} parent=1 // loop_header
      %s17 = sphi 0, %s21
      %p18 = scmp.ge.s32.totalorder %s17, 8
      %s27 = sphi 0, %s29
      %s30 = sphi 0, %s27
      %s31 = sphi 0, %s30
      %s47 = sphi 0, %s31
      %s53 = sphi 0, %s55
      %s56 = sphi 0, %s53
      %s57 = sphi 0, %s56
      %s73 = sphi 0, %s57
      %s79 = sphi 0, %s81
      %s82 = sphi 0, %s79
      %s83 = sphi 0, %s82
      %s99 = sphi 0, %s83
      %s105 = sphi 0, %s107
      %s108 = sphi 0, %s105
      %s109 = sphi 0, %s108
      %s125 = sphi 0, %s109
      %s129 = sphi 0, %s129
      %s131 = sphi 0, %s129
      %s132 = sphi 0, %s131
      %s146 = sphi 0, %s132
      %s150 = sphi 0, %s150
      %s152 = sphi 0, %s150
      %s153 = sphi 0, %s152
      %s167 = sphi 0, %s153
      %s171 = sphi 0, %s171
      %s173 = sphi 0, %s171
      %s174 = sphi 0, %s173
      %s188 = sphi 0, %s174
      %s192 = sphi 0, %s192
      %s194 = sphi 0, %s192
      %s195 = sphi 0, %s194
      %s209 = sphi 0, %s195
      %s215 = sphi 0, %s217
      %s218 = sphi 0, %s215
      %s219 = sphi 0, %s218
      %s235 = sphi 0, %s219
    $region4: #{resnet50_size_forward.4} parent=1 // loop_header_branch
      %20 = sbr.rel (%p18) target = $region8
    $region5: #{resnet50_size_forward.4} parent=1 // loop_body
      %s22 = ssub.s32 %s17, 1
      %s23 = ssub.s32 %s17, 2
      %s24 = sadd.s32 %s17, 1
      %s25 = ssub.s32 %s17, %s24
      %p26 = scmp.eq.s32.totalorder %s25, 0
      %s28 = sadd.s32 %s27, 1
      %s29 = scalar_select %p26, %s27, %s28
      %p32 = pneg %p26
      %p33 = scmp.eq.s32.totalorder %s17, 5
      %p34 = por %p32, %p33
      %p35 = scmp.ne.s32.totalorder %s27, %s30
      %p36 = scmp.eq.s32.totalorder %s17, 0
      %p37 = por %p35, %p36
      %p38 = scmp.ne.s32.totalorder %s27, %s30
      %p39 = scmp.eq.s32.totalorder %s22, 5
      %p40 = por %p38, %p39
      %p41 = scmp.ne.s32.totalorder %s30, %s31
      %p42 = scmp.eq.s32.totalorder %s22, 0
      %p43 = por %p41, %p42
      %p44 = scmp.ne.s32.totalorder %s30, %s31
      %p45 = scmp.eq.s32.totalorder %s23, 5
      %p46 = por %p44, %p45
      %p48 = scmp.ne.s32.totalorder %s31, %s47
      %p49 = scmp.eq.s32.totalorder %s23, 0
      %p50 = por %p48, %p49
      %s51 = ssub.s32 %s17, %s24
      %p52 = scmp.eq.s32.totalorder %s51, 0
      %s54 = sadd.s32 %s53, 1
      %s55 = scalar_select %p52, %s53, %s54
      %p58 = pneg %p52
      %p59 = scmp.eq.s32.totalorder %s17, 5
      %p60 = por %p58, %p59
      %p61 = scmp.ne.s32.totalorder %s53, %s56
      %p62 = scmp.eq.s32.totalorder %s17, 0
      %p63 = por %p61, %p62
      %p64 = scmp.ne.s32.totalorder %s53, %s56
      %p65 = scmp.eq.s32.totalorder %s22, 5
      %p66 = por %p64, %p65
      %p67 = scmp.ne.s32.totalorder %s56, %s57
      %p68 = scmp.eq.s32.totalorder %s22, 0
      %p69 = por %p67, %p68
      %p70 = scmp.ne.s32.totalorder %s56, %s57
      %p71 = scmp.eq.s32.totalorder %s23, 5
      %p72 = por %p70, %p71
      %p74 = scmp.ne.s32.totalorder %s57, %s73
      %p75 = scmp.eq.s32.totalorder %s23, 0
      %p76 = por %p74, %p75
      %s77 = ssub.s32 %s17, %s24
      %p78 = scmp.eq.s32.totalorder %s77, 0
      %s80 = sadd.s32 %s79, 1
      %s81 = scalar_select %p78, %s79, %s80
      %p84 = pneg %p78
      %p85 = scmp.eq.s32.totalorder %s17, 5
      %p86 = por %p84, %p85
      %p87 = scmp.ne.s32.totalorder %s79, %s82
      %p88 = scmp.eq.s32.totalorder %s17, 0
      %p89 = por %p87, %p88
      %p90 = scmp.ne.s32.totalorder %s79, %s82
      %p91 = scmp.eq.s32.totalorder %s22, 5
      %p92 = por %p90, %p91
      %p93 = scmp.ne.s32.totalorder %s82, %s83
      %p94 = scmp.eq.s32.totalorder %s22, 0
      %p95 = por %p93, %p94
      %p96 = scmp.ne.s32.totalorder %s82, %s83
      %p97 = scmp.eq.s32.totalorder %s23, 5
      %p98 = por %p96, %p97
      %p100 = scmp.ne.s32.totalorder %s83, %s99
      %p101 = scmp.eq.s32.totalorder %s23, 0
      %p102 = por %p100, %p101
      %s103 = ssub.s32 %s17, %s24
      %p104 = scmp.eq.s32.totalorder %s103, 0
      %s106 = sadd.s32 %s105, 1
      %s107 = scalar_select %p104, %s105, %s106
      %p110 = pneg %p104
      %p111 = scmp.eq.s32.totalorder %s17, 5
      %p112 = por %p110, %p111
      %p113 = scmp.ne.s32.totalorder %s105, %s108
      %p114 = scmp.eq.s32.totalorder %s17, 0
      %p115 = por %p113, %p114
      %p116 = scmp.ne.s32.totalorder %s105, %s108
      %p117 = scmp.eq.s32.totalorder %s22, 5
      %p118 = por %p116, %p117
      %p119 = scmp.ne.s32.totalorder %s108, %s109
      %p120 = scmp.eq.s32.totalorder %s22, 0
      %p121 = por %p119, %p120
      %p122 = scmp.ne.s32.totalorder %s108, %s109
      %p123 = scmp.eq.s32.totalorder %s23, 5
      %p124 = por %p122, %p123
      %p126 = scmp.ne.s32.totalorder %s109, %s125
      %p127 = scmp.eq.s32.totalorder %s23, 0
      %p128 = por %p126, %p127
      %s130 = sadd.s32 %s129, 1
      %p133 = scmp.eq.s32.totalorder %s17, 5
      %p134 = scmp.ne.s32.totalorder %s129, %s131
      %p135 = scmp.eq.s32.totalorder %s17, 0
      %p136 = por %p134, %p135
      %p137 = scmp.ne.s32.totalorder %s129, %s131
      %p138 = scmp.eq.s32.totalorder %s22, 5
      %p139 = por %p137, %p138
      %p140 = scmp.ne.s32.totalorder %s131, %s132
      %p141 = scmp.eq.s32.totalorder %s22, 0
      %p142 = por %p140, %p141
      %p143 = scmp.ne.s32.totalorder %s131, %s132
      %p144 = scmp.eq.s32.totalorder %s23, 5
      %p145 = por %p143, %p144
      %p147 = scmp.ne.s32.totalorder %s132, %s146
      %p148 = scmp.eq.s32.totalorder %s23, 0
      %p149 = por %p147, %p148
      %s151 = sadd.s32 %s150, 1
      %p154 = scmp.eq.s32.totalorder %s17, 5
      %p155 = scmp.ne.s32.totalorder %s150, %s152
      %p156 = scmp.eq.s32.totalorder %s17, 0
      %p157 = por %p155, %p156
      %p158 = scmp.ne.s32.totalorder %s150, %s152
      %p159 = scmp.eq.s32.totalorder %s22, 5
      %p160 = por %p158, %p159
      %p161 = scmp.ne.s32.totalorder %s152, %s153
      %p162 = scmp.eq.s32.totalorder %s22, 0
      %p163 = por %p161, %p162
      %p164 = scmp.ne.s32.totalorder %s152, %s153
      %p165 = scmp.eq.s32.totalorder %s23, 5
      %p166 = por %p164, %p165
      %p168 = scmp.ne.s32.totalorder %s153, %s167
      %p169 = scmp.eq.s32.totalorder %s23, 0
      %p170 = por %p168, %p169
      %s172 = sadd.s32 %s171, 1
      %p175 = scmp.eq.s32.totalorder %s17, 5
      %p176 = scmp.ne.s32.totalorder %s171, %s173
      %p177 = scmp.eq.s32.totalorder %s17, 0
      %p178 = por %p176, %p177
      %p179 = scmp.ne.s32.totalorder %s171, %s173
      %p180 = scmp.eq.s32.totalorder %s22, 5
      %p181 = por %p179, %p180
      %p182 = scmp.ne.s32.totalorder %s173, %s174
      %p183 = scmp.eq.s32.totalorder %s22, 0
      %p184 = por %p182, %p183
      %p185 = scmp.ne.s32.totalorder %s173, %s174
      %p186 = scmp.eq.s32.totalorder %s23, 5
      %p187 = por %p185, %p186
      %p189 = scmp.ne.s32.totalorder %s174, %s188
      %p190 = scmp.eq.s32.totalorder %s23, 0
      %p191 = por %p189, %p190
      %s193 = sadd.s32 %s192, 1
      %p196 = scmp.eq.s32.totalorder %s17, 5
      %p197 = scmp.ne.s32.totalorder %s192, %s194
      %p198 = scmp.eq.s32.totalorder %s17, 0
      %p199 = por %p197, %p198
      %p200 = scmp.ne.s32.totalorder %s192, %s194
      %p201 = scmp.eq.s32.totalorder %s22, 5
      %p202 = por %p200, %p201
      %p203 = scmp.ne.s32.totalorder %s194, %s195
      %p204 = scmp.eq.s32.totalorder %s22, 0
      %p205 = por %p203, %p204
      %p206 = scmp.ne.s32.totalorder %s194, %s195
      %p207 = scmp.eq.s32.totalorder %s23, 5
      %p208 = por %p206, %p207
      %p210 = scmp.ne.s32.totalorder %s195, %s209
      %p211 = scmp.eq.s32.totalorder %s23, 0
      %p212 = por %p210, %p211
      %s213 = ssub.s32 %s17, %s24
      %p214 = scmp.eq.s32.totalorder %s213, 0
      %s216 = sadd.s32 %s215, 1
      %s217 = scalar_select %p214, %s215, %s216
      %p220 = pneg %p214
      %p221 = scmp.eq.s32.totalorder %s17, 5
      %p222 = por %p220, %p221
      %p223 = scmp.ne.s32.totalorder %s215, %s218
      %p224 = scmp.eq.s32.totalorder %s17, 0
      %p225 = por %p223, %p224
      %p226 = scmp.ne.s32.totalorder %s215, %s218
      %p227 = scmp.eq.s32.totalorder %s22, 5
      %p228 = por %p226, %p227
      %p229 = scmp.ne.s32.totalorder %s218, %s219
      %p230 = scmp.eq.s32.totalorder %s22, 0
      %p231 = por %p229, %p230
      %p232 = scmp.ne.s32.totalorder %s218, %s219
      %p233 = scmp.eq.s32.totalorder %s23, 5
      %p234 = por %p232, %p233
      %p236 = scmp.ne.s32.totalorder %s219, %s235
      %p237 = scmp.eq.s32.totalorder %s23, 0
      %p238 = por %p236, %p237
      %p239 = scmp.le.s32.totalorder 1, %s17
      %p240 = scmp.lt.s32.totalorder %s17, 7
      %p241 = pnand %p239, %p240
      %p242 = pneg %p241
      // Predicated region
      $region9: #{resnet50_size_forward.4} parent=5 // pred_check
        _
      $region10: #{resnet50_size_forward.4} parent=5 // pred_check_branch
        %244 = sbr.rel (%p241) target = $region12
      $region11: #{resnet50_size_forward.4} parent=5 // pred_region
        %s245 = ssub.s32 %s17, 1
        // Predicated region
        $region13: #{resnet50_size_forward.4} parent=11 // pred_check
          %p246 = pneg %p142
        $region14: #{resnet50_size_forward.4} parent=11 // pred_check_branch
          %248 = sbr.rel (%p246) target = $region16
        $region15: #{resnet50_size_forward.4} parent=11 // pred_region
          _
        $region16: #{resnet50_size_forward.4} parent=11 // pred_fallthru
          _
        // Predicated region
        $region17: #{resnet50_size_forward.4} parent=11 // pred_check
          %p249 = pneg %p163
        $region18: #{resnet50_size_forward.4} parent=11 // pred_check_branch
          %251 = sbr.rel (%p249) target = $region20
        $region19: #{resnet50_size_forward.4} parent=11 // pred_region
          _
        $region20: #{resnet50_size_forward.4} parent=11 // pred_fallthru
          _
        // Predicated region
        $region21: #{resnet50_size_forward.4} parent=11 // pred_check
          %p252 = pneg %p184
        $region22: #{resnet50_size_forward.4} parent=11 // pred_check_branch
          %254 = sbr.rel (%p252) target = $region24
        $region23: #{resnet50_size_forward.4} parent=11 // pred_region
          _
        $region24: #{resnet50_size_forward.4} parent=11 // pred_fallthru
          _
        // Predicated region
        $region25: #{resnet50_size_forward.4} parent=11 // pred_check
          %p255 = pneg %p205
        $region26: #{resnet50_size_forward.4} parent=11 // pred_check_branch
          %257 = sbr.rel (%p255) target = $region28
        $region27: #{resnet50_size_forward.4} parent=11 // pred_region
          _
        $region28: #{resnet50_size_forward.4} parent=11 // pred_fallthru
          _
      $region12: #{resnet50_size_forward.4} parent=5 // pred_fallthru
        _
      %p258 = scmp.lt.s32.totalorder %s17, 6
      // Predicated region
      $region29: #{resnet50_size_forward.4} parent=5 // pred_check
        %p259 = pneg %p258
      $region30: #{resnet50_size_forward.4} parent=5 // pred_check_branch
        %261 = sbr.rel (%p259) target = $region32
      $region31: #{resnet50_size_forward.4} parent=5 // pred_region
        // Predicated region
        $region33: #{resnet50_size_forward.4} parent=31 // pred_check
          %p262 = pneg %p37
        $region34: #{resnet50_size_forward.4} parent=31 // pred_check_branch
          %264 = sbr.rel (%p262) target = $region36
        $region35: #{resnet50_size_forward.4} parent=31 // pred_region
          %s265 = smul.u32 7, %s17
          %p266 = scmp.lt.s32.totalorder %s265, 41
          %s267 = scalar_select %p266, %s265, 41
          %s268 = smul.addr %s267, 2
          %s269 = smul.addr %s268, 8
          %s270 = scalar_lea.vmem %s0, %s269
          %s271 = smul.u32 7, %s17
        $region36: #{resnet50_size_forward.4} parent=31 // pred_fallthru
          _
        // Predicated region
        $region37: #{resnet50_size_forward.4} parent=31 // pred_check
          %p272 = pneg %p63
        $region38: #{resnet50_size_forward.4} parent=31 // pred_check_branch
          %274 = sbr.rel (%p272) target = $region40
        $region39: #{resnet50_size_forward.4} parent=31 // pred_region
          %s275 = smul.u32 7, %s17
          %p276 = scmp.lt.s32.totalorder %s275, 41
          %s277 = scalar_select %p276, %s275, 41
          %s278 = smul.addr %s277, 4
          %s279 = smul.addr %s278, 8
          %s280 = scalar_lea.vmem %s1, %s279
          %s281 = smul.u32 7, %s17
        $region40: #{resnet50_size_forward.4} parent=31 // pred_fallthru
          _
        // Predicated region
        $region41: #{resnet50_size_forward.4} parent=31 // pred_check
          %p282 = pneg %p89
        $region42: #{resnet50_size_forward.4} parent=31 // pred_check_branch
          %284 = sbr.rel (%p282) target = $region44
        $region43: #{resnet50_size_forward.4} parent=31 // pred_region
          %s285 = smul.u32 7, %s17
          %p286 = scmp.lt.s32.totalorder %s285, 41
          %s287 = scalar_select %p286, %s285, 41
          %s288 = scalar_lea.vmem %s2, %s287
          %s289 = smul.u32 7, %s17
        $region44: #{resnet50_size_forward.4} parent=31 // pred_fallthru
          _
        // Predicated region
        $region45: #{resnet50_size_forward.4} parent=31 // pred_check
          %p290 = pneg %p115
        $region46: #{resnet50_size_forward.4} parent=31 // pred_check_branch
          %292 = sbr.rel (%p290) target = $region48
        $region47: #{resnet50_size_forward.4} parent=31 // pred_region
          %s293 = smul.u32 7, %s17
          %p294 = scmp.lt.s32.totalorder %s293, 41
          %s295 = scalar_select %p294, %s293, 41
          %s296 = scalar_lea.vmem %s3, %s295
          %s297 = smul.u32 7, %s17
        $region48: #{resnet50_size_forward.4} parent=31 // pred_fallthru
          _
      $region32: #{resnet50_size_forward.4} parent=5 // pred_fallthru
        _
      %p298 = scmp.le.s32.totalorder 1, %s17
      %p299 = scmp.lt.s32.totalorder %s17, 7
      %p300 = pnand %p298, %p299
      %p301 = pneg %p300
      // Predicated region
      $region49: #{resnet50_size_forward.4} parent=5 // pred_check
        _
      $region50: #{resnet50_size_forward.4} parent=5 // pred_check_branch
        %303 = sbr.rel (%p300) target = $region52
      $region51: #{resnet50_size_forward.4} parent=5 // pred_region
        %s304 = ssub.s32 %s17, 1
        %s305 = smul.u32 7, %s22
        %p306 = scmp.lt.s32.totalorder %s305, 41
        %s307 = scalar_select %p306, %s305, 41
        %s308 = smul.addr %s307, 2
        %s309 = smul.addr %s308, 8
        %s310 = scalar_lea.vmem %s0, %s309
        %p311 = pneg %p43
        %p312 = pneg %p40
        %s313 = smul.u32 7, %s22
        %p314 = scmp.lt.s32.totalorder %s313, 41
        %s315 = scalar_select %p314, %s313, 41
        %s316 = smul.addr %s315, 4
        %s317 = smul.addr %s316, 8
        %s318 = scalar_lea.vmem %s1, %s317
        %p319 = pneg %p69
        %p320 = pneg %p66
        %s321 = smul.u32 7, %s22
        %p322 = scmp.lt.s32.totalorder %s321, 41
        %s323 = scalar_select %p322, %s321, 41
        %s324 = scalar_lea.vmem %s2, %s323
        %p325 = pneg %p95
        %p326 = pneg %p92
        %s327 = smul.u32 7, %s22
        %p328 = scmp.lt.s32.totalorder %s327, 41
        %s329 = scalar_select %p328, %s327, 41
        %s330 = scalar_lea.vmem %s3, %s329
        %p331 = pneg %p121
        %p332 = pneg %p118
        %p333 = pneg %p142
        %p334 = pneg %p139
        %p335 = pneg %p163
        %p336 = pneg %p160
        %p337 = pneg %p184
        %p338 = pneg %p181
        %p339 = pneg %p205
        %p340 = pneg %p202
        %p341 = pneg %p231
        %p342 = pneg %p228
        %s343 = sand.u32 %s218, 1
        %s344 = scalar_lea.sflag [#allocation3], %s343
        %s345 = sand.u32 %s218, 1
        %s346 = smul.addr %s345, 3584
        %s347 = scalar_lea.vmem [#allocation2], %s346
        %s348 = smul.u32 7, %s22
        %p349 = scmp.lt.s32.totalorder %s348, 41
        %s350 = scalar_select %p349, %s348, 41
        %s351 = smul.addr %s350, 2
        %s352 = smul.addr %s351, 8
        %s353 = scalar_lea.vmem %s0, %s352
        %s354 = smul.u32 7, %s22
        %s355 = smul.u32 7, %s22
        %p356 = scmp.lt.s32.totalorder %s355, 41
        %s357 = scalar_select %p356, %s355, 41
        %s358 = smul.addr %s357, 4
        %s359 = smul.addr %s358, 8
        %s360 = scalar_lea.vmem %s1, %s359
        %s361 = smul.u32 7, %s22
        %s362 = smul.u32 7, %s22
        %p363 = scmp.lt.s32.totalorder %s362, 41
        %s364 = scalar_select %p363, %s362, 41
        %s365 = scalar_lea.vmem %s2, %s364
        %s366 = smul.u32 7, %s22
        %s367 = smul.u32 7, %s22
        %p368 = scmp.lt.s32.totalorder %s367, 41
        %s369 = scalar_select %p368, %s367, 41
        %s370 = scalar_lea.vmem %s3, %s369
        %s371 = smul.u32 7, %s22
        %s372 = smul.u32 7, %s22
        %v374 = vld [vmem:[%s4] sm:$0xf]
        %v375 = vld [vmem:[%s4 + $0x4] sm:$0xf]
        %v376 = vld [vmem:[%s4 + $0x8] sm:$0xf]
        %v377 = vld [vmem:[%s4 + $0xc] sm:$0xf]
        %v378 = vld [vmem:[%s5] sm:$0xf]
        %v379 = vld [vmem:[%s5 + $0x4] sm:$0xf]
        %v380 = vld [vmem:[%s6] sm:$0xf]
        %v381 = vld [vmem:[%s6 + $0x4] sm:$0xf]
        %v382 = vld [vmem:[%s6 + $0x8] sm:$0xf]
        %v383 = vld [vmem:[%s6 + $0xc] sm:$0xf]
        %v384 = vld [vmem:[%s6 + $0x10] sm:$0xf]
        %v385 = vld [vmem:[%s6 + $0x14] sm:$0xf]
        %v386 = vld [vmem:[%s6 + $0x18] sm:$0xf]
        %v387 = vld [vmem:[%s6 + $0x1c] sm:$0xf]
        %v388 = vld [vmem:[%s6 + $0x20] sm:$0xf]
        %v389 = vld [vmem:[%s6 + $0x24] sm:$0xf]
        %v390 = vld [vmem:[%s6 + $0x28] sm:$0xf]
        %v391 = vld [vmem:[%s6 + $0x2c] sm:$0xf]
        %v392 = vld [vmem:[%s6 + $0x30] sm:$0xf]
        %v393 = vld [vmem:[%s6 + $0x34] sm:$0xf]
        %v394 = vld [vmem:[%s6 + $0x38] sm:$0xf]
        %v395 = vld [vmem:[%s6 + $0x3c] sm:$0xf]
        %v396 = vld [vmem:[%s6 + $0x40] sm:$0xf]
        %v397 = vld [vmem:[%s6 + $0x44] sm:$0xf]
        %v398 = vld [vmem:[%s6 + $0x48] sm:$0xf]
        %v399 = vld [vmem:[%s6 + $0x4c] sm:$0xf]
        %v400 = vld [vmem:[%s6 + $0x50] sm:$0xf]
        %v401 = vld [vmem:[%s6 + $0x54] sm:$0xf]
        %v402 = vld [vmem:[%s6 + $0x58] sm:$0xf]
        %v403 = vld [vmem:[%s6 + $0x5c] sm:$0xf]
        %v404 = vld [vmem:[%s6 + $0x60] sm:$0xf]
        %v405 = vld [vmem:[%s6 + $0x64] sm:$0xf]
        %v406 = vld [vmem:[%s6 + $0x68] sm:$0xf]
        %v407 = vld [vmem:[%s6 + $0x6c] sm:$0xf]
        %v408 = vld [vmem:[%s6 + $0x70] sm:$0xf]
        %v409 = vld [vmem:[%s6 + $0x74] sm:$0xf]
        %v410 = vld [vmem:[%s6 + $0x78] sm:$0xf]
        %v411 = vld [vmem:[%s6 + $0x7c] sm:$0xf]
        %v412 = vld [vmem:[%s7] sm:$0xff]
        %v413 = vld [vmem:[%s7 + $0x8] sm:$0xff]
        %v414 = vld [vmem:[%s7 + $0x10] sm:$0xff]
        %v415 = vld [vmem:[%s7 + $0x18] sm:$0xff]
        loop: start=0, step=1, limit=7
        $region53: #{resnet50_size_forward.4} parent=51 // loop_pre_header
          _
        $region54: #{resnet50_size_forward.4} parent=51 // loop_header
          %s417 = sphi 0, %s421
          %p418 = scmp.ge.s32.totalorder %s417, 7
        $region55: #{resnet50_size_forward.4} parent=51 // loop_header_branch
          %420 = sbr.rel (%p418) target = $region59
        $region56: #{resnet50_size_forward.4} parent=51 // loop_body
          %s422 = smul.u32 %s417, 16
          %s423 = scalar_lea.vmem %s353, %s422
          %v424 = vld [vmem:[%s423] sm:$0xff]
          %v425 = vld [vmem:[%s423 + $0x8] sm:$0xff]
          %v426 = vpack.c.bf16 %v425, %v424
          %v429 = vunpack.c.l.b16 %v378
          %v430 = vunpack.c.l.b16 %v379
          %v431 = vpack.c.b16 %v430, %v429
          %vm433 = vcmask 130048
          %v435 = vsel %vm433, %v426, 0
          %437 = vmatprep.subr.bf16.mxu0 0
          %438 = vmatpush1.bf16.msra.mxu0 %v431
          %439 = vmatprep.subr.bf16.mxu0 0
          %440 = vmatpush1.bf16.msra.mxu0 0
          %441 = vmatprep.subr.bf16.mxu0 0
          %442 = vmatpush1.bf16.msra.mxu0 0
          %443 = vmatprep.subr.bf16.mxu0 0
          %444 = vmatpush1.bf16.msra.mxu0 0
          %445 = vmatprep.subr.bf16.mxu0 0
          %446 = vmatpush1.bf16.msra.mxu0 0
          %447 = vmatprep.subr.bf16.mxu0 0
          %448 = vmatpush1.bf16.msra.mxu0 0
          %449 = vmatprep.subr.bf16.mxu0 0
          %450 = vmatpush1.bf16.msra.mxu0 0
          %451 = vmatprep.subr.bf16.mxu0 0
          %452 = vmatpush1.bf16.msra.mxu0 0
          %453 = vmatprep.subr.bf16.mxu0 0
          %454 = vmatpush1.bf16.msra.mxu0 0
          %455 = vmatprep.subr.bf16.mxu0 0
          %456 = vmatpush1.bf16.msra.mxu0 0
          %457 = vmatprep.subr.bf16.mxu0 0
          %458 = vmatpush1.bf16.msra.mxu0 0
          %459 = vmatprep.subr.bf16.mxu0 0
          %460 = vmatpush1.bf16.msra.mxu0 0
          %461 = vmatprep.subr.bf16.mxu0 0
          %462 = vmatpush1.bf16.msra.mxu0 0
          %463 = vmatprep.subr.bf16.mxu0 0
          %464 = vmatpush1.bf16.msra.mxu0 0
          %465 = vmatprep.subr.bf16.mxu0 0
          %466 = vmatpush1.bf16.msra.mxu0 0
          %467 = vmatprep.subr.bf16.mxu0 0
          %468 = vmatpush1.bf16.msra.mxu0 0
          %469 = vmatprep.mubr.bf16.mxu0 0
          %470 = vmatmul.mubr.bf16.gmra.mrb[0].mxu0 %v435
          %v471 = vpop.f32.mrb[0].mxu0
          %v472 = vadd.f32 0.0, %v471
          %v473 = vpop.f32.mrb[0].mxu0
          %v474 = vpop.f32.mrb[0].mxu0
          %v475 = vadd.f32 0.0, %v474
          %v476 = vpop.f32.mrb[0].mxu0
          %477 = vdwg.mxu0
          %v478 = vpack.c.bf16 %v475, %v472
          %s479 = scalar_lea.vmem %s365, %s417
          %v480 = vld [vmem:[%s479] sm:$0x1]
          %v482 = vlaneseq
          %v483 = vshrl.u32 %v482, 7
          %v484 = vsub.s32 0, %v483
          %v485 = vrot.slane %v480, %v484
          %486 = vset.pattern.permute.xlu0 0
          %487 = vperm.xlu0 %486, %v485
          %v488 = vpop.permute.xlu0 %487
          %v494 = vunpack.c.l.b16 %v374
          %v495 = vunpack.c.l.b16 %v375
          %v496 = vunpack.c.l.b16 %v376
          %v497 = vunpack.c.l.b16 %v377
          %v498 = vpack.c.b16 %v495, %v494
          %v499 = vpack.c.b16 %v497, %v496
          %v501 = vsel %vm433, %v498, 0
          %v504 = vsel %vm433, %v499, 0
          %506 = vmatprep.subr.bf16.mxu0 0
          %507 = vmatpush1.bf16.msra.mxu0 %v478
          %508 = vmatprep.subr.bf16.mxu0 0
          %509 = vmatpush1.bf16.msra.mxu0 0
          %510 = vmatprep.subr.bf16.mxu0 0
          %511 = vmatpush1.bf16.msra.mxu0 0
          %512 = vmatprep.subr.bf16.mxu0 0
          %513 = vmatpush1.bf16.msra.mxu0 0
          %514 = vmatprep.subr.bf16.mxu0 0
          %515 = vmatpush1.bf16.msra.mxu0 0
          %516 = vmatprep.subr.bf16.mxu0 0
          %517 = vmatpush1.bf16.msra.mxu0 0
          %518 = vmatprep.subr.bf16.mxu0 0
          %519 = vmatpush1.bf16.msra.mxu0 0
          %520 = vmatprep.subr.bf16.mxu0 0
          %521 = vmatpush1.bf16.msra.mxu0 0
          %522 = vmatprep.subr.bf16.mxu0 0
          %523 = vmatpush1.bf16.msra.mxu0 0
          %524 = vmatprep.subr.bf16.mxu0 0
          %525 = vmatpush1.bf16.msra.mxu0 0
          %526 = vmatprep.subr.bf16.mxu0 0
          %527 = vmatpush1.bf16.msra.mxu0 0
          %528 = vmatprep.subr.bf16.mxu0 0
          %529 = vmatpush1.bf16.msra.mxu0 0
          %530 = vmatprep.subr.bf16.mxu0 0
          %531 = vmatpush1.bf16.msra.mxu0 0
          %532 = vmatprep.subr.bf16.mxu0 0
          %533 = vmatpush1.bf16.msra.mxu0 0
          %534 = vmatprep.subr.bf16.mxu0 0
          %535 = vmatpush1.bf16.msra.mxu0 0
          %536 = vmatprep.subr.bf16.mxu0 0
          %537 = vmatpush1.bf16.msra.mxu0 0
          %538 = vmatprep.mubr.bf16.mxu0 0
          %539 = vmatmul.mubr.bf16.gmra.mrb[0].mxu0 %v501
          %v540 = vpop.f32.mrb[0].mxu0
          %v541 = vadd.f32 %v488, %v540
          %v542 = vpop.f32.mrb[0].mxu0
          %v543 = vpop.f32.mrb[0].mxu0
          %v544 = vadd.f32 %v488, %v543
          %v545 = vpop.f32.mrb[0].mxu0
          %546 = vmatprep.mubr.bf16.mxu0 0
          %547 = vmatmul.mubr.bf16.gmra.mrb[0].mxu0 %v504
          %v548 = vpop.f32.mrb[0].mxu0
          %v549 = vadd.f32 %v488, %v548
          %v550 = vpop.f32.mrb[0].mxu0
          %v551 = vpop.f32.mrb[0].mxu0
          %v552 = vadd.f32 %v488, %v551
          %v553 = vpop.f32.mrb[0].mxu0
          %554 = vdwg.mxu0
          %s555 = smul.u32 %s417, 32
          %s556 = scalar_lea.vmem %s360, %s555
          %v557 = vld [vmem:[%s556] sm:$0xff]
          %v558 = vld [vmem:[%s556 + $0x8] sm:$0xff]
          %v559 = vld [vmem:[%s556 + $0x10] sm:$0xff]
          %v560 = vld [vmem:[%s556 + $0x18] sm:$0xff]
          %v561 = vadd.f32 %v541, %v557
          %v562 = vadd.f32 %v544, %v558
          %v563 = vadd.f32 %v549, %v559
          %v564 = vadd.f32 %v552, %v560
          %v565 = vpack.c.bf16 %v562, %v561
          %v566 = vpack.c.bf16 %v564, %v563
          %v571 = vunpack.c.l.b16 %v412
          %v572 = vunpack.c.h.b16 %v412
          %v573 = vunpack.c.l.b16 %v413
          %v574 = vunpack.c.h.b16 %v413
          %v575 = vunpack.c.l.b16 %v414
          %v576 = vunpack.c.h.b16 %v414
          %v577 = vunpack.c.l.b16 %v415
          %v578 = vunpack.c.h.b16 %v415
          %v579 = vpack.c.b16 %v573, %v571
          %v580 = vpack.c.b16 %v574, %v572
          %v581 = vpack.c.b16 %v577, %v575
          %v582 = vpack.c.b16 %v578, %v576
          %vm587 = vcmask 261120
          %v589 = vsel %vm587, %v565, 0
          %v592 = vsel %vm587, %v566, 0
          %594 = vmatprep.subr.bf16.mxu0 %v580
          %595 = vmatpush1.bf16.msra.mxu0 %v579
          %596 = vmatprep.subr.bf16.mxu0 %v582
          %597 = vmatpush1.bf16.msra.mxu0 %v581
          %598 = vmatprep.subr.bf16.mxu0 0
          %599 = vmatpush1.bf16.msra.mxu0 0
          %600 = vmatprep.subr.bf16.mxu0 0
          %601 = vmatpush1.bf16.msra.mxu0 0
          %602 = vmatprep.subr.bf16.mxu0 0
          %603 = vmatpush1.bf16.msra.mxu0 0
          %604 = vmatprep.subr.bf16.mxu0 0
          %605 = vmatpush1.bf16.msra.mxu0 0
          %606 = vmatprep.subr.bf16.mxu0 0
          %607 = vmatpush1.bf16.msra.mxu0 0
          %608 = vmatprep.subr.bf16.mxu0 0
          %609 = vmatpush1.bf16.msra.mxu0 0
          %610 = vmatprep.subr.bf16.mxu0 0
          %611 = vmatpush1.bf16.msra.mxu0 0
          %612 = vmatprep.subr.bf16.mxu0 0
          %613 = vmatpush1.bf16.msra.mxu0 0
          %614 = vmatprep.subr.bf16.mxu0 0
          %615 = vmatpush1.bf16.msra.mxu0 0
          %616 = vmatprep.subr.bf16.mxu0 0
          %617 = vmatpush1.bf16.msra.mxu0 0
          %618 = vmatprep.subr.bf16.mxu0 0
          %619 = vmatpush1.bf16.msra.mxu0 0
          %620 = vmatprep.subr.bf16.mxu0 0
          %621 = vmatpush1.bf16.msra.mxu0 0
          %622 = vmatprep.subr.bf16.mxu0 0
          %623 = vmatpush1.bf16.msra.mxu0 0
          %624 = vmatprep.subr.bf16.mxu0 0
          %625 = vmatpush1.bf16.msra.mxu0 0
          %626 = vmatprep.mubr.bf16.mxu0 0
          %627 = vmatmul.mubr.bf16.gmra.mrb[0].mxu0 %v589
          %v628 = vpop.f32.mrb[0].mxu0
          %v629 = vadd.f32 0.0, %v628
          %v630 = vpop.f32.mrb[0].mxu0
          %v631 = vadd.f32 0.0, %v630
          %v632 = vpop.f32.mrb[0].mxu0
          %v633 = vadd.f32 0.0, %v632
          %v634 = vpop.f32.mrb[0].mxu0
          %v635 = vadd.f32 0.0, %v634
          %636 = vmatprep.mubr.bf16.mxu0 0
          %637 = vmatmul.mubr.bf16.gmra.mrb[0].mxu0 %v592
          %v638 = vpop.f32.mrb[0].mxu0
          %v639 = vadd.f32 0.0, %v638
          %v640 = vpop.f32.mrb[0].mxu0
          %v641 = vadd.f32 0.0, %v640
          %v642 = vpop.f32.mrb[0].mxu0
          %v643 = vadd.f32 0.0, %v642
          %v644 = vpop.f32.mrb[0].mxu0
          %v645 = vadd.f32 0.0, %v644
          %646 = vdwg.mxu0
          %v647 = vpack.c.bf16 %v633, %v629
          %v648 = vpack.c.bf16 %v635, %v631
          %v649 = vpack.c.bf16 %v643, %v639
          %v650 = vpack.c.bf16 %v645, %v641
          %s651 = scalar_lea.vmem %s370, %s417
          %v652 = vld [vmem:[%s651] sm:$0x1]
          %v654 = vlaneseq
          %v655 = vshrl.u32 %v654, 7
          %v656 = vsub.s32 0, %v655
          %v657 = vrot.slane %v652, %v656
          %658 = vset.pattern.permute.xlu0 0
          %659 = vperm.xlu0 %658, %v657
          %v660 = vpop.permute.xlu0 %659
          %v694 = vunpack.c.l.b16 %v380
          %v695 = vunpack.c.l.b16 %v381
          %v696 = vunpack.c.l.b16 %v382
          %v697 = vunpack.c.l.b16 %v383
          %v698 = vunpack.c.l.b16 %v384
          %v699 = vunpack.c.l.b16 %v385
          %v700 = vunpack.c.l.b16 %v386
          %v701 = vunpack.c.l.b16 %v387
          %v702 = vunpack.c.l.b16 %v388
          %v703 = vunpack.c.l.b16 %v389
          %v704 = vunpack.c.l.b16 %v390
          %v705 = vunpack.c.l.b16 %v391
          %v706 = vunpack.c.l.b16 %v392
          %v707 = vunpack.c.l.b16 %v393
          %v708 = vunpack.c.l.b16 %v394
          %v709 = vunpack.c.l.b16 %v395
          %v710 = vunpack.c.l.b16 %v396
          %v711 = vunpack.c.l.b16 %v397
          %v712 = vunpack.c.l.b16 %v398
          %v713 = vunpack.c.l.b16 %v399
          %v714 = vunpack.c.l.b16 %v400
          %v715 = vunpack.c.l.b16 %v401
          %v716 = vunpack.c.l.b16 %v402
          %v717 = vunpack.c.l.b16 %v403
          %v718 = vunpack.c.l.b16 %v404
          %v719 = vunpack.c.l.b16 %v405
          %v720 = vunpack.c.l.b16 %v406
          %v721 = vunpack.c.l.b16 %v407
          %v722 = vunpack.c.l.b16 %v408
          %v723 = vunpack.c.l.b16 %v409
          %v724 = vunpack.c.l.b16 %v410
          %v725 = vunpack.c.l.b16 %v411
          %v726 = vpack.c.b16 %v695, %v694
          %v727 = vpack.c.b16 %v697, %v696
          %v728 = vpack.c.b16 %v699, %v698
          %v729 = vpack.c.b16 %v701, %v700
          %v730 = vpack.c.b16 %v703, %v702
          %v731 = vpack.c.b16 %v705, %v704
          %v732 = vpack.c.b16 %v707, %v706
          %v733 = vpack.c.b16 %v709, %v708
          %v734 = vpack.c.b16 %v711, %v710
          %v735 = vpack.c.b16 %v713, %v712
          %v736 = vpack.c.b16 %v715, %v714
          %v737 = vpack.c.b16 %v717, %v716
          %v738 = vpack.c.b16 %v719, %v718
          %v739 = vpack.c.b16 %v721, %v720
          %v740 = vpack.c.b16 %v723, %v722
          %v741 = vpack.c.b16 %v725, %v724
          %v743 = vsel %vm587, %v726, 0
          %v746 = vsel %vm587, %v727, 0
          %v749 = vsel %vm587, %v728, 0
          %v752 = vsel %vm587, %v729, 0
          %v755 = vsel %vm587, %v730, 0
          %v758 = vsel %vm587, %v731, 0
          %v761 = vsel %vm587, %v732, 0
          %v764 = vsel %vm587, %v733, 0
          %v767 = vsel %vm587, %v734, 0
          %v770 = vsel %vm587, %v735, 0
          %v773 = vsel %vm587, %v736, 0
          %v776 = vsel %vm587, %v737, 0
          %v779 = vsel %vm587, %v738, 0
          %v782 = vsel %vm587, %v739, 0
          %v785 = vsel %vm587, %v740, 0
          %v788 = vsel %vm587, %v741, 0
          %790 = vmatprep.subr.bf16.mxu0 %v648
          %791 = vmatpush1.bf16.msra.mxu0 %v647
          %792 = vmatprep.subr.bf16.mxu0 %v650
          %793 = vmatpush1.bf16.msra.mxu0 %v649
          %794 = vmatprep.subr.bf16.mxu0 0
          %795 = vmatpush1.bf16.msra.mxu0 0
          %796 = vmatprep.subr.bf16.mxu0 0
          %797 = vmatpush1.bf16.msra.mxu0 0
          %798 = vmatprep.subr.bf16.mxu0 0
          %799 = vmatpush1.bf16.msra.mxu0 0
          %800 = vmatprep.subr.bf16.mxu0 0
          %801 = vmatpush1.bf16.msra.mxu0 0
          %802 = vmatprep.subr.bf16.mxu0 0
          %803 = vmatpush1.bf16.msra.mxu0 0
          %804 = vmatprep.subr.bf16.mxu0 0
          %805 = vmatpush1.bf16.msra.mxu0 0
          %806 = vmatprep.subr.bf16.mxu0 0
          %807 = vmatpush1.bf16.msra.mxu0 0
          %808 = vmatprep.subr.bf16.mxu0 0
          %809 = vmatpush1.bf16.msra.mxu0 0
          %810 = vmatprep.subr.bf16.mxu0 0
          %811 = vmatpush1.bf16.msra.mxu0 0
          %812 = vmatprep.subr.bf16.mxu0 0
          %813 = vmatpush1.bf16.msra.mxu0 0
          %814 = vmatprep.subr.bf16.mxu0 0
          %815 = vmatpush1.bf16.msra.mxu0 0
          %816 = vmatprep.subr.bf16.mxu0 0
          %817 = vmatpush1.bf16.msra.mxu0 0
          %818 = vmatprep.subr.bf16.mxu0 0
          %819 = vmatpush1.bf16.msra.mxu0 0
          %820 = vmatprep.subr.bf16.mxu0 0
          %821 = vmatpush1.bf16.msra.mxu0 0
          %822 = vmatprep.mubr.bf16.mxu0 0
          %823 = vmatmul.mubr.bf16.gmra.mrb[0].mxu0 %v743
          %v824 = vpop.f32.mrb[0].mxu0
          %v825 = vadd.f32 %v660, %v824
          %v826 = vpop.f32.mrb[0].mxu0
          %v827 = vadd.f32 %v660, %v826
          %v828 = vpop.f32.mrb[0].mxu0
          %v829 = vadd.f32 %v660, %v828
          %v830 = vpop.f32.mrb[0].mxu0
          %v831 = vadd.f32 %v660, %v830
          %832 = vmatprep.mubr.bf16.mxu0 0
          %833 = vmatmul.mubr.bf16.gmra.mrb[0].mxu0 %v746
          %v834 = vpop.f32.mrb[0].mxu0
          %v835 = vadd.f32 %v660, %v834
          %v836 = vpop.f32.mrb[0].mxu0
          %v837 = vadd.f32 %v660, %v836
          %v838 = vpop.f32.mrb[0].mxu0
          %v839 = vadd.f32 %v660, %v838
          %v840 = vpop.f32.mrb[0].mxu0
          %v841 = vadd.f32 %v660, %v840
          %842 = vmatprep.mubr.bf16.mxu0 0
          %843 = vmatmul.mubr.bf16.gmra.mrb[0].mxu0 %v749
          %v844 = vpop.f32.mrb[0].mxu0
          %v845 = vadd.f32 %v660, %v844
          %v846 = vpop.f32.mrb[0].mxu0
          %v847 = vadd.f32 %v660, %v846
          %v848 = vpop.f32.mrb[0].mxu0
          %v849 = vadd.f32 %v660, %v848
          %v850 = vpop.f32.mrb[0].mxu0
          %v851 = vadd.f32 %v660, %v850
          %852 = vmatprep.mubr.bf16.mxu0 0
          %853 = vmatmul.mubr.bf16.gmra.mrb[0].mxu0 %v752
          %v854 = vpop.f32.mrb[0].mxu0
          %v855 = vadd.f32 %v660, %v854
          %v856 = vpop.f32.mrb[0].mxu0
          %v857 = vadd.f32 %v660, %v856
          %v858 = vpop.f32.mrb[0].mxu0
          %v859 = vadd.f32 %v660, %v858
          %v860 = vpop.f32.mrb[0].mxu0
          %v861 = vadd.f32 %v660, %v860
          %862 = vmatprep.mubr.bf16.mxu0 0
          %863 = vmatmul.mubr.bf16.gmra.mrb[0].mxu0 %v755
          %v864 = vpop.f32.mrb[0].mxu0
          %v865 = vadd.f32 %v660, %v864
          %v866 = vpop.f32.mrb[0].mxu0
          %v867 = vadd.f32 %v660, %v866
          %v868 = vpop.f32.mrb[0].mxu0
          %v869 = vadd.f32 %v660, %v868
          %v870 = vpop.f32.mrb[0].mxu0
          %v871 = vadd.f32 %v660, %v870
          %872 = vmatprep.mubr.bf16.mxu0 0
          %873 = vmatmul.mubr.bf16.gmra.mrb[0].mxu0 %v758
          %v874 = vpop.f32.mrb[0].mxu0
          %v875 = vadd.f32 %v660, %v874
          %v876 = vpop.f32.mrb[0].mxu0
          %v877 = vadd.f32 %v660, %v876
          %v878 = vpop.f32.mrb[0].mxu0
          %v879 = vadd.f32 %v660, %v878
          %v880 = vpop.f32.mrb[0].mxu0
          %v881 = vadd.f32 %v660, %v880
          %882 = vmatprep.mubr.bf16.mxu0 0
          %883 = vmatmul.mubr.bf16.gmra.mrb[0].mxu0 %v761
          %v884 = vpop.f32.mrb[0].mxu0
          %v885 = vadd.f32 %v660, %v884
          %v886 = vpop.f32.mrb[0].mxu0
          %v887 = vadd.f32 %v660, %v886
          %v888 = vpop.f32.mrb[0].mxu0
          %v889 = vadd.f32 %v660, %v888
          %v890 = vpop.f32.mrb[0].mxu0
          %v891 = vadd.f32 %v660, %v890
          %892 = vmatprep.mubr.bf16.mxu0 0
          %893 = vmatmul.mubr.bf16.gmra.mrb[0].mxu0 %v764
          %v894 = vpop.f32.mrb[0].mxu0
          %v895 = vadd.f32 %v660, %v894
          %v896 = vpop.f32.mrb[0].mxu0
          %v897 = vadd.f32 %v660, %v896
          %v898 = vpop.f32.mrb[0].mxu0
          %v899 = vadd.f32 %v660, %v898
          %v900 = vpop.f32.mrb[0].mxu0
          %v901 = vadd.f32 %v660, %v900
          %902 = vmatprep.mubr.bf16.mxu0 0
          %903 = vmatmul.mubr.bf16.gmra.mrb[0].mxu0 %v767
          %v904 = vpop.f32.mrb[0].mxu0
          %v905 = vadd.f32 %v660, %v904
          %v906 = vpop.f32.mrb[0].mxu0
          %v907 = vadd.f32 %v660, %v906
          %v908 = vpop.f32.mrb[0].mxu0
          %v909 = vadd.f32 %v660, %v908
          %v910 = vpop.f32.mrb[0].mxu0
          %v911 = vadd.f32 %v660, %v910
          %912 = vmatprep.mubr.bf16.mxu0 0
          %913 = vmatmul.mubr.bf16.gmra.mrb[0].mxu0 %v770
          %v914 = vpop.f32.mrb[0].mxu0
          %v915 = vadd.f32 %v660, %v914
          %v916 = vpop.f32.mrb[0].mxu0
          %v917 = vadd.f32 %v660, %v916
          %v918 = vpop.f32.mrb[0].mxu0
          %v919 = vadd.f32 %v660, %v918
          %v920 = vpop.f32.mrb[0].mxu0
          %v921 = vadd.f32 %v660, %v920
          %922 = vmatprep.mubr.bf16.mxu0 0
          %923 = vmatmul.mubr.bf16.gmra.mrb[0].mxu0 %v773
          %v924 = vpop.f32.mrb[0].mxu0
          %v925 = vadd.f32 %v660, %v924
          %v926 = vpop.f32.mrb[0].mxu0
          %v927 = vadd.f32 %v660, %v926
          %v928 = vpop.f32.mrb[0].mxu0
          %v929 = vadd.f32 %v660, %v928
          %v930 = vpop.f32.mrb[0].mxu0
          %v931 = vadd.f32 %v660, %v930
          %932 = vmatprep.mubr.bf16.mxu0 0
          %933 = vmatmul.mubr.bf16.gmra.mrb[0].mxu0 %v776
          %v934 = vpop.f32.mrb[0].mxu0
          %v935 = vadd.f32 %v660, %v934
          %v936 = vpop.f32.mrb[0].mxu0
          %v937 = vadd.f32 %v660, %v936
          %v938 = vpop.f32.mrb[0].mxu0
          %v939 = vadd.f32 %v660, %v938
          %v940 = vpop.f32.mrb[0].mxu0
          %v941 = vadd.f32 %v660, %v940
          %942 = vmatprep.mubr.bf16.mxu0 0
          %943 = vmatmul.mubr.bf16.gmra.mrb[0].mxu0 %v779
          %v944 = vpop.f32.mrb[0].mxu0
          %v945 = vadd.f32 %v660, %v944
          %v946 = vpop.f32.mrb[0].mxu0
          %v947 = vadd.f32 %v660, %v946
          %v948 = vpop.f32.mrb[0].mxu0
          %v949 = vadd.f32 %v660, %v948
          %v950 = vpop.f32.mrb[0].mxu0
          %v951 = vadd.f32 %v660, %v950
          %952 = vmatprep.mubr.bf16.mxu0 0
          %953 = vmatmul.mubr.bf16.gmra.mrb[0].mxu0 %v782
          %v954 = vpop.f32.mrb[0].mxu0
          %v955 = vadd.f32 %v660, %v954
          %v956 = vpop.f32.mrb[0].mxu0
          %v957 = vadd.f32 %v660, %v956
          %v958 = vpop.f32.mrb[0].mxu0
          %v959 = vadd.f32 %v660, %v958
          %v960 = vpop.f32.mrb[0].mxu0
          %v961 = vadd.f32 %v660, %v960
          %962 = vmatprep.mubr.bf16.mxu0 0
          %963 = vmatmul.mubr.bf16.gmra.mrb[0].mxu0 %v785
          %v964 = vpop.f32.mrb[0].mxu0
          %v965 = vadd.f32 %v660, %v964
          %v966 = vpop.f32.mrb[0].mxu0
          %v967 = vadd.f32 %v660, %v966
          %v968 = vpop.f32.mrb[0].mxu0
          %v969 = vadd.f32 %v660, %v968
          %v970 = vpop.f32.mrb[0].mxu0
          %v971 = vadd.f32 %v660, %v970
          %972 = vmatprep.mubr.bf16.mxu0 0
          %973 = vmatmul.mubr.bf16.gmra.mrb[0].mxu0 %v788
          %v974 = vpop.f32.mrb[0].mxu0
          %v975 = vadd.f32 %v660, %v974
          %v976 = vpop.f32.mrb[0].mxu0
          %v977 = vadd.f32 %v660, %v976
          %v978 = vpop.f32.mrb[0].mxu0
          %v979 = vadd.f32 %v660, %v978
          %v980 = vpop.f32.mrb[0].mxu0
          %v981 = vadd.f32 %v660, %v980
          %982 = vdwg.mxu0
          %s983 = smul.u32 %s417, 64
          %s984 = smul.addr %s983, 8
          %s985 = scalar_lea.vmem %s347, %s984 [#allocation2]
          %986 = vst [vmem:[%s985] sm:$0xff] %v825
          %987 = vst [vmem:[%s985 + $0x8] sm:$0xff] %v827
          %988 = vst [vmem:[%s985 + $0x10] sm:$0xff] %v829
          %989 = vst [vmem:[%s985 + $0x18] sm:$0xff] %v831
          %990 = vst [vmem:[%s985 + $0x20] sm:$0xff] %v835
          %991 = vst [vmem:[%s985 + $0x28] sm:$0xff] %v837
          %992 = vst [vmem:[%s985 + $0x30] sm:$0xff] %v839
          %993 = vst [vmem:[%s985 + $0x38] sm:$0xff] %v841
          %994 = vst [vmem:[%s985 + $0x40] sm:$0xff] %v845
          %995 = vst [vmem:[%s985 + $0x48] sm:$0xff] %v847
          %996 = vst [vmem:[%s985 + $0x50] sm:$0xff] %v849
          %997 = vst [vmem:[%s985 + $0x58] sm:$0xff] %v851
          %998 = vst [vmem:[%s985 + $0x60] sm:$0xff] %v855
          %999 = vst [vmem:[%s985 + $0x68] sm:$0xff] %v857
          %1000 = vst [vmem:[%s985 + $0x70] sm:$0xff] %v859
          %1001 = vst [vmem:[%s985 + $0x78] sm:$0xff] %v861
          %1002 = vst [vmem:[%s985 + $0x80] sm:$0xff] %v865
          %1003 = vst [vmem:[%s985 + $0x88] sm:$0xff] %v867
          %1004 = vst [vmem:[%s985 + $0x90] sm:$0xff] %v869
          %1005 = vst [vmem:[%s985 + $0x98] sm:$0xff] %v871
          %1006 = vst [vmem:[%s985 + $0xa0] sm:$0xff] %v875
          %1007 = vst [vmem:[%s985 + $0xa8] sm:$0xff] %v877
          %1008 = vst [vmem:[%s985 + $0xb0] sm:$0xff] %v879
          %1009 = vst [vmem:[%s985 + $0xb8] sm:$0xff] %v881
          %1010 = vst [vmem:[%s985 + $0xc0] sm:$0xff] %v885
          %1011 = vst [vmem:[%s985 + $0xc8] sm:$0xff] %v887
          %1012 = vst [vmem:[%s985 + $0xd0] sm:$0xff] %v889
          %1013 = vst [vmem:[%s985 + $0xd8] sm:$0xff] %v891
          %1014 = vst [vmem:[%s985 + $0xe0] sm:$0xff] %v895
          %1015 = vst [vmem:[%s985 + $0xe8] sm:$0xff] %v897
          %1016 = vst [vmem:[%s985 + $0xf0] sm:$0xff] %v899
          %1017 = vst [vmem:[%s985 + $0xf8] sm:$0xff] %v901
          %1018 = vst [vmem:[%s985 + $0x100] sm:$0xff] %v905
          %1019 = vst [vmem:[%s985 + $0x108] sm:$0xff] %v907
          %1020 = vst [vmem:[%s985 + $0x110] sm:$0xff] %v909
          %1021 = vst [vmem:[%s985 + $0x118] sm:$0xff] %v911
          %1022 = vst [vmem:[%s985 + $0x120] sm:$0xff] %v915
          %1023 = vst [vmem:[%s985 + $0x128] sm:$0xff] %v917
          %1024 = vst [vmem:[%s985 + $0x130] sm:$0xff] %v919
          %1025 = vst [vmem:[%s985 + $0x138] sm:$0xff] %v921
          %1026 = vst [vmem:[%s985 + $0x140] sm:$0xff] %v925
          %1027 = vst [vmem:[%s985 + $0x148] sm:$0xff] %v927
          %1028 = vst [vmem:[%s985 + $0x150] sm:$0xff] %v929
          %1029 = vst [vmem:[%s985 + $0x158] sm:$0xff] %v931
          %1030 = vst [vmem:[%s985 + $0x160] sm:$0xff] %v935
          %1031 = vst [vmem:[%s985 + $0x168] sm:$0xff] %v937
          %1032 = vst [vmem:[%s985 + $0x170] sm:$0xff] %v939
          %1033 = vst [vmem:[%s985 + $0x178] sm:$0xff] %v941
          %1034 = vst [vmem:[%s985 + $0x180] sm:$0xff] %v945
          %1035 = vst [vmem:[%s985 + $0x188] sm:$0xff] %v947
          %1036 = vst [vmem:[%s985 + $0x190] sm:$0xff] %v949
          %1037 = vst [vmem:[%s985 + $0x198] sm:$0xff] %v951
          %1038 = vst [vmem:[%s985 + $0x1a0] sm:$0xff] %v955
          %1039 = vst [vmem:[%s985 + $0x1a8] sm:$0xff] %v957
          %1040 = vst [vmem:[%s985 + $0x1b0] sm:$0xff] %v959
          %1041 = vst [vmem:[%s985 + $0x1b8] sm:$0xff] %v961
          %1042 = vst [vmem:[%s985 + $0x1c0] sm:$0xff] %v965
          %1043 = vst [vmem:[%s985 + $0x1c8] sm:$0xff] %v967
          %1044 = vst [vmem:[%s985 + $0x1d0] sm:$0xff] %v969
          %1045 = vst [vmem:[%s985 + $0x1d8] sm:$0xff] %v971
          %1046 = vst [vmem:[%s985 + $0x1e0] sm:$0xff] %v975
          %1047 = vst [vmem:[%s985 + $0x1e8] sm:$0xff] %v977
          %1048 = vst [vmem:[%s985 + $0x1f0] sm:$0xff] %v979
          %1049 = vst [vmem:[%s985 + $0x1f8] sm:$0xff] %v981
        $region57: #{resnet50_size_forward.4} parent=51 // loop_footer
          %s421 = sadd.s32 1, %s417
        $region58: #{resnet50_size_forward.4} parent=51 // loop_footer_branch
          %416 = sbr.rel target = $region54
        $region59: #{resnet50_size_forward.4} parent=51 // loop_exit
          _
        %s1050 = sand.u32 %s218, 1
        %s1051 = scalar_lea.sflag [#allocation3], %s1050
        %s1052 = sand.u32 %s218, 1
        %s1053 = smul.addr %s1052, 3584
        %s1054 = scalar_lea.vmem [#allocation2], %s1053
        // Predicated region
        $region60: #{resnet50_size_forward.4} parent=51 // pred_check
          %p1055 = pneg %p228
        $region61: #{resnet50_size_forward.4} parent=51 // pred_check_branch
          %1057 = sbr.rel (%p1055) target = $region63
        $region62: #{resnet50_size_forward.4} parent=51 // pred_region
          %s1058 = smul.u32 7, %s22
          %s1060 = ssub.s32 57344, 57344
          %1061 = vsyncadd %s1051, %s1060
          %s1062 = smul.addr %s1058, 64
          %s1063 = smul.addr %s1062, 128
          %s1064 = scalar_lea.hbm %s8, %s1063
          %s1065 = sshll.u32 %s1054, 4
          %s1066 = int_to_ptr.vmem [resolvable:$true] %s1065
          %1071 = dma.vmem_to_hbm [thread:$0]  %s1066, 57344, %s1064, %s1051, 256, 256, 16
        $region63: #{resnet50_size_forward.4} parent=51 // pred_fallthru
          _
      $region52: #{resnet50_size_forward.4} parent=5 // pred_fallthru
        _
      %p1072 = scmp.le.s32.totalorder 2, %s17
      // Predicated region
      $region64: #{resnet50_size_forward.4} parent=5 // pred_check
        %p1073 = pneg %p1072
      $region65: #{resnet50_size_forward.4} parent=5 // pred_check_branch
        %1075 = sbr.rel (%p1073) target = $region67
      $region66: #{resnet50_size_forward.4} parent=5 // pred_region
        %s1076 = ssub.s32 %s17, 2
        // Predicated region
        $region68: #{resnet50_size_forward.4} parent=66 // pred_check
          %p1077 = pneg %p234
        $region69: #{resnet50_size_forward.4} parent=66 // pred_check_branch
          %1079 = sbr.rel (%p1077) target = $region71
        $region70: #{resnet50_size_forward.4} parent=66 // pred_region
          %s1080 = sand.u32 %s219, 1
          %s1081 = scalar_lea.sflag [#allocation3], %s1080
          %s1082 = sand.u32 %s219, 1
          %s1083 = smul.addr %s1082, 3584
          %s1084 = scalar_lea.vmem [#allocation2], %s1083
          %1085 = dma.done %s1081, 57344
        $region71: #{resnet50_size_forward.4} parent=66 // pred_fallthru
          _
      $region67: #{resnet50_size_forward.4} parent=5 // pred_fallthru
        _
    $region6: #{resnet50_size_forward.4} parent=1 // loop_footer
      %s21 = sadd.s32 1, %s17
    $region7: #{resnet50_size_forward.4} parent=1 // loop_footer_branch
      %16 = sbr.rel target = $region3
    $region8: #{resnet50_size_forward.4} parent=1 // loop_exit
      _
    %1086 = vsyncpa [#allocation3], 1
    %s1087 = scalar_lea.sflag [#allocation3], 1
    %1088 = vsyncpa %s1087, 1

// kernel: resnet50_size_forward.5
$region0: #{resnet50_size_forward.5}
  #allocation0 [shape = 'u32[]', space=smem, size = 0x4, offset = 0x4, fixed_abs, tag = 'smem constant byte address 0x4 - core index']
  #allocation1 [shape = 'u32[144,128]{1,0:T(1,128)}', space=vmem, size = 0x12000, scoped, tag = 'internal scratch']
  %s0 = inlined_call_operand.vmem [shape: f32[2,16384], index: 0, kind: input, shape index: {}]
  %s1 = inlined_call_operand.vmem [shape: bf16[16384,32], index: 1, kind: input, shape index: {}]
  %s2 = inlined_call_operand.vmem [shape: f32[1,32], index: 2, kind: input, shape index: {}]
  %s3 = inlined_call_operand.hbm [shape: f32[2,32], index: 3, kind: output, shape index: {}]
  %s4 = sld [smem:[#allocation0]]
  $region53: #{resnet50_size_forward.5} parent=0
    _
  %s6 = ssub.s32 1, %s4
  %s7 = scalar_select 0, %s6, %s4
  $region1: #{resnet50_size_forward.5} parent=0
    #allocation2 [shape = 'u8[1024]{0}', space=vmem, size = 0x400, scoped, tag = 'output window, operand 0, single buffered']
    #allocation3 [shape = 's32[2]{0}', space=sflag, size = 0x8, scoped, tag = 'scoped memory for resnet50_size_forward.5']
    %8 = vsyncpa [#allocation3], 0
    loop: start=0, step=1, limit=4
    $region2: #{resnet50_size_forward.5} parent=1 // loop_pre_header
      _
    $region3: #{resnet50_size_forward.5} parent=1 // loop_header
      %s10 = sphi 0, %s14
      %p11 = scmp.ge.s32.totalorder %s10, 4
      %s20 = sphi 0, %s22
      %s23 = sphi 0, %s20
      %s24 = sphi 0, %s23
      %s40 = sphi 0, %s24
      %s46 = sphi 0, %s48
      %s49 = sphi 0, %s46
      %s50 = sphi 0, %s49
      %s66 = sphi 0, %s50
      %s70 = sphi 0, %s70
      %s72 = sphi 0, %s70
      %s73 = sphi 0, %s72
      %s87 = sphi 0, %s73
      %s91 = sphi 0, %s91
      %s93 = sphi 0, %s91
      %s94 = sphi 0, %s93
      %s108 = sphi 0, %s94
    $region4: #{resnet50_size_forward.5} parent=1 // loop_header_branch
      %13 = sbr.rel (%p11) target = $region8
    $region5: #{resnet50_size_forward.5} parent=1 // loop_body
      %s15 = ssub.s32 %s10, 1
      %s16 = ssub.s32 %s10, 2
      %s17 = sadd.s32 %s10, 1
      %s18 = ssub.s32 %s10, %s17
      %p19 = scmp.eq.s32.totalorder %s18, 0
      %s21 = sadd.s32 %s20, 1
      %s22 = scalar_select %p19, %s20, %s21
      %p25 = pneg %p19
      %p26 = scmp.eq.s32.totalorder %s10, 1
      %p27 = por %p25, %p26
      %p28 = scmp.ne.s32.totalorder %s20, %s23
      %p29 = scmp.eq.s32.totalorder %s10, 0
      %p30 = por %p28, %p29
      %p31 = scmp.ne.s32.totalorder %s20, %s23
      %p32 = scmp.eq.s32.totalorder %s15, 1
      %p33 = por %p31, %p32
      %p34 = scmp.ne.s32.totalorder %s23, %s24
      %p35 = scmp.eq.s32.totalorder %s15, 0
      %p36 = por %p34, %p35
      %p37 = scmp.ne.s32.totalorder %s23, %s24
      %p38 = scmp.eq.s32.totalorder %s16, 1
      %p39 = por %p37, %p38
      %p41 = scmp.ne.s32.totalorder %s24, %s40
      %p42 = scmp.eq.s32.totalorder %s16, 0
      %p43 = por %p41, %p42
      %s44 = ssub.s32 %s10, %s17
      %p45 = scmp.eq.s32.totalorder %s44, 0
      %s47 = sadd.s32 %s46, 1
      %s48 = scalar_select %p45, %s46, %s47
      %p51 = pneg %p45
      %p52 = scmp.eq.s32.totalorder %s10, 1
      %p53 = por %p51, %p52
      %p54 = scmp.ne.s32.totalorder %s46, %s49
      %p55 = scmp.eq.s32.totalorder %s10, 0
      %p56 = por %p54, %p55
      %p57 = scmp.ne.s32.totalorder %s46, %s49
      %p58 = scmp.eq.s32.totalorder %s15, 1
      %p59 = por %p57, %p58
      %p60 = scmp.ne.s32.totalorder %s49, %s50
      %p61 = scmp.eq.s32.totalorder %s15, 0
      %p62 = por %p60, %p61
      %p63 = scmp.ne.s32.totalorder %s49, %s50
      %p64 = scmp.eq.s32.totalorder %s16, 1
      %p65 = por %p63, %p64
      %p67 = scmp.ne.s32.totalorder %s50, %s66
      %p68 = scmp.eq.s32.totalorder %s16, 0
      %p69 = por %p67, %p68
      %s71 = sadd.s32 %s70, 1
      %p74 = scmp.eq.s32.totalorder %s10, 1
      %p75 = scmp.ne.s32.totalorder %s70, %s72
      %p76 = scmp.eq.s32.totalorder %s10, 0
      %p77 = por %p75, %p76
      %p78 = scmp.ne.s32.totalorder %s70, %s72
      %p79 = scmp.eq.s32.totalorder %s15, 1
      %p80 = por %p78, %p79
      %p81 = scmp.ne.s32.totalorder %s72, %s73
      %p82 = scmp.eq.s32.totalorder %s15, 0
      %p83 = por %p81, %p82
      %p84 = scmp.ne.s32.totalorder %s72, %s73
      %p85 = scmp.eq.s32.totalorder %s16, 1
      %p86 = por %p84, %p85
      %p88 = scmp.ne.s32.totalorder %s73, %s87
      %p89 = scmp.eq.s32.totalorder %s16, 0
      %p90 = por %p88, %p89
      %s92 = sadd.s32 %s91, 1
      %p95 = scmp.eq.s32.totalorder %s10, 1
      %p96 = scmp.ne.s32.totalorder %s91, %s93
      %p97 = scmp.eq.s32.totalorder %s10, 0
      %p98 = por %p96, %p97
      %p99 = scmp.ne.s32.totalorder %s91, %s93
      %p100 = scmp.eq.s32.totalorder %s15, 1
      %p101 = por %p99, %p100
      %p102 = scmp.ne.s32.totalorder %s93, %s94
      %p103 = scmp.eq.s32.totalorder %s15, 0
      %p104 = por %p102, %p103
      %p105 = scmp.ne.s32.totalorder %s93, %s94
      %p106 = scmp.eq.s32.totalorder %s16, 1
      %p107 = por %p105, %p106
      %p109 = scmp.ne.s32.totalorder %s94, %s108
      %p110 = scmp.eq.s32.totalorder %s16, 0
      %p111 = por %p109, %p110
      %p112 = scmp.le.s32.totalorder 1, %s10
      %p113 = scmp.lt.s32.totalorder %s10, 3
      %p114 = pnand %p112, %p113
      %p115 = pneg %p114
      // Predicated region
      $region9: #{resnet50_size_forward.5} parent=5 // pred_check
        _
      $region10: #{resnet50_size_forward.5} parent=5 // pred_check_branch
        %117 = sbr.rel (%p114) target = $region12
      $region11: #{resnet50_size_forward.5} parent=5 // pred_region
        %s118 = ssub.s32 %s10, 1
        // Predicated region
        $region13: #{resnet50_size_forward.5} parent=11 // pred_check
          %p119 = pneg %p83
        $region14: #{resnet50_size_forward.5} parent=11 // pred_check_branch
          %121 = sbr.rel (%p119) target = $region16
        $region15: #{resnet50_size_forward.5} parent=11 // pred_region
          _
        $region16: #{resnet50_size_forward.5} parent=11 // pred_fallthru
          _
      $region12: #{resnet50_size_forward.5} parent=5 // pred_fallthru
        _
      %p122 = scmp.lt.s32.totalorder %s10, 2
      // Predicated region
      $region17: #{resnet50_size_forward.5} parent=5 // pred_check
        %p123 = pneg %p122
      $region18: #{resnet50_size_forward.5} parent=5 // pred_check_branch
        %125 = sbr.rel (%p123) target = $region20
      $region19: #{resnet50_size_forward.5} parent=5 // pred_region
        // Predicated region
        $region21: #{resnet50_size_forward.5} parent=19 // pred_check
          %p126 = pneg %p30
        $region22: #{resnet50_size_forward.5} parent=19 // pred_check_branch
          %128 = sbr.rel (%p126) target = $region24
        $region23: #{resnet50_size_forward.5} parent=19 // pred_region
          %s129 = smul.u32 64, %s10
          %p130 = scmp.lt.s32.totalorder %s129, 127
          %s131 = scalar_select %p130, %s129, 127
          %s132 = smul.addr %s131, 2
          %s133 = scalar_lea.vmem %s0, %s132
          %s134 = smul.u32 64, %s10
        $region24: #{resnet50_size_forward.5} parent=19 // pred_fallthru
          _
        // Predicated region
        $region25: #{resnet50_size_forward.5} parent=19 // pred_check
          %p135 = pneg %p56
        $region26: #{resnet50_size_forward.5} parent=19 // pred_check_branch
          %137 = sbr.rel (%p135) target = $region28
        $region27: #{resnet50_size_forward.5} parent=19 // pred_region
          %s138 = smul.u32 1024, %s10
          %p139 = scmp.lt.s32.totalorder %s138, 2047
          %s140 = scalar_select %p139, %s138, 2047
          %s141 = smul.addr %s140, 4
          %s142 = scalar_lea.vmem %s1, %s141
          %s143 = smul.u32 1024, %s10
        $region28: #{resnet50_size_forward.5} parent=19 // pred_fallthru
          _
      $region20: #{resnet50_size_forward.5} parent=5 // pred_fallthru
        _
      %p144 = scmp.le.s32.totalorder 1, %s10
      %p145 = scmp.lt.s32.totalorder %s10, 3
      %p146 = pnand %p144, %p145
      %p147 = pneg %p146
      // Predicated region
      $region29: #{resnet50_size_forward.5} parent=5 // pred_check
        _
      $region30: #{resnet50_size_forward.5} parent=5 // pred_check_branch
        %149 = sbr.rel (%p146) target = $region32
      $region31: #{resnet50_size_forward.5} parent=5 // pred_region
        %s150 = ssub.s32 %s10, 1
        %s151 = smul.u32 64, %s15
        %p152 = scmp.lt.s32.totalorder %s151, 127
        %s153 = scalar_select %p152, %s151, 127
        %s154 = smul.addr %s153, 2
        %s155 = scalar_lea.vmem %s0, %s154
        %p156 = pneg %p36
        %p157 = pneg %p33
        %s158 = smul.u32 1024, %s15
        %p159 = scmp.lt.s32.totalorder %s158, 2047
        %s160 = scalar_select %p159, %s158, 2047
        %s161 = smul.addr %s160, 4
        %s162 = scalar_lea.vmem %s1, %s161
        %p163 = pneg %p62
        %p164 = pneg %p59
        %p165 = pneg %p83
        %p166 = pneg %p80
        %p167 = pneg %p104
        %p168 = pneg %p101
        %s169 = smul.u32 64, %s15
        %p170 = scmp.lt.s32.totalorder %s169, 127
        %s171 = scalar_select %p170, %s169, 127
        %s172 = smul.addr %s171, 2
        %s173 = scalar_lea.vmem %s0, %s172
        %s174 = smul.u32 64, %s15
        %s175 = smul.u32 1024, %s15
        %p176 = scmp.lt.s32.totalorder %s175, 2047
        %s177 = scalar_select %p176, %s175, 2047
        %s178 = smul.addr %s177, 4
        %s179 = scalar_lea.vmem %s1, %s178
        %s180 = smul.u32 1024, %s15
        %p182 = scmp.eq.s32.totalorder %s15, 0
        // Predicated region
        $region33: #{resnet50_size_forward.5} parent=31 // pred_check
          %p183 = pneg %p182
        $region34: #{resnet50_size_forward.5} parent=31 // pred_check_branch
          %185 = sbr.rel (%p183) target = $region36
        $region35: #{resnet50_size_forward.5} parent=31 // pred_region
          %vm186 = vcmask 254976
          %187 = vst.msk [vmem:[#allocation2] sm:$0x3] %vm186, 0.0
        $region36: #{resnet50_size_forward.5} parent=31 // pred_fallthru
          _
        %v188 = vld [vmem:[#allocation2] sm:$0x3]
        %v189 = vld [vmem:[%s173] sm:$0xff]
        %v190 = vld [vmem:[%s173 + $0x8] sm:$0xff]
        %v191 = vld [vmem:[%s173 + $0x10] sm:$0xff]
        %v192 = vld [vmem:[%s173 + $0x18] sm:$0xff]
        %v193 = vld [vmem:[%s173 + $0x20] sm:$0xff]
        %v194 = vld [vmem:[%s173 + $0x28] sm:$0xff]
        %v195 = vld [vmem:[%s173 + $0x30] sm:$0xff]
        %v196 = vld [vmem:[%s173 + $0x38] sm:$0xff]
        %v197 = vld [vmem:[%s173 + $0x40] sm:$0xff]
        %v198 = vld [vmem:[%s173 + $0x48] sm:$0xff]
        %v199 = vld [vmem:[%s173 + $0x50] sm:$0xff]
        %v200 = vld [vmem:[%s173 + $0x58] sm:$0xff]
        %v201 = vld [vmem:[%s173 + $0x60] sm:$0xff]
        %v202 = vld [vmem:[%s173 + $0x68] sm:$0xff]
        %v203 = vld [vmem:[%s173 + $0x70] sm:$0xff]
        %v204 = vld [vmem:[%s173 + $0x78] sm:$0xff]
        %v221 = vcombine.high %v189, %v189
        %v223 = vunpack.c.l.s4 1983009808
        %v224 = vunpack.c.0.s8 %v223
        %v225 = vlaneseq
        %v226 = vshrl.u32 %v225, 7
        %v227 = vsub.s32 %v224, %v226
        %v228 = vrot.slane %v189, %v227
        %v230 = vunpack.c.l.s4 1983009808
        %v231 = vunpack.c.0.s8 %v230
        %v232 = vlaneseq
        %v233 = vshrl.u32 %v232, 7
        %v234 = vsub.s32 %v231, %v233
        %v235 = vrot.slane %v221, %v234
        %v236 = vcombine.high %v228, %v228
        %v237 = vcombine.high %v235, %v235
        %v238 = vcombine.high %v190, %v190
        %v240 = vunpack.c.l.s4 1983009808
        %v241 = vunpack.c.0.s8 %v240
        %v242 = vlaneseq
        %v243 = vshrl.u32 %v242, 7
        %v244 = vsub.s32 %v241, %v243
        %v245 = vrot.slane %v190, %v244
        %v247 = vunpack.c.l.s4 1983009808
        %v248 = vunpack.c.0.s8 %v247
        %v249 = vlaneseq
        %v250 = vshrl.u32 %v249, 7
        %v251 = vsub.s32 %v248, %v250
        %v252 = vrot.slane %v238, %v251
        %v253 = vcombine.high %v245, %v245
        %v254 = vcombine.high %v252, %v252
        %v255 = vcombine.high %v191, %v191
        %v257 = vunpack.c.l.s4 1983009808
        %v258 = vunpack.c.0.s8 %v257
        %v259 = vlaneseq
        %v260 = vshrl.u32 %v259, 7
        %v261 = vsub.s32 %v258, %v260
        %v262 = vrot.slane %v191, %v261
        %v264 = vunpack.c.l.s4 1983009808
        %v265 = vunpack.c.0.s8 %v264
        %v266 = vlaneseq
        %v267 = vshrl.u32 %v266, 7
        %v268 = vsub.s32 %v265, %v267
        %v269 = vrot.slane %v255, %v268
        %v270 = vcombine.high %v262, %v262
        %v271 = vcombine.high %v269, %v269
        %v272 = vcombine.high %v192, %v192
        %v274 = vunpack.c.l.s4 1983009808
        %v275 = vunpack.c.0.s8 %v274
        %v276 = vlaneseq
        %v277 = vshrl.u32 %v276, 7
        %v278 = vsub.s32 %v275, %v277
        %v279 = vrot.slane %v192, %v278
        %v281 = vunpack.c.l.s4 1983009808
        %v282 = vunpack.c.0.s8 %v281
        %v283 = vlaneseq
        %v284 = vshrl.u32 %v283, 7
        %v285 = vsub.s32 %v282, %v284
        %v286 = vrot.slane %v272, %v285
        %v287 = vcombine.high %v279, %v279
        %v288 = vcombine.high %v286, %v286
        %v289 = vcombine.high %v193, %v193
        %v291 = vunpack.c.l.s4 1983009808
        %v292 = vunpack.c.0.s8 %v291
        %v293 = vlaneseq
        %v294 = vshrl.u32 %v293, 7
        %v295 = vsub.s32 %v292, %v294
        %v296 = vrot.slane %v193, %v295
        %v298 = vunpack.c.l.s4 1983009808
        %v299 = vunpack.c.0.s8 %v298
        %v300 = vlaneseq
        %v301 = vshrl.u32 %v300, 7
        %v302 = vsub.s32 %v299, %v301
        %v303 = vrot.slane %v289, %v302
        %v304 = vcombine.high %v296, %v296
        %v305 = vcombine.high %v303, %v303
        %v306 = vcombine.high %v194, %v194
        %v308 = vunpack.c.l.s4 1983009808
        %v309 = vunpack.c.0.s8 %v308
        %v310 = vlaneseq
        %v311 = vshrl.u32 %v310, 7
        %v312 = vsub.s32 %v309, %v311
        %v313 = vrot.slane %v194, %v312
        %v315 = vunpack.c.l.s4 1983009808
        %v316 = vunpack.c.0.s8 %v315
        %v317 = vlaneseq
        %v318 = vshrl.u32 %v317, 7
        %v319 = vsub.s32 %v316, %v318
        %v320 = vrot.slane %v306, %v319
        %v321 = vcombine.high %v313, %v313
        %v322 = vcombine.high %v320, %v320
        %v323 = vcombine.high %v195, %v195
        %v325 = vunpack.c.l.s4 1983009808
        %v326 = vunpack.c.0.s8 %v325
        %v327 = vlaneseq
        %v328 = vshrl.u32 %v327, 7
        %v329 = vsub.s32 %v326, %v328
        %v330 = vrot.slane %v195, %v329
        %v332 = vunpack.c.l.s4 1983009808
        %v333 = vunpack.c.0.s8 %v332
        %v334 = vlaneseq
        %v335 = vshrl.u32 %v334, 7
        %v336 = vsub.s32 %v333, %v335
        %v337 = vrot.slane %v323, %v336
        %v338 = vcombine.high %v330, %v330
        %v339 = vcombine.high %v337, %v337
        %v340 = vcombine.high %v196, %v196
        %v342 = vunpack.c.l.s4 1983009808
        %v343 = vunpack.c.0.s8 %v342
        %v344 = vlaneseq
        %v345 = vshrl.u32 %v344, 7
        %v346 = vsub.s32 %v343, %v345
        %v347 = vrot.slane %v196, %v346
        %v349 = vunpack.c.l.s4 1983009808
        %v350 = vunpack.c.0.s8 %v349
        %v351 = vlaneseq
        %v352 = vshrl.u32 %v351, 7
        %v353 = vsub.s32 %v350, %v352
        %v354 = vrot.slane %v340, %v353
        %v355 = vcombine.high %v347, %v347
        %v356 = vcombine.high %v354, %v354
        %v357 = vcombine.high %v197, %v197
        %v359 = vunpack.c.l.s4 1983009808
        %v360 = vunpack.c.0.s8 %v359
        %v361 = vlaneseq
        %v362 = vshrl.u32 %v361, 7
        %v363 = vsub.s32 %v360, %v362
        %v364 = vrot.slane %v197, %v363
        %v366 = vunpack.c.l.s4 1983009808
        %v367 = vunpack.c.0.s8 %v366
        %v368 = vlaneseq
        %v369 = vshrl.u32 %v368, 7
        %v370 = vsub.s32 %v367, %v369
        %v371 = vrot.slane %v357, %v370
        %v372 = vcombine.high %v364, %v364
        %v373 = vcombine.high %v371, %v371
        %v374 = vcombine.high %v198, %v198
        %v376 = vunpack.c.l.s4 1983009808
        %v377 = vunpack.c.0.s8 %v376
        %v378 = vlaneseq
        %v379 = vshrl.u32 %v378, 7
        %v380 = vsub.s32 %v377, %v379
        %v381 = vrot.slane %v198, %v380
        %v383 = vunpack.c.l.s4 1983009808
        %v384 = vunpack.c.0.s8 %v383
        %v385 = vlaneseq
        %v386 = vshrl.u32 %v385, 7
        %v387 = vsub.s32 %v384, %v386
        %v388 = vrot.slane %v374, %v387
        %v389 = vcombine.high %v381, %v381
        %v390 = vcombine.high %v388, %v388
        %v391 = vcombine.high %v199, %v199
        %v393 = vunpack.c.l.s4 1983009808
        %v394 = vunpack.c.0.s8 %v393
        %v395 = vlaneseq
        %v396 = vshrl.u32 %v395, 7
        %v397 = vsub.s32 %v394, %v396
        %v398 = vrot.slane %v199, %v397
        %v400 = vunpack.c.l.s4 1983009808
        %v401 = vunpack.c.0.s8 %v400
        %v402 = vlaneseq
        %v403 = vshrl.u32 %v402, 7
        %v404 = vsub.s32 %v401, %v403
        %v405 = vrot.slane %v391, %v404
        %v406 = vcombine.high %v398, %v398
        %v407 = vcombine.high %v405, %v405
        %v408 = vcombine.high %v200, %v200
        %v410 = vunpack.c.l.s4 1983009808
        %v411 = vunpack.c.0.s8 %v410
        %v412 = vlaneseq
        %v413 = vshrl.u32 %v412, 7
        %v414 = vsub.s32 %v411, %v413
        %v415 = vrot.slane %v200, %v414
        %v417 = vunpack.c.l.s4 1983009808
        %v418 = vunpack.c.0.s8 %v417
        %v419 = vlaneseq
        %v420 = vshrl.u32 %v419, 7
        %v421 = vsub.s32 %v418, %v420
        %v422 = vrot.slane %v408, %v421
        %v423 = vcombine.high %v415, %v415
        %v424 = vcombine.high %v422, %v422
        %v425 = vcombine.high %v201, %v201
        %v427 = vunpack.c.l.s4 1983009808
        %v428 = vunpack.c.0.s8 %v427
        %v429 = vlaneseq
        %v430 = vshrl.u32 %v429, 7
        %v431 = vsub.s32 %v428, %v430
        %v432 = vrot.slane %v201, %v431
        %v434 = vunpack.c.l.s4 1983009808
        %v435 = vunpack.c.0.s8 %v434
        %v436 = vlaneseq
        %v437 = vshrl.u32 %v436, 7
        %v438 = vsub.s32 %v435, %v437
        %v439 = vrot.slane %v425, %v438
        %v440 = vcombine.high %v432, %v432
        %v441 = vcombine.high %v439, %v439
        %v442 = vcombine.high %v202, %v202
        %v444 = vunpack.c.l.s4 1983009808
        %v445 = vunpack.c.0.s8 %v444
        %v446 = vlaneseq
        %v447 = vshrl.u32 %v446, 7
        %v448 = vsub.s32 %v445, %v447
        %v449 = vrot.slane %v202, %v448
        %v451 = vunpack.c.l.s4 1983009808
        %v452 = vunpack.c.0.s8 %v451
        %v453 = vlaneseq
        %v454 = vshrl.u32 %v453, 7
        %v455 = vsub.s32 %v452, %v454
        %v456 = vrot.slane %v442, %v455
        %v457 = vcombine.high %v449, %v449
        %v458 = vcombine.high %v456, %v456
        %v459 = vcombine.high %v203, %v203
        %v461 = vunpack.c.l.s4 1983009808
        %v462 = vunpack.c.0.s8 %v461
        %v463 = vlaneseq
        %v464 = vshrl.u32 %v463, 7
        %v465 = vsub.s32 %v462, %v464
        %v466 = vrot.slane %v203, %v465
        %v468 = vunpack.c.l.s4 1983009808
        %v469 = vunpack.c.0.s8 %v468
        %v470 = vlaneseq
        %v471 = vshrl.u32 %v470, 7
        %v472 = vsub.s32 %v469, %v471
        %v473 = vrot.slane %v459, %v472
        %v474 = vcombine.high %v466, %v466
        %v475 = vcombine.high %v473, %v473
        %v476 = vcombine.high %v204, %v204
        %v478 = vunpack.c.l.s4 1983009808
        %v479 = vunpack.c.0.s8 %v478
        %v480 = vlaneseq
        %v481 = vshrl.u32 %v480, 7
        %v482 = vsub.s32 %v479, %v481
        %v483 = vrot.slane %v204, %v482
        %v485 = vunpack.c.l.s4 1983009808
        %v486 = vunpack.c.0.s8 %v485
        %v487 = vlaneseq
        %v488 = vshrl.u32 %v487, 7
        %v489 = vsub.s32 %v486, %v488
        %v490 = vrot.slane %v476, %v489
        %v491 = vcombine.high %v483, %v483
        %v492 = vcombine.high %v490, %v490
        %v557 = vpack.c.bf16 %v228, %v228
        %v558 = vpack.c.bf16 %v236, %v236
        %v559 = vpack.c.bf16 %v235, %v235
        %v560 = vpack.c.bf16 %v237, %v237
        %v561 = vpack.c.bf16 %v245, %v245
        %v562 = vpack.c.bf16 %v253, %v253
        %v563 = vpack.c.bf16 %v252, %v252
        %v564 = vpack.c.bf16 %v254, %v254
        %v565 = vpack.c.bf16 %v262, %v262
        %v566 = vpack.c.bf16 %v270, %v270
        %v567 = vpack.c.bf16 %v269, %v269
        %v568 = vpack.c.bf16 %v271, %v271
        %v569 = vpack.c.bf16 %v279, %v279
        %v570 = vpack.c.bf16 %v287, %v287
        %v571 = vpack.c.bf16 %v286, %v286
        %v572 = vpack.c.bf16 %v288, %v288
        %v573 = vpack.c.bf16 %v296, %v296
        %v574 = vpack.c.bf16 %v304, %v304
        %v575 = vpack.c.bf16 %v303, %v303
        %v576 = vpack.c.bf16 %v305, %v305
        %v577 = vpack.c.bf16 %v313, %v313
        %v578 = vpack.c.bf16 %v321, %v321
        %v579 = vpack.c.bf16 %v320, %v320
        %v580 = vpack.c.bf16 %v322, %v322
        %v581 = vpack.c.bf16 %v330, %v330
        %v582 = vpack.c.bf16 %v338, %v338
        %v583 = vpack.c.bf16 %v337, %v337
        %v584 = vpack.c.bf16 %v339, %v339
        %v585 = vpack.c.bf16 %v347, %v347
        %v586 = vpack.c.bf16 %v355, %v355
        %v587 = vpack.c.bf16 %v354, %v354
        %v588 = vpack.c.bf16 %v356, %v356
        %v589 = vpack.c.bf16 %v364, %v364
        %v590 = vpack.c.bf16 %v372, %v372
        %v591 = vpack.c.bf16 %v371, %v371
        %v592 = vpack.c.bf16 %v373, %v373
        %v593 = vpack.c.bf16 %v381, %v381
        %v594 = vpack.c.bf16 %v389, %v389
        %v595 = vpack.c.bf16 %v388, %v388
        %v596 = vpack.c.bf16 %v390, %v390
        %v597 = vpack.c.bf16 %v398, %v398
        %v598 = vpack.c.bf16 %v406, %v406
        %v599 = vpack.c.bf16 %v405, %v405
        %v600 = vpack.c.bf16 %v407, %v407
        %v601 = vpack.c.bf16 %v415, %v415
        %v602 = vpack.c.bf16 %v423, %v423
        %v603 = vpack.c.bf16 %v422, %v422
        %v604 = vpack.c.bf16 %v424, %v424
        %v605 = vpack.c.bf16 %v432, %v432
        %v606 = vpack.c.bf16 %v440, %v440
        %v607 = vpack.c.bf16 %v439, %v439
        %v608 = vpack.c.bf16 %v441, %v441
        %v609 = vpack.c.bf16 %v449, %v449
        %v610 = vpack.c.bf16 %v457, %v457
        %v611 = vpack.c.bf16 %v456, %v456
        %v612 = vpack.c.bf16 %v458, %v458
        %v613 = vpack.c.bf16 %v466, %v466
        %v614 = vpack.c.bf16 %v474, %v474
        %v615 = vpack.c.bf16 %v473, %v473
        %v616 = vpack.c.bf16 %v475, %v475
        %v617 = vpack.c.bf16 %v483, %v483
        %v618 = vpack.c.bf16 %v491, %v491
        %v619 = vpack.c.bf16 %v490, %v490
        %v620 = vpack.c.bf16 %v492, %v492
        %v621 = vld [vmem:[%s179] sm:$0xf]
        %v622 = vld [vmem:[%s179 + $0x4] sm:$0xf]
        %v623 = vld [vmem:[%s179 + $0x8] sm:$0xf]
        %v624 = vld [vmem:[%s179 + $0xc] sm:$0xf]
        %v625 = vld [vmem:[%s179 + $0x10] sm:$0xf]
        %v626 = vld [vmem:[%s179 + $0x14] sm:$0xf]
        %v627 = vld [vmem:[%s179 + $0x18] sm:$0xf]
        %v628 = vld [vmem:[%s179 + $0x1c] sm:$0xf]
        %v629 = vld [vmem:[%s179 + $0x20] sm:$0xf]
        %v630 = vld [vmem:[%s179 + $0x24] sm:$0xf]
        %v631 = vld [vmem:[%s179 + $0x28] sm:$0xf]
        %v632 = vld [vmem:[%s179 + $0x2c] sm:$0xf]
        %v633 = vld [vmem:[%s179 + $0x30] sm:$0xf]
        %v634 = vld [vmem:[%s179 + $0x34] sm:$0xf]
        %v635 = vld [vmem:[%s179 + $0x38] sm:$0xf]
        %v636 = vld [vmem:[%s179 + $0x3c] sm:$0xf]
        %v637 = vld [vmem:[%s179 + $0x40] sm:$0xf]
        %v638 = vld [vmem:[%s179 + $0x44] sm:$0xf]
        %v639 = vld [vmem:[%s179 + $0x48] sm:$0xf]
        %v640 = vld [vmem:[%s179 + $0x4c] sm:$0xf]
        %v641 = vld [vmem:[%s179 + $0x50] sm:$0xf]
        %v642 = vld [vmem:[%s179 + $0x54] sm:$0xf]
        %v643 = vld [vmem:[%s179 + $0x58] sm:$0xf]
        %v644 = vld [vmem:[%s179 + $0x5c] sm:$0xf]
        %v645 = vld [vmem:[%s179 + $0x60] sm:$0xf]
        %v646 = vld [vmem:[%s179 + $0x64] sm:$0xf]
        %v647 = vld [vmem:[%s179 + $0x68] sm:$0xf]
        %v648 = vld [vmem:[%s179 + $0x6c] sm:$0xf]
        %v649 = vld [vmem:[%s179 + $0x70] sm:$0xf]
        %v650 = vld [vmem:[%s179 + $0x74] sm:$0xf]
        %v651 = vld [vmem:[%s179 + $0x78] sm:$0xf]
        %v652 = vld [vmem:[%s179 + $0x7c] sm:$0xf]
        %v653 = vld [vmem:[%s179 + $0x80] sm:$0xf]
        %v654 = vld [vmem:[%s179 + $0x84] sm:$0xf]
        %v655 = vld [vmem:[%s179 + $0x88] sm:$0xf]
        %v656 = vld [vmem:[%s179 + $0x8c] sm:$0xf]
        %v657 = vld [vmem:[%s179 + $0x90] sm:$0xf]
        %v658 = vld [vmem:[%s179 + $0x94] sm:$0xf]
        %v659 = vld [vmem:[%s179 + $0x98] sm:$0xf]
        %v660 = vld [vmem:[%s179 + $0x9c] sm:$0xf]
        %v661 = vld [vmem:[%s179 + $0xa0] sm:$0xf]
        %v662 = vld [vmem:[%s179 + $0xa4] sm:$0xf]
        %v663 = vld [vmem:[%s179 + $0xa8] sm:$0xf]
        %v664 = vld [vmem:[%s179 + $0xac] sm:$0xf]
        %v665 = vld [vmem:[%s179 + $0xb0] sm:$0xf]
        %v666 = vld [vmem:[%s179 + $0xb4] sm:$0xf]
        %v667 = vld [vmem:[%s179 + $0xb8] sm:$0xf]
        %v668 = vld [vmem:[%s179 + $0xbc] sm:$0xf]
        %v669 = vld [vmem:[%s179 + $0xc0] sm:$0xf]
        %v670 = vld [vmem:[%s179 + $0xc4] sm:$0xf]
        %v671 = vld [vmem:[%s179 + $0xc8] sm:$0xf]
        %v672 = vld [vmem:[%s179 + $0xcc] sm:$0xf]
        %v673 = vld [vmem:[%s179 + $0xd0] sm:$0xf]
        %v674 = vld [vmem:[%s179 + $0xd4] sm:$0xf]
        %v675 = vld [vmem:[%s179 + $0xd8] sm:$0xf]
        %v676 = vld [vmem:[%s179 + $0xdc] sm:$0xf]
        %v677 = vld [vmem:[%s179 + $0xe0] sm:$0xf]
        %v678 = vld [vmem:[%s179 + $0xe4] sm:$0xf]
        %v679 = vld [vmem:[%s179 + $0xe8] sm:$0xf]
        %v680 = vld [vmem:[%s179 + $0xec] sm:$0xf]
        %v681 = vld [vmem:[%s179 + $0xf0] sm:$0xf]
        %v682 = vld [vmem:[%s179 + $0xf4] sm:$0xf]
        %v683 = vld [vmem:[%s179 + $0xf8] sm:$0xf]
        %v684 = vld [vmem:[%s179 + $0xfc] sm:$0xf]
        %v685 = vld [vmem:[%s179 + $0x100] sm:$0xf]
        %v686 = vld [vmem:[%s179 + $0x104] sm:$0xf]
        %v687 = vld [vmem:[%s179 + $0x108] sm:$0xf]
        %v688 = vld [vmem:[%s179 + $0x10c] sm:$0xf]
        %v689 = vld [vmem:[%s179 + $0x110] sm:$0xf]
        %v690 = vld [vmem:[%s179 + $0x114] sm:$0xf]
        %v691 = vld [vmem:[%s179 + $0x118] sm:$0xf]
        %v692 = vld [vmem:[%s179 + $0x11c] sm:$0xf]
        %v693 = vld [vmem:[%s179 + $0x120] sm:$0xf]
        %v694 = vld [vmem:[%s179 + $0x124] sm:$0xf]
        %v695 = vld [vmem:[%s179 + $0x128] sm:$0xf]
        %v696 = vld [vmem:[%s179 + $0x12c] sm:$0xf]
        %v697 = vld [vmem:[%s179 + $0x130] sm:$0xf]
        %v698 = vld [vmem:[%s179 + $0x134] sm:$0xf]
        %v699 = vld [vmem:[%s179 + $0x138] sm:$0xf]
        %v700 = vld [vmem:[%s179 + $0x13c] sm:$0xf]
        %v701 = vld [vmem:[%s179 + $0x140] sm:$0xf]
        %v702 = vld [vmem:[%s179 + $0x144] sm:$0xf]
        %v703 = vld [vmem:[%s179 + $0x148] sm:$0xf]
        %v704 = vld [vmem:[%s179 + $0x14c] sm:$0xf]
        %v705 = vld [vmem:[%s179 + $0x150] sm:$0xf]
        %v706 = vld [vmem:[%s179 + $0x154] sm:$0xf]
        %v707 = vld [vmem:[%s179 + $0x158] sm:$0xf]
        %v708 = vld [vmem:[%s179 + $0x15c] sm:$0xf]
        %v709 = vld [vmem:[%s179 + $0x160] sm:$0xf]
        %v710 = vld [vmem:[%s179 + $0x164] sm:$0xf]
        %v711 = vld [vmem:[%s179 + $0x168] sm:$0xf]
        %v712 = vld [vmem:[%s179 + $0x16c] sm:$0xf]
        %v713 = vld [vmem:[%s179 + $0x170] sm:$0xf]
        %v714 = vld [vmem:[%s179 + $0x174] sm:$0xf]
        %v715 = vld [vmem:[%s179 + $0x178] sm:$0xf]
        %v716 = vld [vmem:[%s179 + $0x17c] sm:$0xf]
        %v717 = vld [vmem:[%s179 + $0x180] sm:$0xf]
        %v718 = vld [vmem:[%s179 + $0x184] sm:$0xf]
        %v719 = vld [vmem:[%s179 + $0x188] sm:$0xf]
        %v720 = vld [vmem:[%s179 + $0x18c] sm:$0xf]
        %v721 = vld [vmem:[%s179 + $0x190] sm:$0xf]
        %v722 = vld [vmem:[%s179 + $0x194] sm:$0xf]
        %v723 = vld [vmem:[%s179 + $0x198] sm:$0xf]
        %v724 = vld [vmem:[%s179 + $0x19c] sm:$0xf]
        %v725 = vld [vmem:[%s179 + $0x1a0] sm:$0xf]
        %v726 = vld [vmem:[%s179 + $0x1a4] sm:$0xf]
        %v727 = vld [vmem:[%s179 + $0x1a8] sm:$0xf]
        %v728 = vld [vmem:[%s179 + $0x1ac] sm:$0xf]
        %v729 = vld [vmem:[%s179 + $0x1b0] sm:$0xf]
        %v730 = vld [vmem:[%s179 + $0x1b4] sm:$0xf]
        %v731 = vld [vmem:[%s179 + $0x1b8] sm:$0xf]
        %v732 = vld [vmem:[%s179 + $0x1bc] sm:$0xf]
        %v733 = vld [vmem:[%s179 + $0x1c0] sm:$0xf]
        %v734 = vld [vmem:[%s179 + $0x1c4] sm:$0xf]
        %v735 = vld [vmem:[%s179 + $0x1c8] sm:$0xf]
        %v736 = vld [vmem:[%s179 + $0x1cc] sm:$0xf]
        %v737 = vld [vmem:[%s179 + $0x1d0] sm:$0xf]
        %v738 = vld [vmem:[%s179 + $0x1d4] sm:$0xf]
        %v739 = vld [vmem:[%s179 + $0x1d8] sm:$0xf]
        %v740 = vld [vmem:[%s179 + $0x1dc] sm:$0xf]
        %v741 = vld [vmem:[%s179 + $0x1e0] sm:$0xf]
        %v742 = vld [vmem:[%s179 + $0x1e4] sm:$0xf]
        %v743 = vld [vmem:[%s179 + $0x1e8] sm:$0xf]
        %v744 = vld [vmem:[%s179 + $0x1ec] sm:$0xf]
        %v745 = vld [vmem:[%s179 + $0x1f0] sm:$0xf]
        %v746 = vld [vmem:[%s179 + $0x1f4] sm:$0xf]
        %v747 = vld [vmem:[%s179 + $0x1f8] sm:$0xf]
        %v748 = vld [vmem:[%s179 + $0x1fc] sm:$0xf]
        %v749 = vld [vmem:[%s179 + $0x200] sm:$0xf]
        %v750 = vld [vmem:[%s179 + $0x204] sm:$0xf]
        %v751 = vld [vmem:[%s179 + $0x208] sm:$0xf]
        %v752 = vld [vmem:[%s179 + $0x20c] sm:$0xf]
        %v753 = vld [vmem:[%s179 + $0x210] sm:$0xf]
        %v754 = vld [vmem:[%s179 + $0x214] sm:$0xf]
        %v755 = vld [vmem:[%s179 + $0x218] sm:$0xf]
        %v756 = vld [vmem:[%s179 + $0x21c] sm:$0xf]
        %v757 = vld [vmem:[%s179 + $0x220] sm:$0xf]
        %v758 = vld [vmem:[%s179 + $0x224] sm:$0xf]
        %v759 = vld [vmem:[%s179 + $0x228] sm:$0xf]
        %v760 = vld [vmem:[%s179 + $0x22c] sm:$0xf]
        %v761 = vld [vmem:[%s179 + $0x230] sm:$0xf]
        %v762 = vld [vmem:[%s179 + $0x234] sm:$0xf]
        %v763 = vld [vmem:[%s179 + $0x238] sm:$0xf]
        %v764 = vld [vmem:[%s179 + $0x23c] sm:$0xf]
        %v765 = vld [vmem:[%s179 + $0x240] sm:$0xf]
        %v766 = vld [vmem:[%s179 + $0x244] sm:$0xf]
        %v767 = vld [vmem:[%s179 + $0x248] sm:$0xf]
        %v768 = vld [vmem:[%s179 + $0x24c] sm:$0xf]
        %v769 = vld [vmem:[%s179 + $0x250] sm:$0xf]
        %v770 = vld [vmem:[%s179 + $0x254] sm:$0xf]
        %v771 = vld [vmem:[%s179 + $0x258] sm:$0xf]
        %v772 = vld [vmem:[%s179 + $0x25c] sm:$0xf]
        %v773 = vld [vmem:[%s179 + $0x260] sm:$0xf]
        %v774 = vld [vmem:[%s179 + $0x264] sm:$0xf]
        %v775 = vld [vmem:[%s179 + $0x268] sm:$0xf]
        %v776 = vld [vmem:[%s179 + $0x26c] sm:$0xf]
        %v777 = vld [vmem:[%s179 + $0x270] sm:$0xf]
        %v778 = vld [vmem:[%s179 + $0x274] sm:$0xf]
        %v779 = vld [vmem:[%s179 + $0x278] sm:$0xf]
        %v780 = vld [vmem:[%s179 + $0x27c] sm:$0xf]
        %v781 = vld [vmem:[%s179 + $0x280] sm:$0xf]
        %v782 = vld [vmem:[%s179 + $0x284] sm:$0xf]
        %v783 = vld [vmem:[%s179 + $0x288] sm:$0xf]
        %v784 = vld [vmem:[%s179 + $0x28c] sm:$0xf]
        %v785 = vld [vmem:[%s179 + $0x290] sm:$0xf]
        %v786 = vld [vmem:[%s179 + $0x294] sm:$0xf]
        %v787 = vld [vmem:[%s179 + $0x298] sm:$0xf]
        %v788 = vld [vmem:[%s179 + $0x29c] sm:$0xf]
        %v789 = vld [vmem:[%s179 + $0x2a0] sm:$0xf]
        %v790 = vld [vmem:[%s179 + $0x2a4] sm:$0xf]
        %v791 = vld [vmem:[%s179 + $0x2a8] sm:$0xf]
        %v792 = vld [vmem:[%s179 + $0x2ac] sm:$0xf]
        %v793 = vld [vmem:[%s179 + $0x2b0] sm:$0xf]
        %v794 = vld [vmem:[%s179 + $0x2b4] sm:$0xf]
        %v795 = vld [vmem:[%s179 + $0x2b8] sm:$0xf]
        %v796 = vld [vmem:[%s179 + $0x2bc] sm:$0xf]
        %v797 = vld [vmem:[%s179 + $0x2c0] sm:$0xf]
        %v798 = vld [vmem:[%s179 + $0x2c4] sm:$0xf]
        %v799 = vld [vmem:[%s179 + $0x2c8] sm:$0xf]
        %v800 = vld [vmem:[%s179 + $0x2cc] sm:$0xf]
        %v801 = vld [vmem:[%s179 + $0x2d0] sm:$0xf]
        %v802 = vld [vmem:[%s179 + $0x2d4] sm:$0xf]
        %v803 = vld [vmem:[%s179 + $0x2d8] sm:$0xf]
        %v804 = vld [vmem:[%s179 + $0x2dc] sm:$0xf]
        %v805 = vld [vmem:[%s179 + $0x2e0] sm:$0xf]
        %v806 = vld [vmem:[%s179 + $0x2e4] sm:$0xf]
        %v807 = vld [vmem:[%s179 + $0x2e8] sm:$0xf]
        %v808 = vld [vmem:[%s179 + $0x2ec] sm:$0xf]
        %v809 = vld [vmem:[%s179 + $0x2f0] sm:$0xf]
        %v810 = vld [vmem:[%s179 + $0x2f4] sm:$0xf]
        %v811 = vld [vmem:[%s179 + $0x2f8] sm:$0xf]
        %v812 = vld [vmem:[%s179 + $0x2fc] sm:$0xf]
        %v813 = vld [vmem:[%s179 + $0x300] sm:$0xf]
        %v814 = vld [vmem:[%s179 + $0x304] sm:$0xf]
        %v815 = vld [vmem:[%s179 + $0x308] sm:$0xf]
        %v816 = vld [vmem:[%s179 + $0x30c] sm:$0xf]
        %v817 = vld [vmem:[%s179 + $0x310] sm:$0xf]
        %v818 = vld [vmem:[%s179 + $0x314] sm:$0xf]
        %v819 = vld [vmem:[%s179 + $0x318] sm:$0xf]
        %v820 = vld [vmem:[%s179 + $0x31c] sm:$0xf]
        %v821 = vld [vmem:[%s179 + $0x320] sm:$0xf]
        %v822 = vld [vmem:[%s179 + $0x324] sm:$0xf]
        %v823 = vld [vmem:[%s179 + $0x328] sm:$0xf]
        %v824 = vld [vmem:[%s179 + $0x32c] sm:$0xf]
        %v825 = vld [vmem:[%s179 + $0x330] sm:$0xf]
        %v826 = vld [vmem:[%s179 + $0x334] sm:$0xf]
        %v827 = vld [vmem:[%s179 + $0x338] sm:$0xf]
        %v828 = vld [vmem:[%s179 + $0x33c] sm:$0xf]
        %v829 = vld [vmem:[%s179 + $0x340] sm:$0xf]
        %v830 = vld [vmem:[%s179 + $0x344] sm:$0xf]
        %v831 = vld [vmem:[%s179 + $0x348] sm:$0xf]
        %v832 = vld [vmem:[%s179 + $0x34c] sm:$0xf]
        %v833 = vld [vmem:[%s179 + $0x350] sm:$0xf]
        %v834 = vld [vmem:[%s179 + $0x354] sm:$0xf]
        %v835 = vld [vmem:[%s179 + $0x358] sm:$0xf]
        %v836 = vld [vmem:[%s179 + $0x35c] sm:$0xf]
        %v837 = vld [vmem:[%s179 + $0x360] sm:$0xf]
        %v838 = vld [vmem:[%s179 + $0x364] sm:$0xf]
        %v839 = vld [vmem:[%s179 + $0x368] sm:$0xf]
        %v840 = vld [vmem:[%s179 + $0x36c] sm:$0xf]
        %v841 = vld [vmem:[%s179 + $0x370] sm:$0xf]
        %v842 = vld [vmem:[%s179 + $0x374] sm:$0xf]
        %v843 = vld [vmem:[%s179 + $0x378] sm:$0xf]
        %v844 = vld [vmem:[%s179 + $0x37c] sm:$0xf]
        %v845 = vld [vmem:[%s179 + $0x380] sm:$0xf]
        %v846 = vld [vmem:[%s179 + $0x384] sm:$0xf]
        %v847 = vld [vmem:[%s179 + $0x388] sm:$0xf]
        %v848 = vld [vmem:[%s179 + $0x38c] sm:$0xf]
        %v849 = vld [vmem:[%s179 + $0x390] sm:$0xf]
        %v850 = vld [vmem:[%s179 + $0x394] sm:$0xf]
        %v851 = vld [vmem:[%s179 + $0x398] sm:$0xf]
        %v852 = vld [vmem:[%s179 + $0x39c] sm:$0xf]
        %v853 = vld [vmem:[%s179 + $0x3a0] sm:$0xf]
        %v854 = vld [vmem:[%s179 + $0x3a4] sm:$0xf]
        %v855 = vld [vmem:[%s179 + $0x3a8] sm:$0xf]
        %v856 = vld [vmem:[%s179 + $0x3ac] sm:$0xf]
        %v857 = vld [vmem:[%s179 + $0x3b0] sm:$0xf]
        %v858 = vld [vmem:[%s179 + $0x3b4] sm:$0xf]
        %v859 = vld [vmem:[%s179 + $0x3b8] sm:$0xf]
        %v860 = vld [vmem:[%s179 + $0x3bc] sm:$0xf]
        %v861 = vld [vmem:[%s179 + $0x3c0] sm:$0xf]
        %v862 = vld [vmem:[%s179 + $0x3c4] sm:$0xf]
        %v863 = vld [vmem:[%s179 + $0x3c8] sm:$0xf]
        %v864 = vld [vmem:[%s179 + $0x3cc] sm:$0xf]
        %v865 = vld [vmem:[%s179 + $0x3d0] sm:$0xf]
        %v866 = vld [vmem:[%s179 + $0x3d4] sm:$0xf]
        %v867 = vld [vmem:[%s179 + $0x3d8] sm:$0xf]
        %v868 = vld [vmem:[%s179 + $0x3dc] sm:$0xf]
        %v869 = vld [vmem:[%s179 + $0x3e0] sm:$0xf]
        %v870 = vld [vmem:[%s179 + $0x3e4] sm:$0xf]
        %v871 = vld [vmem:[%s179 + $0x3e8] sm:$0xf]
        %v872 = vld [vmem:[%s179 + $0x3ec] sm:$0xf]
        %v873 = vld [vmem:[%s179 + $0x3f0] sm:$0xf]
        %v874 = vld [vmem:[%s179 + $0x3f4] sm:$0xf]
        %v875 = vld [vmem:[%s179 + $0x3f8] sm:$0xf]
        %v876 = vld [vmem:[%s179 + $0x3fc] sm:$0xf]
        %v877 = vld [vmem:[%s179 + $0x400] sm:$0xf]
        %v878 = vld [vmem:[%s179 + $0x404] sm:$0xf]
        %v879 = vld [vmem:[%s179 + $0x408] sm:$0xf]
        %v880 = vld [vmem:[%s179 + $0x40c] sm:$0xf]
        %v881 = vld [vmem:[%s179 + $0x410] sm:$0xf]
        %v882 = vld [vmem:[%s179 + $0x414] sm:$0xf]
        %v883 = vld [vmem:[%s179 + $0x418] sm:$0xf]
        %v884 = vld [vmem:[%s179 + $0x41c] sm:$0xf]
        %v885 = vld [vmem:[%s179 + $0x420] sm:$0xf]
        %v886 = vld [vmem:[%s179 + $0x424] sm:$0xf]
        %v887 = vld [vmem:[%s179 + $0x428] sm:$0xf]
        %v888 = vld [vmem:[%s179 + $0x42c] sm:$0xf]
        %v889 = vld [vmem:[%s179 + $0x430] sm:$0xf]
        %v890 = vld [vmem:[%s179 + $0x434] sm:$0xf]
        %v891 = vld [vmem:[%s179 + $0x438] sm:$0xf]
        %v892 = vld [vmem:[%s179 + $0x43c] sm:$0xf]
        %v893 = vld [vmem:[%s179 + $0x440] sm:$0xf]
        %v894 = vld [vmem:[%s179 + $0x444] sm:$0xf]
        %v895 = vld [vmem:[%s179 + $0x448] sm:$0xf]
        %v896 = vld [vmem:[%s179 + $0x44c] sm:$0xf]
        %v897 = vld [vmem:[%s179 + $0x450] sm:$0xf]
        %v898 = vld [vmem:[%s179 + $0x454] sm:$0xf]
        %v899 = vld [vmem:[%s179 + $0x458] sm:$0xf]
        %v900 = vld [vmem:[%s179 + $0x45c] sm:$0xf]
        %v901 = vld [vmem:[%s179 + $0x460] sm:$0xf]
        %v902 = vld [vmem:[%s179 + $0x464] sm:$0xf]
        %v903 = vld [vmem:[%s179 + $0x468] sm:$0xf]
        %v904 = vld [vmem:[%s179 + $0x46c] sm:$0xf]
        %v905 = vld [vmem:[%s179 + $0x470] sm:$0xf]
        %v906 = vld [vmem:[%s179 + $0x474] sm:$0xf]
        %v907 = vld [vmem:[%s179 + $0x478] sm:$0xf]
        %v908 = vld [vmem:[%s179 + $0x47c] sm:$0xf]
        %v909 = vld [vmem:[%s179 + $0x480] sm:$0xf]
        %v910 = vld [vmem:[%s179 + $0x484] sm:$0xf]
        %v911 = vld [vmem:[%s179 + $0x488] sm:$0xf]
        %v912 = vld [vmem:[%s179 + $0x48c] sm:$0xf]
        %v913 = vld [vmem:[%s179 + $0x490] sm:$0xf]
        %v914 = vld [vmem:[%s179 + $0x494] sm:$0xf]
        %v915 = vld [vmem:[%s179 + $0x498] sm:$0xf]
        %v916 = vld [vmem:[%s179 + $0x49c] sm:$0xf]
        %v917 = vld [vmem:[%s179 + $0x4a0] sm:$0xf]
        %v918 = vld [vmem:[%s179 + $0x4a4] sm:$0xf]
        %v919 = vld [vmem:[%s179 + $0x4a8] sm:$0xf]
        %v920 = vld [vmem:[%s179 + $0x4ac] sm:$0xf]
        %v921 = vld [vmem:[%s179 + $0x4b0] sm:$0xf]
        %v922 = vld [vmem:[%s179 + $0x4b4] sm:$0xf]
        %v923 = vld [vmem:[%s179 + $0x4b8] sm:$0xf]
        %v924 = vld [vmem:[%s179 + $0x4bc] sm:$0xf]
        %v925 = vld [vmem:[%s179 + $0x4c0] sm:$0xf]
        %v926 = vld [vmem:[%s179 + $0x4c4] sm:$0xf]
        %v927 = vld [vmem:[%s179 + $0x4c8] sm:$0xf]
        %v928 = vld [vmem:[%s179 + $0x4cc] sm:$0xf]
        %v929 = vld [vmem:[%s179 + $0x4d0] sm:$0xf]
        %v930 = vld [vmem:[%s179 + $0x4d4] sm:$0xf]
        %v931 = vld [vmem:[%s179 + $0x4d8] sm:$0xf]
        %v932 = vld [vmem:[%s179 + $0x4dc] sm:$0xf]
        %v933 = vld [vmem:[%s179 + $0x4e0] sm:$0xf]
        %v934 = vld [vmem:[%s179 + $0x4e4] sm:$0xf]
        %v935 = vld [vmem:[%s179 + $0x4e8] sm:$0xf]
        %v936 = vld [vmem:[%s179 + $0x4ec] sm:$0xf]
        %v937 = vld [vmem:[%s179 + $0x4f0] sm:$0xf]
        %v938 = vld [vmem:[%s179 + $0x4f4] sm:$0xf]
        %v939 = vld [vmem:[%s179 + $0x4f8] sm:$0xf]
        %v940 = vld [vmem:[%s179 + $0x4fc] sm:$0xf]
        %v941 = vld [vmem:[%s179 + $0x500] sm:$0xf]
        %v942 = vld [vmem:[%s179 + $0x504] sm:$0xf]
        %v943 = vld [vmem:[%s179 + $0x508] sm:$0xf]
        %v944 = vld [vmem:[%s179 + $0x50c] sm:$0xf]
        %v945 = vld [vmem:[%s179 + $0x510] sm:$0xf]
        %v946 = vld [vmem:[%s179 + $0x514] sm:$0xf]
        %v947 = vld [vmem:[%s179 + $0x518] sm:$0xf]
        %v948 = vld [vmem:[%s179 + $0x51c] sm:$0xf]
        %v949 = vld [vmem:[%s179 + $0x520] sm:$0xf]
        %v950 = vld [vmem:[%s179 + $0x524] sm:$0xf]
        %v951 = vld [vmem:[%s179 + $0x528] sm:$0xf]
        %v952 = vld [vmem:[%s179 + $0x52c] sm:$0xf]
        %v953 = vld [vmem:[%s179 + $0x530] sm:$0xf]
        %v954 = vld [vmem:[%s179 + $0x534] sm:$0xf]
        %v955 = vld [vmem:[%s179 + $0x538] sm:$0xf]
        %v956 = vld [vmem:[%s179 + $0x53c] sm:$0xf]
        %v957 = vld [vmem:[%s179 + $0x540] sm:$0xf]
        %v958 = vld [vmem:[%s179 + $0x544] sm:$0xf]
        %v959 = vld [vmem:[%s179 + $0x548] sm:$0xf]
        %v960 = vld [vmem:[%s179 + $0x54c] sm:$0xf]
        %v961 = vld [vmem:[%s179 + $0x550] sm:$0xf]
        %v962 = vld [vmem:[%s179 + $0x554] sm:$0xf]
        %v963 = vld [vmem:[%s179 + $0x558] sm:$0xf]
        %v964 = vld [vmem:[%s179 + $0x55c] sm:$0xf]
        %v965 = vld [vmem:[%s179 + $0x560] sm:$0xf]
        %v966 = vld [vmem:[%s179 + $0x564] sm:$0xf]
        %v967 = vld [vmem:[%s179 + $0x568] sm:$0xf]
        %v968 = vld [vmem:[%s179 + $0x56c] sm:$0xf]
        %v969 = vld [vmem:[%s179 + $0x570] sm:$0xf]
        %v970 = vld [vmem:[%s179 + $0x574] sm:$0xf]
        %v971 = vld [vmem:[%s179 + $0x578] sm:$0xf]
        %v972 = vld [vmem:[%s179 + $0x57c] sm:$0xf]
        %v973 = vld [vmem:[%s179 + $0x580] sm:$0xf]
        %v974 = vld [vmem:[%s179 + $0x584] sm:$0xf]
        %v975 = vld [vmem:[%s179 + $0x588] sm:$0xf]
        %v976 = vld [vmem:[%s179 + $0x58c] sm:$0xf]
        %v977 = vld [vmem:[%s179 + $0x590] sm:$0xf]
        %v978 = vld [vmem:[%s179 + $0x594] sm:$0xf]
        %v979 = vld [vmem:[%s179 + $0x598] sm:$0xf]
        %v980 = vld [vmem:[%s179 + $0x59c] sm:$0xf]
        %v981 = vld [vmem:[%s179 + $0x5a0] sm:$0xf]
        %v982 = vld [vmem:[%s179 + $0x5a4] sm:$0xf]
        %v983 = vld [vmem:[%s179 + $0x5a8] sm:$0xf]
        %v984 = vld [vmem:[%s179 + $0x5ac] sm:$0xf]
        %v985 = vld [vmem:[%s179 + $0x5b0] sm:$0xf]
        %v986 = vld [vmem:[%s179 + $0x5b4] sm:$0xf]
        %v987 = vld [vmem:[%s179 + $0x5b8] sm:$0xf]
        %v988 = vld [vmem:[%s179 + $0x5bc] sm:$0xf]
        %v989 = vld [vmem:[%s179 + $0x5c0] sm:$0xf]
        %v990 = vld [vmem:[%s179 + $0x5c4] sm:$0xf]
        %v991 = vld [vmem:[%s179 + $0x5c8] sm:$0xf]
        %v992 = vld [vmem:[%s179 + $0x5cc] sm:$0xf]
        %v993 = vld [vmem:[%s179 + $0x5d0] sm:$0xf]
        %v994 = vld [vmem:[%s179 + $0x5d4] sm:$0xf]
        %v995 = vld [vmem:[%s179 + $0x5d8] sm:$0xf]
        %v996 = vld [vmem:[%s179 + $0x5dc] sm:$0xf]
        %v997 = vld [vmem:[%s179 + $0x5e0] sm:$0xf]
        %v998 = vld [vmem:[%s179 + $0x5e4] sm:$0xf]
        %v999 = vld [vmem:[%s179 + $0x5e8] sm:$0xf]
        %v1000 = vld [vmem:[%s179 + $0x5ec] sm:$0xf]
        %v1001 = vld [vmem:[%s179 + $0x5f0] sm:$0xf]
        %v1002 = vld [vmem:[%s179 + $0x5f4] sm:$0xf]
        %v1003 = vld [vmem:[%s179 + $0x5f8] sm:$0xf]
        %v1004 = vld [vmem:[%s179 + $0x5fc] sm:$0xf]
        %v1005 = vld [vmem:[%s179 + $0x600] sm:$0xf]
        %v1006 = vld [vmem:[%s179 + $0x604] sm:$0xf]
        %v1007 = vld [vmem:[%s179 + $0x608] sm:$0xf]
        %v1008 = vld [vmem:[%s179 + $0x60c] sm:$0xf]
        %v1009 = vld [vmem:[%s179 + $0x610] sm:$0xf]
        %v1010 = vld [vmem:[%s179 + $0x614] sm:$0xf]
        %v1011 = vld [vmem:[%s179 + $0x618] sm:$0xf]
        %v1012 = vld [vmem:[%s179 + $0x61c] sm:$0xf]
        %v1013 = vld [vmem:[%s179 + $0x620] sm:$0xf]
        %v1014 = vld [vmem:[%s179 + $0x624] sm:$0xf]
        %v1015 = vld [vmem:[%s179 + $0x628] sm:$0xf]
        %v1016 = vld [vmem:[%s179 + $0x62c] sm:$0xf]
        %v1017 = vld [vmem:[%s179 + $0x630] sm:$0xf]
        %v1018 = vld [vmem:[%s179 + $0x634] sm:$0xf]
        %v1019 = vld [vmem:[%s179 + $0x638] sm:$0xf]
        %v1020 = vld [vmem:[%s179 + $0x63c] sm:$0xf]
        %v1021 = vld [vmem:[%s179 + $0x640] sm:$0xf]
        %v1022 = vld [vmem:[%s179 + $0x644] sm:$0xf]
        %v1023 = vld [vmem:[%s179 + $0x648] sm:$0xf]
        %v1024 = vld [vmem:[%s179 + $0x64c] sm:$0xf]
        %v1025 = vld [vmem:[%s179 + $0x650] sm:$0xf]
        %v1026 = vld [vmem:[%s179 + $0x654] sm:$0xf]
        %v1027 = vld [vmem:[%s179 + $0x658] sm:$0xf]
        %v1028 = vld [vmem:[%s179 + $0x65c] sm:$0xf]
        %v1029 = vld [vmem:[%s179 + $0x660] sm:$0xf]
        %v1030 = vld [vmem:[%s179 + $0x664] sm:$0xf]
        %v1031 = vld [vmem:[%s179 + $0x668] sm:$0xf]
        %v1032 = vld [vmem:[%s179 + $0x66c] sm:$0xf]
        %v1033 = vld [vmem:[%s179 + $0x670] sm:$0xf]
        %v1034 = vld [vmem:[%s179 + $0x674] sm:$0xf]
        %v1035 = vld [vmem:[%s179 + $0x678] sm:$0xf]
        %v1036 = vld [vmem:[%s179 + $0x67c] sm:$0xf]
        %v1037 = vld [vmem:[%s179 + $0x680] sm:$0xf]
        %v1038 = vld [vmem:[%s179 + $0x684] sm:$0xf]
        %v1039 = vld [vmem:[%s179 + $0x688] sm:$0xf]
        %v1040 = vld [vmem:[%s179 + $0x68c] sm:$0xf]
        %v1041 = vld [vmem:[%s179 + $0x690] sm:$0xf]
        %v1042 = vld [vmem:[%s179 + $0x694] sm:$0xf]
        %v1043 = vld [vmem:[%s179 + $0x698] sm:$0xf]
        %v1044 = vld [vmem:[%s179 + $0x69c] sm:$0xf]
        %v1045 = vld [vmem:[%s179 + $0x6a0] sm:$0xf]
        %v1046 = vld [vmem:[%s179 + $0x6a4] sm:$0xf]
        %v1047 = vld [vmem:[%s179 + $0x6a8] sm:$0xf]
        %v1048 = vld [vmem:[%s179 + $0x6ac] sm:$0xf]
        %v1049 = vld [vmem:[%s179 + $0x6b0] sm:$0xf]
        %v1050 = vld [vmem:[%s179 + $0x6b4] sm:$0xf]
        %v1051 = vld [vmem:[%s179 + $0x6b8] sm:$0xf]
        %v1052 = vld [vmem:[%s179 + $0x6bc] sm:$0xf]
        %v1053 = vld [vmem:[%s179 + $0x6c0] sm:$0xf]
        %v1054 = vld [vmem:[%s179 + $0x6c4] sm:$0xf]
        %v1055 = vld [vmem:[%s179 + $0x6c8] sm:$0xf]
        %v1056 = vld [vmem:[%s179 + $0x6cc] sm:$0xf]
        %v1057 = vld [vmem:[%s179 + $0x6d0] sm:$0xf]
        %v1058 = vld [vmem:[%s179 + $0x6d4] sm:$0xf]
        %v1059 = vld [vmem:[%s179 + $0x6d8] sm:$0xf]
        %v1060 = vld [vmem:[%s179 + $0x6dc] sm:$0xf]
        %v1061 = vld [vmem:[%s179 + $0x6e0] sm:$0xf]
        %v1062 = vld [vmem:[%s179 + $0x6e4] sm:$0xf]
        %v1063 = vld [vmem:[%s179 + $0x6e8] sm:$0xf]
        %v1064 = vld [vmem:[%s179 + $0x6ec] sm:$0xf]
        %v1065 = vld [vmem:[%s179 + $0x6f0] sm:$0xf]
        %v1066 = vld [vmem:[%s179 + $0x6f4] sm:$0xf]
        %v1067 = vld [vmem:[%s179 + $0x6f8] sm:$0xf]
        %v1068 = vld [vmem:[%s179 + $0x6fc] sm:$0xf]
        %v1069 = vld [vmem:[%s179 + $0x700] sm:$0xf]
        %v1070 = vld [vmem:[%s179 + $0x704] sm:$0xf]
        %v1071 = vld [vmem:[%s179 + $0x708] sm:$0xf]
        %v1072 = vld [vmem:[%s179 + $0x70c] sm:$0xf]
        %v1073 = vld [vmem:[%s179 + $0x710] sm:$0xf]
        %v1074 = vld [vmem:[%s179 + $0x714] sm:$0xf]
        %v1075 = vld [vmem:[%s179 + $0x718] sm:$0xf]
        %v1076 = vld [vmem:[%s179 + $0x71c] sm:$0xf]
        %v1077 = vld [vmem:[%s179 + $0x720] sm:$0xf]
        %v1078 = vld [vmem:[%s179 + $0x724] sm:$0xf]
        %v1079 = vld [vmem:[%s179 + $0x728] sm:$0xf]
        %v1080 = vld [vmem:[%s179 + $0x72c] sm:$0xf]
        %v1081 = vld [vmem:[%s179 + $0x730] sm:$0xf]
        %v1082 = vld [vmem:[%s179 + $0x734] sm:$0xf]
        %v1083 = vld [vmem:[%s179 + $0x738] sm:$0xf]
        %v1084 = vld [vmem:[%s179 + $0x73c] sm:$0xf]
        %v1085 = vld [vmem:[%s179 + $0x740] sm:$0xf]
        %v1086 = vld [vmem:[%s179 + $0x744] sm:$0xf]
        %v1087 = vld [vmem:[%s179 + $0x748] sm:$0xf]
        %v1088 = vld [vmem:[%s179 + $0x74c] sm:$0xf]
        %v1089 = vld [vmem:[%s179 + $0x750] sm:$0xf]
        %v1090 = vld [vmem:[%s179 + $0x754] sm:$0xf]
        %v1091 = vld [vmem:[%s179 + $0x758] sm:$0xf]
        %v1092 = vld [vmem:[%s179 + $0x75c] sm:$0xf]
        %v1093 = vld [vmem:[%s179 + $0x760] sm:$0xf]
        %v1094 = vld [vmem:[%s179 + $0x764] sm:$0xf]
        %v1095 = vld [vmem:[%s179 + $0x768] sm:$0xf]
        %v1096 = vld [vmem:[%s179 + $0x76c] sm:$0xf]
        %v1097 = vld [vmem:[%s179 + $0x770] sm:$0xf]
        %v1098 = vld [vmem:[%s179 + $0x774] sm:$0xf]
        %v1099 = vld [vmem:[%s179 + $0x778] sm:$0xf]
        %v1100 = vld [vmem:[%s179 + $0x77c] sm:$0xf]
        %v1101 = vld [vmem:[%s179 + $0x780] sm:$0xf]
        %v1102 = vld [vmem:[%s179 + $0x784] sm:$0xf]
        %v1103 = vld [vmem:[%s179 + $0x788] sm:$0xf]
        %v1104 = vld [vmem:[%s179 + $0x78c] sm:$0xf]
        %v1105 = vld [vmem:[%s179 + $0x790] sm:$0xf]
        %v1106 = vld [vmem:[%s179 + $0x794] sm:$0xf]
        %v1107 = vld [vmem:[%s179 + $0x798] sm:$0xf]
        %v1108 = vld [vmem:[%s179 + $0x79c] sm:$0xf]
        %v1109 = vld [vmem:[%s179 + $0x7a0] sm:$0xf]
        %v1110 = vld [vmem:[%s179 + $0x7a4] sm:$0xf]
        %v1111 = vld [vmem:[%s179 + $0x7a8] sm:$0xf]
        %v1112 = vld [vmem:[%s179 + $0x7ac] sm:$0xf]
        %v1113 = vld [vmem:[%s179 + $0x7b0] sm:$0xf]
        %v1114 = vld [vmem:[%s179 + $0x7b4] sm:$0xf]
        %v1115 = vld [vmem:[%s179 + $0x7b8] sm:$0xf]
        %v1116 = vld [vmem:[%s179 + $0x7bc] sm:$0xf]
        %v1117 = vld [vmem:[%s179 + $0x7c0] sm:$0xf]
        %v1118 = vld [vmem:[%s179 + $0x7c4] sm:$0xf]
        %v1119 = vld [vmem:[%s179 + $0x7c8] sm:$0xf]
        %v1120 = vld [vmem:[%s179 + $0x7cc] sm:$0xf]
        %v1121 = vld [vmem:[%s179 + $0x7d0] sm:$0xf]
        %v1122 = vld [vmem:[%s179 + $0x7d4] sm:$0xf]
        %v1123 = vld [vmem:[%s179 + $0x7d8] sm:$0xf]
        %v1124 = vld [vmem:[%s179 + $0x7dc] sm:$0xf]
        %v1125 = vld [vmem:[%s179 + $0x7e0] sm:$0xf]
        %v1126 = vld [vmem:[%s179 + $0x7e4] sm:$0xf]
        %v1127 = vld [vmem:[%s179 + $0x7e8] sm:$0xf]
        %v1128 = vld [vmem:[%s179 + $0x7ec] sm:$0xf]
        %v1129 = vld [vmem:[%s179 + $0x7f0] sm:$0xf]
        %v1130 = vld [vmem:[%s179 + $0x7f4] sm:$0xf]
        %v1131 = vld [vmem:[%s179 + $0x7f8] sm:$0xf]
        %v1132 = vld [vmem:[%s179 + $0x7fc] sm:$0xf]
        %v1133 = vld [vmem:[%s179 + $0x800] sm:$0xf]
        %v1134 = vld [vmem:[%s179 + $0x804] sm:$0xf]
        %v1135 = vld [vmem:[%s179 + $0x808] sm:$0xf]
        %v1136 = vld [vmem:[%s179 + $0x80c] sm:$0xf]
        %v1137 = vld [vmem:[%s179 + $0x810] sm:$0xf]
        %v1138 = vld [vmem:[%s179 + $0x814] sm:$0xf]
        %v1139 = vld [vmem:[%s179 + $0x818] sm:$0xf]
        %v1140 = vld [vmem:[%s179 + $0x81c] sm:$0xf]
        %v1141 = vld [vmem:[%s179 + $0x820] sm:$0xf]
        %v1142 = vld [vmem:[%s179 + $0x824] sm:$0xf]
        %v1143 = vld [vmem:[%s179 + $0x828] sm:$0xf]
        %v1144 = vld [vmem:[%s179 + $0x82c] sm:$0xf]
        %v1145 = vld [vmem:[%s179 + $0x830] sm:$0xf]
        %v1146 = vld [vmem:[%s179 + $0x834] sm:$0xf]
        %v1147 = vld [vmem:[%s179 + $0x838] sm:$0xf]
        %v1148 = vld [vmem:[%s179 + $0x83c] sm:$0xf]
        %v1149 = vld [vmem:[%s179 + $0x840] sm:$0xf]
        %v1150 = vld [vmem:[%s179 + $0x844] sm:$0xf]
        %v1151 = vld [vmem:[%s179 + $0x848] sm:$0xf]
        %v1152 = vld [vmem:[%s179 + $0x84c] sm:$0xf]
        %v1153 = vld [vmem:[%s179 + $0x850] sm:$0xf]
        %v1154 = vld [vmem:[%s179 + $0x854] sm:$0xf]
        %v1155 = vld [vmem:[%s179 + $0x858] sm:$0xf]
        %v1156 = vld [vmem:[%s179 + $0x85c] sm:$0xf]
        %v1157 = vld [vmem:[%s179 + $0x860] sm:$0xf]
        %v1158 = vld [vmem:[%s179 + $0x864] sm:$0xf]
        %v1159 = vld [vmem:[%s179 + $0x868] sm:$0xf]
        %v1160 = vld [vmem:[%s179 + $0x86c] sm:$0xf]
        %v1161 = vld [vmem:[%s179 + $0x870] sm:$0xf]
        %v1162 = vld [vmem:[%s179 + $0x874] sm:$0xf]
        %v1163 = vld [vmem:[%s179 + $0x878] sm:$0xf]
        %v1164 = vld [vmem:[%s179 + $0x87c] sm:$0xf]
        %v1165 = vld [vmem:[%s179 + $0x880] sm:$0xf]
        %v1166 = vld [vmem:[%s179 + $0x884] sm:$0xf]
        %v1167 = vld [vmem:[%s179 + $0x888] sm:$0xf]
        %v1168 = vld [vmem:[%s179 + $0x88c] sm:$0xf]
        %v1169 = vld [vmem:[%s179 + $0x890] sm:$0xf]
        %v1170 = vld [vmem:[%s179 + $0x894] sm:$0xf]
        %v1171 = vld [vmem:[%s179 + $0x898] sm:$0xf]
        %v1172 = vld [vmem:[%s179 + $0x89c] sm:$0xf]
        %v1173 = vld [vmem:[%s179 + $0x8a0] sm:$0xf]
        %v1174 = vld [vmem:[%s179 + $0x8a4] sm:$0xf]
        %v1175 = vld [vmem:[%s179 + $0x8a8] sm:$0xf]
        %v1176 = vld [vmem:[%s179 + $0x8ac] sm:$0xf]
        %v1177 = vld [vmem:[%s179 + $0x8b0] sm:$0xf]
        %v1178 = vld [vmem:[%s179 + $0x8b4] sm:$0xf]
        %v1179 = vld [vmem:[%s179 + $0x8b8] sm:$0xf]
        %v1180 = vld [vmem:[%s179 + $0x8bc] sm:$0xf]
        %v1181 = vld [vmem:[%s179 + $0x8c0] sm:$0xf]
        %v1182 = vld [vmem:[%s179 + $0x8c4] sm:$0xf]
        %v1183 = vld [vmem:[%s179 + $0x8c8] sm:$0xf]
        %v1184 = vld [vmem:[%s179 + $0x8cc] sm:$0xf]
        %v1185 = vld [vmem:[%s179 + $0x8d0] sm:$0xf]
        %v1186 = vld [vmem:[%s179 + $0x8d4] sm:$0xf]
        %v1187 = vld [vmem:[%s179 + $0x8d8] sm:$0xf]
        %v1188 = vld [vmem:[%s179 + $0x8dc] sm:$0xf]
        %v1189 = vld [vmem:[%s179 + $0x8e0] sm:$0xf]
        %v1190 = vld [vmem:[%s179 + $0x8e4] sm:$0xf]
        %v1191 = vld [vmem:[%s179 + $0x8e8] sm:$0xf]
        %v1192 = vld [vmem:[%s179 + $0x8ec] sm:$0xf]
        %v1193 = vld [vmem:[%s179 + $0x8f0] sm:$0xf]
        %v1194 = vld [vmem:[%s179 + $0x8f4] sm:$0xf]
        %v1195 = vld [vmem:[%s179 + $0x8f8] sm:$0xf]
        %v1196 = vld [vmem:[%s179 + $0x8fc] sm:$0xf]
        %v1197 = vld [vmem:[%s179 + $0x900] sm:$0xf]
        %v1198 = vld [vmem:[%s179 + $0x904] sm:$0xf]
        %v1199 = vld [vmem:[%s179 + $0x908] sm:$0xf]
        %v1200 = vld [vmem:[%s179 + $0x90c] sm:$0xf]
        %v1201 = vld [vmem:[%s179 + $0x910] sm:$0xf]
        %v1202 = vld [vmem:[%s179 + $0x914] sm:$0xf]
        %v1203 = vld [vmem:[%s179 + $0x918] sm:$0xf]
        %v1204 = vld [vmem:[%s179 + $0x91c] sm:$0xf]
        %v1205 = vld [vmem:[%s179 + $0x920] sm:$0xf]
        %v1206 = vld [vmem:[%s179 + $0x924] sm:$0xf]
        %v1207 = vld [vmem:[%s179 + $0x928] sm:$0xf]
        %v1208 = vld [vmem:[%s179 + $0x92c] sm:$0xf]
        %v1209 = vld [vmem:[%s179 + $0x930] sm:$0xf]
        %v1210 = vld [vmem:[%s179 + $0x934] sm:$0xf]
        %v1211 = vld [vmem:[%s179 + $0x938] sm:$0xf]
        %v1212 = vld [vmem:[%s179 + $0x93c] sm:$0xf]
        %v1213 = vld [vmem:[%s179 + $0x940] sm:$0xf]
        %v1214 = vld [vmem:[%s179 + $0x944] sm:$0xf]
        %v1215 = vld [vmem:[%s179 + $0x948] sm:$0xf]
        %v1216 = vld [vmem:[%s179 + $0x94c] sm:$0xf]
        %v1217 = vld [vmem:[%s179 + $0x950] sm:$0xf]
        %v1218 = vld [vmem:[%s179 + $0x954] sm:$0xf]
        %v1219 = vld [vmem:[%s179 + $0x958] sm:$0xf]
        %v1220 = vld [vmem:[%s179 + $0x95c] sm:$0xf]
        %v1221 = vld [vmem:[%s179 + $0x960] sm:$0xf]
        %v1222 = vld [vmem:[%s179 + $0x964] sm:$0xf]
        %v1223 = vld [vmem:[%s179 + $0x968] sm:$0xf]
        %v1224 = vld [vmem:[%s179 + $0x96c] sm:$0xf]
        %v1225 = vld [vmem:[%s179 + $0x970] sm:$0xf]
        %v1226 = vld [vmem:[%s179 + $0x974] sm:$0xf]
        %v1227 = vld [vmem:[%s179 + $0x978] sm:$0xf]
        %v1228 = vld [vmem:[%s179 + $0x97c] sm:$0xf]
        %v1229 = vld [vmem:[%s179 + $0x980] sm:$0xf]
        %v1230 = vld [vmem:[%s179 + $0x984] sm:$0xf]
        %v1231 = vld [vmem:[%s179 + $0x988] sm:$0xf]
        %v1232 = vld [vmem:[%s179 + $0x98c] sm:$0xf]
        %v1233 = vld [vmem:[%s179 + $0x990] sm:$0xf]
        %v1234 = vld [vmem:[%s179 + $0x994] sm:$0xf]
        %v1235 = vld [vmem:[%s179 + $0x998] sm:$0xf]
        %v1236 = vld [vmem:[%s179 + $0x99c] sm:$0xf]
        %v1237 = vld [vmem:[%s179 + $0x9a0] sm:$0xf]
        %v1238 = vld [vmem:[%s179 + $0x9a4] sm:$0xf]
        %v1239 = vld [vmem:[%s179 + $0x9a8] sm:$0xf]
        %v1240 = vld [vmem:[%s179 + $0x9ac] sm:$0xf]
        %v1241 = vld [vmem:[%s179 + $0x9b0] sm:$0xf]
        %v1242 = vld [vmem:[%s179 + $0x9b4] sm:$0xf]
        %v1243 = vld [vmem:[%s179 + $0x9b8] sm:$0xf]
        %v1244 = vld [vmem:[%s179 + $0x9bc] sm:$0xf]
        %v1245 = vld [vmem:[%s179 + $0x9c0] sm:$0xf]
        %v1246 = vld [vmem:[%s179 + $0x9c4] sm:$0xf]
        %v1247 = vld [vmem:[%s179 + $0x9c8] sm:$0xf]
        %v1248 = vld [vmem:[%s179 + $0x9cc] sm:$0xf]
        %v1249 = vld [vmem:[%s179 + $0x9d0] sm:$0xf]
        %v1250 = vld [vmem:[%s179 + $0x9d4] sm:$0xf]
        %v1251 = vld [vmem:[%s179 + $0x9d8] sm:$0xf]
        %v1252 = vld [vmem:[%s179 + $0x9dc] sm:$0xf]
        %v1253 = vld [vmem:[%s179 + $0x9e0] sm:$0xf]
        %v1254 = vld [vmem:[%s179 + $0x9e4] sm:$0xf]
        %v1255 = vld [vmem:[%s179 + $0x9e8] sm:$0xf]
        %v1256 = vld [vmem:[%s179 + $0x9ec] sm:$0xf]
        %v1257 = vld [vmem:[%s179 + $0x9f0] sm:$0xf]
        %v1258 = vld [vmem:[%s179 + $0x9f4] sm:$0xf]
        %v1259 = vld [vmem:[%s179 + $0x9f8] sm:$0xf]
        %v1260 = vld [vmem:[%s179 + $0x9fc] sm:$0xf]
        %v1261 = vld [vmem:[%s179 + $0xa00] sm:$0xf]
        %v1262 = vld [vmem:[%s179 + $0xa04] sm:$0xf]
        %v1263 = vld [vmem:[%s179 + $0xa08] sm:$0xf]
        %v1264 = vld [vmem:[%s179 + $0xa0c] sm:$0xf]
        %v1265 = vld [vmem:[%s179 + $0xa10] sm:$0xf]
        %v1266 = vld [vmem:[%s179 + $0xa14] sm:$0xf]
        %v1267 = vld [vmem:[%s179 + $0xa18] sm:$0xf]
        %v1268 = vld [vmem:[%s179 + $0xa1c] sm:$0xf]
        %v1269 = vld [vmem:[%s179 + $0xa20] sm:$0xf]
        %v1270 = vld [vmem:[%s179 + $0xa24] sm:$0xf]
        %v1271 = vld [vmem:[%s179 + $0xa28] sm:$0xf]
        %v1272 = vld [vmem:[%s179 + $0xa2c] sm:$0xf]
        %v1273 = vld [vmem:[%s179 + $0xa30] sm:$0xf]
        %v1274 = vld [vmem:[%s179 + $0xa34] sm:$0xf]
        %v1275 = vld [vmem:[%s179 + $0xa38] sm:$0xf]
        %v1276 = vld [vmem:[%s179 + $0xa3c] sm:$0xf]
        %v1277 = vld [vmem:[%s179 + $0xa40] sm:$0xf]
        %v1278 = vld [vmem:[%s179 + $0xa44] sm:$0xf]
        %v1279 = vld [vmem:[%s179 + $0xa48] sm:$0xf]
        %v1280 = vld [vmem:[%s179 + $0xa4c] sm:$0xf]
        %v1281 = vld [vmem:[%s179 + $0xa50] sm:$0xf]
        %v1282 = vld [vmem:[%s179 + $0xa54] sm:$0xf]
        %v1283 = vld [vmem:[%s179 + $0xa58] sm:$0xf]
        %v1284 = vld [vmem:[%s179 + $0xa5c] sm:$0xf]
        %v1285 = vld [vmem:[%s179 + $0xa60] sm:$0xf]
        %v1286 = vld [vmem:[%s179 + $0xa64] sm:$0xf]
        %v1287 = vld [vmem:[%s179 + $0xa68] sm:$0xf]
        %v1288 = vld [vmem:[%s179 + $0xa6c] sm:$0xf]
        %v1289 = vld [vmem:[%s179 + $0xa70] sm:$0xf]
        %v1290 = vld [vmem:[%s179 + $0xa74] sm:$0xf]
        %v1291 = vld [vmem:[%s179 + $0xa78] sm:$0xf]
        %v1292 = vld [vmem:[%s179 + $0xa7c] sm:$0xf]
        %v1293 = vld [vmem:[%s179 + $0xa80] sm:$0xf]
        %v1294 = vld [vmem:[%s179 + $0xa84] sm:$0xf]
        %v1295 = vld [vmem:[%s179 + $0xa88] sm:$0xf]
        %v1296 = vld [vmem:[%s179 + $0xa8c] sm:$0xf]
        %v1297 = vld [vmem:[%s179 + $0xa90] sm:$0xf]
        %v1298 = vld [vmem:[%s179 + $0xa94] sm:$0xf]
        %v1299 = vld [vmem:[%s179 + $0xa98] sm:$0xf]
        %v1300 = vld [vmem:[%s179 + $0xa9c] sm:$0xf]
        %v1301 = vld [vmem:[%s179 + $0xaa0] sm:$0xf]
        %v1302 = vld [vmem:[%s179 + $0xaa4] sm:$0xf]
        %v1303 = vld [vmem:[%s179 + $0xaa8] sm:$0xf]
        %v1304 = vld [vmem:[%s179 + $0xaac] sm:$0xf]
        %v1305 = vld [vmem:[%s179 + $0xab0] sm:$0xf]
        %v1306 = vld [vmem:[%s179 + $0xab4] sm:$0xf]
        %v1307 = vld [vmem:[%s179 + $0xab8] sm:$0xf]
        %v1308 = vld [vmem:[%s179 + $0xabc] sm:$0xf]
        %v1309 = vld [vmem:[%s179 + $0xac0] sm:$0xf]
        %v1310 = vld [vmem:[%s179 + $0xac4] sm:$0xf]
        %v1311 = vld [vmem:[%s179 + $0xac8] sm:$0xf]
        %v1312 = vld [vmem:[%s179 + $0xacc] sm:$0xf]
        %v1313 = vld [vmem:[%s179 + $0xad0] sm:$0xf]
        %v1314 = vld [vmem:[%s179 + $0xad4] sm:$0xf]
        %v1315 = vld [vmem:[%s179 + $0xad8] sm:$0xf]
        %v1316 = vld [vmem:[%s179 + $0xadc] sm:$0xf]
        %v1317 = vld [vmem:[%s179 + $0xae0] sm:$0xf]
        %v1318 = vld [vmem:[%s179 + $0xae4] sm:$0xf]
        %v1319 = vld [vmem:[%s179 + $0xae8] sm:$0xf]
        %v1320 = vld [vmem:[%s179 + $0xaec] sm:$0xf]
        %v1321 = vld [vmem:[%s179 + $0xaf0] sm:$0xf]
        %v1322 = vld [vmem:[%s179 + $0xaf4] sm:$0xf]
        %v1323 = vld [vmem:[%s179 + $0xaf8] sm:$0xf]
        %v1324 = vld [vmem:[%s179 + $0xafc] sm:$0xf]
        %v1325 = vld [vmem:[%s179 + $0xb00] sm:$0xf]
        %v1326 = vld [vmem:[%s179 + $0xb04] sm:$0xf]
        %v1327 = vld [vmem:[%s179 + $0xb08] sm:$0xf]
        %v1328 = vld [vmem:[%s179 + $0xb0c] sm:$0xf]
        %v1329 = vld [vmem:[%s179 + $0xb10] sm:$0xf]
        %v1330 = vld [vmem:[%s179 + $0xb14] sm:$0xf]
        %v1331 = vld [vmem:[%s179 + $0xb18] sm:$0xf]
        %v1332 = vld [vmem:[%s179 + $0xb1c] sm:$0xf]
        %v1333 = vld [vmem:[%s179 + $0xb20] sm:$0xf]
        %v1334 = vld [vmem:[%s179 + $0xb24] sm:$0xf]
        %v1335 = vld [vmem:[%s179 + $0xb28] sm:$0xf]
        %v1336 = vld [vmem:[%s179 + $0xb2c] sm:$0xf]
        %v1337 = vld [vmem:[%s179 + $0xb30] sm:$0xf]
        %v1338 = vld [vmem:[%s179 + $0xb34] sm:$0xf]
        %v1339 = vld [vmem:[%s179 + $0xb38] sm:$0xf]
        %v1340 = vld [vmem:[%s179 + $0xb3c] sm:$0xf]
        %v1341 = vld [vmem:[%s179 + $0xb40] sm:$0xf]
        %v1342 = vld [vmem:[%s179 + $0xb44] sm:$0xf]
        %v1343 = vld [vmem:[%s179 + $0xb48] sm:$0xf]
        %v1344 = vld [vmem:[%s179 + $0xb4c] sm:$0xf]
        %v1345 = vld [vmem:[%s179 + $0xb50] sm:$0xf]
        %v1346 = vld [vmem:[%s179 + $0xb54] sm:$0xf]
        %v1347 = vld [vmem:[%s179 + $0xb58] sm:$0xf]
        %v1348 = vld [vmem:[%s179 + $0xb5c] sm:$0xf]
        %v1349 = vld [vmem:[%s179 + $0xb60] sm:$0xf]
        %v1350 = vld [vmem:[%s179 + $0xb64] sm:$0xf]
        %v1351 = vld [vmem:[%s179 + $0xb68] sm:$0xf]
        %v1352 = vld [vmem:[%s179 + $0xb6c] sm:$0xf]
        %v1353 = vld [vmem:[%s179 + $0xb70] sm:$0xf]
        %v1354 = vld [vmem:[%s179 + $0xb74] sm:$0xf]
        %v1355 = vld [vmem:[%s179 + $0xb78] sm:$0xf]
        %v1356 = vld [vmem:[%s179 + $0xb7c] sm:$0xf]
        %v1357 = vld [vmem:[%s179 + $0xb80] sm:$0xf]
        %v1358 = vld [vmem:[%s179 + $0xb84] sm:$0xf]
        %v1359 = vld [vmem:[%s179 + $0xb88] sm:$0xf]
        %v1360 = vld [vmem:[%s179 + $0xb8c] sm:$0xf]
        %v1361 = vld [vmem:[%s179 + $0xb90] sm:$0xf]
        %v1362 = vld [vmem:[%s179 + $0xb94] sm:$0xf]
        %v1363 = vld [vmem:[%s179 + $0xb98] sm:$0xf]
        %v1364 = vld [vmem:[%s179 + $0xb9c] sm:$0xf]
        %v1365 = vld [vmem:[%s179 + $0xba0] sm:$0xf]
        %v1366 = vld [vmem:[%s179 + $0xba4] sm:$0xf]
        %v1367 = vld [vmem:[%s179 + $0xba8] sm:$0xf]
        %v1368 = vld [vmem:[%s179 + $0xbac] sm:$0xf]
        %v1369 = vld [vmem:[%s179 + $0xbb0] sm:$0xf]
        %v1370 = vld [vmem:[%s179 + $0xbb4] sm:$0xf]
        %v1371 = vld [vmem:[%s179 + $0xbb8] sm:$0xf]
        %v1372 = vld [vmem:[%s179 + $0xbbc] sm:$0xf]
        %v1373 = vld [vmem:[%s179 + $0xbc0] sm:$0xf]
        %v1374 = vld [vmem:[%s179 + $0xbc4] sm:$0xf]
        %v1375 = vld [vmem:[%s179 + $0xbc8] sm:$0xf]
        %v1376 = vld [vmem:[%s179 + $0xbcc] sm:$0xf]
        %v1377 = vld [vmem:[%s179 + $0xbd0] sm:$0xf]
        %v1378 = vld [vmem:[%s179 + $0xbd4] sm:$0xf]
        %v1379 = vld [vmem:[%s179 + $0xbd8] sm:$0xf]
        %v1380 = vld [vmem:[%s179 + $0xbdc] sm:$0xf]
        %v1381 = vld [vmem:[%s179 + $0xbe0] sm:$0xf]
        %v1382 = vld [vmem:[%s179 + $0xbe4] sm:$0xf]
        %v1383 = vld [vmem:[%s179 + $0xbe8] sm:$0xf]
        %v1384 = vld [vmem:[%s179 + $0xbec] sm:$0xf]
        %v1385 = vld [vmem:[%s179 + $0xbf0] sm:$0xf]
        %v1386 = vld [vmem:[%s179 + $0xbf4] sm:$0xf]
        %v1387 = vld [vmem:[%s179 + $0xbf8] sm:$0xf]
        %v1388 = vld [vmem:[%s179 + $0xbfc] sm:$0xf]
        %v1389 = vld [vmem:[%s179 + $0xc00] sm:$0xf]
        %v1390 = vld [vmem:[%s179 + $0xc04] sm:$0xf]
        %v1391 = vld [vmem:[%s179 + $0xc08] sm:$0xf]
        %v1392 = vld [vmem:[%s179 + $0xc0c] sm:$0xf]
        %v1393 = vld [vmem:[%s179 + $0xc10] sm:$0xf]
        %v1394 = vld [vmem:[%s179 + $0xc14] sm:$0xf]
        %v1395 = vld [vmem:[%s179 + $0xc18] sm:$0xf]
        %v1396 = vld [vmem:[%s179 + $0xc1c] sm:$0xf]
        %v1397 = vld [vmem:[%s179 + $0xc20] sm:$0xf]
        %v1398 = vld [vmem:[%s179 + $0xc24] sm:$0xf]
        %v1399 = vld [vmem:[%s179 + $0xc28] sm:$0xf]
        %v1400 = vld [vmem:[%s179 + $0xc2c] sm:$0xf]
        %v1401 = vld [vmem:[%s179 + $0xc30] sm:$0xf]
        %v1402 = vld [vmem:[%s179 + $0xc34] sm:$0xf]
        %v1403 = vld [vmem:[%s179 + $0xc38] sm:$0xf]
        %v1404 = vld [vmem:[%s179 + $0xc3c] sm:$0xf]
        %v1405 = vld [vmem:[%s179 + $0xc40] sm:$0xf]
        %v1406 = vld [vmem:[%s179 + $0xc44] sm:$0xf]
        %v1407 = vld [vmem:[%s179 + $0xc48] sm:$0xf]
        %v1408 = vld [vmem:[%s179 + $0xc4c] sm:$0xf]
        %v1409 = vld [vmem:[%s179 + $0xc50] sm:$0xf]
        %v1410 = vld [vmem:[%s179 + $0xc54] sm:$0xf]
        %v1411 = vld [vmem:[%s179 + $0xc58] sm:$0xf]
        %v1412 = vld [vmem:[%s179 + $0xc5c] sm:$0xf]
        %v1413 = vld [vmem:[%s179 + $0xc60] sm:$0xf]
        %v1414 = vld [vmem:[%s179 + $0xc64] sm:$0xf]
        %v1415 = vld [vmem:[%s179 + $0xc68] sm:$0xf]
        %v1416 = vld [vmem:[%s179 + $0xc6c] sm:$0xf]
        %v1417 = vld [vmem:[%s179 + $0xc70] sm:$0xf]
        %v1418 = vld [vmem:[%s179 + $0xc74] sm:$0xf]
        %v1419 = vld [vmem:[%s179 + $0xc78] sm:$0xf]
        %v1420 = vld [vmem:[%s179 + $0xc7c] sm:$0xf]
        %v1421 = vld [vmem:[%s179 + $0xc80] sm:$0xf]
        %v1422 = vld [vmem:[%s179 + $0xc84] sm:$0xf]
        %v1423 = vld [vmem:[%s179 + $0xc88] sm:$0xf]
        %v1424 = vld [vmem:[%s179 + $0xc8c] sm:$0xf]
        %v1425 = vld [vmem:[%s179 + $0xc90] sm:$0xf]
        %v1426 = vld [vmem:[%s179 + $0xc94] sm:$0xf]
        %v1427 = vld [vmem:[%s179 + $0xc98] sm:$0xf]
        %v1428 = vld [vmem:[%s179 + $0xc9c] sm:$0xf]
        %v1429 = vld [vmem:[%s179 + $0xca0] sm:$0xf]
        %v1430 = vld [vmem:[%s179 + $0xca4] sm:$0xf]
        %v1431 = vld [vmem:[%s179 + $0xca8] sm:$0xf]
        %v1432 = vld [vmem:[%s179 + $0xcac] sm:$0xf]
        %v1433 = vld [vmem:[%s179 + $0xcb0] sm:$0xf]
        %v1434 = vld [vmem:[%s179 + $0xcb4] sm:$0xf]
        %v1435 = vld [vmem:[%s179 + $0xcb8] sm:$0xf]
        %v1436 = vld [vmem:[%s179 + $0xcbc] sm:$0xf]
        %v1437 = vld [vmem:[%s179 + $0xcc0] sm:$0xf]
        %v1438 = vld [vmem:[%s179 + $0xcc4] sm:$0xf]
        %v1439 = vld [vmem:[%s179 + $0xcc8] sm:$0xf]
        %v1440 = vld [vmem:[%s179 + $0xccc] sm:$0xf]
        %v1441 = vld [vmem:[%s179 + $0xcd0] sm:$0xf]
        %v1442 = vld [vmem:[%s179 + $0xcd4] sm:$0xf]
        %v1443 = vld [vmem:[%s179 + $0xcd8] sm:$0xf]
        %v1444 = vld [vmem:[%s179 + $0xcdc] sm:$0xf]
        %v1445 = vld [vmem:[%s179 + $0xce0] sm:$0xf]
        %v1446 = vld [vmem:[%s179 + $0xce4] sm:$0xf]
        %v1447 = vld [vmem:[%s179 + $0xce8] sm:$0xf]
        %v1448 = vld [vmem:[%s179 + $0xcec] sm:$0xf]
        %v1449 = vld [vmem:[%s179 + $0xcf0] sm:$0xf]
        %v1450 = vld [vmem:[%s179 + $0xcf4] sm:$0xf]
        %v1451 = vld [vmem:[%s179 + $0xcf8] sm:$0xf]
        %v1452 = vld [vmem:[%s179 + $0xcfc] sm:$0xf]
        %v1453 = vld [vmem:[%s179 + $0xd00] sm:$0xf]
        %v1454 = vld [vmem:[%s179 + $0xd04] sm:$0xf]
        %v1455 = vld [vmem:[%s179 + $0xd08] sm:$0xf]
        %v1456 = vld [vmem:[%s179 + $0xd0c] sm:$0xf]
        %v1457 = vld [vmem:[%s179 + $0xd10] sm:$0xf]
        %v1458 = vld [vmem:[%s179 + $0xd14] sm:$0xf]
        %v1459 = vld [vmem:[%s179 + $0xd18] sm:$0xf]
        %v1460 = vld [vmem:[%s179 + $0xd1c] sm:$0xf]
        %v1461 = vld [vmem:[%s179 + $0xd20] sm:$0xf]
        %v1462 = vld [vmem:[%s179 + $0xd24] sm:$0xf]
        %v1463 = vld [vmem:[%s179 + $0xd28] sm:$0xf]
        %v1464 = vld [vmem:[%s179 + $0xd2c] sm:$0xf]
        %v1465 = vld [vmem:[%s179 + $0xd30] sm:$0xf]
        %v1466 = vld [vmem:[%s179 + $0xd34] sm:$0xf]
        %v1467 = vld [vmem:[%s179 + $0xd38] sm:$0xf]
        %v1468 = vld [vmem:[%s179 + $0xd3c] sm:$0xf]
        %v1469 = vld [vmem:[%s179 + $0xd40] sm:$0xf]
        %v1470 = vld [vmem:[%s179 + $0xd44] sm:$0xf]
        %v1471 = vld [vmem:[%s179 + $0xd48] sm:$0xf]
        %v1472 = vld [vmem:[%s179 + $0xd4c] sm:$0xf]
        %v1473 = vld [vmem:[%s179 + $0xd50] sm:$0xf]
        %v1474 = vld [vmem:[%s179 + $0xd54] sm:$0xf]
        %v1475 = vld [vmem:[%s179 + $0xd58] sm:$0xf]
        %v1476 = vld [vmem:[%s179 + $0xd5c] sm:$0xf]
        %v1477 = vld [vmem:[%s179 + $0xd60] sm:$0xf]
        %v1478 = vld [vmem:[%s179 + $0xd64] sm:$0xf]
        %v1479 = vld [vmem:[%s179 + $0xd68] sm:$0xf]
        %v1480 = vld [vmem:[%s179 + $0xd6c] sm:$0xf]
        %v1481 = vld [vmem:[%s179 + $0xd70] sm:$0xf]
        %v1482 = vld [vmem:[%s179 + $0xd74] sm:$0xf]
        %v1483 = vld [vmem:[%s179 + $0xd78] sm:$0xf]
        %v1484 = vld [vmem:[%s179 + $0xd7c] sm:$0xf]
        %v1485 = vld [vmem:[%s179 + $0xd80] sm:$0xf]
        %v1486 = vld [vmem:[%s179 + $0xd84] sm:$0xf]
        %v1487 = vld [vmem:[%s179 + $0xd88] sm:$0xf]
        %v1488 = vld [vmem:[%s179 + $0xd8c] sm:$0xf]
        %v1489 = vld [vmem:[%s179 + $0xd90] sm:$0xf]
        %v1490 = vld [vmem:[%s179 + $0xd94] sm:$0xf]
        %v1491 = vld [vmem:[%s179 + $0xd98] sm:$0xf]
        %v1492 = vld [vmem:[%s179 + $0xd9c] sm:$0xf]
        %v1493 = vld [vmem:[%s179 + $0xda0] sm:$0xf]
        %v1494 = vld [vmem:[%s179 + $0xda4] sm:$0xf]
        %v1495 = vld [vmem:[%s179 + $0xda8] sm:$0xf]
        %v1496 = vld [vmem:[%s179 + $0xdac] sm:$0xf]
        %v1497 = vld [vmem:[%s179 + $0xdb0] sm:$0xf]
        %v1498 = vld [vmem:[%s179 + $0xdb4] sm:$0xf]
        %v1499 = vld [vmem:[%s179 + $0xdb8] sm:$0xf]
        %v1500 = vld [vmem:[%s179 + $0xdbc] sm:$0xf]
        %v1501 = vld [vmem:[%s179 + $0xdc0] sm:$0xf]
        %v1502 = vld [vmem:[%s179 + $0xdc4] sm:$0xf]
        %v1503 = vld [vmem:[%s179 + $0xdc8] sm:$0xf]
        %v1504 = vld [vmem:[%s179 + $0xdcc] sm:$0xf]
        %v1505 = vld [vmem:[%s179 + $0xdd0] sm:$0xf]
        %v1506 = vld [vmem:[%s179 + $0xdd4] sm:$0xf]
        %v1507 = vld [vmem:[%s179 + $0xdd8] sm:$0xf]
        %v1508 = vld [vmem:[%s179 + $0xddc] sm:$0xf]
        %v1509 = vld [vmem:[%s179 + $0xde0] sm:$0xf]
        %v1510 = vld [vmem:[%s179 + $0xde4] sm:$0xf]
        %v1511 = vld [vmem:[%s179 + $0xde8] sm:$0xf]
        %v1512 = vld [vmem:[%s179 + $0xdec] sm:$0xf]
        %v1513 = vld [vmem:[%s179 + $0xdf0] sm:$0xf]
        %v1514 = vld [vmem:[%s179 + $0xdf4] sm:$0xf]
        %v1515 = vld [vmem:[%s179 + $0xdf8] sm:$0xf]
        %v1516 = vld [vmem:[%s179 + $0xdfc] sm:$0xf]
        %v1517 = vld [vmem:[%s179 + $0xe00] sm:$0xf]
        %v1518 = vld [vmem:[%s179 + $0xe04] sm:$0xf]
        %v1519 = vld [vmem:[%s179 + $0xe08] sm:$0xf]
        %v1520 = vld [vmem:[%s179 + $0xe0c] sm:$0xf]
        %v1521 = vld [vmem:[%s179 + $0xe10] sm:$0xf]
        %v1522 = vld [vmem:[%s179 + $0xe14] sm:$0xf]
        %v1523 = vld [vmem:[%s179 + $0xe18] sm:$0xf]
        %v1524 = vld [vmem:[%s179 + $0xe1c] sm:$0xf]
        %v1525 = vld [vmem:[%s179 + $0xe20] sm:$0xf]
        %v1526 = vld [vmem:[%s179 + $0xe24] sm:$0xf]
        %v1527 = vld [vmem:[%s179 + $0xe28] sm:$0xf]
        %v1528 = vld [vmem:[%s179 + $0xe2c] sm:$0xf]
        %v1529 = vld [vmem:[%s179 + $0xe30] sm:$0xf]
        %v1530 = vld [vmem:[%s179 + $0xe34] sm:$0xf]
        %v1531 = vld [vmem:[%s179 + $0xe38] sm:$0xf]
        %v1532 = vld [vmem:[%s179 + $0xe3c] sm:$0xf]
        %v1533 = vld [vmem:[%s179 + $0xe40] sm:$0xf]
        %v1534 = vld [vmem:[%s179 + $0xe44] sm:$0xf]
        %v1535 = vld [vmem:[%s179 + $0xe48] sm:$0xf]
        %v1536 = vld [vmem:[%s179 + $0xe4c] sm:$0xf]
        %v1537 = vld [vmem:[%s179 + $0xe50] sm:$0xf]
        %v1538 = vld [vmem:[%s179 + $0xe54] sm:$0xf]
        %v1539 = vld [vmem:[%s179 + $0xe58] sm:$0xf]
        %v1540 = vld [vmem:[%s179 + $0xe5c] sm:$0xf]
        %v1541 = vld [vmem:[%s179 + $0xe60] sm:$0xf]
        %v1542 = vld [vmem:[%s179 + $0xe64] sm:$0xf]
        %v1543 = vld [vmem:[%s179 + $0xe68] sm:$0xf]
        %v1544 = vld [vmem:[%s179 + $0xe6c] sm:$0xf]
        %v1545 = vld [vmem:[%s179 + $0xe70] sm:$0xf]
        %v1546 = vld [vmem:[%s179 + $0xe74] sm:$0xf]
        %v1547 = vld [vmem:[%s179 + $0xe78] sm:$0xf]
        %v1548 = vld [vmem:[%s179 + $0xe7c] sm:$0xf]
        %v1549 = vld [vmem:[%s179 + $0xe80] sm:$0xf]
        %v1550 = vld [vmem:[%s179 + $0xe84] sm:$0xf]
        %v1551 = vld [vmem:[%s179 + $0xe88] sm:$0xf]
        %v1552 = vld [vmem:[%s179 + $0xe8c] sm:$0xf]
        %v1553 = vld [vmem:[%s179 + $0xe90] sm:$0xf]
        %v1554 = vld [vmem:[%s179 + $0xe94] sm:$0xf]
        %v1555 = vld [vmem:[%s179 + $0xe98] sm:$0xf]
        %v1556 = vld [vmem:[%s179 + $0xe9c] sm:$0xf]
        %v1557 = vld [vmem:[%s179 + $0xea0] sm:$0xf]
        %v1558 = vld [vmem:[%s179 + $0xea4] sm:$0xf]
        %v1559 = vld [vmem:[%s179 + $0xea8] sm:$0xf]
        %v1560 = vld [vmem:[%s179 + $0xeac] sm:$0xf]
        %v1561 = vld [vmem:[%s179 + $0xeb0] sm:$0xf]
        %v1562 = vld [vmem:[%s179 + $0xeb4] sm:$0xf]
        %v1563 = vld [vmem:[%s179 + $0xeb8] sm:$0xf]
        %v1564 = vld [vmem:[%s179 + $0xebc] sm:$0xf]
        %v1565 = vld [vmem:[%s179 + $0xec0] sm:$0xf]
        %v1566 = vld [vmem:[%s179 + $0xec4] sm:$0xf]
        %v1567 = vld [vmem:[%s179 + $0xec8] sm:$0xf]
        %v1568 = vld [vmem:[%s179 + $0xecc] sm:$0xf]
        %v1569 = vld [vmem:[%s179 + $0xed0] sm:$0xf]
        %v1570 = vld [vmem:[%s179 + $0xed4] sm:$0xf]
        %v1571 = vld [vmem:[%s179 + $0xed8] sm:$0xf]
        %v1572 = vld [vmem:[%s179 + $0xedc] sm:$0xf]
        %v1573 = vld [vmem:[%s179 + $0xee0] sm:$0xf]
        %v1574 = vld [vmem:[%s179 + $0xee4] sm:$0xf]
        %v1575 = vld [vmem:[%s179 + $0xee8] sm:$0xf]
        %v1576 = vld [vmem:[%s179 + $0xeec] sm:$0xf]
        %v1577 = vld [vmem:[%s179 + $0xef0] sm:$0xf]
        %v1578 = vld [vmem:[%s179 + $0xef4] sm:$0xf]
        %v1579 = vld [vmem:[%s179 + $0xef8] sm:$0xf]
        %v1580 = vld [vmem:[%s179 + $0xefc] sm:$0xf]
        %v1581 = vld [vmem:[%s179 + $0xf00] sm:$0xf]
        %v1582 = vld [vmem:[%s179 + $0xf04] sm:$0xf]
        %v1583 = vld [vmem:[%s179 + $0xf08] sm:$0xf]
        %v1584 = vld [vmem:[%s179 + $0xf0c] sm:$0xf]
        %v1585 = vld [vmem:[%s179 + $0xf10] sm:$0xf]
        %v1586 = vld [vmem:[%s179 + $0xf14] sm:$0xf]
        %v1587 = vld [vmem:[%s179 + $0xf18] sm:$0xf]
        %v1588 = vld [vmem:[%s179 + $0xf1c] sm:$0xf]
        %v1589 = vld [vmem:[%s179 + $0xf20] sm:$0xf]
        %v1590 = vld [vmem:[%s179 + $0xf24] sm:$0xf]
        %v1591 = vld [vmem:[%s179 + $0xf28] sm:$0xf]
        %v1592 = vld [vmem:[%s179 + $0xf2c] sm:$0xf]
        %v1593 = vld [vmem:[%s179 + $0xf30] sm:$0xf]
        %v1594 = vld [vmem:[%s179 + $0xf34] sm:$0xf]
        %v1595 = vld [vmem:[%s179 + $0xf38] sm:$0xf]
        %v1596 = vld [vmem:[%s179 + $0xf3c] sm:$0xf]
        %v1597 = vld [vmem:[%s179 + $0xf40] sm:$0xf]
        %v1598 = vld [vmem:[%s179 + $0xf44] sm:$0xf]
        %v1599 = vld [vmem:[%s179 + $0xf48] sm:$0xf]
        %v1600 = vld [vmem:[%s179 + $0xf4c] sm:$0xf]
        %v1601 = vld [vmem:[%s179 + $0xf50] sm:$0xf]
        %v1602 = vld [vmem:[%s179 + $0xf54] sm:$0xf]
        %v1603 = vld [vmem:[%s179 + $0xf58] sm:$0xf]
        %v1604 = vld [vmem:[%s179 + $0xf5c] sm:$0xf]
        %v1605 = vld [vmem:[%s179 + $0xf60] sm:$0xf]
        %v1606 = vld [vmem:[%s179 + $0xf64] sm:$0xf]
        %v1607 = vld [vmem:[%s179 + $0xf68] sm:$0xf]
        %v1608 = vld [vmem:[%s179 + $0xf6c] sm:$0xf]
        %v1609 = vld [vmem:[%s179 + $0xf70] sm:$0xf]
        %v1610 = vld [vmem:[%s179 + $0xf74] sm:$0xf]
        %v1611 = vld [vmem:[%s179 + $0xf78] sm:$0xf]
        %v1612 = vld [vmem:[%s179 + $0xf7c] sm:$0xf]
        %v1613 = vld [vmem:[%s179 + $0xf80] sm:$0xf]
        %v1614 = vld [vmem:[%s179 + $0xf84] sm:$0xf]
        %v1615 = vld [vmem:[%s179 + $0xf88] sm:$0xf]
        %v1616 = vld [vmem:[%s179 + $0xf8c] sm:$0xf]
        %v1617 = vld [vmem:[%s179 + $0xf90] sm:$0xf]
        %v1618 = vld [vmem:[%s179 + $0xf94] sm:$0xf]
        %v1619 = vld [vmem:[%s179 + $0xf98] sm:$0xf]
        %v1620 = vld [vmem:[%s179 + $0xf9c] sm:$0xf]
        %v1621 = vld [vmem:[%s179 + $0xfa0] sm:$0xf]
        %v1622 = vld [vmem:[%s179 + $0xfa4] sm:$0xf]
        %v1623 = vld [vmem:[%s179 + $0xfa8] sm:$0xf]
        %v1624 = vld [vmem:[%s179 + $0xfac] sm:$0xf]
        %v1625 = vld [vmem:[%s179 + $0xfb0] sm:$0xf]
        %v1626 = vld [vmem:[%s179 + $0xfb4] sm:$0xf]
        %v1627 = vld [vmem:[%s179 + $0xfb8] sm:$0xf]
        %v1628 = vld [vmem:[%s179 + $0xfbc] sm:$0xf]
        %v1629 = vld [vmem:[%s179 + $0xfc0] sm:$0xf]
        %v1630 = vld [vmem:[%s179 + $0xfc4] sm:$0xf]
        %v1631 = vld [vmem:[%s179 + $0xfc8] sm:$0xf]
        %v1632 = vld [vmem:[%s179 + $0xfcc] sm:$0xf]
        %v1633 = vld [vmem:[%s179 + $0xfd0] sm:$0xf]
        %v1634 = vld [vmem:[%s179 + $0xfd4] sm:$0xf]
        %v1635 = vld [vmem:[%s179 + $0xfd8] sm:$0xf]
        %v1636 = vld [vmem:[%s179 + $0xfdc] sm:$0xf]
        %v1637 = vld [vmem:[%s179 + $0xfe0] sm:$0xf]
        %v1638 = vld [vmem:[%s179 + $0xfe4] sm:$0xf]
        %v1639 = vld [vmem:[%s179 + $0xfe8] sm:$0xf]
        %v1640 = vld [vmem:[%s179 + $0xfec] sm:$0xf]
        %v1641 = vld [vmem:[%s179 + $0xff0] sm:$0xf]
        %v1642 = vld [vmem:[%s179 + $0xff4] sm:$0xf]
        %v1643 = vld [vmem:[%s179 + $0xff8] sm:$0xf]
        %v1644 = vld [vmem:[%s179 + $0xffc] sm:$0xf]
        %v2669 = vunpack.c.l.b16 %v621
        %v2670 = vunpack.c.l.b16 %v622
        %v2671 = vunpack.c.l.b16 %v623
        %v2672 = vunpack.c.l.b16 %v624
        %v2673 = vunpack.c.l.b16 %v625
        %v2674 = vunpack.c.l.b16 %v626
        %v2675 = vunpack.c.l.b16 %v627
        %v2676 = vunpack.c.l.b16 %v628
        %v2677 = vunpack.c.l.b16 %v629
        %v2678 = vunpack.c.l.b16 %v630
        %v2679 = vunpack.c.l.b16 %v631
        %v2680 = vunpack.c.l.b16 %v632
        %v2681 = vunpack.c.l.b16 %v633
        %v2682 = vunpack.c.l.b16 %v634
        %v2683 = vunpack.c.l.b16 %v635
        %v2684 = vunpack.c.l.b16 %v636
        %v2685 = vunpack.c.l.b16 %v637
        %v2686 = vunpack.c.l.b16 %v638
        %v2687 = vunpack.c.l.b16 %v639
        %v2688 = vunpack.c.l.b16 %v640
        %v2689 = vunpack.c.l.b16 %v641
        %v2690 = vunpack.c.l.b16 %v642
        %v2691 = vunpack.c.l.b16 %v643
        %v2692 = vunpack.c.l.b16 %v644
        %v2693 = vunpack.c.l.b16 %v645
        %v2694 = vunpack.c.l.b16 %v646
        %v2695 = vunpack.c.l.b16 %v647
        %v2696 = vunpack.c.l.b16 %v648
        %v2697 = vunpack.c.l.b16 %v649
        %v2698 = vunpack.c.l.b16 %v650
        %v2699 = vunpack.c.l.b16 %v651
        %v2700 = vunpack.c.l.b16 %v652
        %v2701 = vunpack.c.l.b16 %v653
        %v2702 = vunpack.c.l.b16 %v654
        %v2703 = vunpack.c.l.b16 %v655
        %v2704 = vunpack.c.l.b16 %v656
        %v2705 = vunpack.c.l.b16 %v657
        %v2706 = vunpack.c.l.b16 %v658
        %v2707 = vunpack.c.l.b16 %v659
        %v2708 = vunpack.c.l.b16 %v660
        %v2709 = vunpack.c.l.b16 %v661
        %v2710 = vunpack.c.l.b16 %v662
        %v2711 = vunpack.c.l.b16 %v663
        %v2712 = vunpack.c.l.b16 %v664
        %v2713 = vunpack.c.l.b16 %v665
        %v2714 = vunpack.c.l.b16 %v666
        %v2715 = vunpack.c.l.b16 %v667
        %v2716 = vunpack.c.l.b16 %v668
        %v2717 = vunpack.c.l.b16 %v669
        %v2718 = vunpack.c.l.b16 %v670
        %v2719 = vunpack.c.l.b16 %v671
        %v2720 = vunpack.c.l.b16 %v672
        %v2721 = vunpack.c.l.b16 %v673
        %v2722 = vunpack.c.l.b16 %v674
        %v2723 = vunpack.c.l.b16 %v675
        %v2724 = vunpack.c.l.b16 %v676
        %v2725 = vunpack.c.l.b16 %v677
        %v2726 = vunpack.c.l.b16 %v678
        %v2727 = vunpack.c.l.b16 %v679
        %v2728 = vunpack.c.l.b16 %v680
        %v2729 = vunpack.c.l.b16 %v681
        %v2730 = vunpack.c.l.b16 %v682
        %v2731 = vunpack.c.l.b16 %v683
        %v2732 = vunpack.c.l.b16 %v684
        %v2733 = vunpack.c.l.b16 %v685
        %v2734 = vunpack.c.l.b16 %v686
        %v2735 = vunpack.c.l.b16 %v687
        %v2736 = vunpack.c.l.b16 %v688
        %v2737 = vunpack.c.l.b16 %v689
        %v2738 = vunpack.c.l.b16 %v690
        %v2739 = vunpack.c.l.b16 %v691
        %v2740 = vunpack.c.l.b16 %v692
        %v2741 = vunpack.c.l.b16 %v693
        %v2742 = vunpack.c.l.b16 %v694
        %v2743 = vunpack.c.l.b16 %v695
        %v2744 = vunpack.c.l.b16 %v696
        %v2745 = vunpack.c.l.b16 %v697
        %v2746 = vunpack.c.l.b16 %v698
        %v2747 = vunpack.c.l.b16 %v699
        %v2748 = vunpack.c.l.b16 %v700
        %v2749 = vunpack.c.l.b16 %v701
        %v2750 = vunpack.c.l.b16 %v702
        %v2751 = vunpack.c.l.b16 %v703
        %v2752 = vunpack.c.l.b16 %v704
        %v2753 = vunpack.c.l.b16 %v705
        %v2754 = vunpack.c.l.b16 %v706
        %v2755 = vunpack.c.l.b16 %v707
        %v2756 = vunpack.c.l.b16 %v708
        %v2757 = vunpack.c.l.b16 %v709
        %v2758 = vunpack.c.l.b16 %v710
        %v2759 = vunpack.c.l.b16 %v711
        %v2760 = vunpack.c.l.b16 %v712
        %v2761 = vunpack.c.l.b16 %v713
        %v2762 = vunpack.c.l.b16 %v714
        %v2763 = vunpack.c.l.b16 %v715
        %v2764 = vunpack.c.l.b16 %v716
        %v2765 = vunpack.c.l.b16 %v717
        %v2766 = vunpack.c.l.b16 %v718
        %v2767 = vunpack.c.l.b16 %v719
        %v2768 = vunpack.c.l.b16 %v720
        %v2769 = vunpack.c.l.b16 %v721
        %v2770 = vunpack.c.l.b16 %v722
        %v2771 = vunpack.c.l.b16 %v723
        %v2772 = vunpack.c.l.b16 %v724
        %v2773 = vunpack.c.l.b16 %v725
        %v2774 = vunpack.c.l.b16 %v726
        %v2775 = vunpack.c.l.b16 %v727
        %v2776 = vunpack.c.l.b16 %v728
        %v2777 = vunpack.c.l.b16 %v729
        %v2778 = vunpack.c.l.b16 %v730
        %v2779 = vunpack.c.l.b16 %v731
        %v2780 = vunpack.c.l.b16 %v732
        %v2781 = vunpack.c.l.b16 %v733
        %v2782 = vunpack.c.l.b16 %v734
        %v2783 = vunpack.c.l.b16 %v735
        %v2784 = vunpack.c.l.b16 %v736
        %v2785 = vunpack.c.l.b16 %v737
        %v2786 = vunpack.c.l.b16 %v738
        %v2787 = vunpack.c.l.b16 %v739
        %v2788 = vunpack.c.l.b16 %v740
        %v2789 = vunpack.c.l.b16 %v741
        %v2790 = vunpack.c.l.b16 %v742
        %v2791 = vunpack.c.l.b16 %v743
        %v2792 = vunpack.c.l.b16 %v744
        %v2793 = vunpack.c.l.b16 %v745
        %v2794 = vunpack.c.l.b16 %v746
        %v2795 = vunpack.c.l.b16 %v747
        %v2796 = vunpack.c.l.b16 %v748
        %v2797 = vunpack.c.l.b16 %v749
        %v2798 = vunpack.c.l.b16 %v750
        %v2799 = vunpack.c.l.b16 %v751
        %v2800 = vunpack.c.l.b16 %v752
        %v2801 = vunpack.c.l.b16 %v753
        %v2802 = vunpack.c.l.b16 %v754
        %v2803 = vunpack.c.l.b16 %v755
        %v2804 = vunpack.c.l.b16 %v756
        %v2805 = vunpack.c.l.b16 %v757
        %v2806 = vunpack.c.l.b16 %v758
        %v2807 = vunpack.c.l.b16 %v759
        %v2808 = vunpack.c.l.b16 %v760
        %v2809 = vunpack.c.l.b16 %v761
        %v2810 = vunpack.c.l.b16 %v762
        %v2811 = vunpack.c.l.b16 %v763
        %v2812 = vunpack.c.l.b16 %v764
        %v2813 = vunpack.c.l.b16 %v765
        %v2814 = vunpack.c.l.b16 %v766
        %v2815 = vunpack.c.l.b16 %v767
        %v2816 = vunpack.c.l.b16 %v768
        %v2817 = vunpack.c.l.b16 %v769
        %v2818 = vunpack.c.l.b16 %v770
        %v2819 = vunpack.c.l.b16 %v771
        %v2820 = vunpack.c.l.b16 %v772
        %v2821 = vunpack.c.l.b16 %v773
        %v2822 = vunpack.c.l.b16 %v774
        %v2823 = vunpack.c.l.b16 %v775
        %v2824 = vunpack.c.l.b16 %v776
        %v2825 = vunpack.c.l.b16 %v777
        %v2826 = vunpack.c.l.b16 %v778
        %v2827 = vunpack.c.l.b16 %v779
        %v2828 = vunpack.c.l.b16 %v780
        %v2829 = vunpack.c.l.b16 %v781
        %v2830 = vunpack.c.l.b16 %v782
        %v2831 = vunpack.c.l.b16 %v783
        %v2832 = vunpack.c.l.b16 %v784
        %v2833 = vunpack.c.l.b16 %v785
        %v2834 = vunpack.c.l.b16 %v786
        %v2835 = vunpack.c.l.b16 %v787
        %v2836 = vunpack.c.l.b16 %v788
        %v2837 = vunpack.c.l.b16 %v789
        %v2838 = vunpack.c.l.b16 %v790
        %v2839 = vunpack.c.l.b16 %v791
        %v2840 = vunpack.c.l.b16 %v792
        %v2841 = vunpack.c.l.b16 %v793
        %v2842 = vunpack.c.l.b16 %v794
        %v2843 = vunpack.c.l.b16 %v795
        %v2844 = vunpack.c.l.b16 %v796
        %v2845 = vunpack.c.l.b16 %v797
        %v2846 = vunpack.c.l.b16 %v798
        %v2847 = vunpack.c.l.b16 %v799
        %v2848 = vunpack.c.l.b16 %v800
        %v2849 = vunpack.c.l.b16 %v801
        %v2850 = vunpack.c.l.b16 %v802
        %v2851 = vunpack.c.l.b16 %v803
        %v2852 = vunpack.c.l.b16 %v804
        %v2853 = vunpack.c.l.b16 %v805
        %v2854 = vunpack.c.l.b16 %v806
        %v2855 = vunpack.c.l.b16 %v807
        %v2856 = vunpack.c.l.b16 %v808
        %v2857 = vunpack.c.l.b16 %v809
        %v2858 = vunpack.c.l.b16 %v810
        %v2859 = vunpack.c.l.b16 %v811
        %v2860 = vunpack.c.l.b16 %v812
        %v2861 = vunpack.c.l.b16 %v813
        %v2862 = vunpack.c.l.b16 %v814
        %v2863 = vunpack.c.l.b16 %v815
        %v2864 = vunpack.c.l.b16 %v816
        %v2865 = vunpack.c.l.b16 %v817
        %v2866 = vunpack.c.l.b16 %v818
        %v2867 = vunpack.c.l.b16 %v819
        %v2868 = vunpack.c.l.b16 %v820
        %v2869 = vunpack.c.l.b16 %v821
        %v2870 = vunpack.c.l.b16 %v822
        %v2871 = vunpack.c.l.b16 %v823
        %v2872 = vunpack.c.l.b16 %v824
        %v2873 = vunpack.c.l.b16 %v825
        %v2874 = vunpack.c.l.b16 %v826
        %v2875 = vunpack.c.l.b16 %v827
        %v2876 = vunpack.c.l.b16 %v828
        %v2877 = vunpack.c.l.b16 %v829
        %v2878 = vunpack.c.l.b16 %v830
        %v2879 = vunpack.c.l.b16 %v831
        %v2880 = vunpack.c.l.b16 %v832
        %v2881 = vunpack.c.l.b16 %v833
        %v2882 = vunpack.c.l.b16 %v834
        %v2883 = vunpack.c.l.b16 %v835
        %v2884 = vunpack.c.l.b16 %v836
        %v2885 = vunpack.c.l.b16 %v837
        %v2886 = vunpack.c.l.b16 %v838
        %v2887 = vunpack.c.l.b16 %v839
        %v2888 = vunpack.c.l.b16 %v840
        %v2889 = vunpack.c.l.b16 %v841
        %v2890 = vunpack.c.l.b16 %v842
        %v2891 = vunpack.c.l.b16 %v843
        %v2892 = vunpack.c.l.b16 %v844
        %v2893 = vunpack.c.l.b16 %v845
        %v2894 = vunpack.c.l.b16 %v846
        %v2895 = vunpack.c.l.b16 %v847
        %v2896 = vunpack.c.l.b16 %v848
        %v2897 = vunpack.c.l.b16 %v849
        %v2898 = vunpack.c.l.b16 %v850
        %v2899 = vunpack.c.l.b16 %v851
        %v2900 = vunpack.c.l.b16 %v852
        %v2901 = vunpack.c.l.b16 %v853
        %v2902 = vunpack.c.l.b16 %v854
        %v2903 = vunpack.c.l.b16 %v855
        %v2904 = vunpack.c.l.b16 %v856
        %v2905 = vunpack.c.l.b16 %v857
        %v2906 = vunpack.c.l.b16 %v858
        %v2907 = vunpack.c.l.b16 %v859
        %v2908 = vunpack.c.l.b16 %v860
        %v2909 = vunpack.c.l.b16 %v861
        %v2910 = vunpack.c.l.b16 %v862
        %v2911 = vunpack.c.l.b16 %v863
        %v2912 = vunpack.c.l.b16 %v864
        %v2913 = vunpack.c.l.b16 %v865
        %v2914 = vunpack.c.l.b16 %v866
        %v2915 = vunpack.c.l.b16 %v867
        %v2916 = vunpack.c.l.b16 %v868
        %v2917 = vunpack.c.l.b16 %v869
        %v2918 = vunpack.c.l.b16 %v870
        %v2919 = vunpack.c.l.b16 %v871
        %v2920 = vunpack.c.l.b16 %v872
        %v2921 = vunpack.c.l.b16 %v873
        %v2922 = vunpack.c.l.b16 %v874
        %v2923 = vunpack.c.l.b16 %v875
        %v2924 = vunpack.c.l.b16 %v876
        %v2925 = vunpack.c.l.b16 %v877
        %v2926 = vunpack.c.l.b16 %v878
        %v2927 = vunpack.c.l.b16 %v879
        %v2928 = vunpack.c.l.b16 %v880
        %v2929 = vunpack.c.l.b16 %v881
        %v2930 = vunpack.c.l.b16 %v882
        %v2931 = vunpack.c.l.b16 %v883
        %v2932 = vunpack.c.l.b16 %v884
        %v2933 = vunpack.c.l.b16 %v885
        %v2934 = vunpack.c.l.b16 %v886
        %v2935 = vunpack.c.l.b16 %v887
        %v2936 = vunpack.c.l.b16 %v888
        %v2937 = vunpack.c.l.b16 %v889
        %v2938 = vunpack.c.l.b16 %v890
        %v2939 = vunpack.c.l.b16 %v891
        %v2940 = vunpack.c.l.b16 %v892
        %v2941 = vunpack.c.l.b16 %v893
        %v2942 = vunpack.c.l.b16 %v894
        %v2943 = vunpack.c.l.b16 %v895
        %v2944 = vunpack.c.l.b16 %v896
        %v2945 = vunpack.c.l.b16 %v897
        %v2946 = vunpack.c.l.b16 %v898
        %v2947 = vunpack.c.l.b16 %v899
        %v2948 = vunpack.c.l.b16 %v900
        %v2949 = vunpack.c.l.b16 %v901
        %v2950 = vunpack.c.l.b16 %v902
        %v2951 = vunpack.c.l.b16 %v903
        %v2952 = vunpack.c.l.b16 %v904
        %v2953 = vunpack.c.l.b16 %v905
        %v2954 = vunpack.c.l.b16 %v906
        %v2955 = vunpack.c.l.b16 %v907
        %v2956 = vunpack.c.l.b16 %v908
        %v2957 = vunpack.c.l.b16 %v909
        %v2958 = vunpack.c.l.b16 %v910
        %v2959 = vunpack.c.l.b16 %v911
        %v2960 = vunpack.c.l.b16 %v912
        %v2961 = vunpack.c.l.b16 %v913
        %v2962 = vunpack.c.l.b16 %v914
        %v2963 = vunpack.c.l.b16 %v915
        %v2964 = vunpack.c.l.b16 %v916
        %v2965 = vunpack.c.l.b16 %v917
        %v2966 = vunpack.c.l.b16 %v918
        %v2967 = vunpack.c.l.b16 %v919
        %v2968 = vunpack.c.l.b16 %v920
        %v2969 = vunpack.c.l.b16 %v921
        %v2970 = vunpack.c.l.b16 %v922
        %v2971 = vunpack.c.l.b16 %v923
        %v2972 = vunpack.c.l.b16 %v924
        %v2973 = vunpack.c.l.b16 %v925
        %v2974 = vunpack.c.l.b16 %v926
        %v2975 = vunpack.c.l.b16 %v927
        %v2976 = vunpack.c.l.b16 %v928
        %v2977 = vunpack.c.l.b16 %v929
        %v2978 = vunpack.c.l.b16 %v930
        %v2979 = vunpack.c.l.b16 %v931
        %v2980 = vunpack.c.l.b16 %v932
        %v2981 = vunpack.c.l.b16 %v933
        %v2982 = vunpack.c.l.b16 %v934
        %v2983 = vunpack.c.l.b16 %v935
        %v2984 = vunpack.c.l.b16 %v936
        %v2985 = vunpack.c.l.b16 %v937
        %v2986 = vunpack.c.l.b16 %v938
        %v2987 = vunpack.c.l.b16 %v939
        %v2988 = vunpack.c.l.b16 %v940
        %v2989 = vunpack.c.l.b16 %v941
        %v2990 = vunpack.c.l.b16 %v942
        %v2991 = vunpack.c.l.b16 %v943
        %v2992 = vunpack.c.l.b16 %v944
        %v2993 = vunpack.c.l.b16 %v945
        %v2994 = vunpack.c.l.b16 %v946
        %v2995 = vunpack.c.l.b16 %v947
        %v2996 = vunpack.c.l.b16 %v948
        %v2997 = vunpack.c.l.b16 %v949
        %v2998 = vunpack.c.l.b16 %v950
        %v2999 = vunpack.c.l.b16 %v951
        %v3000 = vunpack.c.l.b16 %v952
        %v3001 = vunpack.c.l.b16 %v953
        %v3002 = vunpack.c.l.b16 %v954
        %v3003 = vunpack.c.l.b16 %v955
        %v3004 = vunpack.c.l.b16 %v956
        %v3005 = vunpack.c.l.b16 %v957
        %v3006 = vunpack.c.l.b16 %v958
        %v3007 = vunpack.c.l.b16 %v959
        %v3008 = vunpack.c.l.b16 %v960
        %v3009 = vunpack.c.l.b16 %v961
        %v3010 = vunpack.c.l.b16 %v962
        %v3011 = vunpack.c.l.b16 %v963
        %v3012 = vunpack.c.l.b16 %v964
        %v3013 = vunpack.c.l.b16 %v965
        %v3014 = vunpack.c.l.b16 %v966
        %v3015 = vunpack.c.l.b16 %v967
        %v3016 = vunpack.c.l.b16 %v968
        %v3017 = vunpack.c.l.b16 %v969
        %v3018 = vunpack.c.l.b16 %v970
        %v3019 = vunpack.c.l.b16 %v971
        %v3020 = vunpack.c.l.b16 %v972
        %v3021 = vunpack.c.l.b16 %v973
        %v3022 = vunpack.c.l.b16 %v974
        %v3023 = vunpack.c.l.b16 %v975
        %v3024 = vunpack.c.l.b16 %v976
        %v3025 = vunpack.c.l.b16 %v977
        %v3026 = vunpack.c.l.b16 %v978
        %v3027 = vunpack.c.l.b16 %v979
        %v3028 = vunpack.c.l.b16 %v980
        %v3029 = vunpack.c.l.b16 %v981
        %v3030 = vunpack.c.l.b16 %v982
        %v3031 = vunpack.c.l.b16 %v983
        %v3032 = vunpack.c.l.b16 %v984
        %v3033 = vunpack.c.l.b16 %v985
        %v3034 = vunpack.c.l.b16 %v986
        %v3035 = vunpack.c.l.b16 %v987
        %v3036 = vunpack.c.l.b16 %v988
        %v3037 = vunpack.c.l.b16 %v989
        %v3038 = vunpack.c.l.b16 %v990
        %v3039 = vunpack.c.l.b16 %v991
        %v3040 = vunpack.c.l.b16 %v992
        %v3041 = vunpack.c.l.b16 %v993
        %v3042 = vunpack.c.l.b16 %v994
        %v3043 = vunpack.c.l.b16 %v995
        %v3044 = vunpack.c.l.b16 %v996
        %v3045 = vunpack.c.l.b16 %v997
        %v3046 = vunpack.c.l.b16 %v998
        %v3047 = vunpack.c.l.b16 %v999
        %v3048 = vunpack.c.l.b16 %v1000
        %v3049 = vunpack.c.l.b16 %v1001
        %v3050 = vunpack.c.l.b16 %v1002
        %v3051 = vunpack.c.l.b16 %v1003
        %v3052 = vunpack.c.l.b16 %v1004
        %v3053 = vunpack.c.l.b16 %v1005
        %v3054 = vunpack.c.l.b16 %v1006
        %v3055 = vunpack.c.l.b16 %v1007
        %v3056 = vunpack.c.l.b16 %v1008
        %v3057 = vunpack.c.l.b16 %v1009
        %v3058 = vunpack.c.l.b16 %v1010
        %v3059 = vunpack.c.l.b16 %v1011
        %v3060 = vunpack.c.l.b16 %v1012
        %v3061 = vunpack.c.l.b16 %v1013
        %v3062 = vunpack.c.l.b16 %v1014
        %v3063 = vunpack.c.l.b16 %v1015
        %v3064 = vunpack.c.l.b16 %v1016
        %v3065 = vunpack.c.l.b16 %v1017
        %v3066 = vunpack.c.l.b16 %v1018
        %v3067 = vunpack.c.l.b16 %v1019
        %v3068 = vunpack.c.l.b16 %v1020
        %v3069 = vunpack.c.l.b16 %v1021
        %v3070 = vunpack.c.l.b16 %v1022
        %v3071 = vunpack.c.l.b16 %v1023
        %v3072 = vunpack.c.l.b16 %v1024
        %v3073 = vunpack.c.l.b16 %v1025
        %v3074 = vunpack.c.l.b16 %v1026
        %v3075 = vunpack.c.l.b16 %v1027
        %v3076 = vunpack.c.l.b16 %v1028
        %v3077 = vunpack.c.l.b16 %v1029
        %v3078 = vunpack.c.l.b16 %v1030
        %v3079 = vunpack.c.l.b16 %v1031
        %v3080 = vunpack.c.l.b16 %v1032
        %v3081 = vunpack.c.l.b16 %v1033
        %v3082 = vunpack.c.l.b16 %v1034
        %v3083 = vunpack.c.l.b16 %v1035
        %v3084 = vunpack.c.l.b16 %v1036
        %v3085 = vunpack.c.l.b16 %v1037
        %v3086 = vunpack.c.l.b16 %v1038
        %v3087 = vunpack.c.l.b16 %v1039
        %v3088 = vunpack.c.l.b16 %v1040
        %v3089 = vunpack.c.l.b16 %v1041
        %v3090 = vunpack.c.l.b16 %v1042
        %v3091 = vunpack.c.l.b16 %v1043
        %v3092 = vunpack.c.l.b16 %v1044
        %v3093 = vunpack.c.l.b16 %v1045
        %v3094 = vunpack.c.l.b16 %v1046
        %v3095 = vunpack.c.l.b16 %v1047
        %v3096 = vunpack.c.l.b16 %v1048
        %v3097 = vunpack.c.l.b16 %v1049
        %v3098 = vunpack.c.l.b16 %v1050
        %v3099 = vunpack.c.l.b16 %v1051
        %v3100 = vunpack.c.l.b16 %v1052
        %v3101 = vunpack.c.l.b16 %v1053
        %v3102 = vunpack.c.l.b16 %v1054
        %v3103 = vunpack.c.l.b16 %v1055
        %v3104 = vunpack.c.l.b16 %v1056
        %v3105 = vunpack.c.l.b16 %v1057
        %v3106 = vunpack.c.l.b16 %v1058
        %v3107 = vunpack.c.l.b16 %v1059
        %v3108 = vunpack.c.l.b16 %v1060
        %v3109 = vunpack.c.l.b16 %v1061
        %v3110 = vunpack.c.l.b16 %v1062
        %v3111 = vunpack.c.l.b16 %v1063
        %v3112 = vunpack.c.l.b16 %v1064
        %v3113 = vunpack.c.l.b16 %v1065
        %v3114 = vunpack.c.l.b16 %v1066
        %v3115 = vunpack.c.l.b16 %v1067
        %v3116 = vunpack.c.l.b16 %v1068
        %v3117 = vunpack.c.l.b16 %v1069
        %v3118 = vunpack.c.l.b16 %v1070
        %v3119 = vunpack.c.l.b16 %v1071
        %v3120 = vunpack.c.l.b16 %v1072
        %v3121 = vunpack.c.l.b16 %v1073
        %v3122 = vunpack.c.l.b16 %v1074
        %v3123 = vunpack.c.l.b16 %v1075
        %v3124 = vunpack.c.l.b16 %v1076
        %v3125 = vunpack.c.l.b16 %v1077
        %v3126 = vunpack.c.l.b16 %v1078
        %v3127 = vunpack.c.l.b16 %v1079
        %v3128 = vunpack.c.l.b16 %v1080
        %v3129 = vunpack.c.l.b16 %v1081
        %v3130 = vunpack.c.l.b16 %v1082
        %v3131 = vunpack.c.l.b16 %v1083
        %v3132 = vunpack.c.l.b16 %v1084
        %v3133 = vunpack.c.l.b16 %v1085
        %v3134 = vunpack.c.l.b16 %v1086
        %v3135 = vunpack.c.l.b16 %v1087
        %v3136 = vunpack.c.l.b16 %v1088
        %v3137 = vunpack.c.l.b16 %v1089
        %v3138 = vunpack.c.l.b16 %v1090
        %v3139 = vunpack.c.l.b16 %v1091
        %v3140 = vunpack.c.l.b16 %v1092
        %v3141 = vunpack.c.l.b16 %v1093
        %v3142 = vunpack.c.l.b16 %v1094
        %v3143 = vunpack.c.l.b16 %v1095
        %v3144 = vunpack.c.l.b16 %v1096
        %v3145 = vunpack.c.l.b16 %v1097
        %v3146 = vunpack.c.l.b16 %v1098
        %v3147 = vunpack.c.l.b16 %v1099
        %v3148 = vunpack.c.l.b16 %v1100
        %v3149 = vunpack.c.l.b16 %v1101
        %v3150 = vunpack.c.l.b16 %v1102
        %v3151 = vunpack.c.l.b16 %v1103
        %v3152 = vunpack.c.l.b16 %v1104
        %v3153 = vunpack.c.l.b16 %v1105
        %v3154 = vunpack.c.l.b16 %v1106
        %v3155 = vunpack.c.l.b16 %v1107
        %v3156 = vunpack.c.l.b16 %v1108
        %v3157 = vunpack.c.l.b16 %v1109
        %v3158 = vunpack.c.l.b16 %v1110
        %v3159 = vunpack.c.l.b16 %v1111
        %v3160 = vunpack.c.l.b16 %v1112
        %v3161 = vunpack.c.l.b16 %v1113
        %v3162 = vunpack.c.l.b16 %v1114
        %v3163 = vunpack.c.l.b16 %v1115
        %v3164 = vunpack.c.l.b16 %v1116
        %v3165 = vunpack.c.l.b16 %v1117
        %v3166 = vunpack.c.l.b16 %v1118
        %v3167 = vunpack.c.l.b16 %v1119
        %v3168 = vunpack.c.l.b16 %v1120
        %v3169 = vunpack.c.l.b16 %v1121
        %v3170 = vunpack.c.l.b16 %v1122
        %v3171 = vunpack.c.l.b16 %v1123
        %v3172 = vunpack.c.l.b16 %v1124
        %v3173 = vunpack.c.l.b16 %v1125
        %v3174 = vunpack.c.l.b16 %v1126
        %v3175 = vunpack.c.l.b16 %v1127
        %v3176 = vunpack.c.l.b16 %v1128
        %v3177 = vunpack.c.l.b16 %v1129
        %v3178 = vunpack.c.l.b16 %v1130
        %v3179 = vunpack.c.l.b16 %v1131
        %v3180 = vunpack.c.l.b16 %v1132
        %v3181 = vunpack.c.l.b16 %v1133
        %v3182 = vunpack.c.l.b16 %v1134
        %v3183 = vunpack.c.l.b16 %v1135
        %v3184 = vunpack.c.l.b16 %v1136
        %v3185 = vunpack.c.l.b16 %v1137
        %v3186 = vunpack.c.l.b16 %v1138
        %v3187 = vunpack.c.l.b16 %v1139
        %v3188 = vunpack.c.l.b16 %v1140
        %v3189 = vunpack.c.l.b16 %v1141
        %v3190 = vunpack.c.l.b16 %v1142
        %v3191 = vunpack.c.l.b16 %v1143
        %v3192 = vunpack.c.l.b16 %v1144
        %v3193 = vunpack.c.l.b16 %v1145
        %v3194 = vunpack.c.l.b16 %v1146
        %v3195 = vunpack.c.l.b16 %v1147
        %v3196 = vunpack.c.l.b16 %v1148
        %v3197 = vunpack.c.l.b16 %v1149
        %v3198 = vunpack.c.l.b16 %v1150
        %v3199 = vunpack.c.l.b16 %v1151
        %v3200 = vunpack.c.l.b16 %v1152
        %v3201 = vunpack.c.l.b16 %v1153
        %v3202 = vunpack.c.l.b16 %v1154
        %v3203 = vunpack.c.l.b16 %v1155
        %v3204 = vunpack.c.l.b16 %v1156
        %v3205 = vunpack.c.l.b16 %v1157
        %v3206 = vunpack.c.l.b16 %v1158
        %v3207 = vunpack.c.l.b16 %v1159
        %v3208 = vunpack.c.l.b16 %v1160
        %v3209 = vunpack.c.l.b16 %v1161
        %v3210 = vunpack.c.l.b16 %v1162
        %v3211 = vunpack.c.l.b16 %v1163
        %v3212 = vunpack.c.l.b16 %v1164
        %v3213 = vunpack.c.l.b16 %v1165
        %v3214 = vunpack.c.l.b16 %v1166
        %v3215 = vunpack.c.l.b16 %v1167
        %v3216 = vunpack.c.l.b16 %v1168
        %v3217 = vunpack.c.l.b16 %v1169
        %v3218 = vunpack.c.l.b16 %v1170
        %v3219 = vunpack.c.l.b16 %v1171
        %v3220 = vunpack.c.l.b16 %v1172
        %v3221 = vunpack.c.l.b16 %v1173
        %v3222 = vunpack.c.l.b16 %v1174
        %v3223 = vunpack.c.l.b16 %v1175
        %v3224 = vunpack.c.l.b16 %v1176
        %v3225 = vunpack.c.l.b16 %v1177
        %v3226 = vunpack.c.l.b16 %v1178
        %v3227 = vunpack.c.l.b16 %v1179
        %v3228 = vunpack.c.l.b16 %v1180
        %v3229 = vunpack.c.l.b16 %v1181
        %v3230 = vunpack.c.l.b16 %v1182
        %v3231 = vunpack.c.l.b16 %v1183
        %v3232 = vunpack.c.l.b16 %v1184
        %v3233 = vunpack.c.l.b16 %v1185
        %v3234 = vunpack.c.l.b16 %v1186
        %v3235 = vunpack.c.l.b16 %v1187
        %v3236 = vunpack.c.l.b16 %v1188
        %v3237 = vunpack.c.l.b16 %v1189
        %v3238 = vunpack.c.l.b16 %v1190
        %v3239 = vunpack.c.l.b16 %v1191
        %v3240 = vunpack.c.l.b16 %v1192
        %v3241 = vunpack.c.l.b16 %v1193
        %v3242 = vunpack.c.l.b16 %v1194
        %v3243 = vunpack.c.l.b16 %v1195
        %v3244 = vunpack.c.l.b16 %v1196
        %v3245 = vunpack.c.l.b16 %v1197
        %v3246 = vunpack.c.l.b16 %v1198
        %v3247 = vunpack.c.l.b16 %v1199
        %v3248 = vunpack.c.l.b16 %v1200
        %v3249 = vunpack.c.l.b16 %v1201
        %v3250 = vunpack.c.l.b16 %v1202
        %v3251 = vunpack.c.l.b16 %v1203
        %v3252 = vunpack.c.l.b16 %v1204
        %v3253 = vunpack.c.l.b16 %v1205
        %v3254 = vunpack.c.l.b16 %v1206
        %v3255 = vunpack.c.l.b16 %v1207
        %v3256 = vunpack.c.l.b16 %v1208
        %v3257 = vunpack.c.l.b16 %v1209
        %v3258 = vunpack.c.l.b16 %v1210
        %v3259 = vunpack.c.l.b16 %v1211
        %v3260 = vunpack.c.l.b16 %v1212
        %v3261 = vunpack.c.l.b16 %v1213
        %v3262 = vunpack.c.l.b16 %v1214
        %v3263 = vunpack.c.l.b16 %v1215
        %v3264 = vunpack.c.l.b16 %v1216
        %v3265 = vunpack.c.l.b16 %v1217
        %v3266 = vunpack.c.l.b16 %v1218
        %v3267 = vunpack.c.l.b16 %v1219
        %v3268 = vunpack.c.l.b16 %v1220
        %v3269 = vunpack.c.l.b16 %v1221
        %v3270 = vunpack.c.l.b16 %v1222
        %v3271 = vunpack.c.l.b16 %v1223
        %v3272 = vunpack.c.l.b16 %v1224
        %v3273 = vunpack.c.l.b16 %v1225
        %v3274 = vunpack.c.l.b16 %v1226
        %v3275 = vunpack.c.l.b16 %v1227
        %v3276 = vunpack.c.l.b16 %v1228
        %v3277 = vunpack.c.l.b16 %v1229
        %v3278 = vunpack.c.l.b16 %v1230
        %v3279 = vunpack.c.l.b16 %v1231
        %v3280 = vunpack.c.l.b16 %v1232
        %v3281 = vunpack.c.l.b16 %v1233
        %v3282 = vunpack.c.l.b16 %v1234
        %v3283 = vunpack.c.l.b16 %v1235
        %v3284 = vunpack.c.l.b16 %v1236
        %v3285 = vunpack.c.l.b16 %v1237
        %v3286 = vunpack.c.l.b16 %v1238
        %v3287 = vunpack.c.l.b16 %v1239
        %v3288 = vunpack.c.l.b16 %v1240
        %v3289 = vunpack.c.l.b16 %v1241
        %v3290 = vunpack.c.l.b16 %v1242
        %v3291 = vunpack.c.l.b16 %v1243
        %v3292 = vunpack.c.l.b16 %v1244
        %v3293 = vunpack.c.l.b16 %v1245
        %v3294 = vunpack.c.l.b16 %v1246
        %v3295 = vunpack.c.l.b16 %v1247
        %v3296 = vunpack.c.l.b16 %v1248
        %v3297 = vunpack.c.l.b16 %v1249
        %v3298 = vunpack.c.l.b16 %v1250
        %v3299 = vunpack.c.l.b16 %v1251
        %v3300 = vunpack.c.l.b16 %v1252
        %v3301 = vunpack.c.l.b16 %v1253
        %v3302 = vunpack.c.l.b16 %v1254
        %v3303 = vunpack.c.l.b16 %v1255
        %v3304 = vunpack.c.l.b16 %v1256
        %v3305 = vunpack.c.l.b16 %v1257
        %v3306 = vunpack.c.l.b16 %v1258
        %v3307 = vunpack.c.l.b16 %v1259
        %v3308 = vunpack.c.l.b16 %v1260
        %v3309 = vunpack.c.l.b16 %v1261
        %v3310 = vunpack.c.l.b16 %v1262
        %v3311 = vunpack.c.l.b16 %v1263
        %v3312 = vunpack.c.l.b16 %v1264
        %v3313 = vunpack.c.l.b16 %v1265
        %v3314 = vunpack.c.l.b16 %v1266
        %v3315 = vunpack.c.l.b16 %v1267
        %v3316 = vunpack.c.l.b16 %v1268
        %v3317 = vunpack.c.l.b16 %v1269
        %v3318 = vunpack.c.l.b16 %v1270
        %v3319 = vunpack.c.l.b16 %v1271
        %v3320 = vunpack.c.l.b16 %v1272
        %v3321 = vunpack.c.l.b16 %v1273
        %v3322 = vunpack.c.l.b16 %v1274
        %v3323 = vunpack.c.l.b16 %v1275
        %v3324 = vunpack.c.l.b16 %v1276
        %v3325 = vunpack.c.l.b16 %v1277
        %v3326 = vunpack.c.l.b16 %v1278
        %v3327 = vunpack.c.l.b16 %v1279
        %v3328 = vunpack.c.l.b16 %v1280
        %v3329 = vunpack.c.l.b16 %v1281
        %v3330 = vunpack.c.l.b16 %v1282
        %v3331 = vunpack.c.l.b16 %v1283
        %v3332 = vunpack.c.l.b16 %v1284
        %v3333 = vunpack.c.l.b16 %v1285
        %v3334 = vunpack.c.l.b16 %v1286
        %v3335 = vunpack.c.l.b16 %v1287
        %v3336 = vunpack.c.l.b16 %v1288
        %v3337 = vunpack.c.l.b16 %v1289
        %v3338 = vunpack.c.l.b16 %v1290
        %v3339 = vunpack.c.l.b16 %v1291
        %v3340 = vunpack.c.l.b16 %v1292
        %v3341 = vunpack.c.l.b16 %v1293
        %v3342 = vunpack.c.l.b16 %v1294
        %v3343 = vunpack.c.l.b16 %v1295
        %v3344 = vunpack.c.l.b16 %v1296
        %v3345 = vunpack.c.l.b16 %v1297
        %v3346 = vunpack.c.l.b16 %v1298
        %v3347 = vunpack.c.l.b16 %v1299
        %v3348 = vunpack.c.l.b16 %v1300
        %v3349 = vunpack.c.l.b16 %v1301
        %v3350 = vunpack.c.l.b16 %v1302
        %v3351 = vunpack.c.l.b16 %v1303
        %v3352 = vunpack.c.l.b16 %v1304
        %v3353 = vunpack.c.l.b16 %v1305
        %v3354 = vunpack.c.l.b16 %v1306
        %v3355 = vunpack.c.l.b16 %v1307
        %v3356 = vunpack.c.l.b16 %v1308
        %v3357 = vunpack.c.l.b16 %v1309
        %v3358 = vunpack.c.l.b16 %v1310
        %v3359 = vunpack.c.l.b16 %v1311
        %v3360 = vunpack.c.l.b16 %v1312
        %v3361 = vunpack.c.l.b16 %v1313
        %v3362 = vunpack.c.l.b16 %v1314
        %v3363 = vunpack.c.l.b16 %v1315
        %v3364 = vunpack.c.l.b16 %v1316
        %v3365 = vunpack.c.l.b16 %v1317
        %v3366 = vunpack.c.l.b16 %v1318
        %v3367 = vunpack.c.l.b16 %v1319
        %v3368 = vunpack.c.l.b16 %v1320
        %v3369 = vunpack.c.l.b16 %v1321
        %v3370 = vunpack.c.l.b16 %v1322
        %v3371 = vunpack.c.l.b16 %v1323
        %v3372 = vunpack.c.l.b16 %v1324
        %v3373 = vunpack.c.l.b16 %v1325
        %v3374 = vunpack.c.l.b16 %v1326
        %v3375 = vunpack.c.l.b16 %v1327
        %v3376 = vunpack.c.l.b16 %v1328
        %v3377 = vunpack.c.l.b16 %v1329
        %v3378 = vunpack.c.l.b16 %v1330
        %v3379 = vunpack.c.l.b16 %v1331
        %v3380 = vunpack.c.l.b16 %v1332
        %v3381 = vunpack.c.l.b16 %v1333
        %v3382 = vunpack.c.l.b16 %v1334
        %v3383 = vunpack.c.l.b16 %v1335
        %v3384 = vunpack.c.l.b16 %v1336
        %v3385 = vunpack.c.l.b16 %v1337
        %v3386 = vunpack.c.l.b16 %v1338
        %v3387 = vunpack.c.l.b16 %v1339
        %v3388 = vunpack.c.l.b16 %v1340
        %v3389 = vunpack.c.l.b16 %v1341
        %v3390 = vunpack.c.l.b16 %v1342
        %v3391 = vunpack.c.l.b16 %v1343
        %v3392 = vunpack.c.l.b16 %v1344
        %v3393 = vunpack.c.l.b16 %v1345
        %v3394 = vunpack.c.l.b16 %v1346
        %v3395 = vunpack.c.l.b16 %v1347
        %v3396 = vunpack.c.l.b16 %v1348
        %v3397 = vunpack.c.l.b16 %v1349
        %v3398 = vunpack.c.l.b16 %v1350
        %v3399 = vunpack.c.l.b16 %v1351
        %v3400 = vunpack.c.l.b16 %v1352
        %v3401 = vunpack.c.l.b16 %v1353
        %v3402 = vunpack.c.l.b16 %v1354
        %v3403 = vunpack.c.l.b16 %v1355
        %v3404 = vunpack.c.l.b16 %v1356
        %v3405 = vunpack.c.l.b16 %v1357
        %v3406 = vunpack.c.l.b16 %v1358
        %v3407 = vunpack.c.l.b16 %v1359
        %v3408 = vunpack.c.l.b16 %v1360
        %v3409 = vunpack.c.l.b16 %v1361
        %v3410 = vunpack.c.l.b16 %v1362
        %v3411 = vunpack.c.l.b16 %v1363
        %v3412 = vunpack.c.l.b16 %v1364
        %v3413 = vunpack.c.l.b16 %v1365
        %v3414 = vunpack.c.l.b16 %v1366
        %v3415 = vunpack.c.l.b16 %v1367
        %v3416 = vunpack.c.l.b16 %v1368
        %v3417 = vunpack.c.l.b16 %v1369
        %v3418 = vunpack.c.l.b16 %v1370
        %v3419 = vunpack.c.l.b16 %v1371
        %v3420 = vunpack.c.l.b16 %v1372
        %v3421 = vunpack.c.l.b16 %v1373
        %v3422 = vunpack.c.l.b16 %v1374
        %v3423 = vunpack.c.l.b16 %v1375
        %v3424 = vunpack.c.l.b16 %v1376
        %v3425 = vunpack.c.l.b16 %v1377
        %v3426 = vunpack.c.l.b16 %v1378
        %v3427 = vunpack.c.l.b16 %v1379
        %v3428 = vunpack.c.l.b16 %v1380
        %v3429 = vunpack.c.l.b16 %v1381
        %v3430 = vunpack.c.l.b16 %v1382
        %v3431 = vunpack.c.l.b16 %v1383
        %v3432 = vunpack.c.l.b16 %v1384
        %v3433 = vunpack.c.l.b16 %v1385
        %v3434 = vunpack.c.l.b16 %v1386
        %v3435 = vunpack.c.l.b16 %v1387
        %v3436 = vunpack.c.l.b16 %v1388
        %v3437 = vunpack.c.l.b16 %v1389
        %v3438 = vunpack.c.l.b16 %v1390
        %v3439 = vunpack.c.l.b16 %v1391
        %v3440 = vunpack.c.l.b16 %v1392
        %v3441 = vunpack.c.l.b16 %v1393
        %v3442 = vunpack.c.l.b16 %v1394
        %v3443 = vunpack.c.l.b16 %v1395
        %v3444 = vunpack.c.l.b16 %v1396
        %v3445 = vunpack.c.l.b16 %v1397
        %v3446 = vunpack.c.l.b16 %v1398
        %v3447 = vunpack.c.l.b16 %v1399
        %v3448 = vunpack.c.l.b16 %v1400
        %v3449 = vunpack.c.l.b16 %v1401
        %v3450 = vunpack.c.l.b16 %v1402
        %v3451 = vunpack.c.l.b16 %v1403
        %v3452 = vunpack.c.l.b16 %v1404
        %v3453 = vunpack.c.l.b16 %v1405
        %v3454 = vunpack.c.l.b16 %v1406
        %v3455 = vunpack.c.l.b16 %v1407
        %v3456 = vunpack.c.l.b16 %v1408
        %v3457 = vunpack.c.l.b16 %v1409
        %v3458 = vunpack.c.l.b16 %v1410
        %v3459 = vunpack.c.l.b16 %v1411
        %v3460 = vunpack.c.l.b16 %v1412
        %v3461 = vunpack.c.l.b16 %v1413
        %v3462 = vunpack.c.l.b16 %v1414
        %v3463 = vunpack.c.l.b16 %v1415
        %v3464 = vunpack.c.l.b16 %v1416
        %v3465 = vunpack.c.l.b16 %v1417
        %v3466 = vunpack.c.l.b16 %v1418
        %v3467 = vunpack.c.l.b16 %v1419
        %v3468 = vunpack.c.l.b16 %v1420
        %v3469 = vunpack.c.l.b16 %v1421
        %v3470 = vunpack.c.l.b16 %v1422
        %v3471 = vunpack.c.l.b16 %v1423
        %v3472 = vunpack.c.l.b16 %v1424
        %v3473 = vunpack.c.l.b16 %v1425
        %v3474 = vunpack.c.l.b16 %v1426
        %v3475 = vunpack.c.l.b16 %v1427
        %v3476 = vunpack.c.l.b16 %v1428
        %v3477 = vunpack.c.l.b16 %v1429
        %v3478 = vunpack.c.l.b16 %v1430
        %v3479 = vunpack.c.l.b16 %v1431
        %v3480 = vunpack.c.l.b16 %v1432
        %v3481 = vunpack.c.l.b16 %v1433
        %v3482 = vunpack.c.l.b16 %v1434
        %v3483 = vunpack.c.l.b16 %v1435
        %v3484 = vunpack.c.l.b16 %v1436
        %v3485 = vunpack.c.l.b16 %v1437
        %v3486 = vunpack.c.l.b16 %v1438
        %v3487 = vunpack.c.l.b16 %v1439
        %v3488 = vunpack.c.l.b16 %v1440
        %v3489 = vunpack.c.l.b16 %v1441
        %v3490 = vunpack.c.l.b16 %v1442
        %v3491 = vunpack.c.l.b16 %v1443
        %v3492 = vunpack.c.l.b16 %v1444
        %v3493 = vunpack.c.l.b16 %v1445
        %v3494 = vunpack.c.l.b16 %v1446
        %v3495 = vunpack.c.l.b16 %v1447
        %v3496 = vunpack.c.l.b16 %v1448
        %v3497 = vunpack.c.l.b16 %v1449
        %v3498 = vunpack.c.l.b16 %v1450
        %v3499 = vunpack.c.l.b16 %v1451
        %v3500 = vunpack.c.l.b16 %v1452
        %v3501 = vunpack.c.l.b16 %v1453
        %v3502 = vunpack.c.l.b16 %v1454
        %v3503 = vunpack.c.l.b16 %v1455
        %v3504 = vunpack.c.l.b16 %v1456
        %v3505 = vunpack.c.l.b16 %v1457
        %v3506 = vunpack.c.l.b16 %v1458
        %v3507 = vunpack.c.l.b16 %v1459
        %v3508 = vunpack.c.l.b16 %v1460
        %v3509 = vunpack.c.l.b16 %v1461
        %v3510 = vunpack.c.l.b16 %v1462
        %v3511 = vunpack.c.l.b16 %v1463
        %v3512 = vunpack.c.l.b16 %v1464
        %v3513 = vunpack.c.l.b16 %v1465
        %v3514 = vunpack.c.l.b16 %v1466
        %v3515 = vunpack.c.l.b16 %v1467
        %v3516 = vunpack.c.l.b16 %v1468
        %v3517 = vunpack.c.l.b16 %v1469
        %v3518 = vunpack.c.l.b16 %v1470
        %v3519 = vunpack.c.l.b16 %v1471
        %v3520 = vunpack.c.l.b16 %v1472
        %v3521 = vunpack.c.l.b16 %v1473
        %v3522 = vunpack.c.l.b16 %v1474
        %v3523 = vunpack.c.l.b16 %v1475
        %v3524 = vunpack.c.l.b16 %v1476
        %v3525 = vunpack.c.l.b16 %v1477
        %v3526 = vunpack.c.l.b16 %v1478
        %v3527 = vunpack.c.l.b16 %v1479
        %v3528 = vunpack.c.l.b16 %v1480
        %v3529 = vunpack.c.l.b16 %v1481
        %v3530 = vunpack.c.l.b16 %v1482
        %v3531 = vunpack.c.l.b16 %v1483
        %v3532 = vunpack.c.l.b16 %v1484
        %v3533 = vunpack.c.l.b16 %v1485
        %v3534 = vunpack.c.l.b16 %v1486
        %v3535 = vunpack.c.l.b16 %v1487
        %v3536 = vunpack.c.l.b16 %v1488
        %v3537 = vunpack.c.l.b16 %v1489
        %v3538 = vunpack.c.l.b16 %v1490
        %v3539 = vunpack.c.l.b16 %v1491
        %v3540 = vunpack.c.l.b16 %v1492
        %v3541 = vunpack.c.l.b16 %v1493
        %v3542 = vunpack.c.l.b16 %v1494
        %v3543 = vunpack.c.l.b16 %v1495
        %v3544 = vunpack.c.l.b16 %v1496
        %v3545 = vunpack.c.l.b16 %v1497
        %v3546 = vunpack.c.l.b16 %v1498
        %v3547 = vunpack.c.l.b16 %v1499
        %v3548 = vunpack.c.l.b16 %v1500
        %v3549 = vunpack.c.l.b16 %v1501
        %v3550 = vunpack.c.l.b16 %v1502
        %v3551 = vunpack.c.l.b16 %v1503
        %v3552 = vunpack.c.l.b16 %v1504
        %v3553 = vunpack.c.l.b16 %v1505
        %v3554 = vunpack.c.l.b16 %v1506
        %v3555 = vunpack.c.l.b16 %v1507
        %v3556 = vunpack.c.l.b16 %v1508
        %v3557 = vunpack.c.l.b16 %v1509
        %v3558 = vunpack.c.l.b16 %v1510
        %v3559 = vunpack.c.l.b16 %v1511
        %v3560 = vunpack.c.l.b16 %v1512
        %v3561 = vunpack.c.l.b16 %v1513
        %v3562 = vunpack.c.l.b16 %v1514
        %v3563 = vunpack.c.l.b16 %v1515
        %v3564 = vunpack.c.l.b16 %v1516
        %v3565 = vunpack.c.l.b16 %v1517
        %v3566 = vunpack.c.l.b16 %v1518
        %v3567 = vunpack.c.l.b16 %v1519
        %v3568 = vunpack.c.l.b16 %v1520
        %v3569 = vunpack.c.l.b16 %v1521
        %v3570 = vunpack.c.l.b16 %v1522
        %v3571 = vunpack.c.l.b16 %v1523
        %v3572 = vunpack.c.l.b16 %v1524
        %v3573 = vunpack.c.l.b16 %v1525
        %v3574 = vunpack.c.l.b16 %v1526
        %v3575 = vunpack.c.l.b16 %v1527
        %v3576 = vunpack.c.l.b16 %v1528
        %v3577 = vunpack.c.l.b16 %v1529
        %v3578 = vunpack.c.l.b16 %v1530
        %v3579 = vunpack.c.l.b16 %v1531
        %v3580 = vunpack.c.l.b16 %v1532
        %v3581 = vunpack.c.l.b16 %v1533
        %v3582 = vunpack.c.l.b16 %v1534
        %v3583 = vunpack.c.l.b16 %v1535
        %v3584 = vunpack.c.l.b16 %v1536
        %v3585 = vunpack.c.l.b16 %v1537
        %v3586 = vunpack.c.l.b16 %v1538
        %v3587 = vunpack.c.l.b16 %v1539
        %v3588 = vunpack.c.l.b16 %v1540
        %v3589 = vunpack.c.l.b16 %v1541
        %v3590 = vunpack.c.l.b16 %v1542
        %v3591 = vunpack.c.l.b16 %v1543
        %v3592 = vunpack.c.l.b16 %v1544
        %v3593 = vunpack.c.l.b16 %v1545
        %v3594 = vunpack.c.l.b16 %v1546
        %v3595 = vunpack.c.l.b16 %v1547
        %v3596 = vunpack.c.l.b16 %v1548
        %v3597 = vunpack.c.l.b16 %v1549
        %v3598 = vunpack.c.l.b16 %v1550
        %v3599 = vunpack.c.l.b16 %v1551
        %v3600 = vunpack.c.l.b16 %v1552
        %v3601 = vunpack.c.l.b16 %v1553
        %v3602 = vunpack.c.l.b16 %v1554
        %v3603 = vunpack.c.l.b16 %v1555
        %v3604 = vunpack.c.l.b16 %v1556
        %v3605 = vunpack.c.l.b16 %v1557
        %v3606 = vunpack.c.l.b16 %v1558
        %v3607 = vunpack.c.l.b16 %v1559
        %v3608 = vunpack.c.l.b16 %v1560
        %v3609 = vunpack.c.l.b16 %v1561
        %v3610 = vunpack.c.l.b16 %v1562
        %v3611 = vunpack.c.l.b16 %v1563
        %v3612 = vunpack.c.l.b16 %v1564
        %v3613 = vunpack.c.l.b16 %v1565
        %v3614 = vunpack.c.l.b16 %v1566
        %v3615 = vunpack.c.l.b16 %v1567
        %v3616 = vunpack.c.l.b16 %v1568
        %v3617 = vunpack.c.l.b16 %v1569
        %v3618 = vunpack.c.l.b16 %v1570
        %v3619 = vunpack.c.l.b16 %v1571
        %v3620 = vunpack.c.l.b16 %v1572
        %v3621 = vunpack.c.l.b16 %v1573
        %v3622 = vunpack.c.l.b16 %v1574
        %v3623 = vunpack.c.l.b16 %v1575
        %v3624 = vunpack.c.l.b16 %v1576
        %v3625 = vunpack.c.l.b16 %v1577
        %v3626 = vunpack.c.l.b16 %v1578
        %v3627 = vunpack.c.l.b16 %v1579
        %v3628 = vunpack.c.l.b16 %v1580
        %v3629 = vunpack.c.l.b16 %v1581
        %v3630 = vunpack.c.l.b16 %v1582
        %v3631 = vunpack.c.l.b16 %v1583
        %v3632 = vunpack.c.l.b16 %v1584
        %v3633 = vunpack.c.l.b16 %v1585
        %v3634 = vunpack.c.l.b16 %v1586
        %v3635 = vunpack.c.l.b16 %v1587
        %v3636 = vunpack.c.l.b16 %v1588
        %v3637 = vunpack.c.l.b16 %v1589
        %v3638 = vunpack.c.l.b16 %v1590
        %v3639 = vunpack.c.l.b16 %v1591
        %v3640 = vunpack.c.l.b16 %v1592
        %v3641 = vunpack.c.l.b16 %v1593
        %v3642 = vunpack.c.l.b16 %v1594
        %v3643 = vunpack.c.l.b16 %v1595
        %v3644 = vunpack.c.l.b16 %v1596
        %v3645 = vunpack.c.l.b16 %v1597
        %v3646 = vunpack.c.l.b16 %v1598
        %v3647 = vunpack.c.l.b16 %v1599
        %v3648 = vunpack.c.l.b16 %v1600
        %v3649 = vunpack.c.l.b16 %v1601
        %v3650 = vunpack.c.l.b16 %v1602
        %v3651 = vunpack.c.l.b16 %v1603
        %v3652 = vunpack.c.l.b16 %v1604
        %v3653 = vunpack.c.l.b16 %v1605
        %v3654 = vunpack.c.l.b16 %v1606
        %v3655 = vunpack.c.l.b16 %v1607
        %v3656 = vunpack.c.l.b16 %v1608
        %v3657 = vunpack.c.l.b16 %v1609
        %v3658 = vunpack.c.l.b16 %v1610
        %v3659 = vunpack.c.l.b16 %v1611
        %v3660 = vunpack.c.l.b16 %v1612
        %v3661 = vunpack.c.l.b16 %v1613
        %v3662 = vunpack.c.l.b16 %v1614
        %v3663 = vunpack.c.l.b16 %v1615
        %v3664 = vunpack.c.l.b16 %v1616
        %v3665 = vunpack.c.l.b16 %v1617
        %v3666 = vunpack.c.l.b16 %v1618
        %v3667 = vunpack.c.l.b16 %v1619
        %v3668 = vunpack.c.l.b16 %v1620
        %v3669 = vunpack.c.l.b16 %v1621
        %v3670 = vunpack.c.l.b16 %v1622
        %v3671 = vunpack.c.l.b16 %v1623
        %v3672 = vunpack.c.l.b16 %v1624
        %v3673 = vunpack.c.l.b16 %v1625
        %v3674 = vunpack.c.l.b16 %v1626
        %v3675 = vunpack.c.l.b16 %v1627
        %v3676 = vunpack.c.l.b16 %v1628
        %v3677 = vunpack.c.l.b16 %v1629
        %v3678 = vunpack.c.l.b16 %v1630
        %v3679 = vunpack.c.l.b16 %v1631
        %v3680 = vunpack.c.l.b16 %v1632
        %v3681 = vunpack.c.l.b16 %v1633
        %v3682 = vunpack.c.l.b16 %v1634
        %v3683 = vunpack.c.l.b16 %v1635
        %v3684 = vunpack.c.l.b16 %v1636
        %v3685 = vunpack.c.l.b16 %v1637
        %v3686 = vunpack.c.l.b16 %v1638
        %v3687 = vunpack.c.l.b16 %v1639
        %v3688 = vunpack.c.l.b16 %v1640
        %v3689 = vunpack.c.l.b16 %v1641
        %v3690 = vunpack.c.l.b16 %v1642
        %v3691 = vunpack.c.l.b16 %v1643
        %v3692 = vunpack.c.l.b16 %v1644
        %v3693 = vpack.c.b16 %v2670, %v2669
        %v3694 = vpack.c.b16 %v2672, %v2671
        %v3695 = vpack.c.b16 %v2674, %v2673
        %v3696 = vpack.c.b16 %v2676, %v2675
        %v3697 = vpack.c.b16 %v2678, %v2677
        %v3698 = vpack.c.b16 %v2680, %v2679
        %v3699 = vpack.c.b16 %v2682, %v2681
        %v3700 = vpack.c.b16 %v2684, %v2683
        %v3701 = vpack.c.b16 %v2686, %v2685
        %v3702 = vpack.c.b16 %v2688, %v2687
        %v3703 = vpack.c.b16 %v2690, %v2689
        %v3704 = vpack.c.b16 %v2692, %v2691
        %v3705 = vpack.c.b16 %v2694, %v2693
        %v3706 = vpack.c.b16 %v2696, %v2695
        %v3707 = vpack.c.b16 %v2698, %v2697
        %v3708 = vpack.c.b16 %v2700, %v2699
        %v3709 = vpack.c.b16 %v2702, %v2701
        %v3710 = vpack.c.b16 %v2704, %v2703
        %v3711 = vpack.c.b16 %v2706, %v2705
        %v3712 = vpack.c.b16 %v2708, %v2707
        %v3713 = vpack.c.b16 %v2710, %v2709
        %v3714 = vpack.c.b16 %v2712, %v2711
        %v3715 = vpack.c.b16 %v2714, %v2713
        %v3716 = vpack.c.b16 %v2716, %v2715
        %v3717 = vpack.c.b16 %v2718, %v2717
        %v3718 = vpack.c.b16 %v2720, %v2719
        %v3719 = vpack.c.b16 %v2722, %v2721
        %v3720 = vpack.c.b16 %v2724, %v2723
        %v3721 = vpack.c.b16 %v2726, %v2725
        %v3722 = vpack.c.b16 %v2728, %v2727
        %v3723 = vpack.c.b16 %v2730, %v2729
        %v3724 = vpack.c.b16 %v2732, %v2731
        %v3725 = vpack.c.b16 %v2734, %v2733
        %v3726 = vpack.c.b16 %v2736, %v2735
        %v3727 = vpack.c.b16 %v2738, %v2737
        %v3728 = vpack.c.b16 %v2740, %v2739
        %v3729 = vpack.c.b16 %v2742, %v2741
        %v3730 = vpack.c.b16 %v2744, %v2743
        %v3731 = vpack.c.b16 %v2746, %v2745
        %v3732 = vpack.c.b16 %v2748, %v2747
        %v3733 = vpack.c.b16 %v2750, %v2749
        %v3734 = vpack.c.b16 %v2752, %v2751
        %v3735 = vpack.c.b16 %v2754, %v2753
        %v3736 = vpack.c.b16 %v2756, %v2755
        %v3737 = vpack.c.b16 %v2758, %v2757
        %v3738 = vpack.c.b16 %v2760, %v2759
        %v3739 = vpack.c.b16 %v2762, %v2761
        %v3740 = vpack.c.b16 %v2764, %v2763
        %v3741 = vpack.c.b16 %v2766, %v2765
        %v3742 = vpack.c.b16 %v2768, %v2767
        %v3743 = vpack.c.b16 %v2770, %v2769
        %v3744 = vpack.c.b16 %v2772, %v2771
        %v3745 = vpack.c.b16 %v2774, %v2773
        %v3746 = vpack.c.b16 %v2776, %v2775
        %v3747 = vpack.c.b16 %v2778, %v2777
        %v3748 = vpack.c.b16 %v2780, %v2779
        %v3749 = vpack.c.b16 %v2782, %v2781
        %v3750 = vpack.c.b16 %v2784, %v2783
        %v3751 = vpack.c.b16 %v2786, %v2785
        %v3752 = vpack.c.b16 %v2788, %v2787
        %v3753 = vpack.c.b16 %v2790, %v2789
        %v3754 = vpack.c.b16 %v2792, %v2791
        %v3755 = vpack.c.b16 %v2794, %v2793
        %v3756 = vpack.c.b16 %v2796, %v2795
        %v3757 = vpack.c.b16 %v2798, %v2797
        %v3758 = vpack.c.b16 %v2800, %v2799
        %v3759 = vpack.c.b16 %v2802, %v2801
        %v3760 = vpack.c.b16 %v2804, %v2803
        %v3761 = vpack.c.b16 %v2806, %v2805
        %v3762 = vpack.c.b16 %v2808, %v2807
        %v3763 = vpack.c.b16 %v2810, %v2809
        %v3764 = vpack.c.b16 %v2812, %v2811
        %v3765 = vpack.c.b16 %v2814, %v2813
        %v3766 = vpack.c.b16 %v2816, %v2815
        %v3767 = vpack.c.b16 %v2818, %v2817
        %v3768 = vpack.c.b16 %v2820, %v2819
        %v3769 = vpack.c.b16 %v2822, %v2821
        %v3770 = vpack.c.b16 %v2824, %v2823
        %v3771 = vpack.c.b16 %v2826, %v2825
        %v3772 = vpack.c.b16 %v2828, %v2827
        %v3773 = vpack.c.b16 %v2830, %v2829
        %v3774 = vpack.c.b16 %v2832, %v2831
        %v3775 = vpack.c.b16 %v2834, %v2833
        %v3776 = vpack.c.b16 %v2836, %v2835
        %v3777 = vpack.c.b16 %v2838, %v2837
        %v3778 = vpack.c.b16 %v2840, %v2839
        %v3779 = vpack.c.b16 %v2842, %v2841
        %v3780 = vpack.c.b16 %v2844, %v2843
        %v3781 = vpack.c.b16 %v2846, %v2845
        %v3782 = vpack.c.b16 %v2848, %v2847
        %v3783 = vpack.c.b16 %v2850, %v2849
        %v3784 = vpack.c.b16 %v2852, %v2851
        %v3785 = vpack.c.b16 %v2854, %v2853
        %v3786 = vpack.c.b16 %v2856, %v2855
        %v3787 = vpack.c.b16 %v2858, %v2857
        %v3788 = vpack.c.b16 %v2860, %v2859
        %v3789 = vpack.c.b16 %v2862, %v2861
        %v3790 = vpack.c.b16 %v2864, %v2863
        %v3791 = vpack.c.b16 %v2866, %v2865
        %v3792 = vpack.c.b16 %v2868, %v2867
        %v3793 = vpack.c.b16 %v2870, %v2869
        %v3794 = vpack.c.b16 %v2872, %v2871
        %v3795 = vpack.c.b16 %v2874, %v2873
        %v3796 = vpack.c.b16 %v2876, %v2875
        %v3797 = vpack.c.b16 %v2878, %v2877
        %v3798 = vpack.c.b16 %v2880, %v2879
        %v3799 = vpack.c.b16 %v2882, %v2881
        %v3800 = vpack.c.b16 %v2884, %v2883
        %v3801 = vpack.c.b16 %v2886, %v2885
        %v3802 = vpack.c.b16 %v2888, %v2887
        %v3803 = vpack.c.b16 %v2890, %v2889
        %v3804 = vpack.c.b16 %v2892, %v2891
        %v3805 = vpack.c.b16 %v2894, %v2893
        %v3806 = vpack.c.b16 %v2896, %v2895
        %v3807 = vpack.c.b16 %v2898, %v2897
        %v3808 = vpack.c.b16 %v2900, %v2899
        %v3809 = vpack.c.b16 %v2902, %v2901
        %v3810 = vpack.c.b16 %v2904, %v2903
        %v3811 = vpack.c.b16 %v2906, %v2905
        %v3812 = vpack.c.b16 %v2908, %v2907
        %v3813 = vpack.c.b16 %v2910, %v2909
        %v3814 = vpack.c.b16 %v2912, %v2911
        %v3815 = vpack.c.b16 %v2914, %v2913
        %v3816 = vpack.c.b16 %v2916, %v2915
        %v3817 = vpack.c.b16 %v2918, %v2917
        %v3818 = vpack.c.b16 %v2920, %v2919
        %v3819 = vpack.c.b16 %v2922, %v2921
        %v3820 = vpack.c.b16 %v2924, %v2923
        %v3821 = vpack.c.b16 %v2926, %v2925
        %v3822 = vpack.c.b16 %v2928, %v2927
        %v3823 = vpack.c.b16 %v2930, %v2929
        %v3824 = vpack.c.b16 %v2932, %v2931
        %v3825 = vpack.c.b16 %v2934, %v2933
        %v3826 = vpack.c.b16 %v2936, %v2935
        %v3827 = vpack.c.b16 %v2938, %v2937
        %v3828 = vpack.c.b16 %v2940, %v2939
        %v3829 = vpack.c.b16 %v2942, %v2941
        %v3830 = vpack.c.b16 %v2944, %v2943
        %v3831 = vpack.c.b16 %v2946, %v2945
        %v3832 = vpack.c.b16 %v2948, %v2947
        %v3833 = vpack.c.b16 %v2950, %v2949
        %v3834 = vpack.c.b16 %v2952, %v2951
        %v3835 = vpack.c.b16 %v2954, %v2953
        %v3836 = vpack.c.b16 %v2956, %v2955
        %v3837 = vpack.c.b16 %v2958, %v2957
        %v3838 = vpack.c.b16 %v2960, %v2959
        %v3839 = vpack.c.b16 %v2962, %v2961
        %v3840 = vpack.c.b16 %v2964, %v2963
        %v3841 = vpack.c.b16 %v2966, %v2965
        %v3842 = vpack.c.b16 %v2968, %v2967
        %v3843 = vpack.c.b16 %v2970, %v2969
        %v3844 = vpack.c.b16 %v2972, %v2971
        %v3845 = vpack.c.b16 %v2974, %v2973
        %v3846 = vpack.c.b16 %v2976, %v2975
        %v3847 = vpack.c.b16 %v2978, %v2977
        %v3848 = vpack.c.b16 %v2980, %v2979
        %v3849 = vpack.c.b16 %v2982, %v2981
        %v3850 = vpack.c.b16 %v2984, %v2983
        %v3851 = vpack.c.b16 %v2986, %v2985
        %v3852 = vpack.c.b16 %v2988, %v2987
        %v3853 = vpack.c.b16 %v2990, %v2989
        %v3854 = vpack.c.b16 %v2992, %v2991
        %v3855 = vpack.c.b16 %v2994, %v2993
        %v3856 = vpack.c.b16 %v2996, %v2995
        %v3857 = vpack.c.b16 %v2998, %v2997
        %v3858 = vpack.c.b16 %v3000, %v2999
        %v3859 = vpack.c.b16 %v3002, %v3001
        %v3860 = vpack.c.b16 %v3004, %v3003
        %v3861 = vpack.c.b16 %v3006, %v3005
        %v3862 = vpack.c.b16 %v3008, %v3007
        %v3863 = vpack.c.b16 %v3010, %v3009
        %v3864 = vpack.c.b16 %v3012, %v3011
        %v3865 = vpack.c.b16 %v3014, %v3013
        %v3866 = vpack.c.b16 %v3016, %v3015
        %v3867 = vpack.c.b16 %v3018, %v3017
        %v3868 = vpack.c.b16 %v3020, %v3019
        %v3869 = vpack.c.b16 %v3022, %v3021
        %v3870 = vpack.c.b16 %v3024, %v3023
        %v3871 = vpack.c.b16 %v3026, %v3025
        %v3872 = vpack.c.b16 %v3028, %v3027
        %v3873 = vpack.c.b16 %v3030, %v3029
        %v3874 = vpack.c.b16 %v3032, %v3031
        %v3875 = vpack.c.b16 %v3034, %v3033
        %v3876 = vpack.c.b16 %v3036, %v3035
        %v3877 = vpack.c.b16 %v3038, %v3037
        %v3878 = vpack.c.b16 %v3040, %v3039
        %v3879 = vpack.c.b16 %v3042, %v3041
        %v3880 = vpack.c.b16 %v3044, %v3043
        %v3881 = vpack.c.b16 %v3046, %v3045
        %v3882 = vpack.c.b16 %v3048, %v3047
        %v3883 = vpack.c.b16 %v3050, %v3049
        %v3884 = vpack.c.b16 %v3052, %v3051
        %v3885 = vpack.c.b16 %v3054, %v3053
        %v3886 = vpack.c.b16 %v3056, %v3055
        %v3887 = vpack.c.b16 %v3058, %v3057
        %v3888 = vpack.c.b16 %v3060, %v3059
        %v3889 = vpack.c.b16 %v3062, %v3061
        %v3890 = vpack.c.b16 %v3064, %v3063
        %v3891 = vpack.c.b16 %v3066, %v3065
        %v3892 = vpack.c.b16 %v3068, %v3067
        %v3893 = vpack.c.b16 %v3070, %v3069
        %v3894 = vpack.c.b16 %v3072, %v3071
        %v3895 = vpack.c.b16 %v3074, %v3073
        %v3896 = vpack.c.b16 %v3076, %v3075
        %v3897 = vpack.c.b16 %v3078, %v3077
        %v3898 = vpack.c.b16 %v3080, %v3079
        %v3899 = vpack.c.b16 %v3082, %v3081
        %v3900 = vpack.c.b16 %v3084, %v3083
        %v3901 = vpack.c.b16 %v3086, %v3085
        %v3902 = vpack.c.b16 %v3088, %v3087
        %v3903 = vpack.c.b16 %v3090, %v3089
        %v3904 = vpack.c.b16 %v3092, %v3091
        %v3905 = vpack.c.b16 %v3094, %v3093
        %v3906 = vpack.c.b16 %v3096, %v3095
        %v3907 = vpack.c.b16 %v3098, %v3097
        %v3908 = vpack.c.b16 %v3100, %v3099
        %v3909 = vpack.c.b16 %v3102, %v3101
        %v3910 = vpack.c.b16 %v3104, %v3103
        %v3911 = vpack.c.b16 %v3106, %v3105
        %v3912 = vpack.c.b16 %v3108, %v3107
        %v3913 = vpack.c.b16 %v3110, %v3109
        %v3914 = vpack.c.b16 %v3112, %v3111
        %v3915 = vpack.c.b16 %v3114, %v3113
        %v3916 = vpack.c.b16 %v3116, %v3115
        %v3917 = vpack.c.b16 %v3118, %v3117
        %v3918 = vpack.c.b16 %v3120, %v3119
        %v3919 = vpack.c.b16 %v3122, %v3121
        %v3920 = vpack.c.b16 %v3124, %v3123
        %v3921 = vpack.c.b16 %v3126, %v3125
        %v3922 = vpack.c.b16 %v3128, %v3127
        %v3923 = vpack.c.b16 %v3130, %v3129
        %v3924 = vpack.c.b16 %v3132, %v3131
        %v3925 = vpack.c.b16 %v3134, %v3133
        %v3926 = vpack.c.b16 %v3136, %v3135
        %v3927 = vpack.c.b16 %v3138, %v3137
        %v3928 = vpack.c.b16 %v3140, %v3139
        %v3929 = vpack.c.b16 %v3142, %v3141
        %v3930 = vpack.c.b16 %v3144, %v3143
        %v3931 = vpack.c.b16 %v3146, %v3145
        %v3932 = vpack.c.b16 %v3148, %v3147
        %v3933 = vpack.c.b16 %v3150, %v3149
        %v3934 = vpack.c.b16 %v3152, %v3151
        %v3935 = vpack.c.b16 %v3154, %v3153
        %v3936 = vpack.c.b16 %v3156, %v3155
        %v3937 = vpack.c.b16 %v3158, %v3157
        %v3938 = vpack.c.b16 %v3160, %v3159
        %v3939 = vpack.c.b16 %v3162, %v3161
        %v3940 = vpack.c.b16 %v3164, %v3163
        %v3941 = vpack.c.b16 %v3166, %v3165
        %v3942 = vpack.c.b16 %v3168, %v3167
        %v3943 = vpack.c.b16 %v3170, %v3169
        %v3944 = vpack.c.b16 %v3172, %v3171
        %v3945 = vpack.c.b16 %v3174, %v3173
        %v3946 = vpack.c.b16 %v3176, %v3175
        %v3947 = vpack.c.b16 %v3178, %v3177
        %v3948 = vpack.c.b16 %v3180, %v3179
        %v3949 = vpack.c.b16 %v3182, %v3181
        %v3950 = vpack.c.b16 %v3184, %v3183
        %v3951 = vpack.c.b16 %v3186, %v3185
        %v3952 = vpack.c.b16 %v3188, %v3187
        %v3953 = vpack.c.b16 %v3190, %v3189
        %v3954 = vpack.c.b16 %v3192, %v3191
        %v3955 = vpack.c.b16 %v3194, %v3193
        %v3956 = vpack.c.b16 %v3196, %v3195
        %v3957 = vpack.c.b16 %v3198, %v3197
        %v3958 = vpack.c.b16 %v3200, %v3199
        %v3959 = vpack.c.b16 %v3202, %v3201
        %v3960 = vpack.c.b16 %v3204, %v3203
        %v3961 = vpack.c.b16 %v3206, %v3205
        %v3962 = vpack.c.b16 %v3208, %v3207
        %v3963 = vpack.c.b16 %v3210, %v3209
        %v3964 = vpack.c.b16 %v3212, %v3211
        %v3965 = vpack.c.b16 %v3214, %v3213
        %v3966 = vpack.c.b16 %v3216, %v3215
        %v3967 = vpack.c.b16 %v3218, %v3217
        %v3968 = vpack.c.b16 %v3220, %v3219
        %v3969 = vpack.c.b16 %v3222, %v3221
        %v3970 = vpack.c.b16 %v3224, %v3223
        %v3971 = vpack.c.b16 %v3226, %v3225
        %v3972 = vpack.c.b16 %v3228, %v3227
        %v3973 = vpack.c.b16 %v3230, %v3229
        %v3974 = vpack.c.b16 %v3232, %v3231
        %v3975 = vpack.c.b16 %v3234, %v3233
        %v3976 = vpack.c.b16 %v3236, %v3235
        %v3977 = vpack.c.b16 %v3238, %v3237
        %v3978 = vpack.c.b16 %v3240, %v3239
        %v3979 = vpack.c.b16 %v3242, %v3241
        %v3980 = vpack.c.b16 %v3244, %v3243
        %v3981 = vpack.c.b16 %v3246, %v3245
        %v3982 = vpack.c.b16 %v3248, %v3247
        %v3983 = vpack.c.b16 %v3250, %v3249
        %v3984 = vpack.c.b16 %v3252, %v3251
        %v3985 = vpack.c.b16 %v3254, %v3253
        %v3986 = vpack.c.b16 %v3256, %v3255
        %v3987 = vpack.c.b16 %v3258, %v3257
        %v3988 = vpack.c.b16 %v3260, %v3259
        %v3989 = vpack.c.b16 %v3262, %v3261
        %v3990 = vpack.c.b16 %v3264, %v3263
        %v3991 = vpack.c.b16 %v3266, %v3265
        %v3992 = vpack.c.b16 %v3268, %v3267
        %v3993 = vpack.c.b16 %v3270, %v3269
        %v3994 = vpack.c.b16 %v3272, %v3271
        %v3995 = vpack.c.b16 %v3274, %v3273
        %v3996 = vpack.c.b16 %v3276, %v3275
        %v3997 = vpack.c.b16 %v3278, %v3277
        %v3998 = vpack.c.b16 %v3280, %v3279
        %v3999 = vpack.c.b16 %v3282, %v3281
        %v4000 = vpack.c.b16 %v3284, %v3283
        %v4001 = vpack.c.b16 %v3286, %v3285
        %v4002 = vpack.c.b16 %v3288, %v3287
        %v4003 = vpack.c.b16 %v3290, %v3289
        %v4004 = vpack.c.b16 %v3292, %v3291
        %v4005 = vpack.c.b16 %v3294, %v3293
        %v4006 = vpack.c.b16 %v3296, %v3295
        %v4007 = vpack.c.b16 %v3298, %v3297
        %v4008 = vpack.c.b16 %v3300, %v3299
        %v4009 = vpack.c.b16 %v3302, %v3301
        %v4010 = vpack.c.b16 %v3304, %v3303
        %v4011 = vpack.c.b16 %v3306, %v3305
        %v4012 = vpack.c.b16 %v3308, %v3307
        %v4013 = vpack.c.b16 %v3310, %v3309
        %v4014 = vpack.c.b16 %v3312, %v3311
        %v4015 = vpack.c.b16 %v3314, %v3313
        %v4016 = vpack.c.b16 %v3316, %v3315
        %v4017 = vpack.c.b16 %v3318, %v3317
        %v4018 = vpack.c.b16 %v3320, %v3319
        %v4019 = vpack.c.b16 %v3322, %v3321
        %v4020 = vpack.c.b16 %v3324, %v3323
        %v4021 = vpack.c.b16 %v3326, %v3325
        %v4022 = vpack.c.b16 %v3328, %v3327
        %v4023 = vpack.c.b16 %v3330, %v3329
        %v4024 = vpack.c.b16 %v3332, %v3331
        %v4025 = vpack.c.b16 %v3334, %v3333
        %v4026 = vpack.c.b16 %v3336, %v3335
        %v4027 = vpack.c.b16 %v3338, %v3337
        %v4028 = vpack.c.b16 %v3340, %v3339
        %v4029 = vpack.c.b16 %v3342, %v3341
        %v4030 = vpack.c.b16 %v3344, %v3343
        %v4031 = vpack.c.b16 %v3346, %v3345
        %v4032 = vpack.c.b16 %v3348, %v3347
        %v4033 = vpack.c.b16 %v3350, %v3349
        %v4034 = vpack.c.b16 %v3352, %v3351
        %v4035 = vpack.c.b16 %v3354, %v3353
        %v4036 = vpack.c.b16 %v3356, %v3355
        %v4037 = vpack.c.b16 %v3358, %v3357
        %v4038 = vpack.c.b16 %v3360, %v3359
        %v4039 = vpack.c.b16 %v3362, %v3361
        %v4040 = vpack.c.b16 %v3364, %v3363
        %v4041 = vpack.c.b16 %v3366, %v3365
        %v4042 = vpack.c.b16 %v3368, %v3367
        %v4043 = vpack.c.b16 %v3370, %v3369
        %v4044 = vpack.c.b16 %v3372, %v3371
        %v4045 = vpack.c.b16 %v3374, %v3373
        %v4046 = vpack.c.b16 %v3376, %v3375
        %v4047 = vpack.c.b16 %v3378, %v3377
        %v4048 = vpack.c.b16 %v3380, %v3379
        %v4049 = vpack.c.b16 %v3382, %v3381
        %v4050 = vpack.c.b16 %v3384, %v3383
        %v4051 = vpack.c.b16 %v3386, %v3385
        %v4052 = vpack.c.b16 %v3388, %v3387
        %v4053 = vpack.c.b16 %v3390, %v3389
        %v4054 = vpack.c.b16 %v3392, %v3391
        %v4055 = vpack.c.b16 %v3394, %v3393
        %v4056 = vpack.c.b16 %v3396, %v3395
        %v4057 = vpack.c.b16 %v3398, %v3397
        %v4058 = vpack.c.b16 %v3400, %v3399
        %v4059 = vpack.c.b16 %v3402, %v3401
        %v4060 = vpack.c.b16 %v3404, %v3403
        %v4061 = vpack.c.b16 %v3406, %v3405
        %v4062 = vpack.c.b16 %v3408, %v3407
        %v4063 = vpack.c.b16 %v3410, %v3409
        %v4064 = vpack.c.b16 %v3412, %v3411
        %v4065 = vpack.c.b16 %v3414, %v3413
        %v4066 = vpack.c.b16 %v3416, %v3415
        %v4067 = vpack.c.b16 %v3418, %v3417
        %v4068 = vpack.c.b16 %v3420, %v3419
        %v4069 = vpack.c.b16 %v3422, %v3421
        %v4070 = vpack.c.b16 %v3424, %v3423
        %v4071 = vpack.c.b16 %v3426, %v3425
        %v4072 = vpack.c.b16 %v3428, %v3427
        %v4073 = vpack.c.b16 %v3430, %v3429
        %v4074 = vpack.c.b16 %v3432, %v3431
        %v4075 = vpack.c.b16 %v3434, %v3433
        %v4076 = vpack.c.b16 %v3436, %v3435
        %v4077 = vpack.c.b16 %v3438, %v3437
        %v4078 = vpack.c.b16 %v3440, %v3439
        %v4079 = vpack.c.b16 %v3442, %v3441
        %v4080 = vpack.c.b16 %v3444, %v3443
        %v4081 = vpack.c.b16 %v3446, %v3445
        %v4082 = vpack.c.b16 %v3448, %v3447
        %v4083 = vpack.c.b16 %v3450, %v3449
        %v4084 = vpack.c.b16 %v3452, %v3451
        %v4085 = vpack.c.b16 %v3454, %v3453
        %v4086 = vpack.c.b16 %v3456, %v3455
        %v4087 = vpack.c.b16 %v3458, %v3457
        %v4088 = vpack.c.b16 %v3460, %v3459
        %v4089 = vpack.c.b16 %v3462, %v3461
        %v4090 = vpack.c.b16 %v3464, %v3463
        %v4091 = vpack.c.b16 %v3466, %v3465
        %v4092 = vpack.c.b16 %v3468, %v3467
        %v4093 = vpack.c.b16 %v3470, %v3469
        %v4094 = vpack.c.b16 %v3472, %v3471
        %v4095 = vpack.c.b16 %v3474, %v3473
        %v4096 = vpack.c.b16 %v3476, %v3475
        %v4097 = vpack.c.b16 %v3478, %v3477
        %v4098 = vpack.c.b16 %v3480, %v3479
        %v4099 = vpack.c.b16 %v3482, %v3481
        %v4100 = vpack.c.b16 %v3484, %v3483
        %v4101 = vpack.c.b16 %v3486, %v3485
        %v4102 = vpack.c.b16 %v3488, %v3487
        %v4103 = vpack.c.b16 %v3490, %v3489
        %v4104 = vpack.c.b16 %v3492, %v3491
        %v4105 = vpack.c.b16 %v3494, %v3493
        %v4106 = vpack.c.b16 %v3496, %v3495
        %v4107 = vpack.c.b16 %v3498, %v3497
        %v4108 = vpack.c.b16 %v3500, %v3499
        %v4109 = vpack.c.b16 %v3502, %v3501
        %v4110 = vpack.c.b16 %v3504, %v3503
        %v4111 = vpack.c.b16 %v3506, %v3505
        %v4112 = vpack.c.b16 %v3508, %v3507
        %v4113 = vpack.c.b16 %v3510, %v3509
        %v4114 = vpack.c.b16 %v3512, %v3511
        %v4115 = vpack.c.b16 %v3514, %v3513
        %v4116 = vpack.c.b16 %v3516, %v3515
        %v4117 = vpack.c.b16 %v3518, %v3517
        %v4118 = vpack.c.b16 %v3520, %v3519
        %v4119 = vpack.c.b16 %v3522, %v3521
        %v4120 = vpack.c.b16 %v3524, %v3523
        %v4121 = vpack.c.b16 %v3526, %v3525
        %v4122 = vpack.c.b16 %v3528, %v3527
        %v4123 = vpack.c.b16 %v3530, %v3529
        %v4124 = vpack.c.b16 %v3532, %v3531
        %v4125 = vpack.c.b16 %v3534, %v3533
        %v4126 = vpack.c.b16 %v3536, %v3535
        %v4127 = vpack.c.b16 %v3538, %v3537
        %v4128 = vpack.c.b16 %v3540, %v3539
        %v4129 = vpack.c.b16 %v3542, %v3541
        %v4130 = vpack.c.b16 %v3544, %v3543
        %v4131 = vpack.c.b16 %v3546, %v3545
        %v4132 = vpack.c.b16 %v3548, %v3547
        %v4133 = vpack.c.b16 %v3550, %v3549
        %v4134 = vpack.c.b16 %v3552, %v3551
        %v4135 = vpack.c.b16 %v3554, %v3553
        %v4136 = vpack.c.b16 %v3556, %v3555
        %v4137 = vpack.c.b16 %v3558, %v3557
        %v4138 = vpack.c.b16 %v3560, %v3559
        %v4139 = vpack.c.b16 %v3562, %v3561
        %v4140 = vpack.c.b16 %v3564, %v3563
        %v4141 = vpack.c.b16 %v3566, %v3565
        %v4142 = vpack.c.b16 %v3568, %v3567
        %v4143 = vpack.c.b16 %v3570, %v3569
        %v4144 = vpack.c.b16 %v3572, %v3571
        %v4145 = vpack.c.b16 %v3574, %v3573
        %v4146 = vpack.c.b16 %v3576, %v3575
        %v4147 = vpack.c.b16 %v3578, %v3577
        %v4148 = vpack.c.b16 %v3580, %v3579
        %v4149 = vpack.c.b16 %v3582, %v3581
        %v4150 = vpack.c.b16 %v3584, %v3583
        %v4151 = vpack.c.b16 %v3586, %v3585
        %v4152 = vpack.c.b16 %v3588, %v3587
        %v4153 = vpack.c.b16 %v3590, %v3589
        %v4154 = vpack.c.b16 %v3592, %v3591
        %v4155 = vpack.c.b16 %v3594, %v3593
        %v4156 = vpack.c.b16 %v3596, %v3595
        %v4157 = vpack.c.b16 %v3598, %v3597
        %v4158 = vpack.c.b16 %v3600, %v3599
        %v4159 = vpack.c.b16 %v3602, %v3601
        %v4160 = vpack.c.b16 %v3604, %v3603
        %v4161 = vpack.c.b16 %v3606, %v3605
        %v4162 = vpack.c.b16 %v3608, %v3607
        %v4163 = vpack.c.b16 %v3610, %v3609
        %v4164 = vpack.c.b16 %v3612, %v3611
        %v4165 = vpack.c.b16 %v3614, %v3613
        %v4166 = vpack.c.b16 %v3616, %v3615
        %v4167 = vpack.c.b16 %v3618, %v3617
        %v4168 = vpack.c.b16 %v3620, %v3619
        %v4169 = vpack.c.b16 %v3622, %v3621
        %v4170 = vpack.c.b16 %v3624, %v3623
        %v4171 = vpack.c.b16 %v3626, %v3625
        %v4172 = vpack.c.b16 %v3628, %v3627
        %v4173 = vpack.c.b16 %v3630, %v3629
        %v4174 = vpack.c.b16 %v3632, %v3631
        %v4175 = vpack.c.b16 %v3634, %v3633
        %v4176 = vpack.c.b16 %v3636, %v3635
        %v4177 = vpack.c.b16 %v3638, %v3637
        %v4178 = vpack.c.b16 %v3640, %v3639
        %v4179 = vpack.c.b16 %v3642, %v3641
        %v4180 = vpack.c.b16 %v3644, %v3643
        %v4181 = vpack.c.b16 %v3646, %v3645
        %v4182 = vpack.c.b16 %v3648, %v3647
        %v4183 = vpack.c.b16 %v3650, %v3649
        %v4184 = vpack.c.b16 %v3652, %v3651
        %v4185 = vpack.c.b16 %v3654, %v3653
        %v4186 = vpack.c.b16 %v3656, %v3655
        %v4187 = vpack.c.b16 %v3658, %v3657
        %v4188 = vpack.c.b16 %v3660, %v3659
        %v4189 = vpack.c.b16 %v3662, %v3661
        %v4190 = vpack.c.b16 %v3664, %v3663
        %v4191 = vpack.c.b16 %v3666, %v3665
        %v4192 = vpack.c.b16 %v3668, %v3667
        %v4193 = vpack.c.b16 %v3670, %v3669
        %v4194 = vpack.c.b16 %v3672, %v3671
        %v4195 = vpack.c.b16 %v3674, %v3673
        %v4196 = vpack.c.b16 %v3676, %v3675
        %v4197 = vpack.c.b16 %v3678, %v3677
        %v4198 = vpack.c.b16 %v3680, %v3679
        %v4199 = vpack.c.b16 %v3682, %v3681
        %v4200 = vpack.c.b16 %v3684, %v3683
        %v4201 = vpack.c.b16 %v3686, %v3685
        %v4202 = vpack.c.b16 %v3688, %v3687
        %v4203 = vpack.c.b16 %v3690, %v3689
        %v4204 = vpack.c.b16 %v3692, %v3691
        %4717 = vmatprep.subr.bf16.mxu0 0
        %4718 = vmatpush1.bf16.msra.mxu0 %v3693
        %4719 = vmatprep.subr.bf16.mxu0 0
        %4720 = vmatpush1.bf16.msra.mxu0 %v3694
        %4721 = vmatprep.subr.bf16.mxu0 0
        %4722 = vmatpush1.bf16.msra.mxu0 %v3695
        %4723 = vmatprep.subr.bf16.mxu0 0
        %4724 = vmatpush1.bf16.msra.mxu0 %v3696
        %4725 = vmatprep.subr.bf16.mxu0 0
        %4726 = vmatpush1.bf16.msra.mxu0 %v3697
        %4727 = vmatprep.subr.bf16.mxu0 0
        %4728 = vmatpush1.bf16.msra.mxu0 %v3698
        %4729 = vmatprep.subr.bf16.mxu0 0
        %4730 = vmatpush1.bf16.msra.mxu0 %v3699
        %4731 = vmatprep.subr.bf16.mxu0 0
        %4732 = vmatpush1.bf16.msra.mxu0 %v3700
        %4733 = vmatprep.subr.bf16.mxu0 0
        %4734 = vmatpush1.bf16.msra.mxu0 %v3701
        %4735 = vmatprep.subr.bf16.mxu0 0
        %4736 = vmatpush1.bf16.msra.mxu0 %v3702
        %4737 = vmatprep.subr.bf16.mxu0 0
        %4738 = vmatpush1.bf16.msra.mxu0 %v3703
        %4739 = vmatprep.subr.bf16.mxu0 0
        %4740 = vmatpush1.bf16.msra.mxu0 %v3704
        %4741 = vmatprep.subr.bf16.mxu0 0
        %4742 = vmatpush1.bf16.msra.mxu0 %v3705
        %4743 = vmatprep.subr.bf16.mxu0 0
        %4744 = vmatpush1.bf16.msra.mxu0 %v3706
        %4745 = vmatprep.subr.bf16.mxu0 0
        %4746 = vmatpush1.bf16.msra.mxu0 %v3707
        %4747 = vmatprep.subr.bf16.mxu0 0
        %4748 = vmatpush1.bf16.msra.mxu0 %v3708
        %4749 = vmatprep.mubr.bf16.mxu0 %v558
        %4750 = vmatmul.mubr.bf16.gmra.mrb[0].mxu0 %v557
        %v4751 = vpop.f32.mrb[0].mxu0
        %v4752 = vadd.f32 0.0, %v4751
        %v4753 = vpop.f32.mrb[0].mxu0
        %v4754 = vpop.f32.mrb[0].mxu0
        %v4755 = vpop.f32.mrb[0].mxu0
        %4756 = vdwg.mxu0
        %4757 = vmatprep.subr.bf16.mxu0 0
        %4758 = vmatpush1.bf16.msra.mxu0 %v3709
        %4759 = vmatprep.subr.bf16.mxu0 0
        %4760 = vmatpush1.bf16.msra.mxu0 %v3710
        %4761 = vmatprep.subr.bf16.mxu0 0
        %4762 = vmatpush1.bf16.msra.mxu0 %v3711
        %4763 = vmatprep.subr.bf16.mxu0 0
        %4764 = vmatpush1.bf16.msra.mxu0 %v3712
        %4765 = vmatprep.subr.bf16.mxu0 0
        %4766 = vmatpush1.bf16.msra.mxu0 %v3713
        %4767 = vmatprep.subr.bf16.mxu0 0
        %4768 = vmatpush1.bf16.msra.mxu0 %v3714
        %4769 = vmatprep.subr.bf16.mxu0 0
        %4770 = vmatpush1.bf16.msra.mxu0 %v3715
        %4771 = vmatprep.subr.bf16.mxu0 0
        %4772 = vmatpush1.bf16.msra.mxu0 %v3716
        %4773 = vmatprep.subr.bf16.mxu0 0
        %4774 = vmatpush1.bf16.msra.mxu0 %v3717
        %4775 = vmatprep.subr.bf16.mxu0 0
        %4776 = vmatpush1.bf16.msra.mxu0 %v3718
        %4777 = vmatprep.subr.bf16.mxu0 0
        %4778 = vmatpush1.bf16.msra.mxu0 %v3719
        %4779 = vmatprep.subr.bf16.mxu0 0
        %4780 = vmatpush1.bf16.msra.mxu0 %v3720
        %4781 = vmatprep.subr.bf16.mxu0 0
        %4782 = vmatpush1.bf16.msra.mxu0 %v3721
        %4783 = vmatprep.subr.bf16.mxu0 0
        %4784 = vmatpush1.bf16.msra.mxu0 %v3722
        %4785 = vmatprep.subr.bf16.mxu0 0
        %4786 = vmatpush1.bf16.msra.mxu0 %v3723
        %4787 = vmatprep.subr.bf16.mxu0 0
        %4788 = vmatpush1.bf16.msra.mxu0 %v3724
        %4789 = vmatprep.mubr.bf16.mxu0 %v560
        %4790 = vmatmul.mubr.bf16.gmra.mrb[0].mxu0 %v559
        %v4791 = vpop.f32.mrb[0].mxu0
        %v4792 = vadd.f32 %v4752, %v4791
        %v4793 = vpop.f32.mrb[0].mxu0
        %v4794 = vpop.f32.mrb[0].mxu0
        %v4795 = vpop.f32.mrb[0].mxu0
        %4796 = vdwg.mxu0
        %4797 = vmatprep.subr.bf16.mxu0 0
        %4798 = vmatpush1.bf16.msra.mxu0 %v3725
        %4799 = vmatprep.subr.bf16.mxu0 0
        %4800 = vmatpush1.bf16.msra.mxu0 %v3726
        %4801 = vmatprep.subr.bf16.mxu0 0
        %4802 = vmatpush1.bf16.msra.mxu0 %v3727
        %4803 = vmatprep.subr.bf16.mxu0 0
        %4804 = vmatpush1.bf16.msra.mxu0 %v3728
        %4805 = vmatprep.subr.bf16.mxu0 0
        %4806 = vmatpush1.bf16.msra.mxu0 %v3729
        %4807 = vmatprep.subr.bf16.mxu0 0
        %4808 = vmatpush1.bf16.msra.mxu0 %v3730
        %4809 = vmatprep.subr.bf16.mxu0 0
        %4810 = vmatpush1.bf16.msra.mxu0 %v3731
        %4811 = vmatprep.subr.bf16.mxu0 0
        %4812 = vmatpush1.bf16.msra.mxu0 %v3732
        %4813 = vmatprep.subr.bf16.mxu0 0
        %4814 = vmatpush1.bf16.msra.mxu0 %v3733
        %4815 = vmatprep.subr.bf16.mxu0 0
        %4816 = vmatpush1.bf16.msra.mxu0 %v3734
        %4817 = vmatprep.subr.bf16.mxu0 0
        %4818 = vmatpush1.bf16.msra.mxu0 %v3735
        %4819 = vmatprep.subr.bf16.mxu0 0
        %4820 = vmatpush1.bf16.msra.mxu0 %v3736
        %4821 = vmatprep.subr.bf16.mxu0 0
        %4822 = vmatpush1.bf16.msra.mxu0 %v3737
        %4823 = vmatprep.subr.bf16.mxu0 0
        %4824 = vmatpush1.bf16.msra.mxu0 %v3738
        %4825 = vmatprep.subr.bf16.mxu0 0
        %4826 = vmatpush1.bf16.msra.mxu0 %v3739
        %4827 = vmatprep.subr.bf16.mxu0 0
        %4828 = vmatpush1.bf16.msra.mxu0 %v3740
        %4829 = vmatprep.mubr.bf16.mxu0 %v562
        %4830 = vmatmul.mubr.bf16.gmra.mrb[0].mxu0 %v561
        %v4831 = vpop.f32.mrb[0].mxu0
        %v4832 = vadd.f32 %v4792, %v4831
        %v4833 = vpop.f32.mrb[0].mxu0
        %v4834 = vpop.f32.mrb[0].mxu0
        %v4835 = vpop.f32.mrb[0].mxu0
        %4836 = vdwg.mxu0
        %4837 = vmatprep.subr.bf16.mxu0 0
        %4838 = vmatpush1.bf16.msra.mxu0 %v3741
        %4839 = vmatprep.subr.bf16.mxu0 0
        %4840 = vmatpush1.bf16.msra.mxu0 %v3742
        %4841 = vmatprep.subr.bf16.mxu0 0
        %4842 = vmatpush1.bf16.msra.mxu0 %v3743
        %4843 = vmatprep.subr.bf16.mxu0 0
        %4844 = vmatpush1.bf16.msra.mxu0 %v3744
        %4845 = vmatprep.subr.bf16.mxu0 0
        %4846 = vmatpush1.bf16.msra.mxu0 %v3745
        %4847 = vmatprep.subr.bf16.mxu0 0
        %4848 = vmatpush1.bf16.msra.mxu0 %v3746
        %4849 = vmatprep.subr.bf16.mxu0 0
        %4850 = vmatpush1.bf16.msra.mxu0 %v3747
        %4851 = vmatprep.subr.bf16.mxu0 0
        %4852 = vmatpush1.bf16.msra.mxu0 %v3748
        %4853 = vmatprep.subr.bf16.mxu0 0
        %4854 = vmatpush1.bf16.msra.mxu0 %v3749
        %4855 = vmatprep.subr.bf16.mxu0 0
        %4856 = vmatpush1.bf16.msra.mxu0 %v3750
        %4857 = vmatprep.subr.bf16.mxu0 0
        %4858 = vmatpush1.bf16.msra.mxu0 %v3751
        %4859 = vmatprep.subr.bf16.mxu0 0
        %4860 = vmatpush1.bf16.msra.mxu0 %v3752
        %4861 = vmatprep.subr.bf16.mxu0 0
        %4862 = vmatpush1.bf16.msra.mxu0 %v3753
        %4863 = vmatprep.subr.bf16.mxu0 0
        %4864 = vmatpush1.bf16.msra.mxu0 %v3754
        %4865 = vmatprep.subr.bf16.mxu0 0
        %4866 = vmatpush1.bf16.msra.mxu0 %v3755
        %4867 = vmatprep.subr.bf16.mxu0 0
        %4868 = vmatpush1.bf16.msra.mxu0 %v3756
        %4869 = vmatprep.mubr.bf16.mxu0 %v564
        %4870 = vmatmul.mubr.bf16.gmra.mrb[0].mxu0 %v563
        %v4871 = vpop.f32.mrb[0].mxu0
        %v4872 = vadd.f32 %v4832, %v4871
        %v4873 = vpop.f32.mrb[0].mxu0
        %v4874 = vpop.f32.mrb[0].mxu0
        %v4875 = vpop.f32.mrb[0].mxu0
        %4876 = vdwg.mxu0
        %4877 = vmatprep.subr.bf16.mxu0 0
        %4878 = vmatpush1.bf16.msra.mxu0 %v3757
        %4879 = vmatprep.subr.bf16.mxu0 0
        %4880 = vmatpush1.bf16.msra.mxu0 %v3758
        %4881 = vmatprep.subr.bf16.mxu0 0
        %4882 = vmatpush1.bf16.msra.mxu0 %v3759
        %4883 = vmatprep.subr.bf16.mxu0 0
        %4884 = vmatpush1.bf16.msra.mxu0 %v3760
        %4885 = vmatprep.subr.bf16.mxu0 0
        %4886 = vmatpush1.bf16.msra.mxu0 %v3761
        %4887 = vmatprep.subr.bf16.mxu0 0
        %4888 = vmatpush1.bf16.msra.mxu0 %v3762
        %4889 = vmatprep.subr.bf16.mxu0 0
        %4890 = vmatpush1.bf16.msra.mxu0 %v3763
        %4891 = vmatprep.subr.bf16.mxu0 0
        %4892 = vmatpush1.bf16.msra.mxu0 %v3764
        %4893 = vmatprep.subr.bf16.mxu0 0
        %4894 = vmatpush1.bf16.msra.mxu0 %v3765
        %4895 = vmatprep.subr.bf16.mxu0 0
        %4896 = vmatpush1.bf16.msra.mxu0 %v3766
        %4897 = vmatprep.subr.bf16.mxu0 0
        %4898 = vmatpush1.bf16.msra.mxu0 %v3767
        %4899 = vmatprep.subr.bf16.mxu0 0
        %4900 = vmatpush1.bf16.msra.mxu0 %v3768
        %4901 = vmatprep.subr.bf16.mxu0 0
        %4902 = vmatpush1.bf16.msra.mxu0 %v3769
        %4903 = vmatprep.subr.bf16.mxu0 0
        %4904 = vmatpush1.bf16.msra.mxu0 %v3770
        %4905 = vmatprep.subr.bf16.mxu0 0
        %4906 = vmatpush1.bf16.msra.mxu0 %v3771
        %4907 = vmatprep.subr.bf16.mxu0 0
        %4908 = vmatpush1.bf16.msra.mxu0 %v3772
        %4909 = vmatprep.mubr.bf16.mxu0 %v566
        %4910 = vmatmul.mubr.bf16.gmra.mrb[0].mxu0 %v565
        %v4911 = vpop.f32.mrb[0].mxu0
        %v4912 = vadd.f32 %v4872, %v4911
        %v4913 = vpop.f32.mrb[0].mxu0
        %v4914 = vpop.f32.mrb[0].mxu0
        %v4915 = vpop.f32.mrb[0].mxu0
        %4916 = vdwg.mxu0
        %4917 = vmatprep.subr.bf16.mxu0 0
        %4918 = vmatpush1.bf16.msra.mxu0 %v3773
        %4919 = vmatprep.subr.bf16.mxu0 0
        %4920 = vmatpush1.bf16.msra.mxu0 %v3774
        %4921 = vmatprep.subr.bf16.mxu0 0
        %4922 = vmatpush1.bf16.msra.mxu0 %v3775
        %4923 = vmatprep.subr.bf16.mxu0 0
        %4924 = vmatpush1.bf16.msra.mxu0 %v3776
        %4925 = vmatprep.subr.bf16.mxu0 0
        %4926 = vmatpush1.bf16.msra.mxu0 %v3777
        %4927 = vmatprep.subr.bf16.mxu0 0
        %4928 = vmatpush1.bf16.msra.mxu0 %v3778
        %4929 = vmatprep.subr.bf16.mxu0 0
        %4930 = vmatpush1.bf16.msra.mxu0 %v3779
        %4931 = vmatprep.subr.bf16.mxu0 0
        %4932 = vmatpush1.bf16.msra.mxu0 %v3780
        %4933 = vmatprep.subr.bf16.mxu0 0
        %4934 = vmatpush1.bf16.msra.mxu0 %v3781
        %4935 = vmatprep.subr.bf16.mxu0 0
        %4936 = vmatpush1.bf16.msra.mxu0 %v3782
        %4937 = vmatprep.subr.bf16.mxu0 0
        %4938 = vmatpush1.bf16.msra.mxu0 %v3783
        %4939 = vmatprep.subr.bf16.mxu0 0
        %4940 = vmatpush1.bf16.msra.mxu0 %v3784
        %4941 = vmatprep.subr.bf16.mxu0 0
        %4942 = vmatpush1.bf16.msra.mxu0 %v3785
        %4943 = vmatprep.subr.bf16.mxu0 0
        %4944 = vmatpush1.bf16.msra.mxu0 %v3786
        %4945 = vmatprep.subr.bf16.mxu0 0
        %4946 = vmatpush1.bf16.msra.mxu0 %v3787
        %4947 = vmatprep.subr.bf16.mxu0 0
        %4948 = vmatpush1.bf16.msra.mxu0 %v3788
        %4949 = vmatprep.mubr.bf16.mxu0 %v568
        %4950 = vmatmul.mubr.bf16.gmra.mrb[0].mxu0 %v567
        %v4951 = vpop.f32.mrb[0].mxu0
        %v4952 = vadd.f32 %v4912, %v4951
        %v4953 = vpop.f32.mrb[0].mxu0
        %v4954 = vpop.f32.mrb[0].mxu0
        %v4955 = vpop.f32.mrb[0].mxu0
        %4956 = vdwg.mxu0
        %4957 = vmatprep.subr.bf16.mxu0 0
        %4958 = vmatpush1.bf16.msra.mxu0 %v3789
        %4959 = vmatprep.subr.bf16.mxu0 0
        %4960 = vmatpush1.bf16.msra.mxu0 %v3790
        %4961 = vmatprep.subr.bf16.mxu0 0
        %4962 = vmatpush1.bf16.msra.mxu0 %v3791
        %4963 = vmatprep.subr.bf16.mxu0 0
        %4964 = vmatpush1.bf16.msra.mxu0 %v3792
        %4965 = vmatprep.subr.bf16.mxu0 0
        %4966 = vmatpush1.bf16.msra.mxu0 %v3793
        %4967 = vmatprep.subr.bf16.mxu0 0
        %4968 = vmatpush1.bf16.msra.mxu0 %v3794
        %4969 = vmatprep.subr.bf16.mxu0 0
        %4970 = vmatpush1.bf16.msra.mxu0 %v3795
        %4971 = vmatprep.subr.bf16.mxu0 0
        %4972 = vmatpush1.bf16.msra.mxu0 %v3796
        %4973 = vmatprep.subr.bf16.mxu0 0
        %4974 = vmatpush1.bf16.msra.mxu0 %v3797
        %4975 = vmatprep.subr.bf16.mxu0 0
        %4976 = vmatpush1.bf16.msra.mxu0 %v3798
        %4977 = vmatprep.subr.bf16.mxu0 0
        %4978 = vmatpush1.bf16.msra.mxu0 %v3799
        %4979 = vmatprep.subr.bf16.mxu0 0
        %4980 = vmatpush1.bf16.msra.mxu0 %v3800
        %4981 = vmatprep.subr.bf16.mxu0 0
        %4982 = vmatpush1.bf16.msra.mxu0 %v3801
        %4983 = vmatprep.subr.bf16.mxu0 0
        %4984 = vmatpush1.bf16.msra.mxu0 %v3802
        %4985 = vmatprep.subr.bf16.mxu0 0
        %4986 = vmatpush1.bf16.msra.mxu0 %v3803
        %4987 = vmatprep.subr.bf16.mxu0 0
        %4988 = vmatpush1.bf16.msra.mxu0 %v3804
        %4989 = vmatprep.mubr.bf16.mxu0 %v570
        %4990 = vmatmul.mubr.bf16.gmra.mrb[0].mxu0 %v569
        %v4991 = vpop.f32.mrb[0].mxu0
        %v4992 = vadd.f32 %v4952, %v4991
        %v4993 = vpop.f32.mrb[0].mxu0
        %v4994 = vpop.f32.mrb[0].mxu0
        %v4995 = vpop.f32.mrb[0].mxu0
        %4996 = vdwg.mxu0
        %4997 = vmatprep.subr.bf16.mxu0 0
        %4998 = vmatpush1.bf16.msra.mxu0 %v3805
        %4999 = vmatprep.subr.bf16.mxu0 0
        %5000 = vmatpush1.bf16.msra.mxu0 %v3806
        %5001 = vmatprep.subr.bf16.mxu0 0
        %5002 = vmatpush1.bf16.msra.mxu0 %v3807
        %5003 = vmatprep.subr.bf16.mxu0 0
        %5004 = vmatpush1.bf16.msra.mxu0 %v3808
        %5005 = vmatprep.subr.bf16.mxu0 0
        %5006 = vmatpush1.bf16.msra.mxu0 %v3809
        %5007 = vmatprep.subr.bf16.mxu0 0
        %5008 = vmatpush1.bf16.msra.mxu0 %v3810
        %5009 = vmatprep.subr.bf16.mxu0 0
        %5010 = vmatpush1.bf16.msra.mxu0 %v3811
        %5011 = vmatprep.subr.bf16.mxu0 0
        %5012 = vmatpush1.bf16.msra.mxu0 %v3812
        %5013 = vmatprep.subr.bf16.mxu0 0
        %5014 = vmatpush1.bf16.msra.mxu0 %v3813
        %5015 = vmatprep.subr.bf16.mxu0 0
        %5016 = vmatpush1.bf16.msra.mxu0 %v3814
        %5017 = vmatprep.subr.bf16.mxu0 0
        %5018 = vmatpush1.bf16.msra.mxu0 %v3815
        %5019 = vmatprep.subr.bf16.mxu0 0
        %5020 = vmatpush1.bf16.msra.mxu0 %v3816
        %5021 = vmatprep.subr.bf16.mxu0 0
        %5022 = vmatpush1.bf16.msra.mxu0 %v3817
        %5023 = vmatprep.subr.bf16.mxu0 0
        %5024 = vmatpush1.bf16.msra.mxu0 %v3818
        %5025 = vmatprep.subr.bf16.mxu0 0
        %5026 = vmatpush1.bf16.msra.mxu0 %v3819
        %5027 = vmatprep.subr.bf16.mxu0 0
        %5028 = vmatpush1.bf16.msra.mxu0 %v3820
        %5029 = vmatprep.mubr.bf16.mxu0 %v572
        %5030 = vmatmul.mubr.bf16.gmra.mrb[0].mxu0 %v571
        %v5031 = vpop.f32.mrb[0].mxu0
        %v5032 = vadd.f32 %v4992, %v5031
        %v5033 = vpop.f32.mrb[0].mxu0
        %v5034 = vpop.f32.mrb[0].mxu0
        %v5035 = vpop.f32.mrb[0].mxu0
        %5036 = vdwg.mxu0
        %5037 = vmatprep.subr.bf16.mxu0 0
        %5038 = vmatpush1.bf16.msra.mxu0 %v3821
        %5039 = vmatprep.subr.bf16.mxu0 0
        %5040 = vmatpush1.bf16.msra.mxu0 %v3822
        %5041 = vmatprep.subr.bf16.mxu0 0
        %5042 = vmatpush1.bf16.msra.mxu0 %v3823
        %5043 = vmatprep.subr.bf16.mxu0 0
        %5044 = vmatpush1.bf16.msra.mxu0 %v3824
        %5045 = vmatprep.subr.bf16.mxu0 0
        %5046 = vmatpush1.bf16.msra.mxu0 %v3825
        %5047 = vmatprep.subr.bf16.mxu0 0
        %5048 = vmatpush1.bf16.msra.mxu0 %v3826
        %5049 = vmatprep.subr.bf16.mxu0 0
        %5050 = vmatpush1.bf16.msra.mxu0 %v3827
        %5051 = vmatprep.subr.bf16.mxu0 0
        %5052 = vmatpush1.bf16.msra.mxu0 %v3828
        %5053 = vmatprep.subr.bf16.mxu0 0
        %5054 = vmatpush1.bf16.msra.mxu0 %v3829
        %5055 = vmatprep.subr.bf16.mxu0 0
        %5056 = vmatpush1.bf16.msra.mxu0 %v3830
        %5057 = vmatprep.subr.bf16.mxu0 0
        %5058 = vmatpush1.bf16.msra.mxu0 %v3831
        %5059 = vmatprep.subr.bf16.mxu0 0
        %5060 = vmatpush1.bf16.msra.mxu0 %v3832
        %5061 = vmatprep.subr.bf16.mxu0 0
        %5062 = vmatpush1.bf16.msra.mxu0 %v3833
        %5063 = vmatprep.subr.bf16.mxu0 0
        %5064 = vmatpush1.bf16.msra.mxu0 %v3834
        %5065 = vmatprep.subr.bf16.mxu0 0
        %5066 = vmatpush1.bf16.msra.mxu0 %v3835
        %5067 = vmatprep.subr.bf16.mxu0 0
        %5068 = vmatpush1.bf16.msra.mxu0 %v3836
        %5069 = vmatprep.mubr.bf16.mxu0 %v574
        %5070 = vmatmul.mubr.bf16.gmra.mrb[0].mxu0 %v573
        %v5071 = vpop.f32.mrb[0].mxu0
        %v5072 = vadd.f32 %v5032, %v5071
        %v5073 = vpop.f32.mrb[0].mxu0
        %v5074 = vpop.f32.mrb[0].mxu0
        %v5075 = vpop.f32.mrb[0].mxu0
        %5076 = vdwg.mxu0
        %5077 = vmatprep.subr.bf16.mxu0 0
        %5078 = vmatpush1.bf16.msra.mxu0 %v3837
        %5079 = vmatprep.subr.bf16.mxu0 0
        %5080 = vmatpush1.bf16.msra.mxu0 %v3838
        %5081 = vmatprep.subr.bf16.mxu0 0
        %5082 = vmatpush1.bf16.msra.mxu0 %v3839
        %5083 = vmatprep.subr.bf16.mxu0 0
        %5084 = vmatpush1.bf16.msra.mxu0 %v3840
        %5085 = vmatprep.subr.bf16.mxu0 0
        %5086 = vmatpush1.bf16.msra.mxu0 %v3841
        %5087 = vmatprep.subr.bf16.mxu0 0
        %5088 = vmatpush1.bf16.msra.mxu0 %v3842
        %5089 = vmatprep.subr.bf16.mxu0 0
        %5090 = vmatpush1.bf16.msra.mxu0 %v3843
        %5091 = vmatprep.subr.bf16.mxu0 0
        %5092 = vmatpush1.bf16.msra.mxu0 %v3844
        %5093 = vmatprep.subr.bf16.mxu0 0
        %5094 = vmatpush1.bf16.msra.mxu0 %v3845
        %5095 = vmatprep.subr.bf16.mxu0 0
        %5096 = vmatpush1.bf16.msra.mxu0 %v3846
        %5097 = vmatprep.subr.bf16.mxu0 0
        %5098 = vmatpush1.bf16.msra.mxu0 %v3847
        %5099 = vmatprep.subr.bf16.mxu0 0
        %5100 = vmatpush1.bf16.msra.mxu0 %v3848
        %5101 = vmatprep.subr.bf16.mxu0 0
        %5102 = vmatpush1.bf16.msra.mxu0 %v3849
        %5103 = vmatprep.subr.bf16.mxu0 0
        %5104 = vmatpush1.bf16.msra.mxu0 %v3850
        %5105 = vmatprep.subr.bf16.mxu0 0
        %5106 = vmatpush1.bf16.msra.mxu0 %v3851
        %5107 = vmatprep.subr.bf16.mxu0 0
        %5108 = vmatpush1.bf16.msra.mxu0 %v3852
        %5109 = vmatprep.mubr.bf16.mxu0 %v576
        %5110 = vmatmul.mubr.bf16.gmra.mrb[0].mxu0 %v575
        %v5111 = vpop.f32.mrb[0].mxu0
        %v5112 = vadd.f32 %v5072, %v5111
        %v5113 = vpop.f32.mrb[0].mxu0
        %v5114 = vpop.f32.mrb[0].mxu0
        %v5115 = vpop.f32.mrb[0].mxu0
        %5116 = vdwg.mxu0
        %5117 = vmatprep.subr.bf16.mxu0 0
        %5118 = vmatpush1.bf16.msra.mxu0 %v3853
        %5119 = vmatprep.subr.bf16.mxu0 0
        %5120 = vmatpush1.bf16.msra.mxu0 %v3854
        %5121 = vmatprep.subr.bf16.mxu0 0
        %5122 = vmatpush1.bf16.msra.mxu0 %v3855
        %5123 = vmatprep.subr.bf16.mxu0 0
        %5124 = vmatpush1.bf16.msra.mxu0 %v3856
        %5125 = vmatprep.subr.bf16.mxu0 0
        %5126 = vmatpush1.bf16.msra.mxu0 %v3857
        %5127 = vmatprep.subr.bf16.mxu0 0
        %5128 = vmatpush1.bf16.msra.mxu0 %v3858
        %5129 = vmatprep.subr.bf16.mxu0 0
        %5130 = vmatpush1.bf16.msra.mxu0 %v3859
        %5131 = vmatprep.subr.bf16.mxu0 0
        %5132 = vmatpush1.bf16.msra.mxu0 %v3860
        %5133 = vmatprep.subr.bf16.mxu0 0
        %5134 = vmatpush1.bf16.msra.mxu0 %v3861
        %5135 = vmatprep.subr.bf16.mxu0 0
        %5136 = vmatpush1.bf16.msra.mxu0 %v3862
        %5137 = vmatprep.subr.bf16.mxu0 0
        %5138 = vmatpush1.bf16.msra.mxu0 %v3863
        %5139 = vmatprep.subr.bf16.mxu0 0
        %5140 = vmatpush1.bf16.msra.mxu0 %v3864
        %5141 = vmatprep.subr.bf16.mxu0 0
        %5142 = vmatpush1.bf16.msra.mxu0 %v3865
        %5143 = vmatprep.subr.bf16.mxu0 0
        %5144 = vmatpush1.bf16.msra.mxu0 %v3866
        %5145 = vmatprep.subr.bf16.mxu0 0
        %5146 = vmatpush1.bf16.msra.mxu0 %v3867
        %5147 = vmatprep.subr.bf16.mxu0 0
        %5148 = vmatpush1.bf16.msra.mxu0 %v3868
        %5149 = vmatprep.mubr.bf16.mxu0 %v578
        %5150 = vmatmul.mubr.bf16.gmra.mrb[0].mxu0 %v577
        %v5151 = vpop.f32.mrb[0].mxu0
        %v5152 = vadd.f32 %v5112, %v5151
        %v5153 = vpop.f32.mrb[0].mxu0
        %v5154 = vpop.f32.mrb[0].mxu0
        %v5155 = vpop.f32.mrb[0].mxu0
        %5156 = vdwg.mxu0
        %5157 = vmatprep.subr.bf16.mxu0 0
        %5158 = vmatpush1.bf16.msra.mxu0 %v3869
        %5159 = vmatprep.subr.bf16.mxu0 0
        %5160 = vmatpush1.bf16.msra.mxu0 %v3870
        %5161 = vmatprep.subr.bf16.mxu0 0
        %5162 = vmatpush1.bf16.msra.mxu0 %v3871
        %5163 = vmatprep.subr.bf16.mxu0 0
        %5164 = vmatpush1.bf16.msra.mxu0 %v3872
        %5165 = vmatprep.subr.bf16.mxu0 0
        %5166 = vmatpush1.bf16.msra.mxu0 %v3873
        %5167 = vmatprep.subr.bf16.mxu0 0
        %5168 = vmatpush1.bf16.msra.mxu0 %v3874
        %5169 = vmatprep.subr.bf16.mxu0 0
        %5170 = vmatpush1.bf16.msra.mxu0 %v3875
        %5171 = vmatprep.subr.bf16.mxu0 0
        %5172 = vmatpush1.bf16.msra.mxu0 %v3876
        %5173 = vmatprep.subr.bf16.mxu0 0
        %5174 = vmatpush1.bf16.msra.mxu0 %v3877
        %5175 = vmatprep.subr.bf16.mxu0 0
        %5176 = vmatpush1.bf16.msra.mxu0 %v3878
        %5177 = vmatprep.subr.bf16.mxu0 0
        %5178 = vmatpush1.bf16.msra.mxu0 %v3879
        %5179 = vmatprep.subr.bf16.mxu0 0
        %5180 = vmatpush1.bf16.msra.mxu0 %v3880
        %5181 = vmatprep.subr.bf16.mxu0 0
        %5182 = vmatpush1.bf16.msra.mxu0 %v3881
        %5183 = vmatprep.subr.bf16.mxu0 0
        %5184 = vmatpush1.bf16.msra.mxu0 %v3882
        %5185 = vmatprep.subr.bf16.mxu0 0
        %5186 = vmatpush1.bf16.msra.mxu0 %v3883
        %5187 = vmatprep.subr.bf16.mxu0 0
        %5188 = vmatpush1.bf16.msra.mxu0 %v3884
        %5189 = vmatprep.mubr.bf16.mxu0 %v580
        %5190 = vmatmul.mubr.bf16.gmra.mrb[0].mxu0 %v579
        %v5191 = vpop.f32.mrb[0].mxu0
        %v5192 = vadd.f32 %v5152, %v5191
        %v5193 = vpop.f32.mrb[0].mxu0
        %v5194 = vpop.f32.mrb[0].mxu0
        %v5195 = vpop.f32.mrb[0].mxu0
        %5196 = vdwg.mxu0
        %5197 = vmatprep.subr.bf16.mxu0 0
        %5198 = vmatpush1.bf16.msra.mxu0 %v3885
        %5199 = vmatprep.subr.bf16.mxu0 0
        %5200 = vmatpush1.bf16.msra.mxu0 %v3886
        %5201 = vmatprep.subr.bf16.mxu0 0
        %5202 = vmatpush1.bf16.msra.mxu0 %v3887
        %5203 = vmatprep.subr.bf16.mxu0 0
        %5204 = vmatpush1.bf16.msra.mxu0 %v3888
        %5205 = vmatprep.subr.bf16.mxu0 0
        %5206 = vmatpush1.bf16.msra.mxu0 %v3889
        %5207 = vmatprep.subr.bf16.mxu0 0
        %5208 = vmatpush1.bf16.msra.mxu0 %v3890
        %5209 = vmatprep.subr.bf16.mxu0 0
        %5210 = vmatpush1.bf16.msra.mxu0 %v3891
        %5211 = vmatprep.subr.bf16.mxu0 0
        %5212 = vmatpush1.bf16.msra.mxu0 %v3892
        %5213 = vmatprep.subr.bf16.mxu0 0
        %5214 = vmatpush1.bf16.msra.mxu0 %v3893
        %5215 = vmatprep.subr.bf16.mxu0 0
        %5216 = vmatpush1.bf16.msra.mxu0 %v3894
        %5217 = vmatprep.subr.bf16.mxu0 0
        %5218 = vmatpush1.bf16.msra.mxu0 %v3895
        %5219 = vmatprep.subr.bf16.mxu0 0
        %5220 = vmatpush1.bf16.msra.mxu0 %v3896
        %5221 = vmatprep.subr.bf16.mxu0 0
        %5222 = vmatpush1.bf16.msra.mxu0 %v3897
        %5223 = vmatprep.subr.bf16.mxu0 0
        %5224 = vmatpush1.bf16.msra.mxu0 %v3898
        %5225 = vmatprep.subr.bf16.mxu0 0
        %5226 = vmatpush1.bf16.msra.mxu0 %v3899
        %5227 = vmatprep.subr.bf16.mxu0 0
        %5228 = vmatpush1.bf16.msra.mxu0 %v3900
        %5229 = vmatprep.mubr.bf16.mxu0 %v582
        %5230 = vmatmul.mubr.bf16.gmra.mrb[0].mxu0 %v581
        %v5231 = vpop.f32.mrb[0].mxu0
        %v5232 = vadd.f32 %v5192, %v5231
        %v5233 = vpop.f32.mrb[0].mxu0
        %v5234 = vpop.f32.mrb[0].mxu0
        %v5235 = vpop.f32.mrb[0].mxu0
        %5236 = vdwg.mxu0
        %5237 = vmatprep.subr.bf16.mxu0 0
        %5238 = vmatpush1.bf16.msra.mxu0 %v3901
        %5239 = vmatprep.subr.bf16.mxu0 0
        %5240 = vmatpush1.bf16.msra.mxu0 %v3902
        %5241 = vmatprep.subr.bf16.mxu0 0
        %5242 = vmatpush1.bf16.msra.mxu0 %v3903
        %5243 = vmatprep.subr.bf16.mxu0 0
        %5244 = vmatpush1.bf16.msra.mxu0 %v3904
        %5245 = vmatprep.subr.bf16.mxu0 0
        %5246 = vmatpush1.bf16.msra.mxu0 %v3905
        %5247 = vmatprep.subr.bf16.mxu0 0
        %5248 = vmatpush1.bf16.msra.mxu0 %v3906
        %5249 = vmatprep.subr.bf16.mxu0 0
        %5250 = vmatpush1.bf16.msra.mxu0 %v3907
        %5251 = vmatprep.subr.bf16.mxu0 0
        %5252 = vmatpush1.bf16.msra.mxu0 %v3908
        %5253 = vmatprep.subr.bf16.mxu0 0
        %5254 = vmatpush1.bf16.msra.mxu0 %v3909
        %5255 = vmatprep.subr.bf16.mxu0 0
        %5256 = vmatpush1.bf16.msra.mxu0 %v3910
        %5257 = vmatprep.subr.bf16.mxu0 0
        %5258 = vmatpush1.bf16.msra.mxu0 %v3911
        %5259 = vmatprep.subr.bf16.mxu0 0
        %5260 = vmatpush1.bf16.msra.mxu0 %v3912
        %5261 = vmatprep.subr.bf16.mxu0 0
        %5262 = vmatpush1.bf16.msra.mxu0 %v3913
        %5263 = vmatprep.subr.bf16.mxu0 0
        %5264 = vmatpush1.bf16.msra.mxu0 %v3914
        %5265 = vmatprep.subr.bf16.mxu0 0
        %5266 = vmatpush1.bf16.msra.mxu0 %v3915
        %5267 = vmatprep.subr.bf16.mxu0 0
        %5268 = vmatpush1.bf16.msra.mxu0 %v3916
        %5269 = vmatprep.mubr.bf16.mxu0 %v584
        %5270 = vmatmul.mubr.bf16.gmra.mrb[0].mxu0 %v583
        %v5271 = vpop.f32.mrb[0].mxu0
        %v5272 = vadd.f32 %v5232, %v5271
        %v5273 = vpop.f32.mrb[0].mxu0
        %v5274 = vpop.f32.mrb[0].mxu0
        %v5275 = vpop.f32.mrb[0].mxu0
        %5276 = vdwg.mxu0
        %5277 = vmatprep.subr.bf16.mxu0 0
        %5278 = vmatpush1.bf16.msra.mxu0 %v3917
        %5279 = vmatprep.subr.bf16.mxu0 0
        %5280 = vmatpush1.bf16.msra.mxu0 %v3918
        %5281 = vmatprep.subr.bf16.mxu0 0
        %5282 = vmatpush1.bf16.msra.mxu0 %v3919
        %5283 = vmatprep.subr.bf16.mxu0 0
        %5284 = vmatpush1.bf16.msra.mxu0 %v3920
        %5285 = vmatprep.subr.bf16.mxu0 0
        %5286 = vmatpush1.bf16.msra.mxu0 %v3921
        %5287 = vmatprep.subr.bf16.mxu0 0
        %5288 = vmatpush1.bf16.msra.mxu0 %v3922
        %5289 = vmatprep.subr.bf16.mxu0 0
        %5290 = vmatpush1.bf16.msra.mxu0 %v3923
        %5291 = vmatprep.subr.bf16.mxu0 0
        %5292 = vmatpush1.bf16.msra.mxu0 %v3924
        %5293 = vmatprep.subr.bf16.mxu0 0
        %5294 = vmatpush1.bf16.msra.mxu0 %v3925
        %5295 = vmatprep.subr.bf16.mxu0 0
        %5296 = vmatpush1.bf16.msra.mxu0 %v3926
        %5297 = vmatprep.subr.bf16.mxu0 0
        %5298 = vmatpush1.bf16.msra.mxu0 %v3927
        %5299 = vmatprep.subr.bf16.mxu0 0
        %5300 = vmatpush1.bf16.msra.mxu0 %v3928
        %5301 = vmatprep.subr.bf16.mxu0 0
        %5302 = vmatpush1.bf16.msra.mxu0 %v3929
        %5303 = vmatprep.subr.bf16.mxu0 0
        %5304 = vmatpush1.bf16.msra.mxu0 %v3930
        %5305 = vmatprep.subr.bf16.mxu0 0
        %5306 = vmatpush1.bf16.msra.mxu0 %v3931
        %5307 = vmatprep.subr.bf16.mxu0 0
        %5308 = vmatpush1.bf16.msra.mxu0 %v3932
        %5309 = vmatprep.mubr.bf16.mxu0 %v586
        %5310 = vmatmul.mubr.bf16.gmra.mrb[0].mxu0 %v585
        %v5311 = vpop.f32.mrb[0].mxu0
        %v5312 = vadd.f32 %v5272, %v5311
        %v5313 = vpop.f32.mrb[0].mxu0
        %v5314 = vpop.f32.mrb[0].mxu0
        %v5315 = vpop.f32.mrb[0].mxu0
        %5316 = vdwg.mxu0
        %5317 = vmatprep.subr.bf16.mxu0 0
        %5318 = vmatpush1.bf16.msra.mxu0 %v3933
        %5319 = vmatprep.subr.bf16.mxu0 0
        %5320 = vmatpush1.bf16.msra.mxu0 %v3934
        %5321 = vmatprep.subr.bf16.mxu0 0
        %5322 = vmatpush1.bf16.msra.mxu0 %v3935
        %5323 = vmatprep.subr.bf16.mxu0 0
        %5324 = vmatpush1.bf16.msra.mxu0 %v3936
        %5325 = vmatprep.subr.bf16.mxu0 0
        %5326 = vmatpush1.bf16.msra.mxu0 %v3937
        %5327 = vmatprep.subr.bf16.mxu0 0
        %5328 = vmatpush1.bf16.msra.mxu0 %v3938
        %5329 = vmatprep.subr.bf16.mxu0 0
        %5330 = vmatpush1.bf16.msra.mxu0 %v3939
        %5331 = vmatprep.subr.bf16.mxu0 0
        %5332 = vmatpush1.bf16.msra.mxu0 %v3940
        %5333 = vmatprep.subr.bf16.mxu0 0
        %5334 = vmatpush1.bf16.msra.mxu0 %v3941
        %5335 = vmatprep.subr.bf16.mxu0 0
        %5336 = vmatpush1.bf16.msra.mxu0 %v3942
        %5337 = vmatprep.subr.bf16.mxu0 0
        %5338 = vmatpush1.bf16.msra.mxu0 %v3943
        %5339 = vmatprep.subr.bf16.mxu0 0
        %5340 = vmatpush1.bf16.msra.mxu0 %v3944
        %5341 = vmatprep.subr.bf16.mxu0 0
        %5342 = vmatpush1.bf16.msra.mxu0 %v3945
        %5343 = vmatprep.subr.bf16.mxu0 0
        %5344 = vmatpush1.bf16.msra.mxu0 %v3946
        %5345 = vmatprep.subr.bf16.mxu0 0
        %5346 = vmatpush1.bf16.msra.mxu0 %v3947
        %5347 = vmatprep.subr.bf16.mxu0 0
        %5348 = vmatpush1.bf16.msra.mxu0 %v3948
        %5349 = vmatprep.mubr.bf16.mxu0 %v588
        %5350 = vmatmul.mubr.bf16.gmra.mrb[0].mxu0 %v587
        %v5351 = vpop.f32.mrb[0].mxu0
        %v5352 = vadd.f32 %v5312, %v5351
        %v5353 = vpop.f32.mrb[0].mxu0
        %v5354 = vpop.f32.mrb[0].mxu0
        %v5355 = vpop.f32.mrb[0].mxu0
        %5356 = vdwg.mxu0
        %5357 = vmatprep.subr.bf16.mxu0 0
        %5358 = vmatpush1.bf16.msra.mxu0 %v3949
        %5359 = vmatprep.subr.bf16.mxu0 0
        %5360 = vmatpush1.bf16.msra.mxu0 %v3950
        %5361 = vmatprep.subr.bf16.mxu0 0
        %5362 = vmatpush1.bf16.msra.mxu0 %v3951
        %5363 = vmatprep.subr.bf16.mxu0 0
        %5364 = vmatpush1.bf16.msra.mxu0 %v3952
        %5365 = vmatprep.subr.bf16.mxu0 0
        %5366 = vmatpush1.bf16.msra.mxu0 %v3953
        %5367 = vmatprep.subr.bf16.mxu0 0
        %5368 = vmatpush1.bf16.msra.mxu0 %v3954
        %5369 = vmatprep.subr.bf16.mxu0 0
        %5370 = vmatpush1.bf16.msra.mxu0 %v3955
        %5371 = vmatprep.subr.bf16.mxu0 0
        %5372 = vmatpush1.bf16.msra.mxu0 %v3956
        %5373 = vmatprep.subr.bf16.mxu0 0
        %5374 = vmatpush1.bf16.msra.mxu0 %v3957
        %5375 = vmatprep.subr.bf16.mxu0 0
        %5376 = vmatpush1.bf16.msra.mxu0 %v3958
        %5377 = vmatprep.subr.bf16.mxu0 0
        %5378 = vmatpush1.bf16.msra.mxu0 %v3959
        %5379 = vmatprep.subr.bf16.mxu0 0
        %5380 = vmatpush1.bf16.msra.mxu0 %v3960
        %5381 = vmatprep.subr.bf16.mxu0 0
        %5382 = vmatpush1.bf16.msra.mxu0 %v3961
        %5383 = vmatprep.subr.bf16.mxu0 0
        %5384 = vmatpush1.bf16.msra.mxu0 %v3962
        %5385 = vmatprep.subr.bf16.mxu0 0
        %5386 = vmatpush1.bf16.msra.mxu0 %v3963
        %5387 = vmatprep.subr.bf16.mxu0 0
        %5388 = vmatpush1.bf16.msra.mxu0 %v3964
        %5389 = vmatprep.mubr.bf16.mxu0 %v590
        %5390 = vmatmul.mubr.bf16.gmra.mrb[0].mxu0 %v589
        %v5391 = vpop.f32.mrb[0].mxu0
        %v5392 = vadd.f32 %v5352, %v5391
        %v5393 = vpop.f32.mrb[0].mxu0
        %v5394 = vpop.f32.mrb[0].mxu0
        %v5395 = vpop.f32.mrb[0].mxu0
        %5396 = vdwg.mxu0
        %5397 = vmatprep.subr.bf16.mxu0 0
        %5398 = vmatpush1.bf16.msra.mxu0 %v3965
        %5399 = vmatprep.subr.bf16.mxu0 0
        %5400 = vmatpush1.bf16.msra.mxu0 %v3966
        %5401 = vmatprep.subr.bf16.mxu0 0
        %5402 = vmatpush1.bf16.msra.mxu0 %v3967
        %5403 = vmatprep.subr.bf16.mxu0 0
        %5404 = vmatpush1.bf16.msra.mxu0 %v3968
        %5405 = vmatprep.subr.bf16.mxu0 0
        %5406 = vmatpush1.bf16.msra.mxu0 %v3969
        %5407 = vmatprep.subr.bf16.mxu0 0
        %5408 = vmatpush1.bf16.msra.mxu0 %v3970
        %5409 = vmatprep.subr.bf16.mxu0 0
        %5410 = vmatpush1.bf16.msra.mxu0 %v3971
        %5411 = vmatprep.subr.bf16.mxu0 0
        %5412 = vmatpush1.bf16.msra.mxu0 %v3972
        %5413 = vmatprep.subr.bf16.mxu0 0
        %5414 = vmatpush1.bf16.msra.mxu0 %v3973
        %5415 = vmatprep.subr.bf16.mxu0 0
        %5416 = vmatpush1.bf16.msra.mxu0 %v3974
        %5417 = vmatprep.subr.bf16.mxu0 0
        %5418 = vmatpush1.bf16.msra.mxu0 %v3975
        %5419 = vmatprep.subr.bf16.mxu0 0
        %5420 = vmatpush1.bf16.msra.mxu0 %v3976
        %5421 = vmatprep.subr.bf16.mxu0 0
        %5422 = vmatpush1.bf16.msra.mxu0 %v3977
        %5423 = vmatprep.subr.bf16.mxu0 0
        %5424 = vmatpush1.bf16.msra.mxu0 %v3978
        %5425 = vmatprep.subr.bf16.mxu0 0
        %5426 = vmatpush1.bf16.msra.mxu0 %v3979
        %5427 = vmatprep.subr.bf16.mxu0 0
        %5428 = vmatpush1.bf16.msra.mxu0 %v3980
        %5429 = vmatprep.mubr.bf16.mxu0 %v592
        %5430 = vmatmul.mubr.bf16.gmra.mrb[0].mxu0 %v591
        %v5431 = vpop.f32.mrb[0].mxu0
        %v5432 = vadd.f32 %v5392, %v5431
        %v5433 = vpop.f32.mrb[0].mxu0
        %v5434 = vpop.f32.mrb[0].mxu0
        %v5435 = vpop.f32.mrb[0].mxu0
        %5436 = vdwg.mxu0
        %5437 = vmatprep.subr.bf16.mxu0 0
        %5438 = vmatpush1.bf16.msra.mxu0 %v3981
        %5439 = vmatprep.subr.bf16.mxu0 0
        %5440 = vmatpush1.bf16.msra.mxu0 %v3982
        %5441 = vmatprep.subr.bf16.mxu0 0
        %5442 = vmatpush1.bf16.msra.mxu0 %v3983
        %5443 = vmatprep.subr.bf16.mxu0 0
        %5444 = vmatpush1.bf16.msra.mxu0 %v3984
        %5445 = vmatprep.subr.bf16.mxu0 0
        %5446 = vmatpush1.bf16.msra.mxu0 %v3985
        %5447 = vmatprep.subr.bf16.mxu0 0
        %5448 = vmatpush1.bf16.msra.mxu0 %v3986
        %5449 = vmatprep.subr.bf16.mxu0 0
        %5450 = vmatpush1.bf16.msra.mxu0 %v3987
        %5451 = vmatprep.subr.bf16.mxu0 0
        %5452 = vmatpush1.bf16.msra.mxu0 %v3988
        %5453 = vmatprep.subr.bf16.mxu0 0
        %5454 = vmatpush1.bf16.msra.mxu0 %v3989
        %5455 = vmatprep.subr.bf16.mxu0 0
        %5456 = vmatpush1.bf16.msra.mxu0 %v3990
        %5457 = vmatprep.subr.bf16.mxu0 0
        %5458 = vmatpush1.bf16.msra.mxu0 %v3991
        %5459 = vmatprep.subr.bf16.mxu0 0
        %5460 = vmatpush1.bf16.msra.mxu0 %v3992
        %5461 = vmatprep.subr.bf16.mxu0 0
        %5462 = vmatpush1.bf16.msra.mxu0 %v3993
        %5463 = vmatprep.subr.bf16.mxu0 0
        %5464 = vmatpush1.bf16.msra.mxu0 %v3994
        %5465 = vmatprep.subr.bf16.mxu0 0
        %5466 = vmatpush1.bf16.msra.mxu0 %v3995
        %5467 = vmatprep.subr.bf16.mxu0 0
        %5468 = vmatpush1.bf16.msra.mxu0 %v3996
        %5469 = vmatprep.mubr.bf16.mxu0 %v594
        %5470 = vmatmul.mubr.bf16.gmra.mrb[0].mxu0 %v593
        %v5471 = vpop.f32.mrb[0].mxu0
        %v5472 = vadd.f32 %v5432, %v5471
        %v5473 = vpop.f32.mrb[0].mxu0
        %v5474 = vpop.f32.mrb[0].mxu0
        %v5475 = vpop.f32.mrb[0].mxu0
        %5476 = vdwg.mxu0
        %5477 = vmatprep.subr.bf16.mxu0 0
        %5478 = vmatpush1.bf16.msra.mxu0 %v3997
        %5479 = vmatprep.subr.bf16.mxu0 0
        %5480 = vmatpush1.bf16.msra.mxu0 %v3998
        %5481 = vmatprep.subr.bf16.mxu0 0
        %5482 = vmatpush1.bf16.msra.mxu0 %v3999
        %5483 = vmatprep.subr.bf16.mxu0 0
        %5484 = vmatpush1.bf16.msra.mxu0 %v4000
        %5485 = vmatprep.subr.bf16.mxu0 0
        %5486 = vmatpush1.bf16.msra.mxu0 %v4001
        %5487 = vmatprep.subr.bf16.mxu0 0
        %5488 = vmatpush1.bf16.msra.mxu0 %v4002
        %5489 = vmatprep.subr.bf16.mxu0 0
        %5490 = vmatpush1.bf16.msra.mxu0 %v4003
        %5491 = vmatprep.subr.bf16.mxu0 0
        %5492 = vmatpush1.bf16.msra.mxu0 %v4004
        %5493 = vmatprep.subr.bf16.mxu0 0
        %5494 = vmatpush1.bf16.msra.mxu0 %v4005
        %5495 = vmatprep.subr.bf16.mxu0 0
        %5496 = vmatpush1.bf16.msra.mxu0 %v4006
        %5497 = vmatprep.subr.bf16.mxu0 0
        %5498 = vmatpush1.bf16.msra.mxu0 %v4007
        %5499 = vmatprep.subr.bf16.mxu0 0
        %5500 = vmatpush1.bf16.msra.mxu0 %v4008
        %5501 = vmatprep.subr.bf16.mxu0 0
        %5502 = vmatpush1.bf16.msra.mxu0 %v4009
        %5503 = vmatprep.subr.bf16.mxu0 0
        %5504 = vmatpush1.bf16.msra.mxu0 %v4010
        %5505 = vmatprep.subr.bf16.mxu0 0
        %5506 = vmatpush1.bf16.msra.mxu0 %v4011
        %5507 = vmatprep.subr.bf16.mxu0 0
        %5508 = vmatpush1.bf16.msra.mxu0 %v4012
        %5509 = vmatprep.mubr.bf16.mxu0 %v596
        %5510 = vmatmul.mubr.bf16.gmra.mrb[0].mxu0 %v595
        %v5511 = vpop.f32.mrb[0].mxu0
        %v5512 = vadd.f32 %v5472, %v5511
        %v5513 = vpop.f32.mrb[0].mxu0
        %v5514 = vpop.f32.mrb[0].mxu0
        %v5515 = vpop.f32.mrb[0].mxu0
        %5516 = vdwg.mxu0
        %5517 = vmatprep.subr.bf16.mxu0 0
        %5518 = vmatpush1.bf16.msra.mxu0 %v4013
        %5519 = vmatprep.subr.bf16.mxu0 0
        %5520 = vmatpush1.bf16.msra.mxu0 %v4014
        %5521 = vmatprep.subr.bf16.mxu0 0
        %5522 = vmatpush1.bf16.msra.mxu0 %v4015
        %5523 = vmatprep.subr.bf16.mxu0 0
        %5524 = vmatpush1.bf16.msra.mxu0 %v4016
        %5525 = vmatprep.subr.bf16.mxu0 0
        %5526 = vmatpush1.bf16.msra.mxu0 %v4017
        %5527 = vmatprep.subr.bf16.mxu0 0
        %5528 = vmatpush1.bf16.msra.mxu0 %v4018
        %5529 = vmatprep.subr.bf16.mxu0 0
        %5530 = vmatpush1.bf16.msra.mxu0 %v4019
        %5531 = vmatprep.subr.bf16.mxu0 0
        %5532 = vmatpush1.bf16.msra.mxu0 %v4020
        %5533 = vmatprep.subr.bf16.mxu0 0
        %5534 = vmatpush1.bf16.msra.mxu0 %v4021
        %5535 = vmatprep.subr.bf16.mxu0 0
        %5536 = vmatpush1.bf16.msra.mxu0 %v4022
        %5537 = vmatprep.subr.bf16.mxu0 0
        %5538 = vmatpush1.bf16.msra.mxu0 %v4023
        %5539 = vmatprep.subr.bf16.mxu0 0
        %5540 = vmatpush1.bf16.msra.mxu0 %v4024
        %5541 = vmatprep.subr.bf16.mxu0 0
        %5542 = vmatpush1.bf16.msra.mxu0 %v4025
        %5543 = vmatprep.subr.bf16.mxu0 0
        %5544 = vmatpush1.bf16.msra.mxu0 %v4026
        %5545 = vmatprep.subr.bf16.mxu0 0
        %5546 = vmatpush1.bf16.msra.mxu0 %v4027
        %5547 = vmatprep.subr.bf16.mxu0 0
        %5548 = vmatpush1.bf16.msra.mxu0 %v4028
        %5549 = vmatprep.mubr.bf16.mxu0 %v598
        %5550 = vmatmul.mubr.bf16.gmra.mrb[0].mxu0 %v597
        %v5551 = vpop.f32.mrb[0].mxu0
        %v5552 = vadd.f32 %v5512, %v5551
        %v5553 = vpop.f32.mrb[0].mxu0
        %v5554 = vpop.f32.mrb[0].mxu0
        %v5555 = vpop.f32.mrb[0].mxu0
        %5556 = vdwg.mxu0
        %5557 = vmatprep.subr.bf16.mxu0 0
        %5558 = vmatpush1.bf16.msra.mxu0 %v4029
        %5559 = vmatprep.subr.bf16.mxu0 0
        %5560 = vmatpush1.bf16.msra.mxu0 %v4030
        %5561 = vmatprep.subr.bf16.mxu0 0
        %5562 = vmatpush1.bf16.msra.mxu0 %v4031
        %5563 = vmatprep.subr.bf16.mxu0 0
        %5564 = vmatpush1.bf16.msra.mxu0 %v4032
        %5565 = vmatprep.subr.bf16.mxu0 0
        %5566 = vmatpush1.bf16.msra.mxu0 %v4033
        %5567 = vmatprep.subr.bf16.mxu0 0
        %5568 = vmatpush1.bf16.msra.mxu0 %v4034
        %5569 = vmatprep.subr.bf16.mxu0 0
        %5570 = vmatpush1.bf16.msra.mxu0 %v4035
        %5571 = vmatprep.subr.bf16.mxu0 0
        %5572 = vmatpush1.bf16.msra.mxu0 %v4036
        %5573 = vmatprep.subr.bf16.mxu0 0
        %5574 = vmatpush1.bf16.msra.mxu0 %v4037
        %5575 = vmatprep.subr.bf16.mxu0 0
        %5576 = vmatpush1.bf16.msra.mxu0 %v4038
        %5577 = vmatprep.subr.bf16.mxu0 0
        %5578 = vmatpush1.bf16.msra.mxu0 %v4039
        %5579 = vmatprep.subr.bf16.mxu0 0
        %5580 = vmatpush1.bf16.msra.mxu0 %v4040
        %5581 = vmatprep.subr.bf16.mxu0 0
        %5582 = vmatpush1.bf16.msra.mxu0 %v4041
        %5583 = vmatprep.subr.bf16.mxu0 0
        %5584 = vmatpush1.bf16.msra.mxu0 %v4042
        %5585 = vmatprep.subr.bf16.mxu0 0
        %5586 = vmatpush1.bf16.msra.mxu0 %v4043
        %5587 = vmatprep.subr.bf16.mxu0 0
        %5588 = vmatpush1.bf16.msra.mxu0 %v4044
        %5589 = vmatprep.mubr.bf16.mxu0 %v600
        %5590 = vmatmul.mubr.bf16.gmra.mrb[0].mxu0 %v599
        %v5591 = vpop.f32.mrb[0].mxu0
        %v5592 = vadd.f32 %v5552, %v5591
        %v5593 = vpop.f32.mrb[0].mxu0
        %v5594 = vpop.f32.mrb[0].mxu0
        %v5595 = vpop.f32.mrb[0].mxu0
        %5596 = vdwg.mxu0
        %5597 = vmatprep.subr.bf16.mxu0 0
        %5598 = vmatpush1.bf16.msra.mxu0 %v4045
        %5599 = vmatprep.subr.bf16.mxu0 0
        %5600 = vmatpush1.bf16.msra.mxu0 %v4046
        %5601 = vmatprep.subr.bf16.mxu0 0
        %5602 = vmatpush1.bf16.msra.mxu0 %v4047
        %5603 = vmatprep.subr.bf16.mxu0 0
        %5604 = vmatpush1.bf16.msra.mxu0 %v4048
        %5605 = vmatprep.subr.bf16.mxu0 0
        %5606 = vmatpush1.bf16.msra.mxu0 %v4049
        %5607 = vmatprep.subr.bf16.mxu0 0
        %5608 = vmatpush1.bf16.msra.mxu0 %v4050
        %5609 = vmatprep.subr.bf16.mxu0 0
        %5610 = vmatpush1.bf16.msra.mxu0 %v4051
        %5611 = vmatprep.subr.bf16.mxu0 0
        %5612 = vmatpush1.bf16.msra.mxu0 %v4052
        %5613 = vmatprep.subr.bf16.mxu0 0
        %5614 = vmatpush1.bf16.msra.mxu0 %v4053
        %5615 = vmatprep.subr.bf16.mxu0 0
        %5616 = vmatpush1.bf16.msra.mxu0 %v4054
        %5617 = vmatprep.subr.bf16.mxu0 0
        %5618 = vmatpush1.bf16.msra.mxu0 %v4055
        %5619 = vmatprep.subr.bf16.mxu0 0
        %5620 = vmatpush1.bf16.msra.mxu0 %v4056
        %5621 = vmatprep.subr.bf16.mxu0 0
        %5622 = vmatpush1.bf16.msra.mxu0 %v4057
        %5623 = vmatprep.subr.bf16.mxu0 0
        %5624 = vmatpush1.bf16.msra.mxu0 %v4058
        %5625 = vmatprep.subr.bf16.mxu0 0
        %5626 = vmatpush1.bf16.msra.mxu0 %v4059
        %5627 = vmatprep.subr.bf16.mxu0 0
        %5628 = vmatpush1.bf16.msra.mxu0 %v4060
        %5629 = vmatprep.mubr.bf16.mxu0 %v602
        %5630 = vmatmul.mubr.bf16.gmra.mrb[0].mxu0 %v601
        %v5631 = vpop.f32.mrb[0].mxu0
        %v5632 = vadd.f32 %v5592, %v5631
        %v5633 = vpop.f32.mrb[0].mxu0
        %v5634 = vpop.f32.mrb[0].mxu0
        %v5635 = vpop.f32.mrb[0].mxu0
        %5636 = vdwg.mxu0
        %5637 = vmatprep.subr.bf16.mxu0 0
        %5638 = vmatpush1.bf16.msra.mxu0 %v4061
        %5639 = vmatprep.subr.bf16.mxu0 0
        %5640 = vmatpush1.bf16.msra.mxu0 %v4062
        %5641 = vmatprep.subr.bf16.mxu0 0
        %5642 = vmatpush1.bf16.msra.mxu0 %v4063
        %5643 = vmatprep.subr.bf16.mxu0 0
        %5644 = vmatpush1.bf16.msra.mxu0 %v4064
        %5645 = vmatprep.subr.bf16.mxu0 0
        %5646 = vmatpush1.bf16.msra.mxu0 %v4065
        %5647 = vmatprep.subr.bf16.mxu0 0
        %5648 = vmatpush1.bf16.msra.mxu0 %v4066
        %5649 = vmatprep.subr.bf16.mxu0 0
        %5650 = vmatpush1.bf16.msra.mxu0 %v4067
        %5651 = vmatprep.subr.bf16.mxu0 0
        %5652 = vmatpush1.bf16.msra.mxu0 %v4068
        %5653 = vmatprep.subr.bf16.mxu0 0
        %5654 = vmatpush1.bf16.msra.mxu0 %v4069
        %5655 = vmatprep.subr.bf16.mxu0 0
        %5656 = vmatpush1.bf16.msra.mxu0 %v4070
        %5657 = vmatprep.subr.bf16.mxu0 0
        %5658 = vmatpush1.bf16.msra.mxu0 %v4071
        %5659 = vmatprep.subr.bf16.mxu0 0
        %5660 = vmatpush1.bf16.msra.mxu0 %v4072
        %5661 = vmatprep.subr.bf16.mxu0 0
        %5662 = vmatpush1.bf16.msra.mxu0 %v4073
        %5663 = vmatprep.subr.bf16.mxu0 0
        %5664 = vmatpush1.bf16.msra.mxu0 %v4074
        %5665 = vmatprep.subr.bf16.mxu0 0
        %5666 = vmatpush1.bf16.msra.mxu0 %v4075
        %5667 = vmatprep.subr.bf16.mxu0 0
        %5668 = vmatpush1.bf16.msra.mxu0 %v4076
        %5669 = vmatprep.mubr.bf16.mxu0 %v604
        %5670 = vmatmul.mubr.bf16.gmra.mrb[0].mxu0 %v603
        %v5671 = vpop.f32.mrb[0].mxu0
        %v5672 = vadd.f32 %v5632, %v5671
        %v5673 = vpop.f32.mrb[0].mxu0
        %v5674 = vpop.f32.mrb[0].mxu0
        %v5675 = vpop.f32.mrb[0].mxu0
        %5676 = vdwg.mxu0
        %5677 = vmatprep.subr.bf16.mxu0 0
        %5678 = vmatpush1.bf16.msra.mxu0 %v4077
        %5679 = vmatprep.subr.bf16.mxu0 0
        %5680 = vmatpush1.bf16.msra.mxu0 %v4078
        %5681 = vmatprep.subr.bf16.mxu0 0
        %5682 = vmatpush1.bf16.msra.mxu0 %v4079
        %5683 = vmatprep.subr.bf16.mxu0 0
        %5684 = vmatpush1.bf16.msra.mxu0 %v4080
        %5685 = vmatprep.subr.bf16.mxu0 0
        %5686 = vmatpush1.bf16.msra.mxu0 %v4081
        %5687 = vmatprep.subr.bf16.mxu0 0
        %5688 = vmatpush1.bf16.msra.mxu0 %v4082
        %5689 = vmatprep.subr.bf16.mxu0 0
        %5690 = vmatpush1.bf16.msra.mxu0 %v4083
        %5691 = vmatprep.subr.bf16.mxu0 0
        %5692 = vmatpush1.bf16.msra.mxu0 %v4084
        %5693 = vmatprep.subr.bf16.mxu0 0
        %5694 = vmatpush1.bf16.msra.mxu0 %v4085
        %5695 = vmatprep.subr.bf16.mxu0 0
        %5696 = vmatpush1.bf16.msra.mxu0 %v4086
        %5697 = vmatprep.subr.bf16.mxu0 0
        %5698 = vmatpush1.bf16.msra.mxu0 %v4087
        %5699 = vmatprep.subr.bf16.mxu0 0
        %5700 = vmatpush1.bf16.msra.mxu0 %v4088
        %5701 = vmatprep.subr.bf16.mxu0 0
        %5702 = vmatpush1.bf16.msra.mxu0 %v4089
        %5703 = vmatprep.subr.bf16.mxu0 0
        %5704 = vmatpush1.bf16.msra.mxu0 %v4090
        %5705 = vmatprep.subr.bf16.mxu0 0
        %5706 = vmatpush1.bf16.msra.mxu0 %v4091
        %5707 = vmatprep.subr.bf16.mxu0 0
        %5708 = vmatpush1.bf16.msra.mxu0 %v4092
        %5709 = vmatprep.mubr.bf16.mxu0 %v606
        %5710 = vmatmul.mubr.bf16.gmra.mrb[0].mxu0 %v605
        %v5711 = vpop.f32.mrb[0].mxu0
        %v5712 = vadd.f32 %v5672, %v5711
        %v5713 = vpop.f32.mrb[0].mxu0
        %v5714 = vpop.f32.mrb[0].mxu0
        %v5715 = vpop.f32.mrb[0].mxu0
        %5716 = vdwg.mxu0
        %5717 = vmatprep.subr.bf16.mxu0 0
        %5718 = vmatpush1.bf16.msra.mxu0 %v4093
        %5719 = vmatprep.subr.bf16.mxu0 0
        %5720 = vmatpush1.bf16.msra.mxu0 %v4094
        %5721 = vmatprep.subr.bf16.mxu0 0
        %5722 = vmatpush1.bf16.msra.mxu0 %v4095
        %5723 = vmatprep.subr.bf16.mxu0 0
        %5724 = vmatpush1.bf16.msra.mxu0 %v4096
        %5725 = vmatprep.subr.bf16.mxu0 0
        %5726 = vmatpush1.bf16.msra.mxu0 %v4097
        %5727 = vmatprep.subr.bf16.mxu0 0
        %5728 = vmatpush1.bf16.msra.mxu0 %v4098
        %5729 = vmatprep.subr.bf16.mxu0 0
        %5730 = vmatpush1.bf16.msra.mxu0 %v4099
        %5731 = vmatprep.subr.bf16.mxu0 0
        %5732 = vmatpush1.bf16.msra.mxu0 %v4100
        %5733 = vmatprep.subr.bf16.mxu0 0
        %5734 = vmatpush1.bf16.msra.mxu0 %v4101
        %5735 = vmatprep.subr.bf16.mxu0 0
        %5736 = vmatpush1.bf16.msra.mxu0 %v4102
        %5737 = vmatprep.subr.bf16.mxu0 0
        %5738 = vmatpush1.bf16.msra.mxu0 %v4103
        %5739 = vmatprep.subr.bf16.mxu0 0
        %5740 = vmatpush1.bf16.msra.mxu0 %v4104
        %5741 = vmatprep.subr.bf16.mxu0 0
        %5742 = vmatpush1.bf16.msra.mxu0 %v4105
        %5743 = vmatprep.subr.bf16.mxu0 0
        %5744 = vmatpush1.bf16.msra.mxu0 %v4106
        %5745 = vmatprep.subr.bf16.mxu0 0
        %5746 = vmatpush1.bf16.msra.mxu0 %v4107
        %5747 = vmatprep.subr.bf16.mxu0 0
        %5748 = vmatpush1.bf16.msra.mxu0 %v4108
        %5749 = vmatprep.mubr.bf16.mxu0 %v608
        %5750 = vmatmul.mubr.bf16.gmra.mrb[0].mxu0 %v607
        %v5751 = vpop.f32.mrb[0].mxu0
        %v5752 = vadd.f32 %v5712, %v5751
        %v5753 = vpop.f32.mrb[0].mxu0
        %v5754 = vpop.f32.mrb[0].mxu0
        %v5755 = vpop.f32.mrb[0].mxu0
        %5756 = vdwg.mxu0
        %5757 = vmatprep.subr.bf16.mxu0 0
        %5758 = vmatpush1.bf16.msra.mxu0 %v4109
        %5759 = vmatprep.subr.bf16.mxu0 0
        %5760 = vmatpush1.bf16.msra.mxu0 %v4110
        %5761 = vmatprep.subr.bf16.mxu0 0
        %5762 = vmatpush1.bf16.msra.mxu0 %v4111
        %5763 = vmatprep.subr.bf16.mxu0 0
        %5764 = vmatpush1.bf16.msra.mxu0 %v4112
        %5765 = vmatprep.subr.bf16.mxu0 0
        %5766 = vmatpush1.bf16.msra.mxu0 %v4113
        %5767 = vmatprep.subr.bf16.mxu0 0
        %5768 = vmatpush1.bf16.msra.mxu0 %v4114
        %5769 = vmatprep.subr.bf16.mxu0 0
        %5770 = vmatpush1.bf16.msra.mxu0 %v4115
        %5771 = vmatprep.subr.bf16.mxu0 0
        %5772 = vmatpush1.bf16.msra.mxu0 %v4116
        %5773 = vmatprep.subr.bf16.mxu0 0
        %5774 = vmatpush1.bf16.msra.mxu0 %v4117
        %5775 = vmatprep.subr.bf16.mxu0 0
        %5776 = vmatpush1.bf16.msra.mxu0 %v4118
        %5777 = vmatprep.subr.bf16.mxu0 0
        %5778 = vmatpush1.bf16.msra.mxu0 %v4119
        %5779 = vmatprep.subr.bf16.mxu0 0
        %5780 = vmatpush1.bf16.msra.mxu0 %v4120
        %5781 = vmatprep.subr.bf16.mxu0 0
        %5782 = vmatpush1.bf16.msra.mxu0 %v4121
        %5783 = vmatprep.subr.bf16.mxu0 0
        %5784 = vmatpush1.bf16.msra.mxu0 %v4122
        %5785 = vmatprep.subr.bf16.mxu0 0
        %5786 = vmatpush1.bf16.msra.mxu0 %v4123
        %5787 = vmatprep.subr.bf16.mxu0 0
        %5788 = vmatpush1.bf16.msra.mxu0 %v4124
        %5789 = vmatprep.mubr.bf16.mxu0 %v610
        %5790 = vmatmul.mubr.bf16.gmra.mrb[0].mxu0 %v609
        %v5791 = vpop.f32.mrb[0].mxu0
        %v5792 = vadd.f32 %v5752, %v5791
        %v5793 = vpop.f32.mrb[0].mxu0
        %v5794 = vpop.f32.mrb[0].mxu0
        %v5795 = vpop.f32.mrb[0].mxu0
        %5796 = vdwg.mxu0
        %5797 = vmatprep.subr.bf16.mxu0 0
        %5798 = vmatpush1.bf16.msra.mxu0 %v4125
        %5799 = vmatprep.subr.bf16.mxu0 0
        %5800 = vmatpush1.bf16.msra.mxu0 %v4126
        %5801 = vmatprep.subr.bf16.mxu0 0
        %5802 = vmatpush1.bf16.msra.mxu0 %v4127
        %5803 = vmatprep.subr.bf16.mxu0 0
        %5804 = vmatpush1.bf16.msra.mxu0 %v4128
        %5805 = vmatprep.subr.bf16.mxu0 0
        %5806 = vmatpush1.bf16.msra.mxu0 %v4129
        %5807 = vmatprep.subr.bf16.mxu0 0
        %5808 = vmatpush1.bf16.msra.mxu0 %v4130
        %5809 = vmatprep.subr.bf16.mxu0 0
        %5810 = vmatpush1.bf16.msra.mxu0 %v4131
        %5811 = vmatprep.subr.bf16.mxu0 0
        %5812 = vmatpush1.bf16.msra.mxu0 %v4132
        %5813 = vmatprep.subr.bf16.mxu0 0
        %5814 = vmatpush1.bf16.msra.mxu0 %v4133
        %5815 = vmatprep.subr.bf16.mxu0 0
        %5816 = vmatpush1.bf16.msra.mxu0 %v4134
        %5817 = vmatprep.subr.bf16.mxu0 0
        %5818 = vmatpush1.bf16.msra.mxu0 %v4135
        %5819 = vmatprep.subr.bf16.mxu0 0
        %5820 = vmatpush1.bf16.msra.mxu0 %v4136
        %5821 = vmatprep.subr.bf16.mxu0 0
        %5822 = vmatpush1.bf16.msra.mxu0 %v4137
        %5823 = vmatprep.subr.bf16.mxu0 0
        %5824 = vmatpush1.bf16.msra.mxu0 %v4138
        %5825 = vmatprep.subr.bf16.mxu0 0
        %5826 = vmatpush1.bf16.msra.mxu0 %v4139
        %5827 = vmatprep.subr.bf16.mxu0 0
        %5828 = vmatpush1.bf16.msra.mxu0 %v4140
        %5829 = vmatprep.mubr.bf16.mxu0 %v612
        %5830 = vmatmul.mubr.bf16.gmra.mrb[0].mxu0 %v611
        %v5831 = vpop.f32.mrb[0].mxu0
        %v5832 = vadd.f32 %v5792, %v5831
        %v5833 = vpop.f32.mrb[0].mxu0
        %v5834 = vpop.f32.mrb[0].mxu0
        %v5835 = vpop.f32.mrb[0].mxu0
        %5836 = vdwg.mxu0
        %5837 = vmatprep.subr.bf16.mxu0 0
        %5838 = vmatpush1.bf16.msra.mxu0 %v4141
        %5839 = vmatprep.subr.bf16.mxu0 0
        %5840 = vmatpush1.bf16.msra.mxu0 %v4142
        %5841 = vmatprep.subr.bf16.mxu0 0
        %5842 = vmatpush1.bf16.msra.mxu0 %v4143
        %5843 = vmatprep.subr.bf16.mxu0 0
        %5844 = vmatpush1.bf16.msra.mxu0 %v4144
        %5845 = vmatprep.subr.bf16.mxu0 0
        %5846 = vmatpush1.bf16.msra.mxu0 %v4145
        %5847 = vmatprep.subr.bf16.mxu0 0
        %5848 = vmatpush1.bf16.msra.mxu0 %v4146
        %5849 = vmatprep.subr.bf16.mxu0 0
        %5850 = vmatpush1.bf16.msra.mxu0 %v4147
        %5851 = vmatprep.subr.bf16.mxu0 0
        %5852 = vmatpush1.bf16.msra.mxu0 %v4148
        %5853 = vmatprep.subr.bf16.mxu0 0
        %5854 = vmatpush1.bf16.msra.mxu0 %v4149
        %5855 = vmatprep.subr.bf16.mxu0 0
        %5856 = vmatpush1.bf16.msra.mxu0 %v4150
        %5857 = vmatprep.subr.bf16.mxu0 0
        %5858 = vmatpush1.bf16.msra.mxu0 %v4151
        %5859 = vmatprep.subr.bf16.mxu0 0
        %5860 = vmatpush1.bf16.msra.mxu0 %v4152
        %5861 = vmatprep.subr.bf16.mxu0 0
        %5862 = vmatpush1.bf16.msra.mxu0 %v4153
        %5863 = vmatprep.subr.bf16.mxu0 0
        %5864 = vmatpush1.bf16.msra.mxu0 %v4154
        %5865 = vmatprep.subr.bf16.mxu0 0
        %5866 = vmatpush1.bf16.msra.mxu0 %v4155
        %5867 = vmatprep.subr.bf16.mxu0 0
        %5868 = vmatpush1.bf16.msra.mxu0 %v4156
        %5869 = vmatprep.mubr.bf16.mxu0 %v614
        %5870 = vmatmul.mubr.bf16.gmra.mrb[0].mxu0 %v613
        %v5871 = vpop.f32.mrb[0].mxu0
        %v5872 = vadd.f32 %v5832, %v5871
        %v5873 = vpop.f32.mrb[0].mxu0
        %v5874 = vpop.f32.mrb[0].mxu0
        %v5875 = vpop.f32.mrb[0].mxu0
        %5876 = vdwg.mxu0
        %5877 = vmatprep.subr.bf16.mxu0 0
        %5878 = vmatpush1.bf16.msra.mxu0 %v4157
        %5879 = vmatprep.subr.bf16.mxu0 0
        %5880 = vmatpush1.bf16.msra.mxu0 %v4158
        %5881 = vmatprep.subr.bf16.mxu0 0
        %5882 = vmatpush1.bf16.msra.mxu0 %v4159
        %5883 = vmatprep.subr.bf16.mxu0 0
        %5884 = vmatpush1.bf16.msra.mxu0 %v4160
        %5885 = vmatprep.subr.bf16.mxu0 0
        %5886 = vmatpush1.bf16.msra.mxu0 %v4161
        %5887 = vmatprep.subr.bf16.mxu0 0
        %5888 = vmatpush1.bf16.msra.mxu0 %v4162
        %5889 = vmatprep.subr.bf16.mxu0 0
        %5890 = vmatpush1.bf16.msra.mxu0 %v4163
        %5891 = vmatprep.subr.bf16.mxu0 0
        %5892 = vmatpush1.bf16.msra.mxu0 %v4164
        %5893 = vmatprep.subr.bf16.mxu0 0
        %5894 = vmatpush1.bf16.msra.mxu0 %v4165
        %5895 = vmatprep.subr.bf16.mxu0 0
        %5896 = vmatpush1.bf16.msra.mxu0 %v4166
        %5897 = vmatprep.subr.bf16.mxu0 0
        %5898 = vmatpush1.bf16.msra.mxu0 %v4167
        %5899 = vmatprep.subr.bf16.mxu0 0
        %5900 = vmatpush1.bf16.msra.mxu0 %v4168
        %5901 = vmatprep.subr.bf16.mxu0 0
        %5902 = vmatpush1.bf16.msra.mxu0 %v4169
        %5903 = vmatprep.subr.bf16.mxu0 0
        %5904 = vmatpush1.bf16.msra.mxu0 %v4170
        %5905 = vmatprep.subr.bf16.mxu0 0
        %5906 = vmatpush1.bf16.msra.mxu0 %v4171
        %5907 = vmatprep.subr.bf16.mxu0 0
        %5908 = vmatpush1.bf16.msra.mxu0 %v4172
        %5909 = vmatprep.mubr.bf16.mxu0 %v616
        %5910 = vmatmul.mubr.bf16.gmra.mrb[0].mxu0 %v615
        %v5911 = vpop.f32.mrb[0].mxu0
        %v5912 = vadd.f32 %v5872, %v5911
        %v5913 = vpop.f32.mrb[0].mxu0
        %v5914 = vpop.f32.mrb[0].mxu0
        %v5915 = vpop.f32.mrb[0].mxu0
        %5916 = vdwg.mxu0
        %5917 = vmatprep.subr.bf16.mxu0 0
        %5918 = vmatpush1.bf16.msra.mxu0 %v4173
        %5919 = vmatprep.subr.bf16.mxu0 0
        %5920 = vmatpush1.bf16.msra.mxu0 %v4174
        %5921 = vmatprep.subr.bf16.mxu0 0
        %5922 = vmatpush1.bf16.msra.mxu0 %v4175
        %5923 = vmatprep.subr.bf16.mxu0 0
        %5924 = vmatpush1.bf16.msra.mxu0 %v4176
        %5925 = vmatprep.subr.bf16.mxu0 0
        %5926 = vmatpush1.bf16.msra.mxu0 %v4177
        %5927 = vmatprep.subr.bf16.mxu0 0
        %5928 = vmatpush1.bf16.msra.mxu0 %v4178
        %5929 = vmatprep.subr.bf16.mxu0 0
        %5930 = vmatpush1.bf16.msra.mxu0 %v4179
        %5931 = vmatprep.subr.bf16.mxu0 0
        %5932 = vmatpush1.bf16.msra.mxu0 %v4180
        %5933 = vmatprep.subr.bf16.mxu0 0
        %5934 = vmatpush1.bf16.msra.mxu0 %v4181
        %5935 = vmatprep.subr.bf16.mxu0 0
        %5936 = vmatpush1.bf16.msra.mxu0 %v4182
        %5937 = vmatprep.subr.bf16.mxu0 0
        %5938 = vmatpush1.bf16.msra.mxu0 %v4183
        %5939 = vmatprep.subr.bf16.mxu0 0
        %5940 = vmatpush1.bf16.msra.mxu0 %v4184
        %5941 = vmatprep.subr.bf16.mxu0 0
        %5942 = vmatpush1.bf16.msra.mxu0 %v4185
        %5943 = vmatprep.subr.bf16.mxu0 0
        %5944 = vmatpush1.bf16.msra.mxu0 %v4186
        %5945 = vmatprep.subr.bf16.mxu0 0
        %5946 = vmatpush1.bf16.msra.mxu0 %v4187
        %5947 = vmatprep.subr.bf16.mxu0 0
        %5948 = vmatpush1.bf16.msra.mxu0 %v4188
        %5949 = vmatprep.mubr.bf16.mxu0 %v618
        %5950 = vmatmul.mubr.bf16.gmra.mrb[0].mxu0 %v617
        %v5951 = vpop.f32.mrb[0].mxu0
        %v5952 = vadd.f32 %v5912, %v5951
        %v5953 = vpop.f32.mrb[0].mxu0
        %v5954 = vpop.f32.mrb[0].mxu0
        %v5955 = vpop.f32.mrb[0].mxu0
        %5956 = vdwg.mxu0
        %5957 = vmatprep.subr.bf16.mxu0 0
        %5958 = vmatpush1.bf16.msra.mxu0 %v4189
        %5959 = vmatprep.subr.bf16.mxu0 0
        %5960 = vmatpush1.bf16.msra.mxu0 %v4190
        %5961 = vmatprep.subr.bf16.mxu0 0
        %5962 = vmatpush1.bf16.msra.mxu0 %v4191
        %5963 = vmatprep.subr.bf16.mxu0 0
        %5964 = vmatpush1.bf16.msra.mxu0 %v4192
        %5965 = vmatprep.subr.bf16.mxu0 0
        %5966 = vmatpush1.bf16.msra.mxu0 %v4193
        %5967 = vmatprep.subr.bf16.mxu0 0
        %5968 = vmatpush1.bf16.msra.mxu0 %v4194
        %5969 = vmatprep.subr.bf16.mxu0 0
        %5970 = vmatpush1.bf16.msra.mxu0 %v4195
        %5971 = vmatprep.subr.bf16.mxu0 0
        %5972 = vmatpush1.bf16.msra.mxu0 %v4196
        %5973 = vmatprep.subr.bf16.mxu0 0
        %5974 = vmatpush1.bf16.msra.mxu0 %v4197
        %5975 = vmatprep.subr.bf16.mxu0 0
        %5976 = vmatpush1.bf16.msra.mxu0 %v4198
        %5977 = vmatprep.subr.bf16.mxu0 0
        %5978 = vmatpush1.bf16.msra.mxu0 %v4199
        %5979 = vmatprep.subr.bf16.mxu0 0
        %5980 = vmatpush1.bf16.msra.mxu0 %v4200
        %5981 = vmatprep.subr.bf16.mxu0 0
        %5982 = vmatpush1.bf16.msra.mxu0 %v4201
        %5983 = vmatprep.subr.bf16.mxu0 0
        %5984 = vmatpush1.bf16.msra.mxu0 %v4202
        %5985 = vmatprep.subr.bf16.mxu0 0
        %5986 = vmatpush1.bf16.msra.mxu0 %v4203
        %5987 = vmatprep.subr.bf16.mxu0 0
        %5988 = vmatpush1.bf16.msra.mxu0 %v4204
        %5989 = vmatprep.mubr.bf16.mxu0 %v620
        %5990 = vmatmul.mubr.bf16.gmra.mrb[0].mxu0 %v619
        %v5991 = vpop.f32.mrb[0].mxu0
        %v5992 = vadd.f32 %v5952, %v5991
        %v5993 = vpop.f32.mrb[0].mxu0
        %v5994 = vpop.f32.mrb[0].mxu0
        %v5995 = vpop.f32.mrb[0].mxu0
        %5996 = vdwg.mxu0
        %v5997 = vadd.f32 %v188, %v5992
        %vm5998 = vcmask 254976
        %5999 = vst.msk [vmem:[#allocation2] sm:$0x3] %vm5998, %v5997
        %p6000 = scmp.eq.s32.totalorder %s15, 1
        // Predicated region
        $region37: #{resnet50_size_forward.5} parent=31 // pred_check
          %p6001 = pneg %p6000
        $region38: #{resnet50_size_forward.5} parent=31 // pred_check_branch
          %6003 = sbr.rel (%p6001) target = $region40
        $region39: #{resnet50_size_forward.5} parent=31 // pred_region
          %v6004 = vld [vmem:[#allocation2] sm:$0x3]
          %v6005 = vld [vmem:[%s2] sm:$0x1]
          %v6007 = vlaneseq
          %v6008 = vshrl.u32 %v6007, 7
          %v6009 = vsub.s32 0, %v6008
          %v6010 = vrot.slane %v6005, %v6009
          %v6012 = vadd.f32 %v6004, %v6010
          %v6013 = vxor.u32 %v6012, 2147483648
          %v6014 = vmul.f32 %v6013, 1.442695
          %v6015 = vpow.pop %v6014
          %v6016 = vadd.f32 %v6015, 1.0
          %v6017 = vrcp.pop %v6016
          %v6018 = vmul.f32 1.0, %v6017
          %6019 = vst.msk [vmem:[#allocation2] sm:$0x3] %vm5998, %v6018
        $region40: #{resnet50_size_forward.5} parent=31 // pred_fallthru
          _
        // Predicated region
        $region41: #{resnet50_size_forward.5} parent=31 // pred_check
          %p6020 = pneg %p101
        $region42: #{resnet50_size_forward.5} parent=31 // pred_check_branch
          %6022 = sbr.rel (%p6020) target = $region44
        $region43: #{resnet50_size_forward.5} parent=31 // pred_region
          %s6024 = ssub.s32 32, 32
          %6025 = vsyncadd [#allocation3], %s6024
          %s6027 = sshll.u32 [#allocation2], 4
          %s6028 = int_to_ptr.vmem [resolvable:$true] %s6027
          %6030 = dma.vmem_to_hbm [thread:$0]  %s6028, 32, %s3, [#allocation3]
        $region44: #{resnet50_size_forward.5} parent=31 // pred_fallthru
          _
        // Predicated region
        $region45: #{resnet50_size_forward.5} parent=31 // pred_check
          %p6031 = pneg %p101
        $region46: #{resnet50_size_forward.5} parent=31 // pred_check_branch
          %6033 = sbr.rel (%p6031) target = $region48
        $region47: #{resnet50_size_forward.5} parent=31 // pred_region
          %6034 = dma.done [#allocation3], 32
        $region48: #{resnet50_size_forward.5} parent=31 // pred_fallthru
          _
      $region32: #{resnet50_size_forward.5} parent=5 // pred_fallthru
        _
      %p6035 = scmp.le.s32.totalorder 2, %s10
      // Predicated region
      $region49: #{resnet50_size_forward.5} parent=5 // pred_check
        %p6036 = pneg %p6035
      $region50: #{resnet50_size_forward.5} parent=5 // pred_check_branch
        %6038 = sbr.rel (%p6036) target = $region52
      $region51: #{resnet50_size_forward.5} parent=5 // pred_region
        %s6039 = ssub.s32 %s10, 2
      $region52: #{resnet50_size_forward.5} parent=5 // pred_fallthru
        _
    $region6: #{resnet50_size_forward.5} parent=1 // loop_footer
      %s14 = sadd.s32 1, %s10
    $region7: #{resnet50_size_forward.5} parent=1 // loop_footer_branch
      %9 = sbr.rel target = $region3
    $region8: #{resnet50_size_forward.5} parent=1 // loop_exit
      _
    %6040 = vsyncpa [#allocation3], 1
    %s6041 = scalar_lea.sflag [#allocation3], 1
    %6042 = vsyncpa %s6041, 1

</llo_original>
